<compile_context>
chip_gen: v5e
topology: v5e:2x2
jax: 0.10.0
libtpu: 0.0.40
codegen_flags: <defaults>
</compile_context>

<pallas_src>
import functools

import jax
import jax.numpy as jnp
from jax import lax
from jax.experimental import pallas as pl
from jax.experimental.pallas import tpu as pltpu


# ----------------------------------------------------------------------------
# Fused encoder kernel (one image per grid step; everything stays in VMEM)
# ----------------------------------------------------------------------------
def _encoder_kernel(*refs, num_blocks, H, W, Cin0, C):
    it = iter(refs)
    cat_ref = next(it)                                   # (1, H, W, Cin0) f32
    blocks = []
    for i in range(num_blocks):
        wa = next(it)                                    # (3,3,C or Cin0, C) bf16
        wb = next(it) if (i > 0 and i % 2 == 0) else None  # (3,3,Cin0,C) bf16
        shift = next(it)                                 # (1, C) f32 (folded BN shift)
        blocks.append((wa, wb, shift))
    wf_ref = next(it)                                    # (3, C) bf16  (final 1x1, OI)
    bf_ref = next(it)                                    # (3, 1) f32   (final bias)
    out_ref = next(it)                                   # (1, 3, H*W) f32
    cat_pad = next(it)                                   # (H+2, W+2, Cin0) f32 scratch
    act_pad = next(it)                                   # (H+2, W+2, C)    f32 scratch

    # Zero halos, then copy the concat input into the padded buffer once.
    cat_pad[...] = jnp.zeros_like(cat_pad)
    act_pad[...] = jnp.zeros_like(act_pad)
    cat_pad[pl.ds(1, H), pl.ds(1, W), :] = cat_ref[0]

    def add_taps(acc, src_pad, w_ref, cs):
        # 3x3 conv as 9 shifted (H*W, cs) @ (cs, C) MXU matmuls (bf16 in, f32 acc).
        for ky in range(3):
            for kx in range(3):
                patch = src_pad[pl.ds(ky, H), pl.ds(kx, W), :]
                patch = patch.reshape(H * W, cs).astype(jnp.bfloat16)
                acc = acc + jnp.dot(patch, w_ref[ky, kx],
                                    preferred_element_type=jnp.float32)
        return acc

    y = None
    for i, (wa, wb, shift) in enumerate(blocks):
        acc = jnp.zeros((H * W, C), jnp.float32)
        if i == 0:
            acc = add_taps(acc, cat_pad, wa, Cin0)
        else:
            acc = add_taps(acc, act_pad, wa, C)
            if wb is not None:                           # even block: + conv over concat
                acc = add_taps(acc, cat_pad, wb, Cin0)
        y = jnp.maximum(acc + shift[...], 0.0)           # folded-BN shift + ReLU
        if i < num_blocks - 1:                           # feed the next 3x3 block
            act_pad[pl.ds(1, H), pl.ds(1, W), :] = y.reshape(H, W, C)

    # Final 1x1 conv as epilogue, computed transposed for a lane-dense store:
    # (3, C) @ (H*W, C)^T -> (3, H*W)
    out = lax.dot_general(wf_ref[...], y.astype(jnp.bfloat16),
                          dimension_numbers=(((1,), (1,)), ((), ())),
                          preferred_element_type=jnp.float32)
    out_ref[0] = out + bf_ref[...]


# ----------------------------------------------------------------------------
# Wrapper: builds the (image, broadcast message) concat once, then one pallas_call
# ----------------------------------------------------------------------------
def encoder_forward(params, image_nchw, message, num_blocks):
    image = jnp.transpose(image_nchw, (0, 2, 3, 1)).astype(jnp.float32)  # NCHW -> NHWC
    N, H, W, _ = image.shape
    L = message.shape[-1]
    Cin0 = 3 + L
    C = params["blocks"][0]["wa"].shape[-1]

    msg = jnp.broadcast_to(message[:, None, None, :].astype(jnp.float32), (N, H, W, L))
    concat = jnp.concatenate([image, msg], axis=-1)                      # (N,H,W,Cin0)

    def _full(shape):
        nd = len(shape)
        return pl.BlockSpec(shape, lambda n, _nd=nd: (0,) * _nd)

    inputs = [concat]
    in_specs = [pl.BlockSpec((1, H, W, Cin0), lambda n: (n, 0, 0, 0))]
    for i in range(num_blocks):
        blk = params["blocks"][i]
        inputs.append(blk["wa"]); in_specs.append(_full(blk["wa"].shape))
        if i > 0 and i % 2 == 0:
            inputs.append(blk["wb"]); in_specs.append(_full(blk["wb"].shape))
        inputs.append(blk["shift"]); in_specs.append(_full(blk["shift"].shape))
    inputs += [params["final_w_k"], params["final_b_k"]]
    in_specs += [_full(params["final_w_k"].shape), _full(params["final_b_k"].shape)]

    kern = functools.partial(_encoder_kernel, num_blocks=num_blocks,
                             H=H, W=W, Cin0=Cin0, C=C)
    out = pl.pallas_call(
        kern,
        out_shape=jax.ShapeDtypeStruct((N, 3, H * W), jnp.float32),
        grid=(N,),
        in_specs=in_specs,
        out_specs=pl.BlockSpec((1, 3, H * W), lambda n: (n, 0, 0)),
        scratch_shapes=[pltpu.VMEM((H + 2, W + 2, Cin0), jnp.float32),
                        pltpu.VMEM((H + 2, W + 2, C), jnp.float32)],
        compiler_params=pltpu.CompilerParams(dimension_semantics=("parallel",)),
    )(*inputs)
    # (N, 3, H*W) -> (N, 3, H, W): already NCHW ordering, reshape is free.
    return out.reshape(N, 3, H, W)


# ----------------------------------------------------------------------------
# Parameter construction (deterministic, synthetic; BN folded into conv weights)
# ----------------------------------------------------------------------------
def _make_block_params(key, cin, cout, split_c=None):
    kw, kb, kg, kbt = jax.random.split(key, 4)
    w = jax.random.normal(kw, (3, 3, cin, cout), jnp.float32) / jnp.sqrt(9.0 * cin)
    bias = 0.01 * jax.random.normal(kb, (cout,), jnp.float32)
    gamma = 1.0 + 0.1 * jax.random.normal(kg, (cout,), jnp.float32)
    beta = 0.1 * jax.random.normal(kbt, (cout,), jnp.float32)
    running_mean = jnp.zeros((cout,), jnp.float32)
    running_var = jnp.ones((cout,), jnp.float32)
    eps = 1e-5
    scale = gamma / jnp.sqrt(running_var + eps)
    shift = (beta + (bias - running_mean) * scale).reshape(1, cout)
    w_folded = w * scale[None, None, None, :]            # BN scale folded into conv
    p = {"w_folded": w_folded, "shift": shift}
    wk = w_folded.astype(jnp.bfloat16)                   # MXU-native kernel weights
    if split_c is None:
        p["wa"] = wk
    else:                                                # even block: split per source
        p["wa"] = wk[:, :, :split_c, :]                  # taps applied to `out`
        p["wb"] = wk[:, :, split_c:, :]                  # taps applied to `concat`
    return p


def make_encoder_params(key, num_blocks, num_channels, message_length):
    cin0 = 3 + message_length
    keys = jax.random.split(key, num_blocks + 1)
    blocks = [_make_block_params(keys[0], cin0, num_channels)]
    for i in range(1, num_blocks):
        if i % 2 == 0:
            blocks.append(_make_block_params(keys[i], num_channels + cin0,
                                             num_channels, split_c=num_channels))
        else:
            blocks.append(_make_block_params(keys[i], num_channels, num_channels))
    kfw, kfb = jax.random.split(keys[num_blocks])
    final_w = jax.random.normal(kfw, (num_channels, 3), jnp.float32) / jnp.sqrt(
        float(num_channels))
    final_b = 0.01 * jax.random.normal(kfb, (3,), jnp.float32)
    return {
        "blocks": blocks,
        "final_w": final_w,                                        # (C, 3) f32 (ref)
        "final_b": final_b,                                        # (3,)   f32 (ref)
        "final_w_k": jnp.transpose(final_w).astype(jnp.bfloat16),  # (3, C) bf16
        "final_b_k": final_b.reshape(3, 1),                        # (3, 1) f32
    }


# ----------------------------------------------------------------------------
# Pure-JAX (f32) reference for correctness checking
# ----------------------------------------------------------------------------
def _ref_block(x, w_folded, shift):
    y = lax.conv_general_dilated(x, w_folded, window_strides=(1, 1), padding="SAME",
                                 dimension_numbers=("NHWC", "HWIO", "NHWC"))
    return jnp.maximum(y + shift[0], 0.0)


def encoder_forward_ref(params, image_nchw, message, num_blocks):
    image = jnp.transpose(image_nchw, (0, 2, 3, 1)).astype(jnp.float32)
    N, H, W, _ = image.shape
    L = message.shape[-1]
    msg = jnp.broadcast_to(message[:, None, None, :].astype(jnp.float32), (N, H, W, L))
    concat = jnp.concatenate([image, msg], axis=-1)
    out = _ref_block(concat, params["blocks"][0]["w_folded"], params["blocks"][0]["shift"])
    for i in range(1, num_blocks):
        if i % 2 == 0:
            out = jnp.concatenate([out, concat], axis=-1)
        out = _ref_block(out, params["blocks"][i]["w_folded"], params["blocks"][i]["shift"])
    out = jnp.einsum("nhwc,cd->nhwd", out, params["final_w"]) + params["final_b"]
    return jnp.transpose(out, (0, 3, 1, 2))


# ----------------------------------------------------------------------------
if __name__ == "__main__":
    num_blocks = 4
    num_channels = 32
    message_length = 8
    N, H, W = 2, 16, 16

    key = jax.random.PRNGKey(0)
    k_img, k_msg, k_par = jax.random.split(key, 3)
    image = jax.random.normal(k_img, (N, 3, H, W), jnp.float32)            # NCHW input
    message = jax.random.uniform(k_msg, (N, message_length), jnp.float32)

    params = make_encoder_params(k_par, num_blocks, num_channels, message_length)

    fwd = jax.jit(encoder_forward, static_argnums=(3,))
    out = jax.block_until_ready(fwd(params, image, message, num_blocks))
    assert out.shape == (N, 3, H, W), out.shape

    ref = jax.block_until_ready(encoder_forward_ref(params, image, message, num_blocks))
    err = float(jnp.max(jnp.abs(out - ref)))
    # Tolerance accounts for bf16 MXU inputs (f32 accumulation) vs the f32 reference.
    assert err < 5e-2, err

    print("KERNEL_OK")
</pallas_src>

<mosaic_0001>
module attributes {stable_mosaic.version = 11 : i64} {
  func.func @_encoder_kernel(%arg0: i32, %arg1: memref<1x16x16x11xf32, #tpu.memory_space<vmem>>, %arg2: memref<3x3x11x32xbf16, #tpu.memory_space<vmem>>, %arg3: memref<1x32xf32, #tpu.memory_space<vmem>>, %arg4: memref<3x3x32x32xbf16, #tpu.memory_space<vmem>>, %arg5: memref<1x32xf32, #tpu.memory_space<vmem>>, %arg6: memref<3x3x32x32xbf16, #tpu.memory_space<vmem>>, %arg7: memref<3x3x11x32xbf16, #tpu.memory_space<vmem>>, %arg8: memref<1x32xf32, #tpu.memory_space<vmem>>, %arg9: memref<3x3x32x32xbf16, #tpu.memory_space<vmem>>, %arg10: memref<1x32xf32, #tpu.memory_space<vmem>>, %arg11: memref<3x32xbf16, #tpu.memory_space<vmem>>, %arg12: memref<3x1xf32, #tpu.memory_space<vmem>>, %arg13: memref<1x3x256xf32, #tpu.memory_space<vmem>>, %arg14: memref<18x18x11xf32, #tpu.memory_space<vmem>>, %arg15: memref<18x18x32xf32, #tpu.memory_space<vmem>>) attributes {dimension_semantics = [#tpu.dimension_semantics<parallel>], iteration_bounds = array<i64: 2>, scalar_prefetch = 0 : i64, scratch_operands = 2 : i64, tpu.core_type = #tpu.core_type<tc>, window_params = [{transform_indices = @transform_0, window_bounds = array<i64: 1, 16, 16, 11>}, {pipeline_mode = #tpu.pipeline_mode<synchronous>, transform_indices = @transform_1, window_bounds = array<i64: 3, 3, 11, 32>}, {pipeline_mode = #tpu.pipeline_mode<synchronous>, transform_indices = @transform_2, window_bounds = array<i64: 1, 32>}, {pipeline_mode = #tpu.pipeline_mode<synchronous>, transform_indices = @transform_3, window_bounds = array<i64: 3, 3, 32, 32>}, {pipeline_mode = #tpu.pipeline_mode<synchronous>, transform_indices = @transform_4, window_bounds = array<i64: 1, 32>}, {pipeline_mode = #tpu.pipeline_mode<synchronous>, transform_indices = @transform_5, window_bounds = array<i64: 3, 3, 32, 32>}, {pipeline_mode = #tpu.pipeline_mode<synchronous>, transform_indices = @transform_6, window_bounds = array<i64: 3, 3, 11, 32>}, {pipeline_mode = #tpu.pipeline_mode<synchronous>, transform_indices = @transform_7, window_bounds = array<i64: 1, 32>}, {pipeline_mode = #tpu.pipeline_mode<synchronous>, transform_indices = @transform_8, window_bounds = array<i64: 3, 3, 32, 32>}, {pipeline_mode = #tpu.pipeline_mode<synchronous>, transform_indices = @transform_9, window_bounds = array<i64: 1, 32>}, {pipeline_mode = #tpu.pipeline_mode<synchronous>, transform_indices = @transform_10, window_bounds = array<i64: 3, 32>}, {pipeline_mode = #tpu.pipeline_mode<synchronous>, transform_indices = @transform_11, window_bounds = array<i64: 3, 1>}, {transform_indices = @transform_12, window_bounds = array<i64: 1, 3, 256>}]} {
    %cst = arith.constant 0.000000e+00 : f32
    %0 = vector.broadcast %cst : f32 to vector<18x18x11xf32>
    %c0 = arith.constant 0 : index
    %c0_0 = arith.constant 0 : index
    %c0_1 = arith.constant 0 : index
    %1 = vector.load %arg14[%c0, %c0_0, %c0_1] : memref<18x18x11xf32, #tpu.memory_space<vmem>>, vector<18x18x11xf32>
    tpu.vector_store %arg14[%c0, %c0_0, %c0_1], %0 {strides = array<i32>} : memref<18x18x11xf32, #tpu.memory_space<vmem>>, vector<18x18x11xf32>,
    %cst_2 = arith.constant 0.000000e+00 : f32
    %2 = vector.broadcast %cst_2 : f32 to vector<18x18x32xf32>
    %c0_3 = arith.constant 0 : index
    %c0_4 = arith.constant 0 : index
    %c0_5 = arith.constant 0 : index
    %3 = vector.load %arg15[%c0_3, %c0_4, %c0_5] : memref<18x18x32xf32, #tpu.memory_space<vmem>>, vector<18x18x32xf32>
    tpu.vector_store %arg15[%c0_3, %c0_4, %c0_5], %2 {strides = array<i32>} : memref<18x18x32xf32, #tpu.memory_space<vmem>>, vector<18x18x32xf32>,
    %c0_6 = arith.constant 0 : index
    %c0_7 = arith.constant 0 : index
    %c0_8 = arith.constant 0 : index
    %c0_9 = arith.constant 0 : index
    %4 = vector.load %arg1[%c0_6, %c0_7, %c0_8, %c0_9] : memref<1x16x16x11xf32, #tpu.memory_space<vmem>>, vector<1x16x16x11xf32>
    %5 = vector.shape_cast %4 : vector<1x16x16x11xf32> to vector<16x16x11xf32>
    %c1 = arith.constant 1 : index
    %c1_10 = arith.constant 1 : index
    %c0_11 = arith.constant 0 : index
    %6 = vector.load %arg14[%c1, %c1_10, %c0_11] : memref<18x18x11xf32, #tpu.memory_space<vmem>>, vector<16x16x11xf32>
    tpu.vector_store %arg14[%c1, %c1_10, %c0_11], %5 {strides = array<i32>} : memref<18x18x11xf32, #tpu.memory_space<vmem>>, vector<16x16x11xf32>,
    %cst_12 = arith.constant 0.000000e+00 : f32
    %7 = vector.broadcast %cst_12 : f32 to vector<256x32xf32>
    %c0_13 = arith.constant 0 : index
    %c0_14 = arith.constant 0 : index
    %c0_15 = arith.constant 0 : index
    %8 = vector.load %arg14[%c0_13, %c0_14, %c0_15] : memref<18x18x11xf32, #tpu.memory_space<vmem>>, vector<16x16x11xf32>
    %9 = vector.shape_cast %8 : vector<16x16x11xf32> to vector<256x11xf32>
    %10 = arith.truncf %9 : vector<256x11xf32> to vector<256x11xbf16>
    %c0_16 = arith.constant 0 : index
    %c0_17 = arith.constant 0 : index
    %c0_18 = arith.constant 0 : index
    %c0_19 = arith.constant 0 : index
    %11 = vector.load %arg2[%c0_16, %c0_17, %c0_18, %c0_19] : memref<3x3x11x32xbf16, #tpu.memory_space<vmem>>, vector<1x1x11x32xbf16>
    %12 = vector.shape_cast %11 : vector<1x1x11x32xbf16> to vector<11x32xbf16>
    %cst_20 = arith.constant dense<0.000000e+00> : vector<256x32xf32>
    %13 = tpu.matmul %10, %12, %cst_20 {dimension_numbers = #tpu.dot_dimension_numbers<[1], [0], [0], [1], [0, 0, 1, 1], [], []>} : vector<256x11xbf16>, vector<11x32xbf16>, vector<256x32xf32> -> vector<256x32xf32>
    %14 = arith.addf %7, %13 : vector<256x32xf32>
    %c0_21 = arith.constant 0 : index
    %c1_22 = arith.constant 1 : index
    %c0_23 = arith.constant 0 : index
    %15 = vector.load %arg14[%c0_21, %c1_22, %c0_23] : memref<18x18x11xf32, #tpu.memory_space<vmem>>, vector<16x16x11xf32>
    %16 = vector.shape_cast %15 : vector<16x16x11xf32> to vector<256x11xf32>
    %17 = arith.truncf %16 : vector<256x11xf32> to vector<256x11xbf16>
    %c0_24 = arith.constant 0 : index
    %c1_25 = arith.constant 1 : index
    %c0_26 = arith.constant 0 : index
    %c0_27 = arith.constant 0 : index
    %18 = vector.load %arg2[%c0_24, %c1_25, %c0_26, %c0_27] : memref<3x3x11x32xbf16, #tpu.memory_space<vmem>>, vector<1x1x11x32xbf16>
    %19 = vector.shape_cast %18 : vector<1x1x11x32xbf16> to vector<11x32xbf16>
    %cst_28 = arith.constant dense<0.000000e+00> : vector<256x32xf32>
    %20 = tpu.matmul %17, %19, %cst_28 {dimension_numbers = #tpu.dot_dimension_numbers<[1], [0], [0], [1], [0, 0, 1, 1], [], []>} : vector<256x11xbf16>, vector<11x32xbf16>, vector<256x32xf32> -> vector<256x32xf32>
    %21 = arith.addf %14, %20 : vector<256x32xf32>
    %c0_29 = arith.constant 0 : index
    %c2 = arith.constant 2 : index
    %c0_30 = arith.constant 0 : index
    %22 = vector.load %arg14[%c0_29, %c2, %c0_30] : memref<18x18x11xf32, #tpu.memory_space<vmem>>, vector<16x16x11xf32>
    %23 = vector.shape_cast %22 : vector<16x16x11xf32> to vector<256x11xf32>
    %24 = arith.truncf %23 : vector<256x11xf32> to vector<256x11xbf16>
    %c0_31 = arith.constant 0 : index
    %c2_32 = arith.constant 2 : index
    %c0_33 = arith.constant 0 : index
    %c0_34 = arith.constant 0 : index
    %25 = vector.load %arg2[%c0_31, %c2_32, %c0_33, %c0_34] : memref<3x3x11x32xbf16, #tpu.memory_space<vmem>>, vector<1x1x11x32xbf16>
    %26 = vector.shape_cast %25 : vector<1x1x11x32xbf16> to vector<11x32xbf16>
    %cst_35 = arith.constant dense<0.000000e+00> : vector<256x32xf32>
    %27 = tpu.matmul %24, %26, %cst_35 {dimension_numbers = #tpu.dot_dimension_numbers<[1], [0], [0], [1], [0, 0, 1, 1], [], []>} : vector<256x11xbf16>, vector<11x32xbf16>, vector<256x32xf32> -> vector<256x32xf32>
    %28 = arith.addf %21, %27 : vector<256x32xf32>
    %c1_36 = arith.constant 1 : index
    %c0_37 = arith.constant 0 : index
    %c0_38 = arith.constant 0 : index
    %29 = vector.load %arg14[%c1_36, %c0_37, %c0_38] : memref<18x18x11xf32, #tpu.memory_space<vmem>>, vector<16x16x11xf32>
    %30 = vector.shape_cast %29 : vector<16x16x11xf32> to vector<256x11xf32>
    %31 = arith.truncf %30 : vector<256x11xf32> to vector<256x11xbf16>
    %c1_39 = arith.constant 1 : index
    %c0_40 = arith.constant 0 : index
    %c0_41 = arith.constant 0 : index
    %c0_42 = arith.constant 0 : index
    %32 = vector.load %arg2[%c1_39, %c0_40, %c0_41, %c0_42] : memref<3x3x11x32xbf16, #tpu.memory_space<vmem>>, vector<1x1x11x32xbf16>
    %33 = vector.shape_cast %32 : vector<1x1x11x32xbf16> to vector<11x32xbf16>
    %cst_43 = arith.constant dense<0.000000e+00> : vector<256x32xf32>
    %34 = tpu.matmul %31, %33, %cst_43 {dimension_numbers = #tpu.dot_dimension_numbers<[1], [0], [0], [1], [0, 0, 1, 1], [], []>} : vector<256x11xbf16>, vector<11x32xbf16>, vector<256x32xf32> -> vector<256x32xf32>
    %35 = arith.addf %28, %34 : vector<256x32xf32>
    %c1_44 = arith.constant 1 : index
    %c1_45 = arith.constant 1 : index
    %c0_46 = arith.constant 0 : index
    %36 = vector.load %arg14[%c1_44, %c1_45, %c0_46] : memref<18x18x11xf32, #tpu.memory_space<vmem>>, vector<16x16x11xf32>
    %37 = vector.shape_cast %36 : vector<16x16x11xf32> to vector<256x11xf32>
    %38 = arith.truncf %37 : vector<256x11xf32> to vector<256x11xbf16>
    %c1_47 = arith.constant 1 : index
    %c1_48 = arith.constant 1 : index
    %c0_49 = arith.constant 0 : index
    %c0_50 = arith.constant 0 : index
    %39 = vector.load %arg2[%c1_47, %c1_48, %c0_49, %c0_50] : memref<3x3x11x32xbf16, #tpu.memory_space<vmem>>, vector<1x1x11x32xbf16>
    %40 = vector.shape_cast %39 : vector<1x1x11x32xbf16> to vector<11x32xbf16>
    %cst_51 = arith.constant dense<0.000000e+00> : vector<256x32xf32>
    %41 = tpu.matmul %38, %40, %cst_51 {dimension_numbers = #tpu.dot_dimension_numbers<[1], [0], [0], [1], [0, 0, 1, 1], [], []>} : vector<256x11xbf16>, vector<11x32xbf16>, vector<256x32xf32> -> vector<256x32xf32>
    %42 = arith.addf %35, %41 : vector<256x32xf32>
    %c1_52 = arith.constant 1 : index
    %c2_53 = arith.constant 2 : index
    %c0_54 = arith.constant 0 : index
    %43 = vector.load %arg14[%c1_52, %c2_53, %c0_54] : memref<18x18x11xf32, #tpu.memory_space<vmem>>, vector<16x16x11xf32>
    %44 = vector.shape_cast %43 : vector<16x16x11xf32> to vector<256x11xf32>
    %45 = arith.truncf %44 : vector<256x11xf32> to vector<256x11xbf16>
    %c1_55 = arith.constant 1 : index
    %c2_56 = arith.constant 2 : index
    %c0_57 = arith.constant 0 : index
    %c0_58 = arith.constant 0 : index
    %46 = vector.load %arg2[%c1_55, %c2_56, %c0_57, %c0_58] : memref<3x3x11x32xbf16, #tpu.memory_space<vmem>>, vector<1x1x11x32xbf16>
    %47 = vector.shape_cast %46 : vector<1x1x11x32xbf16> to vector<11x32xbf16>
    %cst_59 = arith.constant dense<0.000000e+00> : vector<256x32xf32>
    %48 = tpu.matmul %45, %47, %cst_59 {dimension_numbers = #tpu.dot_dimension_numbers<[1], [0], [0], [1], [0, 0, 1, 1], [], []>} : vector<256x11xbf16>, vector<11x32xbf16>, vector<256x32xf32> -> vector<256x32xf32>
    %49 = arith.addf %42, %48 : vector<256x32xf32>
    %c2_60 = arith.constant 2 : index
    %c0_61 = arith.constant 0 : index
    %c0_62 = arith.constant 0 : index
    %50 = vector.load %arg14[%c2_60, %c0_61, %c0_62] : memref<18x18x11xf32, #tpu.memory_space<vmem>>, vector<16x16x11xf32>
    %51 = vector.shape_cast %50 : vector<16x16x11xf32> to vector<256x11xf32>
    %52 = arith.truncf %51 : vector<256x11xf32> to vector<256x11xbf16>
    %c2_63 = arith.constant 2 : index
    %c0_64 = arith.constant 0 : index
    %c0_65 = arith.constant 0 : index
    %c0_66 = arith.constant 0 : index
    %53 = vector.load %arg2[%c2_63, %c0_64, %c0_65, %c0_66] : memref<3x3x11x32xbf16, #tpu.memory_space<vmem>>, vector<1x1x11x32xbf16>
    %54 = vector.shape_cast %53 : vector<1x1x11x32xbf16> to vector<11x32xbf16>
    %cst_67 = arith.constant dense<0.000000e+00> : vector<256x32xf32>
    %55 = tpu.matmul %52, %54, %cst_67 {dimension_numbers = #tpu.dot_dimension_numbers<[1], [0], [0], [1], [0, 0, 1, 1], [], []>} : vector<256x11xbf16>, vector<11x32xbf16>, vector<256x32xf32> -> vector<256x32xf32>
    %56 = arith.addf %49, %55 : vector<256x32xf32>
    %c2_68 = arith.constant 2 : index
    %c1_69 = arith.constant 1 : index
    %c0_70 = arith.constant 0 : index
    %57 = vector.load %arg14[%c2_68, %c1_69, %c0_70] : memref<18x18x11xf32, #tpu.memory_space<vmem>>, vector<16x16x11xf32>
    %58 = vector.shape_cast %57 : vector<16x16x11xf32> to vector<256x11xf32>
    %59 = arith.truncf %58 : vector<256x11xf32> to vector<256x11xbf16>
    %c2_71 = arith.constant 2 : index
    %c1_72 = arith.constant 1 : index
    %c0_73 = arith.constant 0 : index
    %c0_74 = arith.constant 0 : index
    %60 = vector.load %arg2[%c2_71, %c1_72, %c0_73, %c0_74] : memref<3x3x11x32xbf16, #tpu.memory_space<vmem>>, vector<1x1x11x32xbf16>
    %61 = vector.shape_cast %60 : vector<1x1x11x32xbf16> to vector<11x32xbf16>
    %cst_75 = arith.constant dense<0.000000e+00> : vector<256x32xf32>
    %62 = tpu.matmul %59, %61, %cst_75 {dimension_numbers = #tpu.dot_dimension_numbers<[1], [0], [0], [1], [0, 0, 1, 1], [], []>} : vector<256x11xbf16>, vector<11x32xbf16>, vector<256x32xf32> -> vector<256x32xf32>
    %63 = arith.addf %56, %62 : vector<256x32xf32>
    %c2_76 = arith.constant 2 : index
    %c2_77 = arith.constant 2 : index
    %c0_78 = arith.constant 0 : index
    %64 = vector.load %arg14[%c2_76, %c2_77, %c0_78] : memref<18x18x11xf32, #tpu.memory_space<vmem>>, vector<16x16x11xf32>
    %65 = vector.shape_cast %64 : vector<16x16x11xf32> to vector<256x11xf32>
    %66 = arith.truncf %65 : vector<256x11xf32> to vector<256x11xbf16>
    %c2_79 = arith.constant 2 : index
    %c2_80 = arith.constant 2 : index
    %c0_81 = arith.constant 0 : index
    %c0_82 = arith.constant 0 : index
    %67 = vector.load %arg2[%c2_79, %c2_80, %c0_81, %c0_82] : memref<3x3x11x32xbf16, #tpu.memory_space<vmem>>, vector<1x1x11x32xbf16>
    %68 = vector.shape_cast %67 : vector<1x1x11x32xbf16> to vector<11x32xbf16>
    %cst_83 = arith.constant dense<0.000000e+00> : vector<256x32xf32>
    %69 = tpu.matmul %66, %68, %cst_83 {dimension_numbers = #tpu.dot_dimension_numbers<[1], [0], [0], [1], [0, 0, 1, 1], [], []>} : vector<256x11xbf16>, vector<11x32xbf16>, vector<256x32xf32> -> vector<256x32xf32>
    %70 = arith.addf %63, %69 : vector<256x32xf32>
    %c0_84 = arith.constant 0 : index
    %c0_85 = arith.constant 0 : index
    %71 = vector.load %arg3[%c0_84, %c0_85] : memref<1x32xf32, #tpu.memory_space<vmem>>, vector<1x32xf32>
    %72 = vector.broadcast %71 : vector<1x32xf32> to vector<256x32xf32>
    %73 = arith.addf %70, %72 : vector<256x32xf32>
    %cst_86 = arith.constant 0.000000e+00 : f32
    %74 = vector.broadcast %cst_86 : f32 to vector<256x32xf32>
    %75 = arith.maximumf %73, %74 : vector<256x32xf32>
    %76 = vector.shape_cast %75 : vector<256x32xf32> to vector<16x16x32xf32>
    %c1_87 = arith.constant 1 : index
    %c1_88 = arith.constant 1 : index
    %c0_89 = arith.constant 0 : index
    %77 = vector.load %arg15[%c1_87, %c1_88, %c0_89] : memref<18x18x32xf32, #tpu.memory_space<vmem>>, vector<16x16x32xf32>
    tpu.vector_store %arg15[%c1_87, %c1_88, %c0_89], %76 {strides = array<i32>} : memref<18x18x32xf32, #tpu.memory_space<vmem>>, vector<16x16x32xf32>,
    %cst_90 = arith.constant 0.000000e+00 : f32
    %78 = vector.broadcast %cst_90 : f32 to vector<256x32xf32>
    %c0_91 = arith.constant 0 : index
    %c0_92 = arith.constant 0 : index
    %c0_93 = arith.constant 0 : index
    %79 = vector.load %arg15[%c0_91, %c0_92, %c0_93] : memref<18x18x32xf32, #tpu.memory_space<vmem>>, vector<16x16x32xf32>
    %80 = vector.shape_cast %79 : vector<16x16x32xf32> to vector<256x32xf32>
    %81 = arith.truncf %80 : vector<256x32xf32> to vector<256x32xbf16>
    %c0_94 = arith.constant 0 : index
    %c0_95 = arith.constant 0 : index
    %c0_96 = arith.constant 0 : index
    %c0_97 = arith.constant 0 : index
    %82 = vector.load %arg4[%c0_94, %c0_95, %c0_96, %c0_97] : memref<3x3x32x32xbf16, #tpu.memory_space<vmem>>, vector<1x1x32x32xbf16>
    %83 = vector.shape_cast %82 : vector<1x1x32x32xbf16> to vector<32x32xbf16>
    %cst_98 = arith.constant dense<0.000000e+00> : vector<256x32xf32>
    %84 = tpu.matmul %81, %83, %cst_98 {dimension_numbers = #tpu.dot_dimension_numbers<[1], [0], [0], [1], [0, 0, 1, 1], [], []>} : vector<256x32xbf16>, vector<32x32xbf16>, vector<256x32xf32> -> vector<256x32xf32>
    %85 = arith.addf %78, %84 : vector<256x32xf32>
    %c0_99 = arith.constant 0 : index
    %c1_100 = arith.constant 1 : index
    %c0_101 = arith.constant 0 : index
    %86 = vector.load %arg15[%c0_99, %c1_100, %c0_101] : memref<18x18x32xf32, #tpu.memory_space<vmem>>, vector<16x16x32xf32>
    %87 = vector.shape_cast %86 : vector<16x16x32xf32> to vector<256x32xf32>
    %88 = arith.truncf %87 : vector<256x32xf32> to vector<256x32xbf16>
    %c0_102 = arith.constant 0 : index
    %c1_103 = arith.constant 1 : index
    %c0_104 = arith.constant 0 : index
    %c0_105 = arith.constant 0 : index
    %89 = vector.load %arg4[%c0_102, %c1_103, %c0_104, %c0_105] : memref<3x3x32x32xbf16, #tpu.memory_space<vmem>>, vector<1x1x32x32xbf16>
    %90 = vector.shape_cast %89 : vector<1x1x32x32xbf16> to vector<32x32xbf16>
    %cst_106 = arith.constant dense<0.000000e+00> : vector<256x32xf32>
    %91 = tpu.matmul %88, %90, %cst_106 {dimension_numbers = #tpu.dot_dimension_numbers<[1], [0], [0], [1], [0, 0, 1, 1], [], []>} : vector<256x32xbf16>, vector<32x32xbf16>, vector<256x32xf32> -> vector<256x32xf32>
    %92 = arith.addf %85, %91 : vector<256x32xf32>
    %c0_107 = arith.constant 0 : index
    %c2_108 = arith.constant 2 : index
    %c0_109 = arith.constant 0 : index
    %93 = vector.load %arg15[%c0_107, %c2_108, %c0_109] : memref<18x18x32xf32, #tpu.memory_space<vmem>>, vector<16x16x32xf32>
    %94 = vector.shape_cast %93 : vector<16x16x32xf32> to vector<256x32xf32>
    %95 = arith.truncf %94 : vector<256x32xf32> to vector<256x32xbf16>
    %c0_110 = arith.constant 0 : index
    %c2_111 = arith.constant 2 : index
    %c0_112 = arith.constant 0 : index
    %c0_113 = arith.constant 0 : index
    %96 = vector.load %arg4[%c0_110, %c2_111, %c0_112, %c0_113] : memref<3x3x32x32xbf16, #tpu.memory_space<vmem>>, vector<1x1x32x32xbf16>
    %97 = vector.shape_cast %96 : vector<1x1x32x32xbf16> to vector<32x32xbf16>
    %cst_114 = arith.constant dense<0.000000e+00> : vector<256x32xf32>
    %98 = tpu.matmul %95, %97, %cst_114 {dimension_numbers = #tpu.dot_dimension_numbers<[1], [0], [0], [1], [0, 0, 1, 1], [], []>} : vector<256x32xbf16>, vector<32x32xbf16>, vector<256x32xf32> -> vector<256x32xf32>
    %99 = arith.addf %92, %98 : vector<256x32xf32>
    %c1_115 = arith.constant 1 : index
    %c0_116 = arith.constant 0 : index
    %c0_117 = arith.constant 0 : index
    %100 = vector.load %arg15[%c1_115, %c0_116, %c0_117] : memref<18x18x32xf32, #tpu.memory_space<vmem>>, vector<16x16x32xf32>
    %101 = vector.shape_cast %100 : vector<16x16x32xf32> to vector<256x32xf32>
    %102 = arith.truncf %101 : vector<256x32xf32> to vector<256x32xbf16>
    %c1_118 = arith.constant 1 : index
    %c0_119 = arith.constant 0 : index
    %c0_120 = arith.constant 0 : index
    %c0_121 = arith.constant 0 : index
    %103 = vector.load %arg4[%c1_118, %c0_119, %c0_120, %c0_121] : memref<3x3x32x32xbf16, #tpu.memory_space<vmem>>, vector<1x1x32x32xbf16>
    %104 = vector.shape_cast %103 : vector<1x1x32x32xbf16> to vector<32x32xbf16>
    %cst_122 = arith.constant dense<0.000000e+00> : vector<256x32xf32>
    %105 = tpu.matmul %102, %104, %cst_122 {dimension_numbers = #tpu.dot_dimension_numbers<[1], [0], [0], [1], [0, 0, 1, 1], [], []>} : vector<256x32xbf16>, vector<32x32xbf16>, vector<256x32xf32> -> vector<256x32xf32>
    %106 = arith.addf %99, %105 : vector<256x32xf32>
    %c1_123 = arith.constant 1 : index
    %c1_124 = arith.constant 1 : index
    %c0_125 = arith.constant 0 : index
    %107 = vector.load %arg15[%c1_123, %c1_124, %c0_125] : memref<18x18x32xf32, #tpu.memory_space<vmem>>, vector<16x16x32xf32>
    %108 = vector.shape_cast %107 : vector<16x16x32xf32> to vector<256x32xf32>
    %109 = arith.truncf %108 : vector<256x32xf32> to vector<256x32xbf16>
    %c1_126 = arith.constant 1 : index
    %c1_127 = arith.constant 1 : index
    %c0_128 = arith.constant 0 : index
    %c0_129 = arith.constant 0 : index
    %110 = vector.load %arg4[%c1_126, %c1_127, %c0_128, %c0_129] : memref<3x3x32x32xbf16, #tpu.memory_space<vmem>>, vector<1x1x32x32xbf16>
    %111 = vector.shape_cast %110 : vector<1x1x32x32xbf16> to vector<32x32xbf16>
    %cst_130 = arith.constant dense<0.000000e+00> : vector<256x32xf32>
    %112 = tpu.matmul %109, %111, %cst_130 {dimension_numbers = #tpu.dot_dimension_numbers<[1], [0], [0], [1], [0, 0, 1, 1], [], []>} : vector<256x32xbf16>, vector<32x32xbf16>, vector<256x32xf32> -> vector<256x32xf32>
    %113 = arith.addf %106, %112 : vector<256x32xf32>
    %c1_131 = arith.constant 1 : index
    %c2_132 = arith.constant 2 : index
    %c0_133 = arith.constant 0 : index
    %114 = vector.load %arg15[%c1_131, %c2_132, %c0_133] : memref<18x18x32xf32, #tpu.memory_space<vmem>>, vector<16x16x32xf32>
    %115 = vector.shape_cast %114 : vector<16x16x32xf32> to vector<256x32xf32>
    %116 = arith.truncf %115 : vector<256x32xf32> to vector<256x32xbf16>
    %c1_134 = arith.constant 1 : index
    %c2_135 = arith.constant 2 : index
    %c0_136 = arith.constant 0 : index
    %c0_137 = arith.constant 0 : index
    %117 = vector.load %arg4[%c1_134, %c2_135, %c0_136, %c0_137] : memref<3x3x32x32xbf16, #tpu.memory_space<vmem>>, vector<1x1x32x32xbf16>
    %118 = vector.shape_cast %117 : vector<1x1x32x32xbf16> to vector<32x32xbf16>
    %cst_138 = arith.constant dense<0.000000e+00> : vector<256x32xf32>
    %119 = tpu.matmul %116, %118, %cst_138 {dimension_numbers = #tpu.dot_dimension_numbers<[1], [0], [0], [1], [0, 0, 1, 1], [], []>} : vector<256x32xbf16>, vector<32x32xbf16>, vector<256x32xf32> -> vector<256x32xf32>
    %120 = arith.addf %113, %119 : vector<256x32xf32>
    %c2_139 = arith.constant 2 : index
    %c0_140 = arith.constant 0 : index
    %c0_141 = arith.constant 0 : index
    %121 = vector.load %arg15[%c2_139, %c0_140, %c0_141] : memref<18x18x32xf32, #tpu.memory_space<vmem>>, vector<16x16x32xf32>
    %122 = vector.shape_cast %121 : vector<16x16x32xf32> to vector<256x32xf32>
    %123 = arith.truncf %122 : vector<256x32xf32> to vector<256x32xbf16>
    %c2_142 = arith.constant 2 : index
    %c0_143 = arith.constant 0 : index
    %c0_144 = arith.constant 0 : index
    %c0_145 = arith.constant 0 : index
    %124 = vector.load %arg4[%c2_142, %c0_143, %c0_144, %c0_145] : memref<3x3x32x32xbf16, #tpu.memory_space<vmem>>, vector<1x1x32x32xbf16>
    %125 = vector.shape_cast %124 : vector<1x1x32x32xbf16> to vector<32x32xbf16>
    %cst_146 = arith.constant dense<0.000000e+00> : vector<256x32xf32>
    %126 = tpu.matmul %123, %125, %cst_146 {dimension_numbers = #tpu.dot_dimension_numbers<[1], [0], [0], [1], [0, 0, 1, 1], [], []>} : vector<256x32xbf16>, vector<32x32xbf16>, vector<256x32xf32> -> vector<256x32xf32>
    %127 = arith.addf %120, %126 : vector<256x32xf32>
    %c2_147 = arith.constant 2 : index
    %c1_148 = arith.constant 1 : index
    %c0_149 = arith.constant 0 : index
    %128 = vector.load %arg15[%c2_147, %c1_148, %c0_149] : memref<18x18x32xf32, #tpu.memory_space<vmem>>, vector<16x16x32xf32>
    %129 = vector.shape_cast %128 : vector<16x16x32xf32> to vector<256x32xf32>
    %130 = arith.truncf %129 : vector<256x32xf32> to vector<256x32xbf16>
    %c2_150 = arith.constant 2 : index
    %c1_151 = arith.constant 1 : index
    %c0_152 = arith.constant 0 : index
    %c0_153 = arith.constant 0 : index
    %131 = vector.load %arg4[%c2_150, %c1_151, %c0_152, %c0_153] : memref<3x3x32x32xbf16, #tpu.memory_space<vmem>>, vector<1x1x32x32xbf16>
    %132 = vector.shape_cast %131 : vector<1x1x32x32xbf16> to vector<32x32xbf16>
    %cst_154 = arith.constant dense<0.000000e+00> : vector<256x32xf32>
    %133 = tpu.matmul %130, %132, %cst_154 {dimension_numbers = #tpu.dot_dimension_numbers<[1], [0], [0], [1], [0, 0, 1, 1], [], []>} : vector<256x32xbf16>, vector<32x32xbf16>, vector<256x32xf32> -> vector<256x32xf32>
    %134 = arith.addf %127, %133 : vector<256x32xf32>
    %c2_155 = arith.constant 2 : index
    %c2_156 = arith.constant 2 : index
    %c0_157 = arith.constant 0 : index
    %135 = vector.load %arg15[%c2_155, %c2_156, %c0_157] : memref<18x18x32xf32, #tpu.memory_space<vmem>>, vector<16x16x32xf32>
    %136 = vector.shape_cast %135 : vector<16x16x32xf32> to vector<256x32xf32>
    %137 = arith.truncf %136 : vector<256x32xf32> to vector<256x32xbf16>
    %c2_158 = arith.constant 2 : index
    %c2_159 = arith.constant 2 : index
    %c0_160 = arith.constant 0 : index
    %c0_161 = arith.constant 0 : index
    %138 = vector.load %arg4[%c2_158, %c2_159, %c0_160, %c0_161] : memref<3x3x32x32xbf16, #tpu.memory_space<vmem>>, vector<1x1x32x32xbf16>
    %139 = vector.shape_cast %138 : vector<1x1x32x32xbf16> to vector<32x32xbf16>
    %cst_162 = arith.constant dense<0.000000e+00> : vector<256x32xf32>
    %140 = tpu.matmul %137, %139, %cst_162 {dimension_numbers = #tpu.dot_dimension_numbers<[1], [0], [0], [1], [0, 0, 1, 1], [], []>} : vector<256x32xbf16>, vector<32x32xbf16>, vector<256x32xf32> -> vector<256x32xf32>
    %141 = arith.addf %134, %140 : vector<256x32xf32>
    %c0_163 = arith.constant 0 : index
    %c0_164 = arith.constant 0 : index
    %142 = vector.load %arg5[%c0_163, %c0_164] : memref<1x32xf32, #tpu.memory_space<vmem>>, vector<1x32xf32>
    %143 = vector.broadcast %142 : vector<1x32xf32> to vector<256x32xf32>
    %144 = arith.addf %141, %143 : vector<256x32xf32>
    %cst_165 = arith.constant 0.000000e+00 : f32
    %145 = vector.broadcast %cst_165 : f32 to vector<256x32xf32>
    %146 = arith.maximumf %144, %145 : vector<256x32xf32>
    %147 = vector.shape_cast %146 : vector<256x32xf32> to vector<16x16x32xf32>
    %c1_166 = arith.constant 1 : index
    %c1_167 = arith.constant 1 : index
    %c0_168 = arith.constant 0 : index
    %148 = vector.load %arg15[%c1_166, %c1_167, %c0_168] : memref<18x18x32xf32, #tpu.memory_space<vmem>>, vector<16x16x32xf32>
    tpu.vector_store %arg15[%c1_166, %c1_167, %c0_168], %147 {strides = array<i32>} : memref<18x18x32xf32, #tpu.memory_space<vmem>>, vector<16x16x32xf32>,
    %cst_169 = arith.constant 0.000000e+00 : f32
    %149 = vector.broadcast %cst_169 : f32 to vector<256x32xf32>
    %c0_170 = arith.constant 0 : index
    %c0_171 = arith.constant 0 : index
    %c0_172 = arith.constant 0 : index
    %150 = vector.load %arg15[%c0_170, %c0_171, %c0_172] : memref<18x18x32xf32, #tpu.memory_space<vmem>>, vector<16x16x32xf32>
    %151 = vector.shape_cast %150 : vector<16x16x32xf32> to vector<256x32xf32>
    %152 = arith.truncf %151 : vector<256x32xf32> to vector<256x32xbf16>
    %c0_173 = arith.constant 0 : index
    %c0_174 = arith.constant 0 : index
    %c0_175 = arith.constant 0 : index
    %c0_176 = arith.constant 0 : index
    %153 = vector.load %arg6[%c0_173, %c0_174, %c0_175, %c0_176] : memref<3x3x32x32xbf16, #tpu.memory_space<vmem>>, vector<1x1x32x32xbf16>
    %154 = vector.shape_cast %153 : vector<1x1x32x32xbf16> to vector<32x32xbf16>
    %cst_177 = arith.constant dense<0.000000e+00> : vector<256x32xf32>
    %155 = tpu.matmul %152, %154, %cst_177 {dimension_numbers = #tpu.dot_dimension_numbers<[1], [0], [0], [1], [0, 0, 1, 1], [], []>} : vector<256x32xbf16>, vector<32x32xbf16>, vector<256x32xf32> -> vector<256x32xf32>
    %156 = arith.addf %149, %155 : vector<256x32xf32>
    %c0_178 = arith.constant 0 : index
    %c1_179 = arith.constant 1 : index
    %c0_180 = arith.constant 0 : index
    %157 = vector.load %arg15[%c0_178, %c1_179, %c0_180] : memref<18x18x32xf32, #tpu.memory_space<vmem>>, vector<16x16x32xf32>
    %158 = vector.shape_cast %157 : vector<16x16x32xf32> to vector<256x32xf32>
    %159 = arith.truncf %158 : vector<256x32xf32> to vector<256x32xbf16>
    %c0_181 = arith.constant 0 : index
    %c1_182 = arith.constant 1 : index
    %c0_183 = arith.constant 0 : index
    %c0_184 = arith.constant 0 : index
    %160 = vector.load %arg6[%c0_181, %c1_182, %c0_183, %c0_184] : memref<3x3x32x32xbf16, #tpu.memory_space<vmem>>, vector<1x1x32x32xbf16>
    %161 = vector.shape_cast %160 : vector<1x1x32x32xbf16> to vector<32x32xbf16>
    %cst_185 = arith.constant dense<0.000000e+00> : vector<256x32xf32>
    %162 = tpu.matmul %159, %161, %cst_185 {dimension_numbers = #tpu.dot_dimension_numbers<[1], [0], [0], [1], [0, 0, 1, 1], [], []>} : vector<256x32xbf16>, vector<32x32xbf16>, vector<256x32xf32> -> vector<256x32xf32>
    %163 = arith.addf %156, %162 : vector<256x32xf32>
    %c0_186 = arith.constant 0 : index
    %c2_187 = arith.constant 2 : index
    %c0_188 = arith.constant 0 : index
    %164 = vector.load %arg15[%c0_186, %c2_187, %c0_188] : memref<18x18x32xf32, #tpu.memory_space<vmem>>, vector<16x16x32xf32>
    %165 = vector.shape_cast %164 : vector<16x16x32xf32> to vector<256x32xf32>
    %166 = arith.truncf %165 : vector<256x32xf32> to vector<256x32xbf16>
    %c0_189 = arith.constant 0 : index
    %c2_190 = arith.constant 2 : index
    %c0_191 = arith.constant 0 : index
    %c0_192 = arith.constant 0 : index
    %167 = vector.load %arg6[%c0_189, %c2_190, %c0_191, %c0_192] : memref<3x3x32x32xbf16, #tpu.memory_space<vmem>>, vector<1x1x32x32xbf16>
    %168 = vector.shape_cast %167 : vector<1x1x32x32xbf16> to vector<32x32xbf16>
    %cst_193 = arith.constant dense<0.000000e+00> : vector<256x32xf32>
    %169 = tpu.matmul %166, %168, %cst_193 {dimension_numbers = #tpu.dot_dimension_numbers<[1], [0], [0], [1], [0, 0, 1, 1], [], []>} : vector<256x32xbf16>, vector<32x32xbf16>, vector<256x32xf32> -> vector<256x32xf32>
    %170 = arith.addf %163, %169 : vector<256x32xf32>
    %c1_194 = arith.constant 1 : index
    %c0_195 = arith.constant 0 : index
    %c0_196 = arith.constant 0 : index
    %171 = vector.load %arg15[%c1_194, %c0_195, %c0_196] : memref<18x18x32xf32, #tpu.memory_space<vmem>>, vector<16x16x32xf32>
    %172 = vector.shape_cast %171 : vector<16x16x32xf32> to vector<256x32xf32>
    %173 = arith.truncf %172 : vector<256x32xf32> to vector<256x32xbf16>
    %c1_197 = arith.constant 1 : index
    %c0_198 = arith.constant 0 : index
    %c0_199 = arith.constant 0 : index
    %c0_200 = arith.constant 0 : index
    %174 = vector.load %arg6[%c1_197, %c0_198, %c0_199, %c0_200] : memref<3x3x32x32xbf16, #tpu.memory_space<vmem>>, vector<1x1x32x32xbf16>
    %175 = vector.shape_cast %174 : vector<1x1x32x32xbf16> to vector<32x32xbf16>
    %cst_201 = arith.constant dense<0.000000e+00> : vector<256x32xf32>
    %176 = tpu.matmul %173, %175, %cst_201 {dimension_numbers = #tpu.dot_dimension_numbers<[1], [0], [0], [1], [0, 0, 1, 1], [], []>} : vector<256x32xbf16>, vector<32x32xbf16>, vector<256x32xf32> -> vector<256x32xf32>
    %177 = arith.addf %170, %176 : vector<256x32xf32>
    %c1_202 = arith.constant 1 : index
    %c1_203 = arith.constant 1 : index
    %c0_204 = arith.constant 0 : index
    %178 = vector.load %arg15[%c1_202, %c1_203, %c0_204] : memref<18x18x32xf32, #tpu.memory_space<vmem>>, vector<16x16x32xf32>
    %179 = vector.shape_cast %178 : vector<16x16x32xf32> to vector<256x32xf32>
    %180 = arith.truncf %179 : vector<256x32xf32> to vector<256x32xbf16>
    %c1_205 = arith.constant 1 : index
    %c1_206 = arith.constant 1 : index
    %c0_207 = arith.constant 0 : index
    %c0_208 = arith.constant 0 : index
    %181 = vector.load %arg6[%c1_205, %c1_206, %c0_207, %c0_208] : memref<3x3x32x32xbf16, #tpu.memory_space<vmem>>, vector<1x1x32x32xbf16>
    %182 = vector.shape_cast %181 : vector<1x1x32x32xbf16> to vector<32x32xbf16>
    %cst_209 = arith.constant dense<0.000000e+00> : vector<256x32xf32>
    %183 = tpu.matmul %180, %182, %cst_209 {dimension_numbers = #tpu.dot_dimension_numbers<[1], [0], [0], [1], [0, 0, 1, 1], [], []>} : vector<256x32xbf16>, vector<32x32xbf16>, vector<256x32xf32> -> vector<256x32xf32>
    %184 = arith.addf %177, %183 : vector<256x32xf32>
    %c1_210 = arith.constant 1 : index
    %c2_211 = arith.constant 2 : index
    %c0_212 = arith.constant 0 : index
    %185 = vector.load %arg15[%c1_210, %c2_211, %c0_212] : memref<18x18x32xf32, #tpu.memory_space<vmem>>, vector<16x16x32xf32>
    %186 = vector.shape_cast %185 : vector<16x16x32xf32> to vector<256x32xf32>
    %187 = arith.truncf %186 : vector<256x32xf32> to vector<256x32xbf16>
    %c1_213 = arith.constant 1 : index
    %c2_214 = arith.constant 2 : index
    %c0_215 = arith.constant 0 : index
    %c0_216 = arith.constant 0 : index
    %188 = vector.load %arg6[%c1_213, %c2_214, %c0_215, %c0_216] : memref<3x3x32x32xbf16, #tpu.memory_space<vmem>>, vector<1x1x32x32xbf16>
    %189 = vector.shape_cast %188 : vector<1x1x32x32xbf16> to vector<32x32xbf16>
    %cst_217 = arith.constant dense<0.000000e+00> : vector<256x32xf32>
    %190 = tpu.matmul %187, %189, %cst_217 {dimension_numbers = #tpu.dot_dimension_numbers<[1], [0], [0], [1], [0, 0, 1, 1], [], []>} : vector<256x32xbf16>, vector<32x32xbf16>, vector<256x32xf32> -> vector<256x32xf32>
    %191 = arith.addf %184, %190 : vector<256x32xf32>
    %c2_218 = arith.constant 2 : index
    %c0_219 = arith.constant 0 : index
    %c0_220 = arith.constant 0 : index
    %192 = vector.load %arg15[%c2_218, %c0_219, %c0_220] : memref<18x18x32xf32, #tpu.memory_space<vmem>>, vector<16x16x32xf32>
    %193 = vector.shape_cast %192 : vector<16x16x32xf32> to vector<256x32xf32>
    %194 = arith.truncf %193 : vector<256x32xf32> to vector<256x32xbf16>
    %c2_221 = arith.constant 2 : index
    %c0_222 = arith.constant 0 : index
    %c0_223 = arith.constant 0 : index
    %c0_224 = arith.constant 0 : index
    %195 = vector.load %arg6[%c2_221, %c0_222, %c0_223, %c0_224] : memref<3x3x32x32xbf16, #tpu.memory_space<vmem>>, vector<1x1x32x32xbf16>
    %196 = vector.shape_cast %195 : vector<1x1x32x32xbf16> to vector<32x32xbf16>
    %cst_225 = arith.constant dense<0.000000e+00> : vector<256x32xf32>
    %197 = tpu.matmul %194, %196, %cst_225 {dimension_numbers = #tpu.dot_dimension_numbers<[1], [0], [0], [1], [0, 0, 1, 1], [], []>} : vector<256x32xbf16>, vector<32x32xbf16>, vector<256x32xf32> -> vector<256x32xf32>
    %198 = arith.addf %191, %197 : vector<256x32xf32>
    %c2_226 = arith.constant 2 : index
    %c1_227 = arith.constant 1 : index
    %c0_228 = arith.constant 0 : index
    %199 = vector.load %arg15[%c2_226, %c1_227, %c0_228] : memref<18x18x32xf32, #tpu.memory_space<vmem>>, vector<16x16x32xf32>
    %200 = vector.shape_cast %199 : vector<16x16x32xf32> to vector<256x32xf32>
    %201 = arith.truncf %200 : vector<256x32xf32> to vector<256x32xbf16>
    %c2_229 = arith.constant 2 : index
    %c1_230 = arith.constant 1 : index
    %c0_231 = arith.constant 0 : index
    %c0_232 = arith.constant 0 : index
    %202 = vector.load %arg6[%c2_229, %c1_230, %c0_231, %c0_232] : memref<3x3x32x32xbf16, #tpu.memory_space<vmem>>, vector<1x1x32x32xbf16>
    %203 = vector.shape_cast %202 : vector<1x1x32x32xbf16> to vector<32x32xbf16>
    %cst_233 = arith.constant dense<0.000000e+00> : vector<256x32xf32>
    %204 = tpu.matmul %201, %203, %cst_233 {dimension_numbers = #tpu.dot_dimension_numbers<[1], [0], [0], [1], [0, 0, 1, 1], [], []>} : vector<256x32xbf16>, vector<32x32xbf16>, vector<256x32xf32> -> vector<256x32xf32>
    %205 = arith.addf %198, %204 : vector<256x32xf32>
    %c2_234 = arith.constant 2 : index
    %c2_235 = arith.constant 2 : index
    %c0_236 = arith.constant 0 : index
    %206 = vector.load %arg15[%c2_234, %c2_235, %c0_236] : memref<18x18x32xf32, #tpu.memory_space<vmem>>, vector<16x16x32xf32>
    %207 = vector.shape_cast %206 : vector<16x16x32xf32> to vector<256x32xf32>
    %208 = arith.truncf %207 : vector<256x32xf32> to vector<256x32xbf16>
    %c2_237 = arith.constant 2 : index
    %c2_238 = arith.constant 2 : index
    %c0_239 = arith.constant 0 : index
    %c0_240 = arith.constant 0 : index
    %209 = vector.load %arg6[%c2_237, %c2_238, %c0_239, %c0_240] : memref<3x3x32x32xbf16, #tpu.memory_space<vmem>>, vector<1x1x32x32xbf16>
    %210 = vector.shape_cast %209 : vector<1x1x32x32xbf16> to vector<32x32xbf16>
    %cst_241 = arith.constant dense<0.000000e+00> : vector<256x32xf32>
    %211 = tpu.matmul %208, %210, %cst_241 {dimension_numbers = #tpu.dot_dimension_numbers<[1], [0], [0], [1], [0, 0, 1, 1], [], []>} : vector<256x32xbf16>, vector<32x32xbf16>, vector<256x32xf32> -> vector<256x32xf32>
    %212 = arith.addf %205, %211 : vector<256x32xf32>
    %c0_242 = arith.constant 0 : index
    %c0_243 = arith.constant 0 : index
    %c0_244 = arith.constant 0 : index
    %213 = vector.load %arg14[%c0_242, %c0_243, %c0_244] : memref<18x18x11xf32, #tpu.memory_space<vmem>>, vector<16x16x11xf32>
    %214 = vector.shape_cast %213 : vector<16x16x11xf32> to vector<256x11xf32>
    %215 = arith.truncf %214 : vector<256x11xf32> to vector<256x11xbf16>
    %c0_245 = arith.constant 0 : index
    %c0_246 = arith.constant 0 : index
    %c0_247 = arith.constant 0 : index
    %c0_248 = arith.constant 0 : index
    %216 = vector.load %arg7[%c0_245, %c0_246, %c0_247, %c0_248] : memref<3x3x11x32xbf16, #tpu.memory_space<vmem>>, vector<1x1x11x32xbf16>
    %217 = vector.shape_cast %216 : vector<1x1x11x32xbf16> to vector<11x32xbf16>
    %cst_249 = arith.constant dense<0.000000e+00> : vector<256x32xf32>
    %218 = tpu.matmul %215, %217, %cst_249 {dimension_numbers = #tpu.dot_dimension_numbers<[1], [0], [0], [1], [0, 0, 1, 1], [], []>} : vector<256x11xbf16>, vector<11x32xbf16>, vector<256x32xf32> -> vector<256x32xf32>
    %219 = arith.addf %212, %218 : vector<256x32xf32>
    %c0_250 = arith.constant 0 : index
    %c1_251 = arith.constant 1 : index
    %c0_252 = arith.constant 0 : index
    %220 = vector.load %arg14[%c0_250, %c1_251, %c0_252] : memref<18x18x11xf32, #tpu.memory_space<vmem>>, vector<16x16x11xf32>
    %221 = vector.shape_cast %220 : vector<16x16x11xf32> to vector<256x11xf32>
    %222 = arith.truncf %221 : vector<256x11xf32> to vector<256x11xbf16>
    %c0_253 = arith.constant 0 : index
    %c1_254 = arith.constant 1 : index
    %c0_255 = arith.constant 0 : index
    %c0_256 = arith.constant 0 : index
    %223 = vector.load %arg7[%c0_253, %c1_254, %c0_255, %c0_256] : memref<3x3x11x32xbf16, #tpu.memory_space<vmem>>, vector<1x1x11x32xbf16>
    %224 = vector.shape_cast %223 : vector<1x1x11x32xbf16> to vector<11x32xbf16>
    %cst_257 = arith.constant dense<0.000000e+00> : vector<256x32xf32>
    %225 = tpu.matmul %222, %224, %cst_257 {dimension_numbers = #tpu.dot_dimension_numbers<[1], [0], [0], [1], [0, 0, 1, 1], [], []>} : vector<256x11xbf16>, vector<11x32xbf16>, vector<256x32xf32> -> vector<256x32xf32>
    %226 = arith.addf %219, %225 : vector<256x32xf32>
    %c0_258 = arith.constant 0 : index
    %c2_259 = arith.constant 2 : index
    %c0_260 = arith.constant 0 : index
    %227 = vector.load %arg14[%c0_258, %c2_259, %c0_260] : memref<18x18x11xf32, #tpu.memory_space<vmem>>, vector<16x16x11xf32>
    %228 = vector.shape_cast %227 : vector<16x16x11xf32> to vector<256x11xf32>
    %229 = arith.truncf %228 : vector<256x11xf32> to vector<256x11xbf16>
    %c0_261 = arith.constant 0 : index
    %c2_262 = arith.constant 2 : index
    %c0_263 = arith.constant 0 : index
    %c0_264 = arith.constant 0 : index
    %230 = vector.load %arg7[%c0_261, %c2_262, %c0_263, %c0_264] : memref<3x3x11x32xbf16, #tpu.memory_space<vmem>>, vector<1x1x11x32xbf16>
    %231 = vector.shape_cast %230 : vector<1x1x11x32xbf16> to vector<11x32xbf16>
    %cst_265 = arith.constant dense<0.000000e+00> : vector<256x32xf32>
    %232 = tpu.matmul %229, %231, %cst_265 {dimension_numbers = #tpu.dot_dimension_numbers<[1], [0], [0], [1], [0, 0, 1, 1], [], []>} : vector<256x11xbf16>, vector<11x32xbf16>, vector<256x32xf32> -> vector<256x32xf32>
    %233 = arith.addf %226, %232 : vector<256x32xf32>
    %c1_266 = arith.constant 1 : index
    %c0_267 = arith.constant 0 : index
    %c0_268 = arith.constant 0 : index
    %234 = vector.load %arg14[%c1_266, %c0_267, %c0_268] : memref<18x18x11xf32, #tpu.memory_space<vmem>>, vector<16x16x11xf32>
    %235 = vector.shape_cast %234 : vector<16x16x11xf32> to vector<256x11xf32>
    %236 = arith.truncf %235 : vector<256x11xf32> to vector<256x11xbf16>
    %c1_269 = arith.constant 1 : index
    %c0_270 = arith.constant 0 : index
    %c0_271 = arith.constant 0 : index
    %c0_272 = arith.constant 0 : index
    %237 = vector.load %arg7[%c1_269, %c0_270, %c0_271, %c0_272] : memref<3x3x11x32xbf16, #tpu.memory_space<vmem>>, vector<1x1x11x32xbf16>
    %238 = vector.shape_cast %237 : vector<1x1x11x32xbf16> to vector<11x32xbf16>
    %cst_273 = arith.constant dense<0.000000e+00> : vector<256x32xf32>
    %239 = tpu.matmul %236, %238, %cst_273 {dimension_numbers = #tpu.dot_dimension_numbers<[1], [0], [0], [1], [0, 0, 1, 1], [], []>} : vector<256x11xbf16>, vector<11x32xbf16>, vector<256x32xf32> -> vector<256x32xf32>
    %240 = arith.addf %233, %239 : vector<256x32xf32>
    %c1_274 = arith.constant 1 : index
    %c1_275 = arith.constant 1 : index
    %c0_276 = arith.constant 0 : index
    %241 = vector.load %arg14[%c1_274, %c1_275, %c0_276] : memref<18x18x11xf32, #tpu.memory_space<vmem>>, vector<16x16x11xf32>
    %242 = vector.shape_cast %241 : vector<16x16x11xf32> to vector<256x11xf32>
    %243 = arith.truncf %242 : vector<256x11xf32> to vector<256x11xbf16>
    %c1_277 = arith.constant 1 : index
    %c1_278 = arith.constant 1 : index
    %c0_279 = arith.constant 0 : index
    %c0_280 = arith.constant 0 : index
    %244 = vector.load %arg7[%c1_277, %c1_278, %c0_279, %c0_280] : memref<3x3x11x32xbf16, #tpu.memory_space<vmem>>, vector<1x1x11x32xbf16>
    %245 = vector.shape_cast %244 : vector<1x1x11x32xbf16> to vector<11x32xbf16>
    %cst_281 = arith.constant dense<0.000000e+00> : vector<256x32xf32>
    %246 = tpu.matmul %243, %245, %cst_281 {dimension_numbers = #tpu.dot_dimension_numbers<[1], [0], [0], [1], [0, 0, 1, 1], [], []>} : vector<256x11xbf16>, vector<11x32xbf16>, vector<256x32xf32> -> vector<256x32xf32>
    %247 = arith.addf %240, %246 : vector<256x32xf32>
    %c1_282 = arith.constant 1 : index
    %c2_283 = arith.constant 2 : index
    %c0_284 = arith.constant 0 : index
    %248 = vector.load %arg14[%c1_282, %c2_283, %c0_284] : memref<18x18x11xf32, #tpu.memory_space<vmem>>, vector<16x16x11xf32>
    %249 = vector.shape_cast %248 : vector<16x16x11xf32> to vector<256x11xf32>
    %250 = arith.truncf %249 : vector<256x11xf32> to vector<256x11xbf16>
    %c1_285 = arith.constant 1 : index
    %c2_286 = arith.constant 2 : index
    %c0_287 = arith.constant 0 : index
    %c0_288 = arith.constant 0 : index
    %251 = vector.load %arg7[%c1_285, %c2_286, %c0_287, %c0_288] : memref<3x3x11x32xbf16, #tpu.memory_space<vmem>>, vector<1x1x11x32xbf16>
    %252 = vector.shape_cast %251 : vector<1x1x11x32xbf16> to vector<11x32xbf16>
    %cst_289 = arith.constant dense<0.000000e+00> : vector<256x32xf32>
    %253 = tpu.matmul %250, %252, %cst_289 {dimension_numbers = #tpu.dot_dimension_numbers<[1], [0], [0], [1], [0, 0, 1, 1], [], []>} : vector<256x11xbf16>, vector<11x32xbf16>, vector<256x32xf32> -> vector<256x32xf32>
    %254 = arith.addf %247, %253 : vector<256x32xf32>
    %c2_290 = arith.constant 2 : index
    %c0_291 = arith.constant 0 : index
    %c0_292 = arith.constant 0 : index
    %255 = vector.load %arg14[%c2_290, %c0_291, %c0_292] : memref<18x18x11xf32, #tpu.memory_space<vmem>>, vector<16x16x11xf32>
    %256 = vector.shape_cast %255 : vector<16x16x11xf32> to vector<256x11xf32>
    %257 = arith.truncf %256 : vector<256x11xf32> to vector<256x11xbf16>
    %c2_293 = arith.constant 2 : index
    %c0_294 = arith.constant 0 : index
    %c0_295 = arith.constant 0 : index
    %c0_296 = arith.constant 0 : index
    %258 = vector.load %arg7[%c2_293, %c0_294, %c0_295, %c0_296] : memref<3x3x11x32xbf16, #tpu.memory_space<vmem>>, vector<1x1x11x32xbf16>
    %259 = vector.shape_cast %258 : vector<1x1x11x32xbf16> to vector<11x32xbf16>
    %cst_297 = arith.constant dense<0.000000e+00> : vector<256x32xf32>
    %260 = tpu.matmul %257, %259, %cst_297 {dimension_numbers = #tpu.dot_dimension_numbers<[1], [0], [0], [1], [0, 0, 1, 1], [], []>} : vector<256x11xbf16>, vector<11x32xbf16>, vector<256x32xf32> -> vector<256x32xf32>
    %261 = arith.addf %254, %260 : vector<256x32xf32>
    %c2_298 = arith.constant 2 : index
    %c1_299 = arith.constant 1 : index
    %c0_300 = arith.constant 0 : index
    %262 = vector.load %arg14[%c2_298, %c1_299, %c0_300] : memref<18x18x11xf32, #tpu.memory_space<vmem>>, vector<16x16x11xf32>
    %263 = vector.shape_cast %262 : vector<16x16x11xf32> to vector<256x11xf32>
    %264 = arith.truncf %263 : vector<256x11xf32> to vector<256x11xbf16>
    %c2_301 = arith.constant 2 : index
    %c1_302 = arith.constant 1 : index
    %c0_303 = arith.constant 0 : index
    %c0_304 = arith.constant 0 : index
    %265 = vector.load %arg7[%c2_301, %c1_302, %c0_303, %c0_304] : memref<3x3x11x32xbf16, #tpu.memory_space<vmem>>, vector<1x1x11x32xbf16>
    %266 = vector.shape_cast %265 : vector<1x1x11x32xbf16> to vector<11x32xbf16>
    %cst_305 = arith.constant dense<0.000000e+00> : vector<256x32xf32>
    %267 = tpu.matmul %264, %266, %cst_305 {dimension_numbers = #tpu.dot_dimension_numbers<[1], [0], [0], [1], [0, 0, 1, 1], [], []>} : vector<256x11xbf16>, vector<11x32xbf16>, vector<256x32xf32> -> vector<256x32xf32>
    %268 = arith.addf %261, %267 : vector<256x32xf32>
    %c2_306 = arith.constant 2 : index
    %c2_307 = arith.constant 2 : index
    %c0_308 = arith.constant 0 : index
    %269 = vector.load %arg14[%c2_306, %c2_307, %c0_308] : memref<18x18x11xf32, #tpu.memory_space<vmem>>, vector<16x16x11xf32>
    %270 = vector.shape_cast %269 : vector<16x16x11xf32> to vector<256x11xf32>
    %271 = arith.truncf %270 : vector<256x11xf32> to vector<256x11xbf16>
    %c2_309 = arith.constant 2 : index
    %c2_310 = arith.constant 2 : index
    %c0_311 = arith.constant 0 : index
    %c0_312 = arith.constant 0 : index
    %272 = vector.load %arg7[%c2_309, %c2_310, %c0_311, %c0_312] : memref<3x3x11x32xbf16, #tpu.memory_space<vmem>>, vector<1x1x11x32xbf16>
    %273 = vector.shape_cast %272 : vector<1x1x11x32xbf16> to vector<11x32xbf16>
    %cst_313 = arith.constant dense<0.000000e+00> : vector<256x32xf32>
    %274 = tpu.matmul %271, %273, %cst_313 {dimension_numbers = #tpu.dot_dimension_numbers<[1], [0], [0], [1], [0, 0, 1, 1], [], []>} : vector<256x11xbf16>, vector<11x32xbf16>, vector<256x32xf32> -> vector<256x32xf32>
    %275 = arith.addf %268, %274 : vector<256x32xf32>
    %c0_314 = arith.constant 0 : index
    %c0_315 = arith.constant 0 : index
    %276 = vector.load %arg8[%c0_314, %c0_315] : memref<1x32xf32, #tpu.memory_space<vmem>>, vector<1x32xf32>
    %277 = vector.broadcast %276 : vector<1x32xf32> to vector<256x32xf32>
    %278 = arith.addf %275, %277 : vector<256x32xf32>
    %cst_316 = arith.constant 0.000000e+00 : f32
    %279 = vector.broadcast %cst_316 : f32 to vector<256x32xf32>
    %280 = arith.maximumf %278, %279 : vector<256x32xf32>
    %281 = vector.shape_cast %280 : vector<256x32xf32> to vector<16x16x32xf32>
    %c1_317 = arith.constant 1 : index
    %c1_318 = arith.constant 1 : index
    %c0_319 = arith.constant 0 : index
    %282 = vector.load %arg15[%c1_317, %c1_318, %c0_319] : memref<18x18x32xf32, #tpu.memory_space<vmem>>, vector<16x16x32xf32>
    tpu.vector_store %arg15[%c1_317, %c1_318, %c0_319], %281 {strides = array<i32>} : memref<18x18x32xf32, #tpu.memory_space<vmem>>, vector<16x16x32xf32>,
    %cst_320 = arith.constant 0.000000e+00 : f32
    %283 = vector.broadcast %cst_320 : f32 to vector<256x32xf32>
    %c0_321 = arith.constant 0 : index
    %c0_322 = arith.constant 0 : index
    %c0_323 = arith.constant 0 : index
    %284 = vector.load %arg15[%c0_321, %c0_322, %c0_323] : memref<18x18x32xf32, #tpu.memory_space<vmem>>, vector<16x16x32xf32>
    %285 = vector.shape_cast %284 : vector<16x16x32xf32> to vector<256x32xf32>
    %286 = arith.truncf %285 : vector<256x32xf32> to vector<256x32xbf16>
    %c0_324 = arith.constant 0 : index
    %c0_325 = arith.constant 0 : index
    %c0_326 = arith.constant 0 : index
    %c0_327 = arith.constant 0 : index
    %287 = vector.load %arg9[%c0_324, %c0_325, %c0_326, %c0_327] : memref<3x3x32x32xbf16, #tpu.memory_space<vmem>>, vector<1x1x32x32xbf16>
    %288 = vector.shape_cast %287 : vector<1x1x32x32xbf16> to vector<32x32xbf16>
    %cst_328 = arith.constant dense<0.000000e+00> : vector<256x32xf32>
    %289 = tpu.matmul %286, %288, %cst_328 {dimension_numbers = #tpu.dot_dimension_numbers<[1], [0], [0], [1], [0, 0, 1, 1], [], []>} : vector<256x32xbf16>, vector<32x32xbf16>, vector<256x32xf32> -> vector<256x32xf32>
    %290 = arith.addf %283, %289 : vector<256x32xf32>
    %c0_329 = arith.constant 0 : index
    %c1_330 = arith.constant 1 : index
    %c0_331 = arith.constant 0 : index
    %291 = vector.load %arg15[%c0_329, %c1_330, %c0_331] : memref<18x18x32xf32, #tpu.memory_space<vmem>>, vector<16x16x32xf32>
    %292 = vector.shape_cast %291 : vector<16x16x32xf32> to vector<256x32xf32>
    %293 = arith.truncf %292 : vector<256x32xf32> to vector<256x32xbf16>
    %c0_332 = arith.constant 0 : index
    %c1_333 = arith.constant 1 : index
    %c0_334 = arith.constant 0 : index
    %c0_335 = arith.constant 0 : index
    %294 = vector.load %arg9[%c0_332, %c1_333, %c0_334, %c0_335] : memref<3x3x32x32xbf16, #tpu.memory_space<vmem>>, vector<1x1x32x32xbf16>
    %295 = vector.shape_cast %294 : vector<1x1x32x32xbf16> to vector<32x32xbf16>
    %cst_336 = arith.constant dense<0.000000e+00> : vector<256x32xf32>
    %296 = tpu.matmul %293, %295, %cst_336 {dimension_numbers = #tpu.dot_dimension_numbers<[1], [0], [0], [1], [0, 0, 1, 1], [], []>} : vector<256x32xbf16>, vector<32x32xbf16>, vector<256x32xf32> -> vector<256x32xf32>
    %297 = arith.addf %290, %296 : vector<256x32xf32>
    %c0_337 = arith.constant 0 : index
    %c2_338 = arith.constant 2 : index
    %c0_339 = arith.constant 0 : index
    %298 = vector.load %arg15[%c0_337, %c2_338, %c0_339] : memref<18x18x32xf32, #tpu.memory_space<vmem>>, vector<16x16x32xf32>
    %299 = vector.shape_cast %298 : vector<16x16x32xf32> to vector<256x32xf32>
    %300 = arith.truncf %299 : vector<256x32xf32> to vector<256x32xbf16>
    %c0_340 = arith.constant 0 : index
    %c2_341 = arith.constant 2 : index
    %c0_342 = arith.constant 0 : index
    %c0_343 = arith.constant 0 : index
    %301 = vector.load %arg9[%c0_340, %c2_341, %c0_342, %c0_343] : memref<3x3x32x32xbf16, #tpu.memory_space<vmem>>, vector<1x1x32x32xbf16>
    %302 = vector.shape_cast %301 : vector<1x1x32x32xbf16> to vector<32x32xbf16>
    %cst_344 = arith.constant dense<0.000000e+00> : vector<256x32xf32>
    %303 = tpu.matmul %300, %302, %cst_344 {dimension_numbers = #tpu.dot_dimension_numbers<[1], [0], [0], [1], [0, 0, 1, 1], [], []>} : vector<256x32xbf16>, vector<32x32xbf16>, vector<256x32xf32> -> vector<256x32xf32>
    %304 = arith.addf %297, %303 : vector<256x32xf32>
    %c1_345 = arith.constant 1 : index
    %c0_346 = arith.constant 0 : index
    %c0_347 = arith.constant 0 : index
    %305 = vector.load %arg15[%c1_345, %c0_346, %c0_347] : memref<18x18x32xf32, #tpu.memory_space<vmem>>, vector<16x16x32xf32>
    %306 = vector.shape_cast %305 : vector<16x16x32xf32> to vector<256x32xf32>
    %307 = arith.truncf %306 : vector<256x32xf32> to vector<256x32xbf16>
    %c1_348 = arith.constant 1 : index
    %c0_349 = arith.constant 0 : index
    %c0_350 = arith.constant 0 : index
    %c0_351 = arith.constant 0 : index
    %308 = vector.load %arg9[%c1_348, %c0_349, %c0_350, %c0_351] : memref<3x3x32x32xbf16, #tpu.memory_space<vmem>>, vector<1x1x32x32xbf16>
    %309 = vector.shape_cast %308 : vector<1x1x32x32xbf16> to vector<32x32xbf16>
    %cst_352 = arith.constant dense<0.000000e+00> : vector<256x32xf32>
    %310 = tpu.matmul %307, %309, %cst_352 {dimension_numbers = #tpu.dot_dimension_numbers<[1], [0], [0], [1], [0, 0, 1, 1], [], []>} : vector<256x32xbf16>, vector<32x32xbf16>, vector<256x32xf32> -> vector<256x32xf32>
    %311 = arith.addf %304, %310 : vector<256x32xf32>
    %c1_353 = arith.constant 1 : index
    %c1_354 = arith.constant 1 : index
    %c0_355 = arith.constant 0 : index
    %312 = vector.load %arg15[%c1_353, %c1_354, %c0_355] : memref<18x18x32xf32, #tpu.memory_space<vmem>>, vector<16x16x32xf32>
    %313 = vector.shape_cast %312 : vector<16x16x32xf32> to vector<256x32xf32>
    %314 = arith.truncf %313 : vector<256x32xf32> to vector<256x32xbf16>
    %c1_356 = arith.constant 1 : index
    %c1_357 = arith.constant 1 : index
    %c0_358 = arith.constant 0 : index
    %c0_359 = arith.constant 0 : index
    %315 = vector.load %arg9[%c1_356, %c1_357, %c0_358, %c0_359] : memref<3x3x32x32xbf16, #tpu.memory_space<vmem>>, vector<1x1x32x32xbf16>
    %316 = vector.shape_cast %315 : vector<1x1x32x32xbf16> to vector<32x32xbf16>
    %cst_360 = arith.constant dense<0.000000e+00> : vector<256x32xf32>
    %317 = tpu.matmul %314, %316, %cst_360 {dimension_numbers = #tpu.dot_dimension_numbers<[1], [0], [0], [1], [0, 0, 1, 1], [], []>} : vector<256x32xbf16>, vector<32x32xbf16>, vector<256x32xf32> -> vector<256x32xf32>
    %318 = arith.addf %311, %317 : vector<256x32xf32>
    %c1_361 = arith.constant 1 : index
    %c2_362 = arith.constant 2 : index
    %c0_363 = arith.constant 0 : index
    %319 = vector.load %arg15[%c1_361, %c2_362, %c0_363] : memref<18x18x32xf32, #tpu.memory_space<vmem>>, vector<16x16x32xf32>
    %320 = vector.shape_cast %319 : vector<16x16x32xf32> to vector<256x32xf32>
    %321 = arith.truncf %320 : vector<256x32xf32> to vector<256x32xbf16>
    %c1_364 = arith.constant 1 : index
    %c2_365 = arith.constant 2 : index
    %c0_366 = arith.constant 0 : index
    %c0_367 = arith.constant 0 : index
    %322 = vector.load %arg9[%c1_364, %c2_365, %c0_366, %c0_367] : memref<3x3x32x32xbf16, #tpu.memory_space<vmem>>, vector<1x1x32x32xbf16>
    %323 = vector.shape_cast %322 : vector<1x1x32x32xbf16> to vector<32x32xbf16>
    %cst_368 = arith.constant dense<0.000000e+00> : vector<256x32xf32>
    %324 = tpu.matmul %321, %323, %cst_368 {dimension_numbers = #tpu.dot_dimension_numbers<[1], [0], [0], [1], [0, 0, 1, 1], [], []>} : vector<256x32xbf16>, vector<32x32xbf16>, vector<256x32xf32> -> vector<256x32xf32>
    %325 = arith.addf %318, %324 : vector<256x32xf32>
    %c2_369 = arith.constant 2 : index
    %c0_370 = arith.constant 0 : index
    %c0_371 = arith.constant 0 : index
    %326 = vector.load %arg15[%c2_369, %c0_370, %c0_371] : memref<18x18x32xf32, #tpu.memory_space<vmem>>, vector<16x16x32xf32>
    %327 = vector.shape_cast %326 : vector<16x16x32xf32> to vector<256x32xf32>
    %328 = arith.truncf %327 : vector<256x32xf32> to vector<256x32xbf16>
    %c2_372 = arith.constant 2 : index
    %c0_373 = arith.constant 0 : index
    %c0_374 = arith.constant 0 : index
    %c0_375 = arith.constant 0 : index
    %329 = vector.load %arg9[%c2_372, %c0_373, %c0_374, %c0_375] : memref<3x3x32x32xbf16, #tpu.memory_space<vmem>>, vector<1x1x32x32xbf16>
    %330 = vector.shape_cast %329 : vector<1x1x32x32xbf16> to vector<32x32xbf16>
    %cst_376 = arith.constant dense<0.000000e+00> : vector<256x32xf32>
    %331 = tpu.matmul %328, %330, %cst_376 {dimension_numbers = #tpu.dot_dimension_numbers<[1], [0], [0], [1], [0, 0, 1, 1], [], []>} : vector<256x32xbf16>, vector<32x32xbf16>, vector<256x32xf32> -> vector<256x32xf32>
    %332 = arith.addf %325, %331 : vector<256x32xf32>
    %c2_377 = arith.constant 2 : index
    %c1_378 = arith.constant 1 : index
    %c0_379 = arith.constant 0 : index
    %333 = vector.load %arg15[%c2_377, %c1_378, %c0_379] : memref<18x18x32xf32, #tpu.memory_space<vmem>>, vector<16x16x32xf32>
    %334 = vector.shape_cast %333 : vector<16x16x32xf32> to vector<256x32xf32>
    %335 = arith.truncf %334 : vector<256x32xf32> to vector<256x32xbf16>
    %c2_380 = arith.constant 2 : index
    %c1_381 = arith.constant 1 : index
    %c0_382 = arith.constant 0 : index
    %c0_383 = arith.constant 0 : index
    %336 = vector.load %arg9[%c2_380, %c1_381, %c0_382, %c0_383] : memref<3x3x32x32xbf16, #tpu.memory_space<vmem>>, vector<1x1x32x32xbf16>
    %337 = vector.shape_cast %336 : vector<1x1x32x32xbf16> to vector<32x32xbf16>
    %cst_384 = arith.constant dense<0.000000e+00> : vector<256x32xf32>
    %338 = tpu.matmul %335, %337, %cst_384 {dimension_numbers = #tpu.dot_dimension_numbers<[1], [0], [0], [1], [0, 0, 1, 1], [], []>} : vector<256x32xbf16>, vector<32x32xbf16>, vector<256x32xf32> -> vector<256x32xf32>
    %339 = arith.addf %332, %338 : vector<256x32xf32>
    %c2_385 = arith.constant 2 : index
    %c2_386 = arith.constant 2 : index
    %c0_387 = arith.constant 0 : index
    %340 = vector.load %arg15[%c2_385, %c2_386, %c0_387] : memref<18x18x32xf32, #tpu.memory_space<vmem>>, vector<16x16x32xf32>
    %341 = vector.shape_cast %340 : vector<16x16x32xf32> to vector<256x32xf32>
    %342 = arith.truncf %341 : vector<256x32xf32> to vector<256x32xbf16>
    %c2_388 = arith.constant 2 : index
    %c2_389 = arith.constant 2 : index
    %c0_390 = arith.constant 0 : index
    %c0_391 = arith.constant 0 : index
    %343 = vector.load %arg9[%c2_388, %c2_389, %c0_390, %c0_391] : memref<3x3x32x32xbf16, #tpu.memory_space<vmem>>, vector<1x1x32x32xbf16>
    %344 = vector.shape_cast %343 : vector<1x1x32x32xbf16> to vector<32x32xbf16>
    %cst_392 = arith.constant dense<0.000000e+00> : vector<256x32xf32>
    %345 = tpu.matmul %342, %344, %cst_392 {dimension_numbers = #tpu.dot_dimension_numbers<[1], [0], [0], [1], [0, 0, 1, 1], [], []>} : vector<256x32xbf16>, vector<32x32xbf16>, vector<256x32xf32> -> vector<256x32xf32>
    %346 = arith.addf %339, %345 : vector<256x32xf32>
    %c0_393 = arith.constant 0 : index
    %c0_394 = arith.constant 0 : index
    %347 = vector.load %arg10[%c0_393, %c0_394] : memref<1x32xf32, #tpu.memory_space<vmem>>, vector<1x32xf32>
    %348 = vector.broadcast %347 : vector<1x32xf32> to vector<256x32xf32>
    %349 = arith.addf %346, %348 : vector<256x32xf32>
    %cst_395 = arith.constant 0.000000e+00 : f32
    %350 = vector.broadcast %cst_395 : f32 to vector<256x32xf32>
    %351 = arith.maximumf %349, %350 : vector<256x32xf32>
    %c0_396 = arith.constant 0 : index
    %c0_397 = arith.constant 0 : index
    %352 = vector.load %arg11[%c0_396, %c0_397] : memref<3x32xbf16, #tpu.memory_space<vmem>>, vector<3x32xbf16>
    %353 = arith.truncf %351 : vector<256x32xf32> to vector<256x32xbf16>
    %cst_398 = arith.constant dense<0.000000e+00> : vector<3x256xf32>
    %354 = tpu.matmul %352, %353, %cst_398 {dimension_numbers = #tpu.dot_dimension_numbers<[1], [1], [0], [0], [0, 0, 1, 0], [], []>} : vector<3x32xbf16>, vector<256x32xbf16>, vector<3x256xf32> -> vector<3x256xf32>
    %c0_399 = arith.constant 0 : index
    %c0_400 = arith.constant 0 : index
    %355 = vector.load %arg12[%c0_399, %c0_400] : memref<3x1xf32, #tpu.memory_space<vmem>>, vector<3x1xf32>
    %356 = vector.broadcast %355 : vector<3x1xf32> to vector<3x256xf32>
    %357 = arith.addf %354, %356 : vector<3x256xf32>
    %c0_401 = arith.constant 0 : index
    %c0_402 = arith.constant 0 : index
    %c0_403 = arith.constant 0 : index
    %358 = vector.load %arg13[%c0_401, %c0_402, %c0_403] : memref<1x3x256xf32, #tpu.memory_space<vmem>>, vector<1x3x256xf32>
    %359 = vector.shape_cast %358 : vector<1x3x256xf32> to vector<3x256xf32>
    %360 = vector.shape_cast %357 : vector<3x256xf32> to vector<1x3x256xf32>
    tpu.vector_store %arg13[%c0_401, %c0_402, %c0_403], %360 {strides = array<i32>} : memref<1x3x256xf32, #tpu.memory_space<vmem>>, vector<1x3x256xf32>,
    return
  }
  func.func @transform_0(%arg0: i32) -> (i32, i32, i32, i32) {
    %c0_i32 = arith.constant 0 : i32
    %c0_i32_0 = arith.constant 0 : i32
    %c0_i32_1 = arith.constant 0 : i32
    %c0_i32_2 = arith.constant 0 : i32
    return %arg0, %c0_i32, %c0_i32_0, %c0_i32_1 : i32, i32, i32, i32
  }
  func.func @transform_1(%arg0: i32) -> (i32, i32, i32, i32) {
    %c0_i32 = arith.constant 0 : i32
    %c0_i32_0 = arith.constant 0 : i32
    %c0_i32_1 = arith.constant 0 : i32
    %c0_i32_2 = arith.constant 0 : i32
    %c0_i32_3 = arith.constant 0 : i32
    return %c0_i32, %c0_i32_0, %c0_i32_1, %c0_i32_2 : i32, i32, i32, i32
  }
  func.func @transform_2(%arg0: i32) -> (i32, i32) {
    %c0_i32 = arith.constant 0 : i32
    %c0_i32_0 = arith.constant 0 : i32
    %c0_i32_1 = arith.constant 0 : i32
    return %c0_i32, %c0_i32_0 : i32, i32
  }
  func.func @transform_3(%arg0: i32) -> (i32, i32, i32, i32) {
    %c0_i32 = arith.constant 0 : i32
    %c0_i32_0 = arith.constant 0 : i32
    %c0_i32_1 = arith.constant 0 : i32
    %c0_i32_2 = arith.constant 0 : i32
    %c0_i32_3 = arith.constant 0 : i32
    return %c0_i32, %c0_i32_0, %c0_i32_1, %c0_i32_2 : i32, i32, i32, i32
  }
  func.func @transform_4(%arg0: i32) -> (i32, i32) {
    %c0_i32 = arith.constant 0 : i32
    %c0_i32_0 = arith.constant 0 : i32
    %c0_i32_1 = arith.constant 0 : i32
    return %c0_i32, %c0_i32_0 : i32, i32
  }
  func.func @transform_5(%arg0: i32) -> (i32, i32, i32, i32) {
    %c0_i32 = arith.constant 0 : i32
    %c0_i32_0 = arith.constant 0 : i32
    %c0_i32_1 = arith.constant 0 : i32
    %c0_i32_2 = arith.constant 0 : i32
    %c0_i32_3 = arith.constant 0 : i32
    return %c0_i32, %c0_i32_0, %c0_i32_1, %c0_i32_2 : i32, i32, i32, i32
  }
  func.func @transform_6(%arg0: i32) -> (i32, i32, i32, i32) {
    %c0_i32 = arith.constant 0 : i32
    %c0_i32_0 = arith.constant 0 : i32
    %c0_i32_1 = arith.constant 0 : i32
    %c0_i32_2 = arith.constant 0 : i32
    %c0_i32_3 = arith.constant 0 : i32
    return %c0_i32, %c0_i32_0, %c0_i32_1, %c0_i32_2 : i32, i32, i32, i32
  }
  func.func @transform_7(%arg0: i32) -> (i32, i32) {
    %c0_i32 = arith.constant 0 : i32
    %c0_i32_0 = arith.constant 0 : i32
    %c0_i32_1 = arith.constant 0 : i32
    return %c0_i32, %c0_i32_0 : i32, i32
  }
  func.func @transform_8(%arg0: i32) -> (i32, i32, i32, i32) {
    %c0_i32 = arith.constant 0 : i32
    %c0_i32_0 = arith.constant 0 : i32
    %c0_i32_1 = arith.constant 0 : i32
    %c0_i32_2 = arith.constant 0 : i32
    %c0_i32_3 = arith.constant 0 : i32
    return %c0_i32, %c0_i32_0, %c0_i32_1, %c0_i32_2 : i32, i32, i32, i32
  }
  func.func @transform_9(%arg0: i32) -> (i32, i32) {
    %c0_i32 = arith.constant 0 : i32
    %c0_i32_0 = arith.constant 0 : i32
    %c0_i32_1 = arith.constant 0 : i32
    return %c0_i32, %c0_i32_0 : i32, i32
  }
  func.func @transform_10(%arg0: i32) -> (i32, i32) {
    %c0_i32 = arith.constant 0 : i32
    %c0_i32_0 = arith.constant 0 : i32
    %c0_i32_1 = arith.constant 0 : i32
    return %c0_i32, %c0_i32_0 : i32, i32
  }
  func.func @transform_11(%arg0: i32) -> (i32, i32) {
    %c0_i32 = arith.constant 0 : i32
    %c0_i32_0 = arith.constant 0 : i32
    %c0_i32_1 = arith.constant 0 : i32
    return %c0_i32, %c0_i32_0 : i32, i32
  }
  func.func @transform_12(%arg0: i32) -> (i32, i32, i32) {
    %c0_i32 = arith.constant 0 : i32
    %c0_i32_0 = arith.constant 0 : i32
    %c0_i32_1 = arith.constant 0 : i32
    return %arg0, %c0_i32, %c0_i32_0 : i32, i32, i32
  }
}

</mosaic_0001>

<llo_original>
// kernel: encoder_forward.1
$region0: #{encoder_forward.1}
  #allocation0 [shape = 'u32[]', space=smem, size = 0x4, offset = 0x4, fixed_abs, tag = 'smem constant byte address 0x4 - core index']
  #allocation1 [shape = 'u32[72,128]{1,0:T(1,128)}', space=vmem, size = 0x9000, scoped, tag = 'internal scratch']
  #allocation2 [shape = 'f32[18,18,11]{2,1,0:T(8,128)}', space=vmem, size = 0x36000, scoped, tag = 'scratch operand']
  #allocation3 [shape = 'f32[18,18,32]{2,1,0:T(8,128)}', space=vmem, size = 0x36000, scoped, tag = 'scratch operand']
  %s0 = inlined_call_operand.vmem [shape: f32[2,16,16,11], index: 0, kind: input, shape index: {}]
  %s1 = inlined_call_operand.vmem [shape: bf16[3,3,11,32], index: 1, kind: input, shape index: {}]
  %s2 = inlined_call_operand.vmem [shape: f32[1,32], index: 2, kind: input, shape index: {}]
  %s3 = inlined_call_operand.vmem [shape: bf16[3,3,32,32], index: 3, kind: input, shape index: {}]
  %s4 = inlined_call_operand.vmem [shape: f32[1,32], index: 4, kind: input, shape index: {}]
  %s5 = inlined_call_operand.vmem [shape: bf16[3,3,32,32], index: 5, kind: input, shape index: {}]
  %s6 = inlined_call_operand.vmem [shape: bf16[3,3,11,32], index: 6, kind: input, shape index: {}]
  %s7 = inlined_call_operand.vmem [shape: f32[1,32], index: 7, kind: input, shape index: {}]
  %s8 = inlined_call_operand.vmem [shape: bf16[3,3,32,32], index: 8, kind: input, shape index: {}]
  %s9 = inlined_call_operand.vmem [shape: f32[1,32], index: 9, kind: input, shape index: {}]
  %s10 = inlined_call_operand.vmem [shape: bf16[3,32], index: 10, kind: input, shape index: {}]
  %s11 = inlined_call_operand.vmem [shape: f32[3,1], index: 11, kind: input, shape index: {}]
  %s12 = inlined_call_operand.vmem [shape: f32[2,3,256], index: 12, kind: output, shape index: {}]
  %s13 = sld [smem:[#allocation0]]
  $region81: #{encoder_forward.1} parent=0
    _
  %s15 = ssub.s32 1, %s13
  %s16 = scalar_select 0, %s15, %s13
  loop: start=0, step=1, limit=4
  $region2: #{encoder_forward.1} parent=0 // loop_pre_header
    _
  $region3: #{encoder_forward.1} parent=0 // loop_header
    %s18 = sphi 0, %s22
    %p19 = scmp.ge.s32.totalorder %s18, 4
    %s28 = sphi 0, %s30
    %s31 = sphi 0, %s28
    %s32 = sphi 0, %s31
    %s48 = sphi 0, %s32
    %s52 = sphi 0, %s52
    %s54 = sphi 0, %s52
    %s55 = sphi 0, %s54
    %s69 = sphi 0, %s55
    %s73 = sphi 0, %s73
    %s75 = sphi 0, %s73
    %s76 = sphi 0, %s75
    %s90 = sphi 0, %s76
    %s94 = sphi 0, %s94
    %s96 = sphi 0, %s94
    %s97 = sphi 0, %s96
    %s111 = sphi 0, %s97
    %s115 = sphi 0, %s115
    %s117 = sphi 0, %s115
    %s118 = sphi 0, %s117
    %s132 = sphi 0, %s118
    %s136 = sphi 0, %s136
    %s138 = sphi 0, %s136
    %s139 = sphi 0, %s138
    %s153 = sphi 0, %s139
    %s157 = sphi 0, %s157
    %s159 = sphi 0, %s157
    %s160 = sphi 0, %s159
    %s174 = sphi 0, %s160
    %s178 = sphi 0, %s178
    %s180 = sphi 0, %s178
    %s181 = sphi 0, %s180
    %s195 = sphi 0, %s181
    %s199 = sphi 0, %s199
    %s201 = sphi 0, %s199
    %s202 = sphi 0, %s201
    %s216 = sphi 0, %s202
    %s220 = sphi 0, %s220
    %s222 = sphi 0, %s220
    %s223 = sphi 0, %s222
    %s237 = sphi 0, %s223
    %s241 = sphi 0, %s241
    %s243 = sphi 0, %s241
    %s244 = sphi 0, %s243
    %s258 = sphi 0, %s244
    %s262 = sphi 0, %s262
    %s264 = sphi 0, %s262
    %s265 = sphi 0, %s264
    %s279 = sphi 0, %s265
    %s285 = sphi 0, %s287
    %s288 = sphi 0, %s285
    %s289 = sphi 0, %s288
    %s305 = sphi 0, %s289
  $region4: #{encoder_forward.1} parent=0 // loop_header_branch
    %21 = sbr.rel (%p19) target = $region8
  $region5: #{encoder_forward.1} parent=0 // loop_body
    %s23 = ssub.s32 %s18, 1
    %s24 = ssub.s32 %s18, 2
    %s25 = sadd.s32 %s18, 1
    %s26 = ssub.s32 %s18, %s25
    %p27 = scmp.eq.s32.totalorder %s26, 0
    %s29 = sadd.s32 %s28, 1
    %s30 = scalar_select %p27, %s28, %s29
    %p33 = pneg %p27
    %p34 = scmp.eq.s32.totalorder %s18, 1
    %p35 = por %p33, %p34
    %p36 = scmp.ne.s32.totalorder %s28, %s31
    %p37 = scmp.eq.s32.totalorder %s18, 0
    %p38 = por %p36, %p37
    %p39 = scmp.ne.s32.totalorder %s28, %s31
    %p40 = scmp.eq.s32.totalorder %s23, 1
    %p41 = por %p39, %p40
    %p42 = scmp.ne.s32.totalorder %s31, %s32
    %p43 = scmp.eq.s32.totalorder %s23, 0
    %p44 = por %p42, %p43
    %p45 = scmp.ne.s32.totalorder %s31, %s32
    %p46 = scmp.eq.s32.totalorder %s24, 1
    %p47 = por %p45, %p46
    %p49 = scmp.ne.s32.totalorder %s32, %s48
    %p50 = scmp.eq.s32.totalorder %s24, 0
    %p51 = por %p49, %p50
    %s53 = sadd.s32 %s52, 1
    %p56 = scmp.eq.s32.totalorder %s18, 1
    %p57 = scmp.ne.s32.totalorder %s52, %s54
    %p58 = scmp.eq.s32.totalorder %s18, 0
    %p59 = por %p57, %p58
    %p60 = scmp.ne.s32.totalorder %s52, %s54
    %p61 = scmp.eq.s32.totalorder %s23, 1
    %p62 = por %p60, %p61
    %p63 = scmp.ne.s32.totalorder %s54, %s55
    %p64 = scmp.eq.s32.totalorder %s23, 0
    %p65 = por %p63, %p64
    %p66 = scmp.ne.s32.totalorder %s54, %s55
    %p67 = scmp.eq.s32.totalorder %s24, 1
    %p68 = por %p66, %p67
    %p70 = scmp.ne.s32.totalorder %s55, %s69
    %p71 = scmp.eq.s32.totalorder %s24, 0
    %p72 = por %p70, %p71
    %s74 = sadd.s32 %s73, 1
    %p77 = scmp.eq.s32.totalorder %s18, 1
    %p78 = scmp.ne.s32.totalorder %s73, %s75
    %p79 = scmp.eq.s32.totalorder %s18, 0
    %p80 = por %p78, %p79
    %p81 = scmp.ne.s32.totalorder %s73, %s75
    %p82 = scmp.eq.s32.totalorder %s23, 1
    %p83 = por %p81, %p82
    %p84 = scmp.ne.s32.totalorder %s75, %s76
    %p85 = scmp.eq.s32.totalorder %s23, 0
    %p86 = por %p84, %p85
    %p87 = scmp.ne.s32.totalorder %s75, %s76
    %p88 = scmp.eq.s32.totalorder %s24, 1
    %p89 = por %p87, %p88
    %p91 = scmp.ne.s32.totalorder %s76, %s90
    %p92 = scmp.eq.s32.totalorder %s24, 0
    %p93 = por %p91, %p92
    %s95 = sadd.s32 %s94, 1
    %p98 = scmp.eq.s32.totalorder %s18, 1
    %p99 = scmp.ne.s32.totalorder %s94, %s96
    %p100 = scmp.eq.s32.totalorder %s18, 0
    %p101 = por %p99, %p100
    %p102 = scmp.ne.s32.totalorder %s94, %s96
    %p103 = scmp.eq.s32.totalorder %s23, 1
    %p104 = por %p102, %p103
    %p105 = scmp.ne.s32.totalorder %s96, %s97
    %p106 = scmp.eq.s32.totalorder %s23, 0
    %p107 = por %p105, %p106
    %p108 = scmp.ne.s32.totalorder %s96, %s97
    %p109 = scmp.eq.s32.totalorder %s24, 1
    %p110 = por %p108, %p109
    %p112 = scmp.ne.s32.totalorder %s97, %s111
    %p113 = scmp.eq.s32.totalorder %s24, 0
    %p114 = por %p112, %p113
    %s116 = sadd.s32 %s115, 1
    %p119 = scmp.eq.s32.totalorder %s18, 1
    %p120 = scmp.ne.s32.totalorder %s115, %s117
    %p121 = scmp.eq.s32.totalorder %s18, 0
    %p122 = por %p120, %p121
    %p123 = scmp.ne.s32.totalorder %s115, %s117
    %p124 = scmp.eq.s32.totalorder %s23, 1
    %p125 = por %p123, %p124
    %p126 = scmp.ne.s32.totalorder %s117, %s118
    %p127 = scmp.eq.s32.totalorder %s23, 0
    %p128 = por %p126, %p127
    %p129 = scmp.ne.s32.totalorder %s117, %s118
    %p130 = scmp.eq.s32.totalorder %s24, 1
    %p131 = por %p129, %p130
    %p133 = scmp.ne.s32.totalorder %s118, %s132
    %p134 = scmp.eq.s32.totalorder %s24, 0
    %p135 = por %p133, %p134
    %s137 = sadd.s32 %s136, 1
    %p140 = scmp.eq.s32.totalorder %s18, 1
    %p141 = scmp.ne.s32.totalorder %s136, %s138
    %p142 = scmp.eq.s32.totalorder %s18, 0
    %p143 = por %p141, %p142
    %p144 = scmp.ne.s32.totalorder %s136, %s138
    %p145 = scmp.eq.s32.totalorder %s23, 1
    %p146 = por %p144, %p145
    %p147 = scmp.ne.s32.totalorder %s138, %s139
    %p148 = scmp.eq.s32.totalorder %s23, 0
    %p149 = por %p147, %p148
    %p150 = scmp.ne.s32.totalorder %s138, %s139
    %p151 = scmp.eq.s32.totalorder %s24, 1
    %p152 = por %p150, %p151
    %p154 = scmp.ne.s32.totalorder %s139, %s153
    %p155 = scmp.eq.s32.totalorder %s24, 0
    %p156 = por %p154, %p155
    %s158 = sadd.s32 %s157, 1
    %p161 = scmp.eq.s32.totalorder %s18, 1
    %p162 = scmp.ne.s32.totalorder %s157, %s159
    %p163 = scmp.eq.s32.totalorder %s18, 0
    %p164 = por %p162, %p163
    %p165 = scmp.ne.s32.totalorder %s157, %s159
    %p166 = scmp.eq.s32.totalorder %s23, 1
    %p167 = por %p165, %p166
    %p168 = scmp.ne.s32.totalorder %s159, %s160
    %p169 = scmp.eq.s32.totalorder %s23, 0
    %p170 = por %p168, %p169
    %p171 = scmp.ne.s32.totalorder %s159, %s160
    %p172 = scmp.eq.s32.totalorder %s24, 1
    %p173 = por %p171, %p172
    %p175 = scmp.ne.s32.totalorder %s160, %s174
    %p176 = scmp.eq.s32.totalorder %s24, 0
    %p177 = por %p175, %p176
    %s179 = sadd.s32 %s178, 1
    %p182 = scmp.eq.s32.totalorder %s18, 1
    %p183 = scmp.ne.s32.totalorder %s178, %s180
    %p184 = scmp.eq.s32.totalorder %s18, 0
    %p185 = por %p183, %p184
    %p186 = scmp.ne.s32.totalorder %s178, %s180
    %p187 = scmp.eq.s32.totalorder %s23, 1
    %p188 = por %p186, %p187
    %p189 = scmp.ne.s32.totalorder %s180, %s181
    %p190 = scmp.eq.s32.totalorder %s23, 0
    %p191 = por %p189, %p190
    %p192 = scmp.ne.s32.totalorder %s180, %s181
    %p193 = scmp.eq.s32.totalorder %s24, 1
    %p194 = por %p192, %p193
    %p196 = scmp.ne.s32.totalorder %s181, %s195
    %p197 = scmp.eq.s32.totalorder %s24, 0
    %p198 = por %p196, %p197
    %s200 = sadd.s32 %s199, 1
    %p203 = scmp.eq.s32.totalorder %s18, 1
    %p204 = scmp.ne.s32.totalorder %s199, %s201
    %p205 = scmp.eq.s32.totalorder %s18, 0
    %p206 = por %p204, %p205
    %p207 = scmp.ne.s32.totalorder %s199, %s201
    %p208 = scmp.eq.s32.totalorder %s23, 1
    %p209 = por %p207, %p208
    %p210 = scmp.ne.s32.totalorder %s201, %s202
    %p211 = scmp.eq.s32.totalorder %s23, 0
    %p212 = por %p210, %p211
    %p213 = scmp.ne.s32.totalorder %s201, %s202
    %p214 = scmp.eq.s32.totalorder %s24, 1
    %p215 = por %p213, %p214
    %p217 = scmp.ne.s32.totalorder %s202, %s216
    %p218 = scmp.eq.s32.totalorder %s24, 0
    %p219 = por %p217, %p218
    %s221 = sadd.s32 %s220, 1
    %p224 = scmp.eq.s32.totalorder %s18, 1
    %p225 = scmp.ne.s32.totalorder %s220, %s222
    %p226 = scmp.eq.s32.totalorder %s18, 0
    %p227 = por %p225, %p226
    %p228 = scmp.ne.s32.totalorder %s220, %s222
    %p229 = scmp.eq.s32.totalorder %s23, 1
    %p230 = por %p228, %p229
    %p231 = scmp.ne.s32.totalorder %s222, %s223
    %p232 = scmp.eq.s32.totalorder %s23, 0
    %p233 = por %p231, %p232
    %p234 = scmp.ne.s32.totalorder %s222, %s223
    %p235 = scmp.eq.s32.totalorder %s24, 1
    %p236 = por %p234, %p235
    %p238 = scmp.ne.s32.totalorder %s223, %s237
    %p239 = scmp.eq.s32.totalorder %s24, 0
    %p240 = por %p238, %p239
    %s242 = sadd.s32 %s241, 1
    %p245 = scmp.eq.s32.totalorder %s18, 1
    %p246 = scmp.ne.s32.totalorder %s241, %s243
    %p247 = scmp.eq.s32.totalorder %s18, 0
    %p248 = por %p246, %p247
    %p249 = scmp.ne.s32.totalorder %s241, %s243
    %p250 = scmp.eq.s32.totalorder %s23, 1
    %p251 = por %p249, %p250
    %p252 = scmp.ne.s32.totalorder %s243, %s244
    %p253 = scmp.eq.s32.totalorder %s23, 0
    %p254 = por %p252, %p253
    %p255 = scmp.ne.s32.totalorder %s243, %s244
    %p256 = scmp.eq.s32.totalorder %s24, 1
    %p257 = por %p255, %p256
    %p259 = scmp.ne.s32.totalorder %s244, %s258
    %p260 = scmp.eq.s32.totalorder %s24, 0
    %p261 = por %p259, %p260
    %s263 = sadd.s32 %s262, 1
    %p266 = scmp.eq.s32.totalorder %s18, 1
    %p267 = scmp.ne.s32.totalorder %s262, %s264
    %p268 = scmp.eq.s32.totalorder %s18, 0
    %p269 = por %p267, %p268
    %p270 = scmp.ne.s32.totalorder %s262, %s264
    %p271 = scmp.eq.s32.totalorder %s23, 1
    %p272 = por %p270, %p271
    %p273 = scmp.ne.s32.totalorder %s264, %s265
    %p274 = scmp.eq.s32.totalorder %s23, 0
    %p275 = por %p273, %p274
    %p276 = scmp.ne.s32.totalorder %s264, %s265
    %p277 = scmp.eq.s32.totalorder %s24, 1
    %p278 = por %p276, %p277
    %p280 = scmp.ne.s32.totalorder %s265, %s279
    %p281 = scmp.eq.s32.totalorder %s24, 0
    %p282 = por %p280, %p281
    %s283 = ssub.s32 %s18, %s25
    %p284 = scmp.eq.s32.totalorder %s283, 0
    %s286 = sadd.s32 %s285, 1
    %s287 = scalar_select %p284, %s285, %s286
    %p290 = pneg %p284
    %p291 = scmp.eq.s32.totalorder %s18, 1
    %p292 = por %p290, %p291
    %p293 = scmp.ne.s32.totalorder %s285, %s288
    %p294 = scmp.eq.s32.totalorder %s18, 0
    %p295 = por %p293, %p294
    %p296 = scmp.ne.s32.totalorder %s285, %s288
    %p297 = scmp.eq.s32.totalorder %s23, 1
    %p298 = por %p296, %p297
    %p299 = scmp.ne.s32.totalorder %s288, %s289
    %p300 = scmp.eq.s32.totalorder %s23, 0
    %p301 = por %p299, %p300
    %p302 = scmp.ne.s32.totalorder %s288, %s289
    %p303 = scmp.eq.s32.totalorder %s24, 1
    %p304 = por %p302, %p303
    %p306 = scmp.ne.s32.totalorder %s289, %s305
    %p307 = scmp.eq.s32.totalorder %s24, 0
    %p308 = por %p306, %p307
    %p309 = scmp.le.s32.totalorder 1, %s18
    %p310 = scmp.lt.s32.totalorder %s18, 3
    %p311 = pnand %p309, %p310
    %p312 = pneg %p311
    // Predicated region
    $region9: #{encoder_forward.1} parent=5 // pred_check
      _
    $region10: #{encoder_forward.1} parent=5 // pred_check_branch
      %314 = sbr.rel (%p311) target = $region12
    $region11: #{encoder_forward.1} parent=5 // pred_region
      %s315 = ssub.s32 %s18, 1
      // Predicated region
      $region13: #{encoder_forward.1} parent=11 // pred_check
        %p316 = pneg %p65
      $region14: #{encoder_forward.1} parent=11 // pred_check_branch
        %318 = sbr.rel (%p316) target = $region16
      $region15: #{encoder_forward.1} parent=11 // pred_region
        _
      $region16: #{encoder_forward.1} parent=11 // pred_fallthru
        _
      // Predicated region
      $region17: #{encoder_forward.1} parent=11 // pred_check
        %p319 = pneg %p86
      $region18: #{encoder_forward.1} parent=11 // pred_check_branch
        %321 = sbr.rel (%p319) target = $region20
      $region19: #{encoder_forward.1} parent=11 // pred_region
        _
      $region20: #{encoder_forward.1} parent=11 // pred_fallthru
        _
      // Predicated region
      $region21: #{encoder_forward.1} parent=11 // pred_check
        %p322 = pneg %p107
      $region22: #{encoder_forward.1} parent=11 // pred_check_branch
        %324 = sbr.rel (%p322) target = $region24
      $region23: #{encoder_forward.1} parent=11 // pred_region
        _
      $region24: #{encoder_forward.1} parent=11 // pred_fallthru
        _
      // Predicated region
      $region25: #{encoder_forward.1} parent=11 // pred_check
        %p325 = pneg %p128
      $region26: #{encoder_forward.1} parent=11 // pred_check_branch
        %327 = sbr.rel (%p325) target = $region28
      $region27: #{encoder_forward.1} parent=11 // pred_region
        _
      $region28: #{encoder_forward.1} parent=11 // pred_fallthru
        _
      // Predicated region
      $region29: #{encoder_forward.1} parent=11 // pred_check
        %p328 = pneg %p149
      $region30: #{encoder_forward.1} parent=11 // pred_check_branch
        %330 = sbr.rel (%p328) target = $region32
      $region31: #{encoder_forward.1} parent=11 // pred_region
        _
      $region32: #{encoder_forward.1} parent=11 // pred_fallthru
        _
      // Predicated region
      $region33: #{encoder_forward.1} parent=11 // pred_check
        %p331 = pneg %p170
      $region34: #{encoder_forward.1} parent=11 // pred_check_branch
        %333 = sbr.rel (%p331) target = $region36
      $region35: #{encoder_forward.1} parent=11 // pred_region
        _
      $region36: #{encoder_forward.1} parent=11 // pred_fallthru
        _
      // Predicated region
      $region37: #{encoder_forward.1} parent=11 // pred_check
        %p334 = pneg %p191
      $region38: #{encoder_forward.1} parent=11 // pred_check_branch
        %336 = sbr.rel (%p334) target = $region40
      $region39: #{encoder_forward.1} parent=11 // pred_region
        _
      $region40: #{encoder_forward.1} parent=11 // pred_fallthru
        _
      // Predicated region
      $region41: #{encoder_forward.1} parent=11 // pred_check
        %p337 = pneg %p212
      $region42: #{encoder_forward.1} parent=11 // pred_check_branch
        %339 = sbr.rel (%p337) target = $region44
      $region43: #{encoder_forward.1} parent=11 // pred_region
        _
      $region44: #{encoder_forward.1} parent=11 // pred_fallthru
        _
      // Predicated region
      $region45: #{encoder_forward.1} parent=11 // pred_check
        %p340 = pneg %p233
      $region46: #{encoder_forward.1} parent=11 // pred_check_branch
        %342 = sbr.rel (%p340) target = $region48
      $region47: #{encoder_forward.1} parent=11 // pred_region
        _
      $region48: #{encoder_forward.1} parent=11 // pred_fallthru
        _
      // Predicated region
      $region49: #{encoder_forward.1} parent=11 // pred_check
        %p343 = pneg %p254
      $region50: #{encoder_forward.1} parent=11 // pred_check_branch
        %345 = sbr.rel (%p343) target = $region52
      $region51: #{encoder_forward.1} parent=11 // pred_region
        _
      $region52: #{encoder_forward.1} parent=11 // pred_fallthru
        _
      // Predicated region
      $region53: #{encoder_forward.1} parent=11 // pred_check
        %p346 = pneg %p275
      $region54: #{encoder_forward.1} parent=11 // pred_check_branch
        %348 = sbr.rel (%p346) target = $region56
      $region55: #{encoder_forward.1} parent=11 // pred_region
        _
      $region56: #{encoder_forward.1} parent=11 // pred_fallthru
        _
    $region12: #{encoder_forward.1} parent=5 // pred_fallthru
      _
    %p349 = scmp.lt.s32.totalorder %s18, 2
    // Predicated region
    $region57: #{encoder_forward.1} parent=5 // pred_check
      %p350 = pneg %p349
    $region58: #{encoder_forward.1} parent=5 // pred_check_branch
      %352 = sbr.rel (%p350) target = $region60
    $region59: #{encoder_forward.1} parent=5 // pred_region
      // Predicated region
      $region61: #{encoder_forward.1} parent=59 // pred_check
        %p353 = pneg %p38
      $region62: #{encoder_forward.1} parent=59 // pred_check_branch
        %355 = sbr.rel (%p353) target = $region64
      $region63: #{encoder_forward.1} parent=59 // pred_region
        %p356 = scmp.lt.s32.totalorder %s18, 1
        %s357 = scalar_select %p356, %s18, 1
        %s358 = smul.addr %s357, 32
        %s359 = smul.addr %s358, 8
        %s360 = scalar_lea.vmem %s0, %s359
      $region64: #{encoder_forward.1} parent=59 // pred_fallthru
        _
    $region60: #{encoder_forward.1} parent=5 // pred_fallthru
      _
    %p361 = scmp.le.s32.totalorder 1, %s18
    %p362 = scmp.lt.s32.totalorder %s18, 3
    %p363 = pnand %p361, %p362
    %p364 = pneg %p363
    // Predicated region
    $region65: #{encoder_forward.1} parent=5 // pred_check
      _
    $region66: #{encoder_forward.1} parent=5 // pred_check_branch
      %366 = sbr.rel (%p363) target = $region68
    $region67: #{encoder_forward.1} parent=5 // pred_region
      %s367 = ssub.s32 %s18, 1
      %p368 = scmp.lt.s32.totalorder %s23, 1
      %s369 = scalar_select %p368, %s23, 1
      %s370 = smul.addr %s369, 32
      %s371 = smul.addr %s370, 8
      %s372 = scalar_lea.vmem %s0, %s371
      %p373 = pneg %p44
      %p374 = pneg %p41
      %p375 = pneg %p65
      %p376 = pneg %p62
      %p377 = pneg %p86
      %p378 = pneg %p83
      %p379 = pneg %p107
      %p380 = pneg %p104
      %p381 = pneg %p128
      %p382 = pneg %p125
      %p383 = pneg %p149
      %p384 = pneg %p146
      %p385 = pneg %p170
      %p386 = pneg %p167
      %p387 = pneg %p191
      %p388 = pneg %p188
      %p389 = pneg %p212
      %p390 = pneg %p209
      %p391 = pneg %p233
      %p392 = pneg %p230
      %p393 = pneg %p254
      %p394 = pneg %p251
      %p395 = pneg %p275
      %p396 = pneg %p272
      %p397 = pneg %p301
      %p398 = pneg %p298
      %p399 = scmp.lt.s32.totalorder %s23, 1
      %s400 = scalar_select %p399, %s23, 1
      %s401 = smul.addr %s400, 2
      %s402 = smul.addr %s401, 4
      %s403 = scalar_lea.vmem %s12, %s402
      %p404 = scmp.lt.s32.totalorder %s23, 1
      %s405 = scalar_select %p404, %s23, 1
      %s406 = smul.addr %s405, 32
      %s407 = smul.addr %s406, 8
      %s408 = scalar_lea.vmem %s0, %s407
      %p409 = scmp.lt.s32.totalorder %s23, 1
      %s410 = scalar_select %p409, %s23, 1
      %s411 = smul.addr %s410, 2
      %s412 = smul.addr %s411, 4
      %s413 = scalar_lea.vmem %s12, %s412
      %vm415 = vcmask 89088
      %416 = vst.msk [vmem:[#allocation2] sm:$0xff] %vm415, 0.0
      %417 = vst.msk [vmem:[#allocation2 + $0x8] sm:$0xff] %vm415, 0.0
      %vm418 = vcmask 82944
      %419 = vst.msk [vmem:[#allocation2 + $0x10] sm:$0x3] %vm418, 0.0
      %420 = vst.msk [vmem:[#allocation2 + $0x18] sm:$0xff] %vm415, 0.0
      %421 = vst.msk [vmem:[#allocation2 + $0x20] sm:$0xff] %vm415, 0.0
      %422 = vst.msk [vmem:[#allocation2 + $0x28] sm:$0x3] %vm418, 0.0
      %423 = vst.msk [vmem:[#allocation2 + $0x30] sm:$0xff] %vm415, 0.0
      %424 = vst.msk [vmem:[#allocation2 + $0x38] sm:$0xff] %vm415, 0.0
      %425 = vst.msk [vmem:[#allocation2 + $0x40] sm:$0x3] %vm418, 0.0
      %426 = vst.msk [vmem:[#allocation2 + $0x48] sm:$0xff] %vm415, 0.0
      %427 = vst.msk [vmem:[#allocation2 + $0x50] sm:$0xff] %vm415, 0.0
      %428 = vst.msk [vmem:[#allocation2 + $0x58] sm:$0x3] %vm418, 0.0
      %429 = vst.msk [vmem:[#allocation2 + $0x60] sm:$0xff] %vm415, 0.0
      %430 = vst.msk [vmem:[#allocation2 + $0x68] sm:$0xff] %vm415, 0.0
      %431 = vst.msk [vmem:[#allocation2 + $0x70] sm:$0x3] %vm418, 0.0
      %432 = vst.msk [vmem:[#allocation2 + $0x78] sm:$0xff] %vm415, 0.0
      %433 = vst.msk [vmem:[#allocation2 + $0x80] sm:$0xff] %vm415, 0.0
      %434 = vst.msk [vmem:[#allocation2 + $0x88] sm:$0x3] %vm418, 0.0
      %435 = vst.msk [vmem:[#allocation2 + $0x90] sm:$0xff] %vm415, 0.0
      %436 = vst.msk [vmem:[#allocation2 + $0x98] sm:$0xff] %vm415, 0.0
      %437 = vst.msk [vmem:[#allocation2 + $0xa0] sm:$0x3] %vm418, 0.0
      %438 = vst.msk [vmem:[#allocation2 + $0xa8] sm:$0xff] %vm415, 0.0
      %439 = vst.msk [vmem:[#allocation2 + $0xb0] sm:$0xff] %vm415, 0.0
      %440 = vst.msk [vmem:[#allocation2 + $0xb8] sm:$0x3] %vm418, 0.0
      %441 = vst.msk [vmem:[#allocation2 + $0xc0] sm:$0xff] %vm415, 0.0
      %442 = vst.msk [vmem:[#allocation2 + $0xc8] sm:$0xff] %vm415, 0.0
      %443 = vst.msk [vmem:[#allocation2 + $0xd0] sm:$0x3] %vm418, 0.0
      %444 = vst.msk [vmem:[#allocation2 + $0xd8] sm:$0xff] %vm415, 0.0
      %445 = vst.msk [vmem:[#allocation2 + $0xe0] sm:$0xff] %vm415, 0.0
      %446 = vst.msk [vmem:[#allocation2 + $0xe8] sm:$0x3] %vm418, 0.0
      %447 = vst.msk [vmem:[#allocation2 + $0xf0] sm:$0xff] %vm415, 0.0
      %448 = vst.msk [vmem:[#allocation2 + $0xf8] sm:$0xff] %vm415, 0.0
      %449 = vst.msk [vmem:[#allocation2 + $0x100] sm:$0x3] %vm418, 0.0
      %450 = vst.msk [vmem:[#allocation2 + $0x108] sm:$0xff] %vm415, 0.0
      %451 = vst.msk [vmem:[#allocation2 + $0x110] sm:$0xff] %vm415, 0.0
      %452 = vst.msk [vmem:[#allocation2 + $0x118] sm:$0x3] %vm418, 0.0
      %453 = vst.msk [vmem:[#allocation2 + $0x120] sm:$0xff] %vm415, 0.0
      %454 = vst.msk [vmem:[#allocation2 + $0x128] sm:$0xff] %vm415, 0.0
      %455 = vst.msk [vmem:[#allocation2 + $0x130] sm:$0x3] %vm418, 0.0
      %456 = vst.msk [vmem:[#allocation2 + $0x138] sm:$0xff] %vm415, 0.0
      %457 = vst.msk [vmem:[#allocation2 + $0x140] sm:$0xff] %vm415, 0.0
      %458 = vst.msk [vmem:[#allocation2 + $0x148] sm:$0x3] %vm418, 0.0
      %459 = vst.msk [vmem:[#allocation2 + $0x150] sm:$0xff] %vm415, 0.0
      %460 = vst.msk [vmem:[#allocation2 + $0x158] sm:$0xff] %vm415, 0.0
      %461 = vst.msk [vmem:[#allocation2 + $0x160] sm:$0x3] %vm418, 0.0
      %462 = vst.msk [vmem:[#allocation2 + $0x168] sm:$0xff] %vm415, 0.0
      %463 = vst.msk [vmem:[#allocation2 + $0x170] sm:$0xff] %vm415, 0.0
      %464 = vst.msk [vmem:[#allocation2 + $0x178] sm:$0x3] %vm418, 0.0
      %465 = vst.msk [vmem:[#allocation2 + $0x180] sm:$0xff] %vm415, 0.0
      %466 = vst.msk [vmem:[#allocation2 + $0x188] sm:$0xff] %vm415, 0.0
      %467 = vst.msk [vmem:[#allocation2 + $0x190] sm:$0x3] %vm418, 0.0
      %468 = vst.msk [vmem:[#allocation2 + $0x198] sm:$0xff] %vm415, 0.0
      %469 = vst.msk [vmem:[#allocation2 + $0x1a0] sm:$0xff] %vm415, 0.0
      %470 = vst.msk [vmem:[#allocation2 + $0x1a8] sm:$0x3] %vm418, 0.0
      %vm471 = vcmask 261120
      %472 = vst.msk [vmem:[#allocation3] sm:$0xff] %vm471, 0.0
      %473 = vst.msk [vmem:[#allocation3 + $0x8] sm:$0xff] %vm471, 0.0
      %vm474 = vcmask 254976
      %475 = vst.msk [vmem:[#allocation3 + $0x10] sm:$0x3] %vm474, 0.0
      %476 = vst.msk [vmem:[#allocation3 + $0x18] sm:$0xff] %vm471, 0.0
      %477 = vst.msk [vmem:[#allocation3 + $0x20] sm:$0xff] %vm471, 0.0
      %478 = vst.msk [vmem:[#allocation3 + $0x28] sm:$0x3] %vm474, 0.0
      %479 = vst.msk [vmem:[#allocation3 + $0x30] sm:$0xff] %vm471, 0.0
      %480 = vst.msk [vmem:[#allocation3 + $0x38] sm:$0xff] %vm471, 0.0
      %481 = vst.msk [vmem:[#allocation3 + $0x40] sm:$0x3] %vm474, 0.0
      %482 = vst.msk [vmem:[#allocation3 + $0x48] sm:$0xff] %vm471, 0.0
      %483 = vst.msk [vmem:[#allocation3 + $0x50] sm:$0xff] %vm471, 0.0
      %484 = vst.msk [vmem:[#allocation3 + $0x58] sm:$0x3] %vm474, 0.0
      %485 = vst.msk [vmem:[#allocation3 + $0x60] sm:$0xff] %vm471, 0.0
      %486 = vst.msk [vmem:[#allocation3 + $0x68] sm:$0xff] %vm471, 0.0
      %487 = vst.msk [vmem:[#allocation3 + $0x70] sm:$0x3] %vm474, 0.0
      %488 = vst.msk [vmem:[#allocation3 + $0x78] sm:$0xff] %vm471, 0.0
      %489 = vst.msk [vmem:[#allocation3 + $0x80] sm:$0xff] %vm471, 0.0
      %490 = vst.msk [vmem:[#allocation3 + $0x88] sm:$0x3] %vm474, 0.0
      %491 = vst.msk [vmem:[#allocation3 + $0x90] sm:$0xff] %vm471, 0.0
      %492 = vst.msk [vmem:[#allocation3 + $0x98] sm:$0xff] %vm471, 0.0
      %493 = vst.msk [vmem:[#allocation3 + $0xa0] sm:$0x3] %vm474, 0.0
      %494 = vst.msk [vmem:[#allocation3 + $0xa8] sm:$0xff] %vm471, 0.0
      %495 = vst.msk [vmem:[#allocation3 + $0xb0] sm:$0xff] %vm471, 0.0
      %496 = vst.msk [vmem:[#allocation3 + $0xb8] sm:$0x3] %vm474, 0.0
      %497 = vst.msk [vmem:[#allocation3 + $0xc0] sm:$0xff] %vm471, 0.0
      %498 = vst.msk [vmem:[#allocation3 + $0xc8] sm:$0xff] %vm471, 0.0
      %499 = vst.msk [vmem:[#allocation3 + $0xd0] sm:$0x3] %vm474, 0.0
      %500 = vst.msk [vmem:[#allocation3 + $0xd8] sm:$0xff] %vm471, 0.0
      %501 = vst.msk [vmem:[#allocation3 + $0xe0] sm:$0xff] %vm471, 0.0
      %502 = vst.msk [vmem:[#allocation3 + $0xe8] sm:$0x3] %vm474, 0.0
      %503 = vst.msk [vmem:[#allocation3 + $0xf0] sm:$0xff] %vm471, 0.0
      %504 = vst.msk [vmem:[#allocation3 + $0xf8] sm:$0xff] %vm471, 0.0
      %505 = vst.msk [vmem:[#allocation3 + $0x100] sm:$0x3] %vm474, 0.0
      %506 = vst.msk [vmem:[#allocation3 + $0x108] sm:$0xff] %vm471, 0.0
      %507 = vst.msk [vmem:[#allocation3 + $0x110] sm:$0xff] %vm471, 0.0
      %508 = vst.msk [vmem:[#allocation3 + $0x118] sm:$0x3] %vm474, 0.0
      %509 = vst.msk [vmem:[#allocation3 + $0x120] sm:$0xff] %vm471, 0.0
      %510 = vst.msk [vmem:[#allocation3 + $0x128] sm:$0xff] %vm471, 0.0
      %511 = vst.msk [vmem:[#allocation3 + $0x130] sm:$0x3] %vm474, 0.0
      %512 = vst.msk [vmem:[#allocation3 + $0x138] sm:$0xff] %vm471, 0.0
      %513 = vst.msk [vmem:[#allocation3 + $0x140] sm:$0xff] %vm471, 0.0
      %514 = vst.msk [vmem:[#allocation3 + $0x148] sm:$0x3] %vm474, 0.0
      %515 = vst.msk [vmem:[#allocation3 + $0x150] sm:$0xff] %vm471, 0.0
      %516 = vst.msk [vmem:[#allocation3 + $0x158] sm:$0xff] %vm471, 0.0
      %517 = vst.msk [vmem:[#allocation3 + $0x160] sm:$0x3] %vm474, 0.0
      %518 = vst.msk [vmem:[#allocation3 + $0x168] sm:$0xff] %vm471, 0.0
      %519 = vst.msk [vmem:[#allocation3 + $0x170] sm:$0xff] %vm471, 0.0
      %520 = vst.msk [vmem:[#allocation3 + $0x178] sm:$0x3] %vm474, 0.0
      %521 = vst.msk [vmem:[#allocation3 + $0x180] sm:$0xff] %vm471, 0.0
      %522 = vst.msk [vmem:[#allocation3 + $0x188] sm:$0xff] %vm471, 0.0
      %523 = vst.msk [vmem:[#allocation3 + $0x190] sm:$0x3] %vm474, 0.0
      %524 = vst.msk [vmem:[#allocation3 + $0x198] sm:$0xff] %vm471, 0.0
      %525 = vst.msk [vmem:[#allocation3 + $0x1a0] sm:$0xff] %vm471, 0.0
      %526 = vst.msk [vmem:[#allocation3 + $0x1a8] sm:$0x3] %vm474, 0.0
      %v527 = vld [vmem:[%s408] sm:$0xff]
      %v528 = vld [vmem:[%s408 + $0x8] sm:$0xff]
      %v529 = vld [vmem:[%s408 + $0x10] sm:$0xff]
      %v530 = vld [vmem:[%s408 + $0x18] sm:$0xff]
      %v531 = vld [vmem:[%s408 + $0x20] sm:$0xff]
      %v532 = vld [vmem:[%s408 + $0x28] sm:$0xff]
      %v533 = vld [vmem:[%s408 + $0x30] sm:$0xff]
      %v534 = vld [vmem:[%s408 + $0x38] sm:$0xff]
      %v535 = vld [vmem:[%s408 + $0x40] sm:$0xff]
      %v536 = vld [vmem:[%s408 + $0x48] sm:$0xff]
      %v537 = vld [vmem:[%s408 + $0x50] sm:$0xff]
      %v538 = vld [vmem:[%s408 + $0x58] sm:$0xff]
      %v539 = vld [vmem:[%s408 + $0x60] sm:$0xff]
      %v540 = vld [vmem:[%s408 + $0x68] sm:$0xff]
      %v541 = vld [vmem:[%s408 + $0x70] sm:$0xff]
      %v542 = vld [vmem:[%s408 + $0x78] sm:$0xff]
      %v543 = vld [vmem:[%s408 + $0x80] sm:$0xff]
      %v544 = vld [vmem:[%s408 + $0x88] sm:$0xff]
      %v545 = vld [vmem:[%s408 + $0x90] sm:$0xff]
      %v546 = vld [vmem:[%s408 + $0x98] sm:$0xff]
      %v547 = vld [vmem:[%s408 + $0xa0] sm:$0xff]
      %v548 = vld [vmem:[%s408 + $0xa8] sm:$0xff]
      %v549 = vld [vmem:[%s408 + $0xb0] sm:$0xff]
      %v550 = vld [vmem:[%s408 + $0xb8] sm:$0xff]
      %v551 = vld [vmem:[%s408 + $0xc0] sm:$0xff]
      %v552 = vld [vmem:[%s408 + $0xc8] sm:$0xff]
      %v553 = vld [vmem:[%s408 + $0xd0] sm:$0xff]
      %v554 = vld [vmem:[%s408 + $0xd8] sm:$0xff]
      %v555 = vld [vmem:[%s408 + $0xe0] sm:$0xff]
      %v556 = vld [vmem:[%s408 + $0xe8] sm:$0xff]
      %v557 = vld [vmem:[%s408 + $0xf0] sm:$0xff]
      %v558 = vld [vmem:[%s408 + $0xf8] sm:$0xff]
      %s559 = scalar_lea.vmem [#allocation2], 24
      %560 = vst.msk [vmem:[%s559 + $0x1] sm:$0xff] %vm415, %v527
      %561 = vst.msk [vmem:[%s559 + $0x9] sm:$0xff] %vm415, %v528
      %562 = vst.msk [vmem:[%s559 + $0x19] sm:$0xff] %vm415, %v529
      %563 = vst.msk [vmem:[%s559 + $0x21] sm:$0xff] %vm415, %v530
      %564 = vst.msk [vmem:[%s559 + $0x31] sm:$0xff] %vm415, %v531
      %565 = vst.msk [vmem:[%s559 + $0x39] sm:$0xff] %vm415, %v532
      %566 = vst.msk [vmem:[%s559 + $0x49] sm:$0xff] %vm415, %v533
      %567 = vst.msk [vmem:[%s559 + $0x51] sm:$0xff] %vm415, %v534
      %568 = vst.msk [vmem:[%s559 + $0x61] sm:$0xff] %vm415, %v535
      %569 = vst.msk [vmem:[%s559 + $0x69] sm:$0xff] %vm415, %v536
      %570 = vst.msk [vmem:[%s559 + $0x79] sm:$0xff] %vm415, %v537
      %571 = vst.msk [vmem:[%s559 + $0x81] sm:$0xff] %vm415, %v538
      %572 = vst.msk [vmem:[%s559 + $0x91] sm:$0xff] %vm415, %v539
      %573 = vst.msk [vmem:[%s559 + $0x99] sm:$0xff] %vm415, %v540
      %574 = vst.msk [vmem:[%s559 + $0xa9] sm:$0xff] %vm415, %v541
      %575 = vst.msk [vmem:[%s559 + $0xb1] sm:$0xff] %vm415, %v542
      %576 = vst.msk [vmem:[%s559 + $0xc1] sm:$0xff] %vm415, %v543
      %577 = vst.msk [vmem:[%s559 + $0xc9] sm:$0xff] %vm415, %v544
      %578 = vst.msk [vmem:[%s559 + $0xd9] sm:$0xff] %vm415, %v545
      %579 = vst.msk [vmem:[%s559 + $0xe1] sm:$0xff] %vm415, %v546
      %580 = vst.msk [vmem:[%s559 + $0xf1] sm:$0xff] %vm415, %v547
      %581 = vst.msk [vmem:[%s559 + $0xf9] sm:$0xff] %vm415, %v548
      %582 = vst.msk [vmem:[%s559 + $0x109] sm:$0xff] %vm415, %v549
      %583 = vst.msk [vmem:[%s559 + $0x111] sm:$0xff] %vm415, %v550
      %584 = vst.msk [vmem:[%s559 + $0x121] sm:$0xff] %vm415, %v551
      %585 = vst.msk [vmem:[%s559 + $0x129] sm:$0xff] %vm415, %v552
      %586 = vst.msk [vmem:[%s559 + $0x139] sm:$0xff] %vm415, %v553
      %587 = vst.msk [vmem:[%s559 + $0x141] sm:$0xff] %vm415, %v554
      %588 = vst.msk [vmem:[%s559 + $0x151] sm:$0xff] %vm415, %v555
      %589 = vst.msk [vmem:[%s559 + $0x159] sm:$0xff] %vm415, %v556
      %590 = vst.msk [vmem:[%s559 + $0x169] sm:$0xff] %vm415, %v557
      %591 = vst.msk [vmem:[%s559 + $0x171] sm:$0xff] %vm415, %v558
      %v592 = vld [vmem:[#allocation2] sm:$0xff]
      %v593 = vld [vmem:[#allocation2 + $0x8] sm:$0xff]
      %v594 = vld [vmem:[#allocation2 + $0x18] sm:$0xff]
      %v595 = vld [vmem:[#allocation2 + $0x20] sm:$0xff]
      %v596 = vld [vmem:[#allocation2 + $0x30] sm:$0xff]
      %v597 = vld [vmem:[#allocation2 + $0x38] sm:$0xff]
      %v598 = vld [vmem:[#allocation2 + $0x48] sm:$0xff]
      %v599 = vld [vmem:[#allocation2 + $0x50] sm:$0xff]
      %v600 = vld [vmem:[#allocation2 + $0x60] sm:$0xff]
      %v601 = vld [vmem:[#allocation2 + $0x68] sm:$0xff]
      %v602 = vld [vmem:[#allocation2 + $0x78] sm:$0xff]
      %v603 = vld [vmem:[#allocation2 + $0x80] sm:$0xff]
      %v604 = vld [vmem:[#allocation2 + $0x90] sm:$0xff]
      %v605 = vld [vmem:[#allocation2 + $0x98] sm:$0xff]
      %v606 = vld [vmem:[#allocation2 + $0xa8] sm:$0xff]
      %v607 = vld [vmem:[#allocation2 + $0xb0] sm:$0xff]
      %v608 = vld [vmem:[#allocation2 + $0xc0] sm:$0xff]
      %v609 = vld [vmem:[#allocation2 + $0xc8] sm:$0xff]
      %v610 = vld [vmem:[#allocation2 + $0xd8] sm:$0xff]
      %v611 = vld [vmem:[#allocation2 + $0xe0] sm:$0xff]
      %v612 = vld [vmem:[#allocation2 + $0xf0] sm:$0xff]
      %v613 = vld [vmem:[#allocation2 + $0xf8] sm:$0xff]
      %v614 = vld [vmem:[#allocation2 + $0x108] sm:$0xff]
      %v615 = vld [vmem:[#allocation2 + $0x110] sm:$0xff]
      %v616 = vld [vmem:[#allocation2 + $0x120] sm:$0xff]
      %v617 = vld [vmem:[#allocation2 + $0x128] sm:$0xff]
      %v618 = vld [vmem:[#allocation2 + $0x138] sm:$0xff]
      %v619 = vld [vmem:[#allocation2 + $0x140] sm:$0xff]
      %v620 = vld [vmem:[#allocation2 + $0x150] sm:$0xff]
      %v621 = vld [vmem:[#allocation2 + $0x158] sm:$0xff]
      %v622 = vld [vmem:[#allocation2 + $0x168] sm:$0xff]
      %v623 = vld [vmem:[#allocation2 + $0x170] sm:$0xff]
      %v624 = vpack.c.bf16 %v593, %v592
      %v625 = vpack.c.bf16 %v595, %v594
      %v626 = vpack.c.bf16 %v597, %v596
      %v627 = vpack.c.bf16 %v599, %v598
      %v628 = vpack.c.bf16 %v601, %v600
      %v629 = vpack.c.bf16 %v603, %v602
      %v630 = vpack.c.bf16 %v605, %v604
      %v631 = vpack.c.bf16 %v607, %v606
      %v632 = vpack.c.bf16 %v609, %v608
      %v633 = vpack.c.bf16 %v611, %v610
      %v634 = vpack.c.bf16 %v613, %v612
      %v635 = vpack.c.bf16 %v615, %v614
      %v636 = vpack.c.bf16 %v617, %v616
      %v637 = vpack.c.bf16 %v619, %v618
      %v638 = vpack.c.bf16 %v621, %v620
      %v639 = vpack.c.bf16 %v623, %v622
      %v640 = vld [vmem:[%s1] sm:$0xf]
      %v641 = vld [vmem:[%s1 + $0x4] sm:$0x3]
      %v642 = vld [vmem:[#allocation2 + $0x1] sm:$0xff]
      %v643 = vld [vmem:[#allocation2 + $0x9] sm:$0xff]
      %v644 = vld [vmem:[#allocation2 + $0x19] sm:$0xff]
      %v645 = vld [vmem:[#allocation2 + $0x21] sm:$0xff]
      %v646 = vld [vmem:[#allocation2 + $0x31] sm:$0xff]
      %v647 = vld [vmem:[#allocation2 + $0x39] sm:$0xff]
      %v648 = vld [vmem:[#allocation2 + $0x49] sm:$0xff]
      %v649 = vld [vmem:[#allocation2 + $0x51] sm:$0xff]
      %v650 = vld [vmem:[#allocation2 + $0x61] sm:$0xff]
      %v651 = vld [vmem:[#allocation2 + $0x69] sm:$0xff]
      %v652 = vld [vmem:[#allocation2 + $0x79] sm:$0xff]
      %v653 = vld [vmem:[#allocation2 + $0x81] sm:$0xff]
      %v654 = vld [vmem:[#allocation2 + $0x91] sm:$0xff]
      %v655 = vld [vmem:[#allocation2 + $0x99] sm:$0xff]
      %v656 = vld [vmem:[#allocation2 + $0xa9] sm:$0xff]
      %v657 = vld [vmem:[#allocation2 + $0xb1] sm:$0xff]
      %v658 = vld [vmem:[#allocation2 + $0xc1] sm:$0xff]
      %v659 = vld [vmem:[#allocation2 + $0xc9] sm:$0xff]
      %v660 = vld [vmem:[#allocation2 + $0xd9] sm:$0xff]
      %v661 = vld [vmem:[#allocation2 + $0xe1] sm:$0xff]
      %v662 = vld [vmem:[#allocation2 + $0xf1] sm:$0xff]
      %v663 = vld [vmem:[#allocation2 + $0xf9] sm:$0xff]
      %v664 = vld [vmem:[#allocation2 + $0x109] sm:$0xff]
      %v665 = vld [vmem:[#allocation2 + $0x111] sm:$0xff]
      %v666 = vld [vmem:[#allocation2 + $0x121] sm:$0xff]
      %v667 = vld [vmem:[#allocation2 + $0x129] sm:$0xff]
      %v668 = vld [vmem:[#allocation2 + $0x139] sm:$0xff]
      %v669 = vld [vmem:[#allocation2 + $0x141] sm:$0xff]
      %v670 = vld [vmem:[#allocation2 + $0x151] sm:$0xff]
      %v671 = vld [vmem:[#allocation2 + $0x159] sm:$0xff]
      %v672 = vld [vmem:[#allocation2 + $0x169] sm:$0xff]
      %v673 = vld [vmem:[#allocation2 + $0x171] sm:$0xff]
      %v674 = vpack.c.bf16 %v643, %v642
      %v675 = vpack.c.bf16 %v645, %v644
      %v676 = vpack.c.bf16 %v647, %v646
      %v677 = vpack.c.bf16 %v649, %v648
      %v678 = vpack.c.bf16 %v651, %v650
      %v679 = vpack.c.bf16 %v653, %v652
      %v680 = vpack.c.bf16 %v655, %v654
      %v681 = vpack.c.bf16 %v657, %v656
      %v682 = vpack.c.bf16 %v659, %v658
      %v683 = vpack.c.bf16 %v661, %v660
      %v684 = vpack.c.bf16 %v663, %v662
      %v685 = vpack.c.bf16 %v665, %v664
      %v686 = vpack.c.bf16 %v667, %v666
      %v687 = vpack.c.bf16 %v669, %v668
      %v688 = vpack.c.bf16 %v671, %v670
      %v689 = vpack.c.bf16 %v673, %v672
      %s690 = scalar_lea.vmem %s1, 8
      %v691 = vld [vmem:[%s690] sm:$0xf]
      %v692 = vld [vmem:[%s690 + $0x4] sm:$0x3]
      %v695 = vunpack.c.l.b16 %v691
      %v696 = vunpack.c.l.b16 %v692
      %v697 = vpack.c.b16 %v696, %v695
      %v699 = vsel %vm415, %v674, 0
      %v702 = vsel %vm415, %v675, 0
      %v705 = vsel %vm415, %v676, 0
      %v708 = vsel %vm415, %v677, 0
      %v711 = vsel %vm415, %v678, 0
      %v714 = vsel %vm415, %v679, 0
      %v717 = vsel %vm415, %v680, 0
      %v720 = vsel %vm415, %v681, 0
      %v723 = vsel %vm415, %v682, 0
      %v726 = vsel %vm415, %v683, 0
      %v729 = vsel %vm415, %v684, 0
      %v732 = vsel %vm415, %v685, 0
      %v735 = vsel %vm415, %v686, 0
      %v738 = vsel %vm415, %v687, 0
      %v741 = vsel %vm415, %v688, 0
      %v744 = vsel %vm415, %v689, 0
      %vm746 = vcmask 1044480
      %vm747 = vcmask 1045504
      %v748 = vsel %vm746, 4294967295, 65535
      %v749 = vsel %vm747, %v748, 0
      %v751 = vand.u32 %v697, %v749
      %753 = vmatpush.bf16.msra.mxu0 0
      %754 = vmatpush.bf16.msra.mxu0 0
      %755 = vmatpush.bf16.msra.mxu0 0
      %756 = vmatpush.bf16.msra.mxu0 0
      %757 = vmatpush.bf16.msra.mxu0 0
      %758 = vmatpush.bf16.msra.mxu0 0
      %759 = vmatpush.bf16.msra.mxu0 0
      %760 = vmatpush.bf16.msra.mxu0 %v751
      %761 = vmatmul.bf16.gmra.mxu0 %v699
      %v762 = vpop.f32.mrf.mxu0
      %v763 = vadd.f32 0.0, %v762
      %v764 = vpop.f32.mrf.mxu0
      %v765 = vadd.f32 0.0, %v764
      %766 = vmatmul.bf16.gmra.mxu0 %v702
      %v767 = vpop.f32.mrf.mxu0
      %v768 = vadd.f32 0.0, %v767
      %v769 = vpop.f32.mrf.mxu0
      %v770 = vadd.f32 0.0, %v769
      %771 = vmatmul.bf16.gmra.mxu0 %v705
      %v772 = vpop.f32.mrf.mxu0
      %v773 = vadd.f32 0.0, %v772
      %v774 = vpop.f32.mrf.mxu0
      %v775 = vadd.f32 0.0, %v774
      %776 = vmatmul.bf16.gmra.mxu0 %v708
      %v777 = vpop.f32.mrf.mxu0
      %v778 = vadd.f32 0.0, %v777
      %v779 = vpop.f32.mrf.mxu0
      %v780 = vadd.f32 0.0, %v779
      %781 = vmatmul.bf16.gmra.mxu0 %v711
      %v782 = vpop.f32.mrf.mxu0
      %v783 = vadd.f32 0.0, %v782
      %v784 = vpop.f32.mrf.mxu0
      %v785 = vadd.f32 0.0, %v784
      %786 = vmatmul.bf16.gmra.mxu0 %v714
      %v787 = vpop.f32.mrf.mxu0
      %v788 = vadd.f32 0.0, %v787
      %v789 = vpop.f32.mrf.mxu0
      %v790 = vadd.f32 0.0, %v789
      %791 = vmatmul.bf16.gmra.mxu0 %v717
      %v792 = vpop.f32.mrf.mxu0
      %v793 = vadd.f32 0.0, %v792
      %v794 = vpop.f32.mrf.mxu0
      %v795 = vadd.f32 0.0, %v794
      %796 = vmatmul.bf16.gmra.mxu0 %v720
      %v797 = vpop.f32.mrf.mxu0
      %v798 = vadd.f32 0.0, %v797
      %v799 = vpop.f32.mrf.mxu0
      %v800 = vadd.f32 0.0, %v799
      %801 = vmatmul.bf16.gmra.mxu0 %v723
      %v802 = vpop.f32.mrf.mxu0
      %v803 = vadd.f32 0.0, %v802
      %v804 = vpop.f32.mrf.mxu0
      %v805 = vadd.f32 0.0, %v804
      %806 = vmatmul.bf16.gmra.mxu0 %v726
      %v807 = vpop.f32.mrf.mxu0
      %v808 = vadd.f32 0.0, %v807
      %v809 = vpop.f32.mrf.mxu0
      %v810 = vadd.f32 0.0, %v809
      %811 = vmatmul.bf16.gmra.mxu0 %v729
      %v812 = vpop.f32.mrf.mxu0
      %v813 = vadd.f32 0.0, %v812
      %v814 = vpop.f32.mrf.mxu0
      %v815 = vadd.f32 0.0, %v814
      %816 = vmatmul.bf16.gmra.mxu0 %v732
      %v817 = vpop.f32.mrf.mxu0
      %v818 = vadd.f32 0.0, %v817
      %v819 = vpop.f32.mrf.mxu0
      %v820 = vadd.f32 0.0, %v819
      %821 = vmatmul.bf16.gmra.mxu0 %v735
      %v822 = vpop.f32.mrf.mxu0
      %v823 = vadd.f32 0.0, %v822
      %v824 = vpop.f32.mrf.mxu0
      %v825 = vadd.f32 0.0, %v824
      %826 = vmatmul.bf16.gmra.mxu0 %v738
      %v827 = vpop.f32.mrf.mxu0
      %v828 = vadd.f32 0.0, %v827
      %v829 = vpop.f32.mrf.mxu0
      %v830 = vadd.f32 0.0, %v829
      %831 = vmatmul.bf16.gmra.mxu0 %v741
      %v832 = vpop.f32.mrf.mxu0
      %v833 = vadd.f32 0.0, %v832
      %v834 = vpop.f32.mrf.mxu0
      %v835 = vadd.f32 0.0, %v834
      %836 = vmatmul.bf16.gmra.mxu0 %v744
      %v837 = vpop.f32.mrf.mxu0
      %v838 = vadd.f32 0.0, %v837
      %v839 = vpop.f32.mrf.mxu0
      %v840 = vadd.f32 0.0, %v839
      %841 = vdwg.mxu0
      %v844 = vunpack.c.l.b16 %v640
      %v845 = vunpack.c.l.b16 %v641
      %v846 = vpack.c.b16 %v845, %v844
      %v848 = vsel %vm415, %v624, 0
      %v851 = vsel %vm415, %v625, 0
      %v854 = vsel %vm415, %v626, 0
      %v857 = vsel %vm415, %v627, 0
      %v860 = vsel %vm415, %v628, 0
      %v863 = vsel %vm415, %v629, 0
      %v866 = vsel %vm415, %v630, 0
      %v869 = vsel %vm415, %v631, 0
      %v872 = vsel %vm415, %v632, 0
      %v875 = vsel %vm415, %v633, 0
      %v878 = vsel %vm415, %v634, 0
      %v881 = vsel %vm415, %v635, 0
      %v884 = vsel %vm415, %v636, 0
      %v887 = vsel %vm415, %v637, 0
      %v890 = vsel %vm415, %v638, 0
      %v893 = vsel %vm415, %v639, 0
      %v896 = vand.u32 %v846, %v749
      %898 = vmatpush.bf16.msra.mxu0 0
      %899 = vmatpush.bf16.msra.mxu0 0
      %900 = vmatpush.bf16.msra.mxu0 0
      %901 = vmatpush.bf16.msra.mxu0 0
      %902 = vmatpush.bf16.msra.mxu0 0
      %903 = vmatpush.bf16.msra.mxu0 0
      %904 = vmatpush.bf16.msra.mxu0 0
      %905 = vmatpush.bf16.msra.mxu0 %v896
      %906 = vmatmul.bf16.gmra.mxu0 %v848
      %v907 = vpop.f32.mrf.mxu0
      %v908 = vadd.f32 %v763, %v907
      %v909 = vpop.f32.mrf.mxu0
      %v910 = vadd.f32 %v765, %v909
      %911 = vmatmul.bf16.gmra.mxu0 %v851
      %v912 = vpop.f32.mrf.mxu0
      %v913 = vadd.f32 %v768, %v912
      %v914 = vpop.f32.mrf.mxu0
      %v915 = vadd.f32 %v770, %v914
      %916 = vmatmul.bf16.gmra.mxu0 %v854
      %v917 = vpop.f32.mrf.mxu0
      %v918 = vadd.f32 %v773, %v917
      %v919 = vpop.f32.mrf.mxu0
      %v920 = vadd.f32 %v775, %v919
      %921 = vmatmul.bf16.gmra.mxu0 %v857
      %v922 = vpop.f32.mrf.mxu0
      %v923 = vadd.f32 %v778, %v922
      %v924 = vpop.f32.mrf.mxu0
      %v925 = vadd.f32 %v780, %v924
      %926 = vmatmul.bf16.gmra.mxu0 %v860
      %v927 = vpop.f32.mrf.mxu0
      %v928 = vadd.f32 %v783, %v927
      %v929 = vpop.f32.mrf.mxu0
      %v930 = vadd.f32 %v785, %v929
      %931 = vmatmul.bf16.gmra.mxu0 %v863
      %v932 = vpop.f32.mrf.mxu0
      %v933 = vadd.f32 %v788, %v932
      %v934 = vpop.f32.mrf.mxu0
      %v935 = vadd.f32 %v790, %v934
      %936 = vmatmul.bf16.gmra.mxu0 %v866
      %v937 = vpop.f32.mrf.mxu0
      %v938 = vadd.f32 %v793, %v937
      %v939 = vpop.f32.mrf.mxu0
      %v940 = vadd.f32 %v795, %v939
      %941 = vmatmul.bf16.gmra.mxu0 %v869
      %v942 = vpop.f32.mrf.mxu0
      %v943 = vadd.f32 %v798, %v942
      %v944 = vpop.f32.mrf.mxu0
      %v945 = vadd.f32 %v800, %v944
      %946 = vmatmul.bf16.gmra.mxu0 %v872
      %v947 = vpop.f32.mrf.mxu0
      %v948 = vadd.f32 %v803, %v947
      %v949 = vpop.f32.mrf.mxu0
      %v950 = vadd.f32 %v805, %v949
      %951 = vmatmul.bf16.gmra.mxu0 %v875
      %v952 = vpop.f32.mrf.mxu0
      %v953 = vadd.f32 %v808, %v952
      %v954 = vpop.f32.mrf.mxu0
      %v955 = vadd.f32 %v810, %v954
      %956 = vmatmul.bf16.gmra.mxu0 %v878
      %v957 = vpop.f32.mrf.mxu0
      %v958 = vadd.f32 %v813, %v957
      %v959 = vpop.f32.mrf.mxu0
      %v960 = vadd.f32 %v815, %v959
      %961 = vmatmul.bf16.gmra.mxu0 %v881
      %v962 = vpop.f32.mrf.mxu0
      %v963 = vadd.f32 %v818, %v962
      %v964 = vpop.f32.mrf.mxu0
      %v965 = vadd.f32 %v820, %v964
      %966 = vmatmul.bf16.gmra.mxu0 %v884
      %v967 = vpop.f32.mrf.mxu0
      %v968 = vadd.f32 %v823, %v967
      %v969 = vpop.f32.mrf.mxu0
      %v970 = vadd.f32 %v825, %v969
      %971 = vmatmul.bf16.gmra.mxu0 %v887
      %v972 = vpop.f32.mrf.mxu0
      %v973 = vadd.f32 %v828, %v972
      %v974 = vpop.f32.mrf.mxu0
      %v975 = vadd.f32 %v830, %v974
      %976 = vmatmul.bf16.gmra.mxu0 %v890
      %v977 = vpop.f32.mrf.mxu0
      %v978 = vadd.f32 %v833, %v977
      %v979 = vpop.f32.mrf.mxu0
      %v980 = vadd.f32 %v835, %v979
      %981 = vmatmul.bf16.gmra.mxu0 %v893
      %v982 = vpop.f32.mrf.mxu0
      %v983 = vadd.f32 %v838, %v982
      %v984 = vpop.f32.mrf.mxu0
      %v985 = vadd.f32 %v840, %v984
      %986 = vdwg.mxu0
      %v987 = vld [vmem:[#allocation2 + $0x2] sm:$0xff]
      %v988 = vld [vmem:[#allocation2 + $0xa] sm:$0xff]
      %v989 = vld [vmem:[#allocation2 + $0x1a] sm:$0xff]
      %v990 = vld [vmem:[#allocation2 + $0x22] sm:$0xff]
      %v991 = vld [vmem:[#allocation2 + $0x32] sm:$0xff]
      %v992 = vld [vmem:[#allocation2 + $0x3a] sm:$0xff]
      %v993 = vld [vmem:[#allocation2 + $0x4a] sm:$0xff]
      %v994 = vld [vmem:[#allocation2 + $0x52] sm:$0xff]
      %v995 = vld [vmem:[#allocation2 + $0x62] sm:$0xff]
      %v996 = vld [vmem:[#allocation2 + $0x6a] sm:$0xff]
      %v997 = vld [vmem:[#allocation2 + $0x7a] sm:$0xff]
      %v998 = vld [vmem:[#allocation2 + $0x82] sm:$0xff]
      %v999 = vld [vmem:[#allocation2 + $0x92] sm:$0xff]
      %v1000 = vld [vmem:[#allocation2 + $0x9a] sm:$0xff]
      %v1001 = vld [vmem:[#allocation2 + $0xaa] sm:$0xff]
      %v1002 = vld [vmem:[#allocation2 + $0xb2] sm:$0xff]
      %v1003 = vld [vmem:[#allocation2 + $0xc2] sm:$0xff]
      %v1004 = vld [vmem:[#allocation2 + $0xca] sm:$0xff]
      %v1005 = vld [vmem:[#allocation2 + $0xda] sm:$0xff]
      %v1006 = vld [vmem:[#allocation2 + $0xe2] sm:$0xff]
      %v1007 = vld [vmem:[#allocation2 + $0xf2] sm:$0xff]
      %v1008 = vld [vmem:[#allocation2 + $0xfa] sm:$0xff]
      %v1009 = vld [vmem:[#allocation2 + $0x10a] sm:$0xff]
      %v1010 = vld [vmem:[#allocation2 + $0x112] sm:$0xff]
      %v1011 = vld [vmem:[#allocation2 + $0x122] sm:$0xff]
      %v1012 = vld [vmem:[#allocation2 + $0x12a] sm:$0xff]
      %v1013 = vld [vmem:[#allocation2 + $0x13a] sm:$0xff]
      %v1014 = vld [vmem:[#allocation2 + $0x142] sm:$0xff]
      %v1015 = vld [vmem:[#allocation2 + $0x152] sm:$0xff]
      %v1016 = vld [vmem:[#allocation2 + $0x15a] sm:$0xff]
      %v1017 = vld [vmem:[#allocation2 + $0x16a] sm:$0xff]
      %v1018 = vld [vmem:[#allocation2 + $0x172] sm:$0xff]
      %v1019 = vpack.c.bf16 %v988, %v987
      %v1020 = vpack.c.bf16 %v990, %v989
      %v1021 = vpack.c.bf16 %v992, %v991
      %v1022 = vpack.c.bf16 %v994, %v993
      %v1023 = vpack.c.bf16 %v996, %v995
      %v1024 = vpack.c.bf16 %v998, %v997
      %v1025 = vpack.c.bf16 %v1000, %v999
      %v1026 = vpack.c.bf16 %v1002, %v1001
      %v1027 = vpack.c.bf16 %v1004, %v1003
      %v1028 = vpack.c.bf16 %v1006, %v1005
      %v1029 = vpack.c.bf16 %v1008, %v1007
      %v1030 = vpack.c.bf16 %v1010, %v1009
      %v1031 = vpack.c.bf16 %v1012, %v1011
      %v1032 = vpack.c.bf16 %v1014, %v1013
      %v1033 = vpack.c.bf16 %v1016, %v1015
      %v1034 = vpack.c.bf16 %v1018, %v1017
      %s1035 = scalar_lea.vmem %s1, 16
      %v1036 = vld [vmem:[%s1035] sm:$0xf]
      %v1037 = vld [vmem:[%s1035 + $0x4] sm:$0x3]
      %v1040 = vunpack.c.l.b16 %v1036
      %v1041 = vunpack.c.l.b16 %v1037
      %v1042 = vpack.c.b16 %v1041, %v1040
      %v1044 = vsel %vm415, %v1019, 0
      %v1047 = vsel %vm415, %v1020, 0
      %v1050 = vsel %vm415, %v1021, 0
      %v1053 = vsel %vm415, %v1022, 0
      %v1056 = vsel %vm415, %v1023, 0
      %v1059 = vsel %vm415, %v1024, 0
      %v1062 = vsel %vm415, %v1025, 0
      %v1065 = vsel %vm415, %v1026, 0
      %v1068 = vsel %vm415, %v1027, 0
      %v1071 = vsel %vm415, %v1028, 0
      %v1074 = vsel %vm415, %v1029, 0
      %v1077 = vsel %vm415, %v1030, 0
      %v1080 = vsel %vm415, %v1031, 0
      %v1083 = vsel %vm415, %v1032, 0
      %v1086 = vsel %vm415, %v1033, 0
      %v1089 = vsel %vm415, %v1034, 0
      %v1092 = vand.u32 %v1042, %v749
      %1094 = vmatpush.bf16.msra.mxu0 0
      %1095 = vmatpush.bf16.msra.mxu0 0
      %1096 = vmatpush.bf16.msra.mxu0 0
      %1097 = vmatpush.bf16.msra.mxu0 0
      %1098 = vmatpush.bf16.msra.mxu0 0
      %1099 = vmatpush.bf16.msra.mxu0 0
      %1100 = vmatpush.bf16.msra.mxu0 0
      %1101 = vmatpush.bf16.msra.mxu0 %v1092
      %1102 = vmatmul.bf16.gmra.mxu0 %v1044
      %v1103 = vpop.f32.mrf.mxu0
      %v1104 = vadd.f32 0.0, %v1103
      %v1105 = vpop.f32.mrf.mxu0
      %v1106 = vadd.f32 0.0, %v1105
      %1107 = vmatmul.bf16.gmra.mxu0 %v1047
      %v1108 = vpop.f32.mrf.mxu0
      %v1109 = vadd.f32 0.0, %v1108
      %v1110 = vpop.f32.mrf.mxu0
      %v1111 = vadd.f32 0.0, %v1110
      %1112 = vmatmul.bf16.gmra.mxu0 %v1050
      %v1113 = vpop.f32.mrf.mxu0
      %v1114 = vadd.f32 0.0, %v1113
      %v1115 = vpop.f32.mrf.mxu0
      %v1116 = vadd.f32 0.0, %v1115
      %1117 = vmatmul.bf16.gmra.mxu0 %v1053
      %v1118 = vpop.f32.mrf.mxu0
      %v1119 = vadd.f32 0.0, %v1118
      %v1120 = vpop.f32.mrf.mxu0
      %v1121 = vadd.f32 0.0, %v1120
      %1122 = vmatmul.bf16.gmra.mxu0 %v1056
      %v1123 = vpop.f32.mrf.mxu0
      %v1124 = vadd.f32 0.0, %v1123
      %v1125 = vpop.f32.mrf.mxu0
      %v1126 = vadd.f32 0.0, %v1125
      %1127 = vmatmul.bf16.gmra.mxu0 %v1059
      %v1128 = vpop.f32.mrf.mxu0
      %v1129 = vadd.f32 0.0, %v1128
      %v1130 = vpop.f32.mrf.mxu0
      %v1131 = vadd.f32 0.0, %v1130
      %1132 = vmatmul.bf16.gmra.mxu0 %v1062
      %v1133 = vpop.f32.mrf.mxu0
      %v1134 = vadd.f32 0.0, %v1133
      %v1135 = vpop.f32.mrf.mxu0
      %v1136 = vadd.f32 0.0, %v1135
      %1137 = vmatmul.bf16.gmra.mxu0 %v1065
      %v1138 = vpop.f32.mrf.mxu0
      %v1139 = vadd.f32 0.0, %v1138
      %v1140 = vpop.f32.mrf.mxu0
      %v1141 = vadd.f32 0.0, %v1140
      %1142 = vmatmul.bf16.gmra.mxu0 %v1068
      %v1143 = vpop.f32.mrf.mxu0
      %v1144 = vadd.f32 0.0, %v1143
      %v1145 = vpop.f32.mrf.mxu0
      %v1146 = vadd.f32 0.0, %v1145
      %1147 = vmatmul.bf16.gmra.mxu0 %v1071
      %v1148 = vpop.f32.mrf.mxu0
      %v1149 = vadd.f32 0.0, %v1148
      %v1150 = vpop.f32.mrf.mxu0
      %v1151 = vadd.f32 0.0, %v1150
      %1152 = vmatmul.bf16.gmra.mxu0 %v1074
      %v1153 = vpop.f32.mrf.mxu0
      %v1154 = vadd.f32 0.0, %v1153
      %v1155 = vpop.f32.mrf.mxu0
      %v1156 = vadd.f32 0.0, %v1155
      %1157 = vmatmul.bf16.gmra.mxu0 %v1077
      %v1158 = vpop.f32.mrf.mxu0
      %v1159 = vadd.f32 0.0, %v1158
      %v1160 = vpop.f32.mrf.mxu0
      %v1161 = vadd.f32 0.0, %v1160
      %1162 = vmatmul.bf16.gmra.mxu0 %v1080
      %v1163 = vpop.f32.mrf.mxu0
      %v1164 = vadd.f32 0.0, %v1163
      %v1165 = vpop.f32.mrf.mxu0
      %v1166 = vadd.f32 0.0, %v1165
      %1167 = vmatmul.bf16.gmra.mxu0 %v1083
      %v1168 = vpop.f32.mrf.mxu0
      %v1169 = vadd.f32 0.0, %v1168
      %v1170 = vpop.f32.mrf.mxu0
      %v1171 = vadd.f32 0.0, %v1170
      %1172 = vmatmul.bf16.gmra.mxu0 %v1086
      %v1173 = vpop.f32.mrf.mxu0
      %v1174 = vadd.f32 0.0, %v1173
      %v1175 = vpop.f32.mrf.mxu0
      %v1176 = vadd.f32 0.0, %v1175
      %1177 = vmatmul.bf16.gmra.mxu0 %v1089
      %v1178 = vpop.f32.mrf.mxu0
      %v1179 = vadd.f32 0.0, %v1178
      %v1180 = vpop.f32.mrf.mxu0
      %v1181 = vadd.f32 0.0, %v1180
      %1182 = vdwg.mxu0
      %v1183 = vadd.f32 %v908, %v1104
      %v1184 = vadd.f32 %v910, %v1106
      %v1185 = vadd.f32 %v913, %v1109
      %v1186 = vadd.f32 %v915, %v1111
      %v1187 = vadd.f32 %v918, %v1114
      %v1188 = vadd.f32 %v920, %v1116
      %v1189 = vadd.f32 %v923, %v1119
      %v1190 = vadd.f32 %v925, %v1121
      %v1191 = vadd.f32 %v928, %v1124
      %v1192 = vadd.f32 %v930, %v1126
      %v1193 = vadd.f32 %v933, %v1129
      %v1194 = vadd.f32 %v935, %v1131
      %v1195 = vadd.f32 %v938, %v1134
      %v1196 = vadd.f32 %v940, %v1136
      %v1197 = vadd.f32 %v943, %v1139
      %v1198 = vadd.f32 %v945, %v1141
      %v1199 = vadd.f32 %v948, %v1144
      %v1200 = vadd.f32 %v950, %v1146
      %v1201 = vadd.f32 %v953, %v1149
      %v1202 = vadd.f32 %v955, %v1151
      %v1203 = vadd.f32 %v958, %v1154
      %v1204 = vadd.f32 %v960, %v1156
      %v1205 = vadd.f32 %v963, %v1159
      %v1206 = vadd.f32 %v965, %v1161
      %v1207 = vadd.f32 %v968, %v1164
      %v1208 = vadd.f32 %v970, %v1166
      %v1209 = vadd.f32 %v973, %v1169
      %v1210 = vadd.f32 %v975, %v1171
      %v1211 = vadd.f32 %v978, %v1174
      %v1212 = vadd.f32 %v980, %v1176
      %v1213 = vadd.f32 %v983, %v1179
      %v1214 = vadd.f32 %v985, %v1181
      %v1215 = vld [vmem:[%s559] sm:$0xff]
      %v1216 = vld [vmem:[%s559 + $0x8] sm:$0xff]
      %v1217 = vld [vmem:[%s559 + $0x18] sm:$0xff]
      %v1218 = vld [vmem:[%s559 + $0x20] sm:$0xff]
      %v1219 = vld [vmem:[%s559 + $0x30] sm:$0xff]
      %v1220 = vld [vmem:[%s559 + $0x38] sm:$0xff]
      %v1221 = vld [vmem:[%s559 + $0x48] sm:$0xff]
      %v1222 = vld [vmem:[%s559 + $0x50] sm:$0xff]
      %v1223 = vld [vmem:[%s559 + $0x60] sm:$0xff]
      %v1224 = vld [vmem:[%s559 + $0x68] sm:$0xff]
      %v1225 = vld [vmem:[%s559 + $0x78] sm:$0xff]
      %v1226 = vld [vmem:[%s559 + $0x80] sm:$0xff]
      %v1227 = vld [vmem:[%s559 + $0x90] sm:$0xff]
      %v1228 = vld [vmem:[%s559 + $0x98] sm:$0xff]
      %v1229 = vld [vmem:[%s559 + $0xa8] sm:$0xff]
      %v1230 = vld [vmem:[%s559 + $0xb0] sm:$0xff]
      %v1231 = vld [vmem:[%s559 + $0xc0] sm:$0xff]
      %v1232 = vld [vmem:[%s559 + $0xc8] sm:$0xff]
      %v1233 = vld [vmem:[%s559 + $0xd8] sm:$0xff]
      %v1234 = vld [vmem:[%s559 + $0xe0] sm:$0xff]
      %v1235 = vld [vmem:[%s559 + $0xf0] sm:$0xff]
      %v1236 = vld [vmem:[%s559 + $0xf8] sm:$0xff]
      %v1237 = vld [vmem:[%s559 + $0x108] sm:$0xff]
      %v1238 = vld [vmem:[%s559 + $0x110] sm:$0xff]
      %v1239 = vld [vmem:[%s559 + $0x120] sm:$0xff]
      %v1240 = vld [vmem:[%s559 + $0x128] sm:$0xff]
      %v1241 = vld [vmem:[%s559 + $0x138] sm:$0xff]
      %v1242 = vld [vmem:[%s559 + $0x140] sm:$0xff]
      %v1243 = vld [vmem:[%s559 + $0x150] sm:$0xff]
      %v1244 = vld [vmem:[%s559 + $0x158] sm:$0xff]
      %v1245 = vld [vmem:[%s559 + $0x168] sm:$0xff]
      %v1246 = vld [vmem:[%s559 + $0x170] sm:$0xff]
      %v1247 = vpack.c.bf16 %v1216, %v1215
      %v1248 = vpack.c.bf16 %v1218, %v1217
      %v1249 = vpack.c.bf16 %v1220, %v1219
      %v1250 = vpack.c.bf16 %v1222, %v1221
      %v1251 = vpack.c.bf16 %v1224, %v1223
      %v1252 = vpack.c.bf16 %v1226, %v1225
      %v1253 = vpack.c.bf16 %v1228, %v1227
      %v1254 = vpack.c.bf16 %v1230, %v1229
      %v1255 = vpack.c.bf16 %v1232, %v1231
      %v1256 = vpack.c.bf16 %v1234, %v1233
      %v1257 = vpack.c.bf16 %v1236, %v1235
      %v1258 = vpack.c.bf16 %v1238, %v1237
      %v1259 = vpack.c.bf16 %v1240, %v1239
      %v1260 = vpack.c.bf16 %v1242, %v1241
      %v1261 = vpack.c.bf16 %v1244, %v1243
      %v1262 = vpack.c.bf16 %v1246, %v1245
      %s1263 = scalar_lea.vmem %s1, 24
      %v1264 = vld [vmem:[%s1263] sm:$0xf]
      %v1265 = vld [vmem:[%s1263 + $0x4] sm:$0x3]
      %v1268 = vunpack.c.l.b16 %v1264
      %v1269 = vunpack.c.l.b16 %v1265
      %v1270 = vpack.c.b16 %v1269, %v1268
      %v1272 = vsel %vm415, %v1247, 0
      %v1275 = vsel %vm415, %v1248, 0
      %v1278 = vsel %vm415, %v1249, 0
      %v1281 = vsel %vm415, %v1250, 0
      %v1284 = vsel %vm415, %v1251, 0
      %v1287 = vsel %vm415, %v1252, 0
      %v1290 = vsel %vm415, %v1253, 0
      %v1293 = vsel %vm415, %v1254, 0
      %v1296 = vsel %vm415, %v1255, 0
      %v1299 = vsel %vm415, %v1256, 0
      %v1302 = vsel %vm415, %v1257, 0
      %v1305 = vsel %vm415, %v1258, 0
      %v1308 = vsel %vm415, %v1259, 0
      %v1311 = vsel %vm415, %v1260, 0
      %v1314 = vsel %vm415, %v1261, 0
      %v1317 = vsel %vm415, %v1262, 0
      %v1320 = vand.u32 %v1270, %v749
      %1322 = vmatpush.bf16.msra.mxu0 0
      %1323 = vmatpush.bf16.msra.mxu0 0
      %1324 = vmatpush.bf16.msra.mxu0 0
      %1325 = vmatpush.bf16.msra.mxu0 0
      %1326 = vmatpush.bf16.msra.mxu0 0
      %1327 = vmatpush.bf16.msra.mxu0 0
      %1328 = vmatpush.bf16.msra.mxu0 0
      %1329 = vmatpush.bf16.msra.mxu0 %v1320
      %1330 = vmatmul.bf16.gmra.mxu0 %v1272
      %v1331 = vpop.f32.mrf.mxu0
      %v1332 = vadd.f32 0.0, %v1331
      %v1333 = vpop.f32.mrf.mxu0
      %v1334 = vadd.f32 0.0, %v1333
      %1335 = vmatmul.bf16.gmra.mxu0 %v1275
      %v1336 = vpop.f32.mrf.mxu0
      %v1337 = vadd.f32 0.0, %v1336
      %v1338 = vpop.f32.mrf.mxu0
      %v1339 = vadd.f32 0.0, %v1338
      %1340 = vmatmul.bf16.gmra.mxu0 %v1278
      %v1341 = vpop.f32.mrf.mxu0
      %v1342 = vadd.f32 0.0, %v1341
      %v1343 = vpop.f32.mrf.mxu0
      %v1344 = vadd.f32 0.0, %v1343
      %1345 = vmatmul.bf16.gmra.mxu0 %v1281
      %v1346 = vpop.f32.mrf.mxu0
      %v1347 = vadd.f32 0.0, %v1346
      %v1348 = vpop.f32.mrf.mxu0
      %v1349 = vadd.f32 0.0, %v1348
      %1350 = vmatmul.bf16.gmra.mxu0 %v1284
      %v1351 = vpop.f32.mrf.mxu0
      %v1352 = vadd.f32 0.0, %v1351
      %v1353 = vpop.f32.mrf.mxu0
      %v1354 = vadd.f32 0.0, %v1353
      %1355 = vmatmul.bf16.gmra.mxu0 %v1287
      %v1356 = vpop.f32.mrf.mxu0
      %v1357 = vadd.f32 0.0, %v1356
      %v1358 = vpop.f32.mrf.mxu0
      %v1359 = vadd.f32 0.0, %v1358
      %1360 = vmatmul.bf16.gmra.mxu0 %v1290
      %v1361 = vpop.f32.mrf.mxu0
      %v1362 = vadd.f32 0.0, %v1361
      %v1363 = vpop.f32.mrf.mxu0
      %v1364 = vadd.f32 0.0, %v1363
      %1365 = vmatmul.bf16.gmra.mxu0 %v1293
      %v1366 = vpop.f32.mrf.mxu0
      %v1367 = vadd.f32 0.0, %v1366
      %v1368 = vpop.f32.mrf.mxu0
      %v1369 = vadd.f32 0.0, %v1368
      %1370 = vmatmul.bf16.gmra.mxu0 %v1296
      %v1371 = vpop.f32.mrf.mxu0
      %v1372 = vadd.f32 0.0, %v1371
      %v1373 = vpop.f32.mrf.mxu0
      %v1374 = vadd.f32 0.0, %v1373
      %1375 = vmatmul.bf16.gmra.mxu0 %v1299
      %v1376 = vpop.f32.mrf.mxu0
      %v1377 = vadd.f32 0.0, %v1376
      %v1378 = vpop.f32.mrf.mxu0
      %v1379 = vadd.f32 0.0, %v1378
      %1380 = vmatmul.bf16.gmra.mxu0 %v1302
      %v1381 = vpop.f32.mrf.mxu0
      %v1382 = vadd.f32 0.0, %v1381
      %v1383 = vpop.f32.mrf.mxu0
      %v1384 = vadd.f32 0.0, %v1383
      %1385 = vmatmul.bf16.gmra.mxu0 %v1305
      %v1386 = vpop.f32.mrf.mxu0
      %v1387 = vadd.f32 0.0, %v1386
      %v1388 = vpop.f32.mrf.mxu0
      %v1389 = vadd.f32 0.0, %v1388
      %1390 = vmatmul.bf16.gmra.mxu0 %v1308
      %v1391 = vpop.f32.mrf.mxu0
      %v1392 = vadd.f32 0.0, %v1391
      %v1393 = vpop.f32.mrf.mxu0
      %v1394 = vadd.f32 0.0, %v1393
      %1395 = vmatmul.bf16.gmra.mxu0 %v1311
      %v1396 = vpop.f32.mrf.mxu0
      %v1397 = vadd.f32 0.0, %v1396
      %v1398 = vpop.f32.mrf.mxu0
      %v1399 = vadd.f32 0.0, %v1398
      %1400 = vmatmul.bf16.gmra.mxu0 %v1314
      %v1401 = vpop.f32.mrf.mxu0
      %v1402 = vadd.f32 0.0, %v1401
      %v1403 = vpop.f32.mrf.mxu0
      %v1404 = vadd.f32 0.0, %v1403
      %1405 = vmatmul.bf16.gmra.mxu0 %v1317
      %v1406 = vpop.f32.mrf.mxu0
      %v1407 = vadd.f32 0.0, %v1406
      %v1408 = vpop.f32.mrf.mxu0
      %v1409 = vadd.f32 0.0, %v1408
      %1410 = vdwg.mxu0
      %v1411 = vadd.f32 %v1183, %v1332
      %v1412 = vadd.f32 %v1184, %v1334
      %v1413 = vadd.f32 %v1185, %v1337
      %v1414 = vadd.f32 %v1186, %v1339
      %v1415 = vadd.f32 %v1187, %v1342
      %v1416 = vadd.f32 %v1188, %v1344
      %v1417 = vadd.f32 %v1189, %v1347
      %v1418 = vadd.f32 %v1190, %v1349
      %v1419 = vadd.f32 %v1191, %v1352
      %v1420 = vadd.f32 %v1192, %v1354
      %v1421 = vadd.f32 %v1193, %v1357
      %v1422 = vadd.f32 %v1194, %v1359
      %v1423 = vadd.f32 %v1195, %v1362
      %v1424 = vadd.f32 %v1196, %v1364
      %v1425 = vadd.f32 %v1197, %v1367
      %v1426 = vadd.f32 %v1198, %v1369
      %v1427 = vadd.f32 %v1199, %v1372
      %v1428 = vadd.f32 %v1200, %v1374
      %v1429 = vadd.f32 %v1201, %v1377
      %v1430 = vadd.f32 %v1202, %v1379
      %v1431 = vadd.f32 %v1203, %v1382
      %v1432 = vadd.f32 %v1204, %v1384
      %v1433 = vadd.f32 %v1205, %v1387
      %v1434 = vadd.f32 %v1206, %v1389
      %v1435 = vadd.f32 %v1207, %v1392
      %v1436 = vadd.f32 %v1208, %v1394
      %v1437 = vadd.f32 %v1209, %v1397
      %v1438 = vadd.f32 %v1210, %v1399
      %v1439 = vadd.f32 %v1211, %v1402
      %v1440 = vadd.f32 %v1212, %v1404
      %v1441 = vadd.f32 %v1213, %v1407
      %v1442 = vadd.f32 %v1214, %v1409
      %v1443 = vld [vmem:[%s559 + $0x1] sm:$0xff]
      %v1444 = vld [vmem:[%s559 + $0x9] sm:$0xff]
      %v1445 = vld [vmem:[%s559 + $0x19] sm:$0xff]
      %v1446 = vld [vmem:[%s559 + $0x21] sm:$0xff]
      %v1447 = vld [vmem:[%s559 + $0x31] sm:$0xff]
      %v1448 = vld [vmem:[%s559 + $0x39] sm:$0xff]
      %v1449 = vld [vmem:[%s559 + $0x49] sm:$0xff]
      %v1450 = vld [vmem:[%s559 + $0x51] sm:$0xff]
      %v1451 = vld [vmem:[%s559 + $0x61] sm:$0xff]
      %v1452 = vld [vmem:[%s559 + $0x69] sm:$0xff]
      %v1453 = vld [vmem:[%s559 + $0x79] sm:$0xff]
      %v1454 = vld [vmem:[%s559 + $0x81] sm:$0xff]
      %v1455 = vld [vmem:[%s559 + $0x91] sm:$0xff]
      %v1456 = vld [vmem:[%s559 + $0x99] sm:$0xff]
      %v1457 = vld [vmem:[%s559 + $0xa9] sm:$0xff]
      %v1458 = vld [vmem:[%s559 + $0xb1] sm:$0xff]
      %v1459 = vld [vmem:[%s559 + $0xc1] sm:$0xff]
      %v1460 = vld [vmem:[%s559 + $0xc9] sm:$0xff]
      %v1461 = vld [vmem:[%s559 + $0xd9] sm:$0xff]
      %v1462 = vld [vmem:[%s559 + $0xe1] sm:$0xff]
      %v1463 = vld [vmem:[%s559 + $0xf1] sm:$0xff]
      %v1464 = vld [vmem:[%s559 + $0xf9] sm:$0xff]
      %v1465 = vld [vmem:[%s559 + $0x109] sm:$0xff]
      %v1466 = vld [vmem:[%s559 + $0x111] sm:$0xff]
      %v1467 = vld [vmem:[%s559 + $0x121] sm:$0xff]
      %v1468 = vld [vmem:[%s559 + $0x129] sm:$0xff]
      %v1469 = vld [vmem:[%s559 + $0x139] sm:$0xff]
      %v1470 = vld [vmem:[%s559 + $0x141] sm:$0xff]
      %v1471 = vld [vmem:[%s559 + $0x151] sm:$0xff]
      %v1472 = vld [vmem:[%s559 + $0x159] sm:$0xff]
      %v1473 = vld [vmem:[%s559 + $0x169] sm:$0xff]
      %v1474 = vld [vmem:[%s559 + $0x171] sm:$0xff]
      %v1475 = vpack.c.bf16 %v1444, %v1443
      %v1476 = vpack.c.bf16 %v1446, %v1445
      %v1477 = vpack.c.bf16 %v1448, %v1447
      %v1478 = vpack.c.bf16 %v1450, %v1449
      %v1479 = vpack.c.bf16 %v1452, %v1451
      %v1480 = vpack.c.bf16 %v1454, %v1453
      %v1481 = vpack.c.bf16 %v1456, %v1455
      %v1482 = vpack.c.bf16 %v1458, %v1457
      %v1483 = vpack.c.bf16 %v1460, %v1459
      %v1484 = vpack.c.bf16 %v1462, %v1461
      %v1485 = vpack.c.bf16 %v1464, %v1463
      %v1486 = vpack.c.bf16 %v1466, %v1465
      %v1487 = vpack.c.bf16 %v1468, %v1467
      %v1488 = vpack.c.bf16 %v1470, %v1469
      %v1489 = vpack.c.bf16 %v1472, %v1471
      %v1490 = vpack.c.bf16 %v1474, %v1473
      %s1491 = scalar_lea.vmem %s1, 32
      %v1492 = vld [vmem:[%s1491] sm:$0xf]
      %v1493 = vld [vmem:[%s1491 + $0x4] sm:$0x3]
      %v1496 = vunpack.c.l.b16 %v1492
      %v1497 = vunpack.c.l.b16 %v1493
      %v1498 = vpack.c.b16 %v1497, %v1496
      %v1500 = vsel %vm415, %v1475, 0
      %v1503 = vsel %vm415, %v1476, 0
      %v1506 = vsel %vm415, %v1477, 0
      %v1509 = vsel %vm415, %v1478, 0
      %v1512 = vsel %vm415, %v1479, 0
      %v1515 = vsel %vm415, %v1480, 0
      %v1518 = vsel %vm415, %v1481, 0
      %v1521 = vsel %vm415, %v1482, 0
      %v1524 = vsel %vm415, %v1483, 0
      %v1527 = vsel %vm415, %v1484, 0
      %v1530 = vsel %vm415, %v1485, 0
      %v1533 = vsel %vm415, %v1486, 0
      %v1536 = vsel %vm415, %v1487, 0
      %v1539 = vsel %vm415, %v1488, 0
      %v1542 = vsel %vm415, %v1489, 0
      %v1545 = vsel %vm415, %v1490, 0
      %v1548 = vand.u32 %v1498, %v749
      %1550 = vmatpush.bf16.msra.mxu0 0
      %1551 = vmatpush.bf16.msra.mxu0 0
      %1552 = vmatpush.bf16.msra.mxu0 0
      %1553 = vmatpush.bf16.msra.mxu0 0
      %1554 = vmatpush.bf16.msra.mxu0 0
      %1555 = vmatpush.bf16.msra.mxu0 0
      %1556 = vmatpush.bf16.msra.mxu0 0
      %1557 = vmatpush.bf16.msra.mxu0 %v1548
      %1558 = vmatmul.bf16.gmra.mxu0 %v1500
      %v1559 = vpop.f32.mrf.mxu0
      %v1560 = vadd.f32 0.0, %v1559
      %v1561 = vpop.f32.mrf.mxu0
      %v1562 = vadd.f32 0.0, %v1561
      %1563 = vmatmul.bf16.gmra.mxu0 %v1503
      %v1564 = vpop.f32.mrf.mxu0
      %v1565 = vadd.f32 0.0, %v1564
      %v1566 = vpop.f32.mrf.mxu0
      %v1567 = vadd.f32 0.0, %v1566
      %1568 = vmatmul.bf16.gmra.mxu0 %v1506
      %v1569 = vpop.f32.mrf.mxu0
      %v1570 = vadd.f32 0.0, %v1569
      %v1571 = vpop.f32.mrf.mxu0
      %v1572 = vadd.f32 0.0, %v1571
      %1573 = vmatmul.bf16.gmra.mxu0 %v1509
      %v1574 = vpop.f32.mrf.mxu0
      %v1575 = vadd.f32 0.0, %v1574
      %v1576 = vpop.f32.mrf.mxu0
      %v1577 = vadd.f32 0.0, %v1576
      %1578 = vmatmul.bf16.gmra.mxu0 %v1512
      %v1579 = vpop.f32.mrf.mxu0
      %v1580 = vadd.f32 0.0, %v1579
      %v1581 = vpop.f32.mrf.mxu0
      %v1582 = vadd.f32 0.0, %v1581
      %1583 = vmatmul.bf16.gmra.mxu0 %v1515
      %v1584 = vpop.f32.mrf.mxu0
      %v1585 = vadd.f32 0.0, %v1584
      %v1586 = vpop.f32.mrf.mxu0
      %v1587 = vadd.f32 0.0, %v1586
      %1588 = vmatmul.bf16.gmra.mxu0 %v1518
      %v1589 = vpop.f32.mrf.mxu0
      %v1590 = vadd.f32 0.0, %v1589
      %v1591 = vpop.f32.mrf.mxu0
      %v1592 = vadd.f32 0.0, %v1591
      %1593 = vmatmul.bf16.gmra.mxu0 %v1521
      %v1594 = vpop.f32.mrf.mxu0
      %v1595 = vadd.f32 0.0, %v1594
      %v1596 = vpop.f32.mrf.mxu0
      %v1597 = vadd.f32 0.0, %v1596
      %1598 = vmatmul.bf16.gmra.mxu0 %v1524
      %v1599 = vpop.f32.mrf.mxu0
      %v1600 = vadd.f32 0.0, %v1599
      %v1601 = vpop.f32.mrf.mxu0
      %v1602 = vadd.f32 0.0, %v1601
      %1603 = vmatmul.bf16.gmra.mxu0 %v1527
      %v1604 = vpop.f32.mrf.mxu0
      %v1605 = vadd.f32 0.0, %v1604
      %v1606 = vpop.f32.mrf.mxu0
      %v1607 = vadd.f32 0.0, %v1606
      %1608 = vmatmul.bf16.gmra.mxu0 %v1530
      %v1609 = vpop.f32.mrf.mxu0
      %v1610 = vadd.f32 0.0, %v1609
      %v1611 = vpop.f32.mrf.mxu0
      %v1612 = vadd.f32 0.0, %v1611
      %1613 = vmatmul.bf16.gmra.mxu0 %v1533
      %v1614 = vpop.f32.mrf.mxu0
      %v1615 = vadd.f32 0.0, %v1614
      %v1616 = vpop.f32.mrf.mxu0
      %v1617 = vadd.f32 0.0, %v1616
      %1618 = vmatmul.bf16.gmra.mxu0 %v1536
      %v1619 = vpop.f32.mrf.mxu0
      %v1620 = vadd.f32 0.0, %v1619
      %v1621 = vpop.f32.mrf.mxu0
      %v1622 = vadd.f32 0.0, %v1621
      %1623 = vmatmul.bf16.gmra.mxu0 %v1539
      %v1624 = vpop.f32.mrf.mxu0
      %v1625 = vadd.f32 0.0, %v1624
      %v1626 = vpop.f32.mrf.mxu0
      %v1627 = vadd.f32 0.0, %v1626
      %1628 = vmatmul.bf16.gmra.mxu0 %v1542
      %v1629 = vpop.f32.mrf.mxu0
      %v1630 = vadd.f32 0.0, %v1629
      %v1631 = vpop.f32.mrf.mxu0
      %v1632 = vadd.f32 0.0, %v1631
      %1633 = vmatmul.bf16.gmra.mxu0 %v1545
      %v1634 = vpop.f32.mrf.mxu0
      %v1635 = vadd.f32 0.0, %v1634
      %v1636 = vpop.f32.mrf.mxu0
      %v1637 = vadd.f32 0.0, %v1636
      %1638 = vdwg.mxu0
      %v1639 = vadd.f32 %v1411, %v1560
      %v1640 = vadd.f32 %v1412, %v1562
      %v1641 = vadd.f32 %v1413, %v1565
      %v1642 = vadd.f32 %v1414, %v1567
      %v1643 = vadd.f32 %v1415, %v1570
      %v1644 = vadd.f32 %v1416, %v1572
      %v1645 = vadd.f32 %v1417, %v1575
      %v1646 = vadd.f32 %v1418, %v1577
      %v1647 = vadd.f32 %v1419, %v1580
      %v1648 = vadd.f32 %v1420, %v1582
      %v1649 = vadd.f32 %v1421, %v1585
      %v1650 = vadd.f32 %v1422, %v1587
      %v1651 = vadd.f32 %v1423, %v1590
      %v1652 = vadd.f32 %v1424, %v1592
      %v1653 = vadd.f32 %v1425, %v1595
      %v1654 = vadd.f32 %v1426, %v1597
      %v1655 = vadd.f32 %v1427, %v1600
      %v1656 = vadd.f32 %v1428, %v1602
      %v1657 = vadd.f32 %v1429, %v1605
      %v1658 = vadd.f32 %v1430, %v1607
      %v1659 = vadd.f32 %v1431, %v1610
      %v1660 = vadd.f32 %v1432, %v1612
      %v1661 = vadd.f32 %v1433, %v1615
      %v1662 = vadd.f32 %v1434, %v1617
      %v1663 = vadd.f32 %v1435, %v1620
      %v1664 = vadd.f32 %v1436, %v1622
      %v1665 = vadd.f32 %v1437, %v1625
      %v1666 = vadd.f32 %v1438, %v1627
      %v1667 = vadd.f32 %v1439, %v1630
      %v1668 = vadd.f32 %v1440, %v1632
      %v1669 = vadd.f32 %v1441, %v1635
      %v1670 = vadd.f32 %v1442, %v1637
      %v1671 = vld [vmem:[%s559 + $0x2] sm:$0xff]
      %v1672 = vld [vmem:[%s559 + $0xa] sm:$0xff]
      %v1673 = vld [vmem:[%s559 + $0x1a] sm:$0xff]
      %v1674 = vld [vmem:[%s559 + $0x22] sm:$0xff]
      %v1675 = vld [vmem:[%s559 + $0x32] sm:$0xff]
      %v1676 = vld [vmem:[%s559 + $0x3a] sm:$0xff]
      %v1677 = vld [vmem:[%s559 + $0x4a] sm:$0xff]
      %v1678 = vld [vmem:[%s559 + $0x52] sm:$0xff]
      %v1679 = vld [vmem:[%s559 + $0x62] sm:$0xff]
      %v1680 = vld [vmem:[%s559 + $0x6a] sm:$0xff]
      %v1681 = vld [vmem:[%s559 + $0x7a] sm:$0xff]
      %v1682 = vld [vmem:[%s559 + $0x82] sm:$0xff]
      %v1683 = vld [vmem:[%s559 + $0x92] sm:$0xff]
      %v1684 = vld [vmem:[%s559 + $0x9a] sm:$0xff]
      %v1685 = vld [vmem:[%s559 + $0xaa] sm:$0xff]
      %v1686 = vld [vmem:[%s559 + $0xb2] sm:$0xff]
      %v1687 = vld [vmem:[%s559 + $0xc2] sm:$0xff]
      %v1688 = vld [vmem:[%s559 + $0xca] sm:$0xff]
      %v1689 = vld [vmem:[%s559 + $0xda] sm:$0xff]
      %v1690 = vld [vmem:[%s559 + $0xe2] sm:$0xff]
      %v1691 = vld [vmem:[%s559 + $0xf2] sm:$0xff]
      %v1692 = vld [vmem:[%s559 + $0xfa] sm:$0xff]
      %v1693 = vld [vmem:[%s559 + $0x10a] sm:$0xff]
      %v1694 = vld [vmem:[%s559 + $0x112] sm:$0xff]
      %v1695 = vld [vmem:[%s559 + $0x122] sm:$0xff]
      %v1696 = vld [vmem:[%s559 + $0x12a] sm:$0xff]
      %v1697 = vld [vmem:[%s559 + $0x13a] sm:$0xff]
      %v1698 = vld [vmem:[%s559 + $0x142] sm:$0xff]
      %v1699 = vld [vmem:[%s559 + $0x152] sm:$0xff]
      %v1700 = vld [vmem:[%s559 + $0x15a] sm:$0xff]
      %v1701 = vld [vmem:[%s559 + $0x16a] sm:$0xff]
      %v1702 = vld [vmem:[%s559 + $0x172] sm:$0xff]
      %v1703 = vpack.c.bf16 %v1672, %v1671
      %v1704 = vpack.c.bf16 %v1674, %v1673
      %v1705 = vpack.c.bf16 %v1676, %v1675
      %v1706 = vpack.c.bf16 %v1678, %v1677
      %v1707 = vpack.c.bf16 %v1680, %v1679
      %v1708 = vpack.c.bf16 %v1682, %v1681
      %v1709 = vpack.c.bf16 %v1684, %v1683
      %v1710 = vpack.c.bf16 %v1686, %v1685
      %v1711 = vpack.c.bf16 %v1688, %v1687
      %v1712 = vpack.c.bf16 %v1690, %v1689
      %v1713 = vpack.c.bf16 %v1692, %v1691
      %v1714 = vpack.c.bf16 %v1694, %v1693
      %v1715 = vpack.c.bf16 %v1696, %v1695
      %v1716 = vpack.c.bf16 %v1698, %v1697
      %v1717 = vpack.c.bf16 %v1700, %v1699
      %v1718 = vpack.c.bf16 %v1702, %v1701
      %s1719 = scalar_lea.vmem %s1, 40
      %v1720 = vld [vmem:[%s1719] sm:$0xf]
      %v1721 = vld [vmem:[%s1719 + $0x4] sm:$0x3]
      %v1724 = vunpack.c.l.b16 %v1720
      %v1725 = vunpack.c.l.b16 %v1721
      %v1726 = vpack.c.b16 %v1725, %v1724
      %v1728 = vsel %vm415, %v1703, 0
      %v1731 = vsel %vm415, %v1704, 0
      %v1734 = vsel %vm415, %v1705, 0
      %v1737 = vsel %vm415, %v1706, 0
      %v1740 = vsel %vm415, %v1707, 0
      %v1743 = vsel %vm415, %v1708, 0
      %v1746 = vsel %vm415, %v1709, 0
      %v1749 = vsel %vm415, %v1710, 0
      %v1752 = vsel %vm415, %v1711, 0
      %v1755 = vsel %vm415, %v1712, 0
      %v1758 = vsel %vm415, %v1713, 0
      %v1761 = vsel %vm415, %v1714, 0
      %v1764 = vsel %vm415, %v1715, 0
      %v1767 = vsel %vm415, %v1716, 0
      %v1770 = vsel %vm415, %v1717, 0
      %v1773 = vsel %vm415, %v1718, 0
      %v1776 = vand.u32 %v1726, %v749
      %1778 = vmatpush.bf16.msra.mxu0 0
      %1779 = vmatpush.bf16.msra.mxu0 0
      %1780 = vmatpush.bf16.msra.mxu0 0
      %1781 = vmatpush.bf16.msra.mxu0 0
      %1782 = vmatpush.bf16.msra.mxu0 0
      %1783 = vmatpush.bf16.msra.mxu0 0
      %1784 = vmatpush.bf16.msra.mxu0 0
      %1785 = vmatpush.bf16.msra.mxu0 %v1776
      %1786 = vmatmul.bf16.gmra.mxu0 %v1728
      %v1787 = vpop.f32.mrf.mxu0
      %v1788 = vadd.f32 0.0, %v1787
      %v1789 = vpop.f32.mrf.mxu0
      %v1790 = vadd.f32 0.0, %v1789
      %1791 = vmatmul.bf16.gmra.mxu0 %v1731
      %v1792 = vpop.f32.mrf.mxu0
      %v1793 = vadd.f32 0.0, %v1792
      %v1794 = vpop.f32.mrf.mxu0
      %v1795 = vadd.f32 0.0, %v1794
      %1796 = vmatmul.bf16.gmra.mxu0 %v1734
      %v1797 = vpop.f32.mrf.mxu0
      %v1798 = vadd.f32 0.0, %v1797
      %v1799 = vpop.f32.mrf.mxu0
      %v1800 = vadd.f32 0.0, %v1799
      %1801 = vmatmul.bf16.gmra.mxu0 %v1737
      %v1802 = vpop.f32.mrf.mxu0
      %v1803 = vadd.f32 0.0, %v1802
      %v1804 = vpop.f32.mrf.mxu0
      %v1805 = vadd.f32 0.0, %v1804
      %1806 = vmatmul.bf16.gmra.mxu0 %v1740
      %v1807 = vpop.f32.mrf.mxu0
      %v1808 = vadd.f32 0.0, %v1807
      %v1809 = vpop.f32.mrf.mxu0
      %v1810 = vadd.f32 0.0, %v1809
      %1811 = vmatmul.bf16.gmra.mxu0 %v1743
      %v1812 = vpop.f32.mrf.mxu0
      %v1813 = vadd.f32 0.0, %v1812
      %v1814 = vpop.f32.mrf.mxu0
      %v1815 = vadd.f32 0.0, %v1814
      %1816 = vmatmul.bf16.gmra.mxu0 %v1746
      %v1817 = vpop.f32.mrf.mxu0
      %v1818 = vadd.f32 0.0, %v1817
      %v1819 = vpop.f32.mrf.mxu0
      %v1820 = vadd.f32 0.0, %v1819
      %1821 = vmatmul.bf16.gmra.mxu0 %v1749
      %v1822 = vpop.f32.mrf.mxu0
      %v1823 = vadd.f32 0.0, %v1822
      %v1824 = vpop.f32.mrf.mxu0
      %v1825 = vadd.f32 0.0, %v1824
      %1826 = vmatmul.bf16.gmra.mxu0 %v1752
      %v1827 = vpop.f32.mrf.mxu0
      %v1828 = vadd.f32 0.0, %v1827
      %v1829 = vpop.f32.mrf.mxu0
      %v1830 = vadd.f32 0.0, %v1829
      %1831 = vmatmul.bf16.gmra.mxu0 %v1755
      %v1832 = vpop.f32.mrf.mxu0
      %v1833 = vadd.f32 0.0, %v1832
      %v1834 = vpop.f32.mrf.mxu0
      %v1835 = vadd.f32 0.0, %v1834
      %1836 = vmatmul.bf16.gmra.mxu0 %v1758
      %v1837 = vpop.f32.mrf.mxu0
      %v1838 = vadd.f32 0.0, %v1837
      %v1839 = vpop.f32.mrf.mxu0
      %v1840 = vadd.f32 0.0, %v1839
      %1841 = vmatmul.bf16.gmra.mxu0 %v1761
      %v1842 = vpop.f32.mrf.mxu0
      %v1843 = vadd.f32 0.0, %v1842
      %v1844 = vpop.f32.mrf.mxu0
      %v1845 = vadd.f32 0.0, %v1844
      %1846 = vmatmul.bf16.gmra.mxu0 %v1764
      %v1847 = vpop.f32.mrf.mxu0
      %v1848 = vadd.f32 0.0, %v1847
      %v1849 = vpop.f32.mrf.mxu0
      %v1850 = vadd.f32 0.0, %v1849
      %1851 = vmatmul.bf16.gmra.mxu0 %v1767
      %v1852 = vpop.f32.mrf.mxu0
      %v1853 = vadd.f32 0.0, %v1852
      %v1854 = vpop.f32.mrf.mxu0
      %v1855 = vadd.f32 0.0, %v1854
      %1856 = vmatmul.bf16.gmra.mxu0 %v1770
      %v1857 = vpop.f32.mrf.mxu0
      %v1858 = vadd.f32 0.0, %v1857
      %v1859 = vpop.f32.mrf.mxu0
      %v1860 = vadd.f32 0.0, %v1859
      %1861 = vmatmul.bf16.gmra.mxu0 %v1773
      %v1862 = vpop.f32.mrf.mxu0
      %v1863 = vadd.f32 0.0, %v1862
      %v1864 = vpop.f32.mrf.mxu0
      %v1865 = vadd.f32 0.0, %v1864
      %1866 = vdwg.mxu0
      %v1867 = vadd.f32 %v1639, %v1788
      %v1868 = vadd.f32 %v1640, %v1790
      %v1869 = vadd.f32 %v1641, %v1793
      %v1870 = vadd.f32 %v1642, %v1795
      %v1871 = vadd.f32 %v1643, %v1798
      %v1872 = vadd.f32 %v1644, %v1800
      %v1873 = vadd.f32 %v1645, %v1803
      %v1874 = vadd.f32 %v1646, %v1805
      %v1875 = vadd.f32 %v1647, %v1808
      %v1876 = vadd.f32 %v1648, %v1810
      %v1877 = vadd.f32 %v1649, %v1813
      %v1878 = vadd.f32 %v1650, %v1815
      %v1879 = vadd.f32 %v1651, %v1818
      %v1880 = vadd.f32 %v1652, %v1820
      %v1881 = vadd.f32 %v1653, %v1823
      %v1882 = vadd.f32 %v1654, %v1825
      %v1883 = vadd.f32 %v1655, %v1828
      %v1884 = vadd.f32 %v1656, %v1830
      %v1885 = vadd.f32 %v1657, %v1833
      %v1886 = vadd.f32 %v1658, %v1835
      %v1887 = vadd.f32 %v1659, %v1838
      %v1888 = vadd.f32 %v1660, %v1840
      %v1889 = vadd.f32 %v1661, %v1843
      %v1890 = vadd.f32 %v1662, %v1845
      %v1891 = vadd.f32 %v1663, %v1848
      %v1892 = vadd.f32 %v1664, %v1850
      %v1893 = vadd.f32 %v1665, %v1853
      %v1894 = vadd.f32 %v1666, %v1855
      %v1895 = vadd.f32 %v1667, %v1858
      %v1896 = vadd.f32 %v1668, %v1860
      %v1897 = vadd.f32 %v1669, %v1863
      %v1898 = vadd.f32 %v1670, %v1865
      %s1899 = scalar_lea.vmem [#allocation2], 48
      %v1900 = vld [vmem:[%s1899] sm:$0xff]
      %v1901 = vld [vmem:[%s1899 + $0x8] sm:$0xff]
      %v1902 = vld [vmem:[%s1899 + $0x18] sm:$0xff]
      %v1903 = vld [vmem:[%s1899 + $0x20] sm:$0xff]
      %v1904 = vld [vmem:[%s1899 + $0x30] sm:$0xff]
      %v1905 = vld [vmem:[%s1899 + $0x38] sm:$0xff]
      %v1906 = vld [vmem:[%s1899 + $0x48] sm:$0xff]
      %v1907 = vld [vmem:[%s1899 + $0x50] sm:$0xff]
      %v1908 = vld [vmem:[%s1899 + $0x60] sm:$0xff]
      %v1909 = vld [vmem:[%s1899 + $0x68] sm:$0xff]
      %v1910 = vld [vmem:[%s1899 + $0x78] sm:$0xff]
      %v1911 = vld [vmem:[%s1899 + $0x80] sm:$0xff]
      %v1912 = vld [vmem:[%s1899 + $0x90] sm:$0xff]
      %v1913 = vld [vmem:[%s1899 + $0x98] sm:$0xff]
      %v1914 = vld [vmem:[%s1899 + $0xa8] sm:$0xff]
      %v1915 = vld [vmem:[%s1899 + $0xb0] sm:$0xff]
      %v1916 = vld [vmem:[%s1899 + $0xc0] sm:$0xff]
      %v1917 = vld [vmem:[%s1899 + $0xc8] sm:$0xff]
      %v1918 = vld [vmem:[%s1899 + $0xd8] sm:$0xff]
      %v1919 = vld [vmem:[%s1899 + $0xe0] sm:$0xff]
      %v1920 = vld [vmem:[%s1899 + $0xf0] sm:$0xff]
      %v1921 = vld [vmem:[%s1899 + $0xf8] sm:$0xff]
      %v1922 = vld [vmem:[%s1899 + $0x108] sm:$0xff]
      %v1923 = vld [vmem:[%s1899 + $0x110] sm:$0xff]
      %v1924 = vld [vmem:[%s1899 + $0x120] sm:$0xff]
      %v1925 = vld [vmem:[%s1899 + $0x128] sm:$0xff]
      %v1926 = vld [vmem:[%s1899 + $0x138] sm:$0xff]
      %v1927 = vld [vmem:[%s1899 + $0x140] sm:$0xff]
      %v1928 = vld [vmem:[%s1899 + $0x150] sm:$0xff]
      %v1929 = vld [vmem:[%s1899 + $0x158] sm:$0xff]
      %v1930 = vld [vmem:[%s1899 + $0x168] sm:$0xff]
      %v1931 = vld [vmem:[%s1899 + $0x170] sm:$0xff]
      %v1932 = vpack.c.bf16 %v1901, %v1900
      %v1933 = vpack.c.bf16 %v1903, %v1902
      %v1934 = vpack.c.bf16 %v1905, %v1904
      %v1935 = vpack.c.bf16 %v1907, %v1906
      %v1936 = vpack.c.bf16 %v1909, %v1908
      %v1937 = vpack.c.bf16 %v1911, %v1910
      %v1938 = vpack.c.bf16 %v1913, %v1912
      %v1939 = vpack.c.bf16 %v1915, %v1914
      %v1940 = vpack.c.bf16 %v1917, %v1916
      %v1941 = vpack.c.bf16 %v1919, %v1918
      %v1942 = vpack.c.bf16 %v1921, %v1920
      %v1943 = vpack.c.bf16 %v1923, %v1922
      %v1944 = vpack.c.bf16 %v1925, %v1924
      %v1945 = vpack.c.bf16 %v1927, %v1926
      %v1946 = vpack.c.bf16 %v1929, %v1928
      %v1947 = vpack.c.bf16 %v1931, %v1930
      %s1948 = scalar_lea.vmem %s1, 48
      %v1949 = vld [vmem:[%s1948] sm:$0xf]
      %v1950 = vld [vmem:[%s1948 + $0x4] sm:$0x3]
      %v1953 = vunpack.c.l.b16 %v1949
      %v1954 = vunpack.c.l.b16 %v1950
      %v1955 = vpack.c.b16 %v1954, %v1953
      %v1957 = vsel %vm415, %v1932, 0
      %v1960 = vsel %vm415, %v1933, 0
      %v1963 = vsel %vm415, %v1934, 0
      %v1966 = vsel %vm415, %v1935, 0
      %v1969 = vsel %vm415, %v1936, 0
      %v1972 = vsel %vm415, %v1937, 0
      %v1975 = vsel %vm415, %v1938, 0
      %v1978 = vsel %vm415, %v1939, 0
      %v1981 = vsel %vm415, %v1940, 0
      %v1984 = vsel %vm415, %v1941, 0
      %v1987 = vsel %vm415, %v1942, 0
      %v1990 = vsel %vm415, %v1943, 0
      %v1993 = vsel %vm415, %v1944, 0
      %v1996 = vsel %vm415, %v1945, 0
      %v1999 = vsel %vm415, %v1946, 0
      %v2002 = vsel %vm415, %v1947, 0
      %v2005 = vand.u32 %v1955, %v749
      %2007 = vmatpush.bf16.msra.mxu0 0
      %2008 = vmatpush.bf16.msra.mxu0 0
      %2009 = vmatpush.bf16.msra.mxu0 0
      %2010 = vmatpush.bf16.msra.mxu0 0
      %2011 = vmatpush.bf16.msra.mxu0 0
      %2012 = vmatpush.bf16.msra.mxu0 0
      %2013 = vmatpush.bf16.msra.mxu0 0
      %2014 = vmatpush.bf16.msra.mxu0 %v2005
      %2015 = vmatmul.bf16.gmra.mxu0 %v1957
      %v2016 = vpop.f32.mrf.mxu0
      %v2017 = vadd.f32 0.0, %v2016
      %v2018 = vpop.f32.mrf.mxu0
      %v2019 = vadd.f32 0.0, %v2018
      %2020 = vmatmul.bf16.gmra.mxu0 %v1960
      %v2021 = vpop.f32.mrf.mxu0
      %v2022 = vadd.f32 0.0, %v2021
      %v2023 = vpop.f32.mrf.mxu0
      %v2024 = vadd.f32 0.0, %v2023
      %2025 = vmatmul.bf16.gmra.mxu0 %v1963
      %v2026 = vpop.f32.mrf.mxu0
      %v2027 = vadd.f32 0.0, %v2026
      %v2028 = vpop.f32.mrf.mxu0
      %v2029 = vadd.f32 0.0, %v2028
      %2030 = vmatmul.bf16.gmra.mxu0 %v1966
      %v2031 = vpop.f32.mrf.mxu0
      %v2032 = vadd.f32 0.0, %v2031
      %v2033 = vpop.f32.mrf.mxu0
      %v2034 = vadd.f32 0.0, %v2033
      %2035 = vmatmul.bf16.gmra.mxu0 %v1969
      %v2036 = vpop.f32.mrf.mxu0
      %v2037 = vadd.f32 0.0, %v2036
      %v2038 = vpop.f32.mrf.mxu0
      %v2039 = vadd.f32 0.0, %v2038
      %2040 = vmatmul.bf16.gmra.mxu0 %v1972
      %v2041 = vpop.f32.mrf.mxu0
      %v2042 = vadd.f32 0.0, %v2041
      %v2043 = vpop.f32.mrf.mxu0
      %v2044 = vadd.f32 0.0, %v2043
      %2045 = vmatmul.bf16.gmra.mxu0 %v1975
      %v2046 = vpop.f32.mrf.mxu0
      %v2047 = vadd.f32 0.0, %v2046
      %v2048 = vpop.f32.mrf.mxu0
      %v2049 = vadd.f32 0.0, %v2048
      %2050 = vmatmul.bf16.gmra.mxu0 %v1978
      %v2051 = vpop.f32.mrf.mxu0
      %v2052 = vadd.f32 0.0, %v2051
      %v2053 = vpop.f32.mrf.mxu0
      %v2054 = vadd.f32 0.0, %v2053
      %2055 = vmatmul.bf16.gmra.mxu0 %v1981
      %v2056 = vpop.f32.mrf.mxu0
      %v2057 = vadd.f32 0.0, %v2056
      %v2058 = vpop.f32.mrf.mxu0
      %v2059 = vadd.f32 0.0, %v2058
      %2060 = vmatmul.bf16.gmra.mxu0 %v1984
      %v2061 = vpop.f32.mrf.mxu0
      %v2062 = vadd.f32 0.0, %v2061
      %v2063 = vpop.f32.mrf.mxu0
      %v2064 = vadd.f32 0.0, %v2063
      %2065 = vmatmul.bf16.gmra.mxu0 %v1987
      %v2066 = vpop.f32.mrf.mxu0
      %v2067 = vadd.f32 0.0, %v2066
      %v2068 = vpop.f32.mrf.mxu0
      %v2069 = vadd.f32 0.0, %v2068
      %2070 = vmatmul.bf16.gmra.mxu0 %v1990
      %v2071 = vpop.f32.mrf.mxu0
      %v2072 = vadd.f32 0.0, %v2071
      %v2073 = vpop.f32.mrf.mxu0
      %v2074 = vadd.f32 0.0, %v2073
      %2075 = vmatmul.bf16.gmra.mxu0 %v1993
      %v2076 = vpop.f32.mrf.mxu0
      %v2077 = vadd.f32 0.0, %v2076
      %v2078 = vpop.f32.mrf.mxu0
      %v2079 = vadd.f32 0.0, %v2078
      %2080 = vmatmul.bf16.gmra.mxu0 %v1996
      %v2081 = vpop.f32.mrf.mxu0
      %v2082 = vadd.f32 0.0, %v2081
      %v2083 = vpop.f32.mrf.mxu0
      %v2084 = vadd.f32 0.0, %v2083
      %2085 = vmatmul.bf16.gmra.mxu0 %v1999
      %v2086 = vpop.f32.mrf.mxu0
      %v2087 = vadd.f32 0.0, %v2086
      %v2088 = vpop.f32.mrf.mxu0
      %v2089 = vadd.f32 0.0, %v2088
      %2090 = vmatmul.bf16.gmra.mxu0 %v2002
      %v2091 = vpop.f32.mrf.mxu0
      %v2092 = vadd.f32 0.0, %v2091
      %v2093 = vpop.f32.mrf.mxu0
      %v2094 = vadd.f32 0.0, %v2093
      %2095 = vdwg.mxu0
      %v2096 = vadd.f32 %v1867, %v2017
      %v2097 = vadd.f32 %v1868, %v2019
      %v2098 = vadd.f32 %v1869, %v2022
      %v2099 = vadd.f32 %v1870, %v2024
      %v2100 = vadd.f32 %v1871, %v2027
      %v2101 = vadd.f32 %v1872, %v2029
      %v2102 = vadd.f32 %v1873, %v2032
      %v2103 = vadd.f32 %v1874, %v2034
      %v2104 = vadd.f32 %v1875, %v2037
      %v2105 = vadd.f32 %v1876, %v2039
      %v2106 = vadd.f32 %v1877, %v2042
      %v2107 = vadd.f32 %v1878, %v2044
      %v2108 = vadd.f32 %v1879, %v2047
      %v2109 = vadd.f32 %v1880, %v2049
      %v2110 = vadd.f32 %v1881, %v2052
      %v2111 = vadd.f32 %v1882, %v2054
      %v2112 = vadd.f32 %v1883, %v2057
      %v2113 = vadd.f32 %v1884, %v2059
      %v2114 = vadd.f32 %v1885, %v2062
      %v2115 = vadd.f32 %v1886, %v2064
      %v2116 = vadd.f32 %v1887, %v2067
      %v2117 = vadd.f32 %v1888, %v2069
      %v2118 = vadd.f32 %v1889, %v2072
      %v2119 = vadd.f32 %v1890, %v2074
      %v2120 = vadd.f32 %v1891, %v2077
      %v2121 = vadd.f32 %v1892, %v2079
      %v2122 = vadd.f32 %v1893, %v2082
      %v2123 = vadd.f32 %v1894, %v2084
      %v2124 = vadd.f32 %v1895, %v2087
      %v2125 = vadd.f32 %v1896, %v2089
      %v2126 = vadd.f32 %v1897, %v2092
      %v2127 = vadd.f32 %v1898, %v2094
      %v2128 = vld [vmem:[%s1899 + $0x1] sm:$0xff]
      %v2129 = vld [vmem:[%s1899 + $0x9] sm:$0xff]
      %v2130 = vld [vmem:[%s1899 + $0x19] sm:$0xff]
      %v2131 = vld [vmem:[%s1899 + $0x21] sm:$0xff]
      %v2132 = vld [vmem:[%s1899 + $0x31] sm:$0xff]
      %v2133 = vld [vmem:[%s1899 + $0x39] sm:$0xff]
      %v2134 = vld [vmem:[%s1899 + $0x49] sm:$0xff]
      %v2135 = vld [vmem:[%s1899 + $0x51] sm:$0xff]
      %v2136 = vld [vmem:[%s1899 + $0x61] sm:$0xff]
      %v2137 = vld [vmem:[%s1899 + $0x69] sm:$0xff]
      %v2138 = vld [vmem:[%s1899 + $0x79] sm:$0xff]
      %v2139 = vld [vmem:[%s1899 + $0x81] sm:$0xff]
      %v2140 = vld [vmem:[%s1899 + $0x91] sm:$0xff]
      %v2141 = vld [vmem:[%s1899 + $0x99] sm:$0xff]
      %v2142 = vld [vmem:[%s1899 + $0xa9] sm:$0xff]
      %v2143 = vld [vmem:[%s1899 + $0xb1] sm:$0xff]
      %v2144 = vld [vmem:[%s1899 + $0xc1] sm:$0xff]
      %v2145 = vld [vmem:[%s1899 + $0xc9] sm:$0xff]
      %v2146 = vld [vmem:[%s1899 + $0xd9] sm:$0xff]
      %v2147 = vld [vmem:[%s1899 + $0xe1] sm:$0xff]
      %v2148 = vld [vmem:[%s1899 + $0xf1] sm:$0xff]
      %v2149 = vld [vmem:[%s1899 + $0xf9] sm:$0xff]
      %v2150 = vld [vmem:[%s1899 + $0x109] sm:$0xff]
      %v2151 = vld [vmem:[%s1899 + $0x111] sm:$0xff]
      %v2152 = vld [vmem:[%s1899 + $0x121] sm:$0xff]
      %v2153 = vld [vmem:[%s1899 + $0x129] sm:$0xff]
      %v2154 = vld [vmem:[%s1899 + $0x139] sm:$0xff]
      %v2155 = vld [vmem:[%s1899 + $0x141] sm:$0xff]
      %v2156 = vld [vmem:[%s1899 + $0x151] sm:$0xff]
      %v2157 = vld [vmem:[%s1899 + $0x159] sm:$0xff]
      %v2158 = vld [vmem:[%s1899 + $0x169] sm:$0xff]
      %v2159 = vld [vmem:[%s1899 + $0x171] sm:$0xff]
      %v2160 = vpack.c.bf16 %v2129, %v2128
      %v2161 = vpack.c.bf16 %v2131, %v2130
      %v2162 = vpack.c.bf16 %v2133, %v2132
      %v2163 = vpack.c.bf16 %v2135, %v2134
      %v2164 = vpack.c.bf16 %v2137, %v2136
      %v2165 = vpack.c.bf16 %v2139, %v2138
      %v2166 = vpack.c.bf16 %v2141, %v2140
      %v2167 = vpack.c.bf16 %v2143, %v2142
      %v2168 = vpack.c.bf16 %v2145, %v2144
      %v2169 = vpack.c.bf16 %v2147, %v2146
      %v2170 = vpack.c.bf16 %v2149, %v2148
      %v2171 = vpack.c.bf16 %v2151, %v2150
      %v2172 = vpack.c.bf16 %v2153, %v2152
      %v2173 = vpack.c.bf16 %v2155, %v2154
      %v2174 = vpack.c.bf16 %v2157, %v2156
      %v2175 = vpack.c.bf16 %v2159, %v2158
      %s2176 = scalar_lea.vmem %s1, 56
      %v2177 = vld [vmem:[%s2176] sm:$0xf]
      %v2178 = vld [vmem:[%s2176 + $0x4] sm:$0x3]
      %v2181 = vunpack.c.l.b16 %v2177
      %v2182 = vunpack.c.l.b16 %v2178
      %v2183 = vpack.c.b16 %v2182, %v2181
      %v2185 = vsel %vm415, %v2160, 0
      %v2188 = vsel %vm415, %v2161, 0
      %v2191 = vsel %vm415, %v2162, 0
      %v2194 = vsel %vm415, %v2163, 0
      %v2197 = vsel %vm415, %v2164, 0
      %v2200 = vsel %vm415, %v2165, 0
      %v2203 = vsel %vm415, %v2166, 0
      %v2206 = vsel %vm415, %v2167, 0
      %v2209 = vsel %vm415, %v2168, 0
      %v2212 = vsel %vm415, %v2169, 0
      %v2215 = vsel %vm415, %v2170, 0
      %v2218 = vsel %vm415, %v2171, 0
      %v2221 = vsel %vm415, %v2172, 0
      %v2224 = vsel %vm415, %v2173, 0
      %v2227 = vsel %vm415, %v2174, 0
      %v2230 = vsel %vm415, %v2175, 0
      %v2233 = vand.u32 %v2183, %v749
      %2235 = vmatpush.bf16.msra.mxu0 0
      %2236 = vmatpush.bf16.msra.mxu0 0
      %2237 = vmatpush.bf16.msra.mxu0 0
      %2238 = vmatpush.bf16.msra.mxu0 0
      %2239 = vmatpush.bf16.msra.mxu0 0
      %2240 = vmatpush.bf16.msra.mxu0 0
      %2241 = vmatpush.bf16.msra.mxu0 0
      %2242 = vmatpush.bf16.msra.mxu0 %v2233
      %2243 = vmatmul.bf16.gmra.mxu0 %v2185
      %v2244 = vpop.f32.mrf.mxu0
      %v2245 = vadd.f32 0.0, %v2244
      %v2246 = vpop.f32.mrf.mxu0
      %v2247 = vadd.f32 0.0, %v2246
      %2248 = vmatmul.bf16.gmra.mxu0 %v2188
      %v2249 = vpop.f32.mrf.mxu0
      %v2250 = vadd.f32 0.0, %v2249
      %v2251 = vpop.f32.mrf.mxu0
      %v2252 = vadd.f32 0.0, %v2251
      %2253 = vmatmul.bf16.gmra.mxu0 %v2191
      %v2254 = vpop.f32.mrf.mxu0
      %v2255 = vadd.f32 0.0, %v2254
      %v2256 = vpop.f32.mrf.mxu0
      %v2257 = vadd.f32 0.0, %v2256
      %2258 = vmatmul.bf16.gmra.mxu0 %v2194
      %v2259 = vpop.f32.mrf.mxu0
      %v2260 = vadd.f32 0.0, %v2259
      %v2261 = vpop.f32.mrf.mxu0
      %v2262 = vadd.f32 0.0, %v2261
      %2263 = vmatmul.bf16.gmra.mxu0 %v2197
      %v2264 = vpop.f32.mrf.mxu0
      %v2265 = vadd.f32 0.0, %v2264
      %v2266 = vpop.f32.mrf.mxu0
      %v2267 = vadd.f32 0.0, %v2266
      %2268 = vmatmul.bf16.gmra.mxu0 %v2200
      %v2269 = vpop.f32.mrf.mxu0
      %v2270 = vadd.f32 0.0, %v2269
      %v2271 = vpop.f32.mrf.mxu0
      %v2272 = vadd.f32 0.0, %v2271
      %2273 = vmatmul.bf16.gmra.mxu0 %v2203
      %v2274 = vpop.f32.mrf.mxu0
      %v2275 = vadd.f32 0.0, %v2274
      %v2276 = vpop.f32.mrf.mxu0
      %v2277 = vadd.f32 0.0, %v2276
      %2278 = vmatmul.bf16.gmra.mxu0 %v2206
      %v2279 = vpop.f32.mrf.mxu0
      %v2280 = vadd.f32 0.0, %v2279
      %v2281 = vpop.f32.mrf.mxu0
      %v2282 = vadd.f32 0.0, %v2281
      %2283 = vmatmul.bf16.gmra.mxu0 %v2209
      %v2284 = vpop.f32.mrf.mxu0
      %v2285 = vadd.f32 0.0, %v2284
      %v2286 = vpop.f32.mrf.mxu0
      %v2287 = vadd.f32 0.0, %v2286
      %2288 = vmatmul.bf16.gmra.mxu0 %v2212
      %v2289 = vpop.f32.mrf.mxu0
      %v2290 = vadd.f32 0.0, %v2289
      %v2291 = vpop.f32.mrf.mxu0
      %v2292 = vadd.f32 0.0, %v2291
      %2293 = vmatmul.bf16.gmra.mxu0 %v2215
      %v2294 = vpop.f32.mrf.mxu0
      %v2295 = vadd.f32 0.0, %v2294
      %v2296 = vpop.f32.mrf.mxu0
      %v2297 = vadd.f32 0.0, %v2296
      %2298 = vmatmul.bf16.gmra.mxu0 %v2218
      %v2299 = vpop.f32.mrf.mxu0
      %v2300 = vadd.f32 0.0, %v2299
      %v2301 = vpop.f32.mrf.mxu0
      %v2302 = vadd.f32 0.0, %v2301
      %2303 = vmatmul.bf16.gmra.mxu0 %v2221
      %v2304 = vpop.f32.mrf.mxu0
      %v2305 = vadd.f32 0.0, %v2304
      %v2306 = vpop.f32.mrf.mxu0
      %v2307 = vadd.f32 0.0, %v2306
      %2308 = vmatmul.bf16.gmra.mxu0 %v2224
      %v2309 = vpop.f32.mrf.mxu0
      %v2310 = vadd.f32 0.0, %v2309
      %v2311 = vpop.f32.mrf.mxu0
      %v2312 = vadd.f32 0.0, %v2311
      %2313 = vmatmul.bf16.gmra.mxu0 %v2227
      %v2314 = vpop.f32.mrf.mxu0
      %v2315 = vadd.f32 0.0, %v2314
      %v2316 = vpop.f32.mrf.mxu0
      %v2317 = vadd.f32 0.0, %v2316
      %2318 = vmatmul.bf16.gmra.mxu0 %v2230
      %v2319 = vpop.f32.mrf.mxu0
      %v2320 = vadd.f32 0.0, %v2319
      %v2321 = vpop.f32.mrf.mxu0
      %v2322 = vadd.f32 0.0, %v2321
      %2323 = vdwg.mxu0
      %v2324 = vadd.f32 %v2096, %v2245
      %v2325 = vadd.f32 %v2097, %v2247
      %v2326 = vadd.f32 %v2098, %v2250
      %v2327 = vadd.f32 %v2099, %v2252
      %v2328 = vadd.f32 %v2100, %v2255
      %v2329 = vadd.f32 %v2101, %v2257
      %v2330 = vadd.f32 %v2102, %v2260
      %v2331 = vadd.f32 %v2103, %v2262
      %v2332 = vadd.f32 %v2104, %v2265
      %v2333 = vadd.f32 %v2105, %v2267
      %v2334 = vadd.f32 %v2106, %v2270
      %v2335 = vadd.f32 %v2107, %v2272
      %v2336 = vadd.f32 %v2108, %v2275
      %v2337 = vadd.f32 %v2109, %v2277
      %v2338 = vadd.f32 %v2110, %v2280
      %v2339 = vadd.f32 %v2111, %v2282
      %v2340 = vadd.f32 %v2112, %v2285
      %v2341 = vadd.f32 %v2113, %v2287
      %v2342 = vadd.f32 %v2114, %v2290
      %v2343 = vadd.f32 %v2115, %v2292
      %v2344 = vadd.f32 %v2116, %v2295
      %v2345 = vadd.f32 %v2117, %v2297
      %v2346 = vadd.f32 %v2118, %v2300
      %v2347 = vadd.f32 %v2119, %v2302
      %v2348 = vadd.f32 %v2120, %v2305
      %v2349 = vadd.f32 %v2121, %v2307
      %v2350 = vadd.f32 %v2122, %v2310
      %v2351 = vadd.f32 %v2123, %v2312
      %v2352 = vadd.f32 %v2124, %v2315
      %v2353 = vadd.f32 %v2125, %v2317
      %v2354 = vadd.f32 %v2126, %v2320
      %v2355 = vadd.f32 %v2127, %v2322
      %v2356 = vld [vmem:[%s1899 + $0x2] sm:$0xff]
      %v2357 = vld [vmem:[%s1899 + $0xa] sm:$0xff]
      %v2358 = vld [vmem:[%s1899 + $0x1a] sm:$0xff]
      %v2359 = vld [vmem:[%s1899 + $0x22] sm:$0xff]
      %v2360 = vld [vmem:[%s1899 + $0x32] sm:$0xff]
      %v2361 = vld [vmem:[%s1899 + $0x3a] sm:$0xff]
      %v2362 = vld [vmem:[%s1899 + $0x4a] sm:$0xff]
      %v2363 = vld [vmem:[%s1899 + $0x52] sm:$0xff]
      %v2364 = vld [vmem:[%s1899 + $0x62] sm:$0xff]
      %v2365 = vld [vmem:[%s1899 + $0x6a] sm:$0xff]
      %v2366 = vld [vmem:[%s1899 + $0x7a] sm:$0xff]
      %v2367 = vld [vmem:[%s1899 + $0x82] sm:$0xff]
      %v2368 = vld [vmem:[%s1899 + $0x92] sm:$0xff]
      %v2369 = vld [vmem:[%s1899 + $0x9a] sm:$0xff]
      %v2370 = vld [vmem:[%s1899 + $0xaa] sm:$0xff]
      %v2371 = vld [vmem:[%s1899 + $0xb2] sm:$0xff]
      %v2372 = vld [vmem:[%s1899 + $0xc2] sm:$0xff]
      %v2373 = vld [vmem:[%s1899 + $0xca] sm:$0xff]
      %v2374 = vld [vmem:[%s1899 + $0xda] sm:$0xff]
      %v2375 = vld [vmem:[%s1899 + $0xe2] sm:$0xff]
      %v2376 = vld [vmem:[%s1899 + $0xf2] sm:$0xff]
      %v2377 = vld [vmem:[%s1899 + $0xfa] sm:$0xff]
      %v2378 = vld [vmem:[%s1899 + $0x10a] sm:$0xff]
      %v2379 = vld [vmem:[%s1899 + $0x112] sm:$0xff]
      %v2380 = vld [vmem:[%s1899 + $0x122] sm:$0xff]
      %v2381 = vld [vmem:[%s1899 + $0x12a] sm:$0xff]
      %v2382 = vld [vmem:[%s1899 + $0x13a] sm:$0xff]
      %v2383 = vld [vmem:[%s1899 + $0x142] sm:$0xff]
      %v2384 = vld [vmem:[%s1899 + $0x152] sm:$0xff]
      %v2385 = vld [vmem:[%s1899 + $0x15a] sm:$0xff]
      %v2386 = vld [vmem:[%s1899 + $0x16a] sm:$0xff]
      %v2387 = vld [vmem:[%s1899 + $0x172] sm:$0xff]
      %v2388 = vpack.c.bf16 %v2357, %v2356
      %v2389 = vpack.c.bf16 %v2359, %v2358
      %v2390 = vpack.c.bf16 %v2361, %v2360
      %v2391 = vpack.c.bf16 %v2363, %v2362
      %v2392 = vpack.c.bf16 %v2365, %v2364
      %v2393 = vpack.c.bf16 %v2367, %v2366
      %v2394 = vpack.c.bf16 %v2369, %v2368
      %v2395 = vpack.c.bf16 %v2371, %v2370
      %v2396 = vpack.c.bf16 %v2373, %v2372
      %v2397 = vpack.c.bf16 %v2375, %v2374
      %v2398 = vpack.c.bf16 %v2377, %v2376
      %v2399 = vpack.c.bf16 %v2379, %v2378
      %v2400 = vpack.c.bf16 %v2381, %v2380
      %v2401 = vpack.c.bf16 %v2383, %v2382
      %v2402 = vpack.c.bf16 %v2385, %v2384
      %v2403 = vpack.c.bf16 %v2387, %v2386
      %s2404 = scalar_lea.vmem %s1, 64
      %v2405 = vld [vmem:[%s2404] sm:$0xf]
      %v2406 = vld [vmem:[%s2404 + $0x4] sm:$0x3]
      %v2409 = vunpack.c.l.b16 %v2405
      %v2410 = vunpack.c.l.b16 %v2406
      %v2411 = vpack.c.b16 %v2410, %v2409
      %v2413 = vsel %vm415, %v2388, 0
      %v2416 = vsel %vm415, %v2389, 0
      %v2419 = vsel %vm415, %v2390, 0
      %v2422 = vsel %vm415, %v2391, 0
      %v2425 = vsel %vm415, %v2392, 0
      %v2428 = vsel %vm415, %v2393, 0
      %v2431 = vsel %vm415, %v2394, 0
      %v2434 = vsel %vm415, %v2395, 0
      %v2437 = vsel %vm415, %v2396, 0
      %v2440 = vsel %vm415, %v2397, 0
      %v2443 = vsel %vm415, %v2398, 0
      %v2446 = vsel %vm415, %v2399, 0
      %v2449 = vsel %vm415, %v2400, 0
      %v2452 = vsel %vm415, %v2401, 0
      %v2455 = vsel %vm415, %v2402, 0
      %v2458 = vsel %vm415, %v2403, 0
      %v2461 = vand.u32 %v2411, %v749
      %2463 = vmatpush.bf16.msra.mxu0 0
      %2464 = vmatpush.bf16.msra.mxu0 0
      %2465 = vmatpush.bf16.msra.mxu0 0
      %2466 = vmatpush.bf16.msra.mxu0 0
      %2467 = vmatpush.bf16.msra.mxu0 0
      %2468 = vmatpush.bf16.msra.mxu0 0
      %2469 = vmatpush.bf16.msra.mxu0 0
      %2470 = vmatpush.bf16.msra.mxu0 %v2461
      %2471 = vmatmul.bf16.gmra.mxu0 %v2413
      %v2472 = vpop.f32.mrf.mxu0
      %v2473 = vadd.f32 0.0, %v2472
      %v2474 = vpop.f32.mrf.mxu0
      %v2475 = vadd.f32 0.0, %v2474
      %2476 = vmatmul.bf16.gmra.mxu0 %v2416
      %v2477 = vpop.f32.mrf.mxu0
      %v2478 = vadd.f32 0.0, %v2477
      %v2479 = vpop.f32.mrf.mxu0
      %v2480 = vadd.f32 0.0, %v2479
      %2481 = vmatmul.bf16.gmra.mxu0 %v2419
      %v2482 = vpop.f32.mrf.mxu0
      %v2483 = vadd.f32 0.0, %v2482
      %v2484 = vpop.f32.mrf.mxu0
      %v2485 = vadd.f32 0.0, %v2484
      %2486 = vmatmul.bf16.gmra.mxu0 %v2422
      %v2487 = vpop.f32.mrf.mxu0
      %v2488 = vadd.f32 0.0, %v2487
      %v2489 = vpop.f32.mrf.mxu0
      %v2490 = vadd.f32 0.0, %v2489
      %2491 = vmatmul.bf16.gmra.mxu0 %v2425
      %v2492 = vpop.f32.mrf.mxu0
      %v2493 = vadd.f32 0.0, %v2492
      %v2494 = vpop.f32.mrf.mxu0
      %v2495 = vadd.f32 0.0, %v2494
      %2496 = vmatmul.bf16.gmra.mxu0 %v2428
      %v2497 = vpop.f32.mrf.mxu0
      %v2498 = vadd.f32 0.0, %v2497
      %v2499 = vpop.f32.mrf.mxu0
      %v2500 = vadd.f32 0.0, %v2499
      %2501 = vmatmul.bf16.gmra.mxu0 %v2431
      %v2502 = vpop.f32.mrf.mxu0
      %v2503 = vadd.f32 0.0, %v2502
      %v2504 = vpop.f32.mrf.mxu0
      %v2505 = vadd.f32 0.0, %v2504
      %2506 = vmatmul.bf16.gmra.mxu0 %v2434
      %v2507 = vpop.f32.mrf.mxu0
      %v2508 = vadd.f32 0.0, %v2507
      %v2509 = vpop.f32.mrf.mxu0
      %v2510 = vadd.f32 0.0, %v2509
      %2511 = vmatmul.bf16.gmra.mxu0 %v2437
      %v2512 = vpop.f32.mrf.mxu0
      %v2513 = vadd.f32 0.0, %v2512
      %v2514 = vpop.f32.mrf.mxu0
      %v2515 = vadd.f32 0.0, %v2514
      %2516 = vmatmul.bf16.gmra.mxu0 %v2440
      %v2517 = vpop.f32.mrf.mxu0
      %v2518 = vadd.f32 0.0, %v2517
      %v2519 = vpop.f32.mrf.mxu0
      %v2520 = vadd.f32 0.0, %v2519
      %2521 = vmatmul.bf16.gmra.mxu0 %v2443
      %v2522 = vpop.f32.mrf.mxu0
      %v2523 = vadd.f32 0.0, %v2522
      %v2524 = vpop.f32.mrf.mxu0
      %v2525 = vadd.f32 0.0, %v2524
      %2526 = vmatmul.bf16.gmra.mxu0 %v2446
      %v2527 = vpop.f32.mrf.mxu0
      %v2528 = vadd.f32 0.0, %v2527
      %v2529 = vpop.f32.mrf.mxu0
      %v2530 = vadd.f32 0.0, %v2529
      %2531 = vmatmul.bf16.gmra.mxu0 %v2449
      %v2532 = vpop.f32.mrf.mxu0
      %v2533 = vadd.f32 0.0, %v2532
      %v2534 = vpop.f32.mrf.mxu0
      %v2535 = vadd.f32 0.0, %v2534
      %2536 = vmatmul.bf16.gmra.mxu0 %v2452
      %v2537 = vpop.f32.mrf.mxu0
      %v2538 = vadd.f32 0.0, %v2537
      %v2539 = vpop.f32.mrf.mxu0
      %v2540 = vadd.f32 0.0, %v2539
      %2541 = vmatmul.bf16.gmra.mxu0 %v2455
      %v2542 = vpop.f32.mrf.mxu0
      %v2543 = vadd.f32 0.0, %v2542
      %v2544 = vpop.f32.mrf.mxu0
      %v2545 = vadd.f32 0.0, %v2544
      %2546 = vmatmul.bf16.gmra.mxu0 %v2458
      %v2547 = vpop.f32.mrf.mxu0
      %v2548 = vadd.f32 0.0, %v2547
      %v2549 = vpop.f32.mrf.mxu0
      %v2550 = vadd.f32 0.0, %v2549
      %2551 = vdwg.mxu0
      %v2552 = vadd.f32 %v2324, %v2473
      %v2553 = vadd.f32 %v2325, %v2475
      %v2554 = vadd.f32 %v2326, %v2478
      %v2555 = vadd.f32 %v2327, %v2480
      %v2556 = vadd.f32 %v2328, %v2483
      %v2557 = vadd.f32 %v2329, %v2485
      %v2558 = vadd.f32 %v2330, %v2488
      %v2559 = vadd.f32 %v2331, %v2490
      %v2560 = vadd.f32 %v2332, %v2493
      %v2561 = vadd.f32 %v2333, %v2495
      %v2562 = vadd.f32 %v2334, %v2498
      %v2563 = vadd.f32 %v2335, %v2500
      %v2564 = vadd.f32 %v2336, %v2503
      %v2565 = vadd.f32 %v2337, %v2505
      %v2566 = vadd.f32 %v2338, %v2508
      %v2567 = vadd.f32 %v2339, %v2510
      %v2568 = vadd.f32 %v2340, %v2513
      %v2569 = vadd.f32 %v2341, %v2515
      %v2570 = vadd.f32 %v2342, %v2518
      %v2571 = vadd.f32 %v2343, %v2520
      %v2572 = vadd.f32 %v2344, %v2523
      %v2573 = vadd.f32 %v2345, %v2525
      %v2574 = vadd.f32 %v2346, %v2528
      %v2575 = vadd.f32 %v2347, %v2530
      %v2576 = vadd.f32 %v2348, %v2533
      %v2577 = vadd.f32 %v2349, %v2535
      %v2578 = vadd.f32 %v2350, %v2538
      %v2579 = vadd.f32 %v2351, %v2540
      %v2580 = vadd.f32 %v2352, %v2543
      %v2581 = vadd.f32 %v2353, %v2545
      %v2582 = vadd.f32 %v2354, %v2548
      %v2583 = vadd.f32 %v2355, %v2550
      %v2584 = vld [vmem:[%s2] sm:$0x1]
      %v2586 = vperm.slane %v2584, 0
      %v2588 = vadd.f32 %v2552, %v2586
      %v2589 = vadd.f32 %v2553, %v2586
      %v2590 = vadd.f32 %v2554, %v2586
      %v2591 = vadd.f32 %v2555, %v2586
      %v2592 = vadd.f32 %v2556, %v2586
      %v2593 = vadd.f32 %v2557, %v2586
      %v2594 = vadd.f32 %v2558, %v2586
      %v2595 = vadd.f32 %v2559, %v2586
      %v2596 = vadd.f32 %v2560, %v2586
      %v2597 = vadd.f32 %v2561, %v2586
      %v2598 = vadd.f32 %v2562, %v2586
      %v2599 = vadd.f32 %v2563, %v2586
      %v2600 = vadd.f32 %v2564, %v2586
      %v2601 = vadd.f32 %v2565, %v2586
      %v2602 = vadd.f32 %v2566, %v2586
      %v2603 = vadd.f32 %v2567, %v2586
      %v2604 = vadd.f32 %v2568, %v2586
      %v2605 = vadd.f32 %v2569, %v2586
      %v2606 = vadd.f32 %v2570, %v2586
      %v2607 = vadd.f32 %v2571, %v2586
      %v2608 = vadd.f32 %v2572, %v2586
      %v2609 = vadd.f32 %v2573, %v2586
      %v2610 = vadd.f32 %v2574, %v2586
      %v2611 = vadd.f32 %v2575, %v2586
      %v2612 = vadd.f32 %v2576, %v2586
      %v2613 = vadd.f32 %v2577, %v2586
      %v2614 = vadd.f32 %v2578, %v2586
      %v2615 = vadd.f32 %v2579, %v2586
      %v2616 = vadd.f32 %v2580, %v2586
      %v2617 = vadd.f32 %v2581, %v2586
      %v2618 = vadd.f32 %v2582, %v2586
      %v2619 = vadd.f32 %v2583, %v2586
      %v2620 = vmax.f32 %v2588, 0.0
      %v2621 = vmax.f32 %v2589, 0.0
      %v2622 = vmax.f32 %v2590, 0.0
      %v2623 = vmax.f32 %v2591, 0.0
      %v2624 = vmax.f32 %v2592, 0.0
      %v2625 = vmax.f32 %v2593, 0.0
      %v2626 = vmax.f32 %v2594, 0.0
      %v2627 = vmax.f32 %v2595, 0.0
      %v2628 = vmax.f32 %v2596, 0.0
      %v2629 = vmax.f32 %v2597, 0.0
      %v2630 = vmax.f32 %v2598, 0.0
      %v2631 = vmax.f32 %v2599, 0.0
      %v2632 = vmax.f32 %v2600, 0.0
      %v2633 = vmax.f32 %v2601, 0.0
      %v2634 = vmax.f32 %v2602, 0.0
      %v2635 = vmax.f32 %v2603, 0.0
      %v2636 = vmax.f32 %v2604, 0.0
      %v2637 = vmax.f32 %v2605, 0.0
      %v2638 = vmax.f32 %v2606, 0.0
      %v2639 = vmax.f32 %v2607, 0.0
      %v2640 = vmax.f32 %v2608, 0.0
      %v2641 = vmax.f32 %v2609, 0.0
      %v2642 = vmax.f32 %v2610, 0.0
      %v2643 = vmax.f32 %v2611, 0.0
      %v2644 = vmax.f32 %v2612, 0.0
      %v2645 = vmax.f32 %v2613, 0.0
      %v2646 = vmax.f32 %v2614, 0.0
      %v2647 = vmax.f32 %v2615, 0.0
      %v2648 = vmax.f32 %v2616, 0.0
      %v2649 = vmax.f32 %v2617, 0.0
      %v2650 = vmax.f32 %v2618, 0.0
      %v2651 = vmax.f32 %v2619, 0.0
      %s2652 = scalar_lea.vmem [#allocation3], 24
      %2653 = vst.msk [vmem:[%s2652 + $0x1] sm:$0xff] %vm471, %v2620
      %2654 = vst.msk [vmem:[%s2652 + $0x9] sm:$0xff] %vm471, %v2621
      %2655 = vst.msk [vmem:[%s2652 + $0x19] sm:$0xff] %vm471, %v2622
      %2656 = vst.msk [vmem:[%s2652 + $0x21] sm:$0xff] %vm471, %v2623
      %2657 = vst.msk [vmem:[%s2652 + $0x31] sm:$0xff] %vm471, %v2624
      %2658 = vst.msk [vmem:[%s2652 + $0x39] sm:$0xff] %vm471, %v2625
      %2659 = vst.msk [vmem:[%s2652 + $0x49] sm:$0xff] %vm471, %v2626
      %2660 = vst.msk [vmem:[%s2652 + $0x51] sm:$0xff] %vm471, %v2627
      %2661 = vst.msk [vmem:[%s2652 + $0x61] sm:$0xff] %vm471, %v2628
      %2662 = vst.msk [vmem:[%s2652 + $0x69] sm:$0xff] %vm471, %v2629
      %2663 = vst.msk [vmem:[%s2652 + $0x79] sm:$0xff] %vm471, %v2630
      %2664 = vst.msk [vmem:[%s2652 + $0x81] sm:$0xff] %vm471, %v2631
      %2665 = vst.msk [vmem:[%s2652 + $0x91] sm:$0xff] %vm471, %v2632
      %2666 = vst.msk [vmem:[%s2652 + $0x99] sm:$0xff] %vm471, %v2633
      %2667 = vst.msk [vmem:[%s2652 + $0xa9] sm:$0xff] %vm471, %v2634
      %2668 = vst.msk [vmem:[%s2652 + $0xb1] sm:$0xff] %vm471, %v2635
      %2669 = vst.msk [vmem:[%s2652 + $0xc1] sm:$0xff] %vm471, %v2636
      %2670 = vst.msk [vmem:[%s2652 + $0xc9] sm:$0xff] %vm471, %v2637
      %2671 = vst.msk [vmem:[%s2652 + $0xd9] sm:$0xff] %vm471, %v2638
      %2672 = vst.msk [vmem:[%s2652 + $0xe1] sm:$0xff] %vm471, %v2639
      %2673 = vst.msk [vmem:[%s2652 + $0xf1] sm:$0xff] %vm471, %v2640
      %2674 = vst.msk [vmem:[%s2652 + $0xf9] sm:$0xff] %vm471, %v2641
      %2675 = vst.msk [vmem:[%s2652 + $0x109] sm:$0xff] %vm471, %v2642
      %2676 = vst.msk [vmem:[%s2652 + $0x111] sm:$0xff] %vm471, %v2643
      %2677 = vst.msk [vmem:[%s2652 + $0x121] sm:$0xff] %vm471, %v2644
      %2678 = vst.msk [vmem:[%s2652 + $0x129] sm:$0xff] %vm471, %v2645
      %2679 = vst.msk [vmem:[%s2652 + $0x139] sm:$0xff] %vm471, %v2646
      %2680 = vst.msk [vmem:[%s2652 + $0x141] sm:$0xff] %vm471, %v2647
      %2681 = vst.msk [vmem:[%s2652 + $0x151] sm:$0xff] %vm471, %v2648
      %2682 = vst.msk [vmem:[%s2652 + $0x159] sm:$0xff] %vm471, %v2649
      %2683 = vst.msk [vmem:[%s2652 + $0x169] sm:$0xff] %vm471, %v2650
      %2684 = vst.msk [vmem:[%s2652 + $0x171] sm:$0xff] %vm471, %v2651
      %v2685 = vld [vmem:[#allocation3] sm:$0xff]
      %v2686 = vld [vmem:[#allocation3 + $0x8] sm:$0xff]
      %v2687 = vld [vmem:[#allocation3 + $0x18] sm:$0xff]
      %v2688 = vld [vmem:[#allocation3 + $0x20] sm:$0xff]
      %v2689 = vld [vmem:[#allocation3 + $0x30] sm:$0xff]
      %v2690 = vld [vmem:[#allocation3 + $0x38] sm:$0xff]
      %v2691 = vld [vmem:[#allocation3 + $0x48] sm:$0xff]
      %v2692 = vld [vmem:[#allocation3 + $0x50] sm:$0xff]
      %v2693 = vld [vmem:[#allocation3 + $0x60] sm:$0xff]
      %v2694 = vld [vmem:[#allocation3 + $0x68] sm:$0xff]
      %v2695 = vld [vmem:[#allocation3 + $0x78] sm:$0xff]
      %v2696 = vld [vmem:[#allocation3 + $0x80] sm:$0xff]
      %v2697 = vld [vmem:[#allocation3 + $0x90] sm:$0xff]
      %v2698 = vld [vmem:[#allocation3 + $0x98] sm:$0xff]
      %v2699 = vld [vmem:[#allocation3 + $0xa8] sm:$0xff]
      %v2700 = vld [vmem:[#allocation3 + $0xb0] sm:$0xff]
      %v2701 = vld [vmem:[#allocation3 + $0xc0] sm:$0xff]
      %v2702 = vld [vmem:[#allocation3 + $0xc8] sm:$0xff]
      %v2703 = vld [vmem:[#allocation3 + $0xd8] sm:$0xff]
      %v2704 = vld [vmem:[#allocation3 + $0xe0] sm:$0xff]
      %v2705 = vld [vmem:[#allocation3 + $0xf0] sm:$0xff]
      %v2706 = vld [vmem:[#allocation3 + $0xf8] sm:$0xff]
      %v2707 = vld [vmem:[#allocation3 + $0x108] sm:$0xff]
      %v2708 = vld [vmem:[#allocation3 + $0x110] sm:$0xff]
      %v2709 = vld [vmem:[#allocation3 + $0x120] sm:$0xff]
      %v2710 = vld [vmem:[#allocation3 + $0x128] sm:$0xff]
      %v2711 = vld [vmem:[#allocation3 + $0x138] sm:$0xff]
      %v2712 = vld [vmem:[#allocation3 + $0x140] sm:$0xff]
      %v2713 = vld [vmem:[#allocation3 + $0x150] sm:$0xff]
      %v2714 = vld [vmem:[#allocation3 + $0x158] sm:$0xff]
      %v2715 = vld [vmem:[#allocation3 + $0x168] sm:$0xff]
      %v2716 = vld [vmem:[#allocation3 + $0x170] sm:$0xff]
      %v2717 = vpack.c.bf16 %v2686, %v2685
      %v2718 = vpack.c.bf16 %v2688, %v2687
      %v2719 = vpack.c.bf16 %v2690, %v2689
      %v2720 = vpack.c.bf16 %v2692, %v2691
      %v2721 = vpack.c.bf16 %v2694, %v2693
      %v2722 = vpack.c.bf16 %v2696, %v2695
      %v2723 = vpack.c.bf16 %v2698, %v2697
      %v2724 = vpack.c.bf16 %v2700, %v2699
      %v2725 = vpack.c.bf16 %v2702, %v2701
      %v2726 = vpack.c.bf16 %v2704, %v2703
      %v2727 = vpack.c.bf16 %v2706, %v2705
      %v2728 = vpack.c.bf16 %v2708, %v2707
      %v2729 = vpack.c.bf16 %v2710, %v2709
      %v2730 = vpack.c.bf16 %v2712, %v2711
      %v2731 = vpack.c.bf16 %v2714, %v2713
      %v2732 = vpack.c.bf16 %v2716, %v2715
      %v2733 = vld [vmem:[%s3] sm:$0xf]
      %v2734 = vld [vmem:[%s3 + $0x4] sm:$0xf]
      %v2735 = vld [vmem:[%s3 + $0x8] sm:$0xf]
      %v2736 = vld [vmem:[%s3 + $0xc] sm:$0xf]
      %v2737 = vld [vmem:[#allocation3 + $0x1] sm:$0xff]
      %v2738 = vld [vmem:[#allocation3 + $0x9] sm:$0xff]
      %v2739 = vld [vmem:[#allocation3 + $0x19] sm:$0xff]
      %v2740 = vld [vmem:[#allocation3 + $0x21] sm:$0xff]
      %v2741 = vld [vmem:[#allocation3 + $0x31] sm:$0xff]
      %v2742 = vld [vmem:[#allocation3 + $0x39] sm:$0xff]
      %v2743 = vld [vmem:[#allocation3 + $0x49] sm:$0xff]
      %v2744 = vld [vmem:[#allocation3 + $0x51] sm:$0xff]
      %v2745 = vld [vmem:[#allocation3 + $0x61] sm:$0xff]
      %v2746 = vld [vmem:[#allocation3 + $0x69] sm:$0xff]
      %v2747 = vld [vmem:[#allocation3 + $0x79] sm:$0xff]
      %v2748 = vld [vmem:[#allocation3 + $0x81] sm:$0xff]
      %v2749 = vld [vmem:[#allocation3 + $0x91] sm:$0xff]
      %v2750 = vld [vmem:[#allocation3 + $0x99] sm:$0xff]
      %v2751 = vld [vmem:[#allocation3 + $0xa9] sm:$0xff]
      %v2752 = vld [vmem:[#allocation3 + $0xb1] sm:$0xff]
      %v2753 = vld [vmem:[#allocation3 + $0xc1] sm:$0xff]
      %v2754 = vld [vmem:[#allocation3 + $0xc9] sm:$0xff]
      %v2755 = vld [vmem:[#allocation3 + $0xd9] sm:$0xff]
      %v2756 = vld [vmem:[#allocation3 + $0xe1] sm:$0xff]
      %v2757 = vld [vmem:[#allocation3 + $0xf1] sm:$0xff]
      %v2758 = vld [vmem:[#allocation3 + $0xf9] sm:$0xff]
      %v2759 = vld [vmem:[#allocation3 + $0x109] sm:$0xff]
      %v2760 = vld [vmem:[#allocation3 + $0x111] sm:$0xff]
      %v2761 = vld [vmem:[#allocation3 + $0x121] sm:$0xff]
      %v2762 = vld [vmem:[#allocation3 + $0x129] sm:$0xff]
      %v2763 = vld [vmem:[#allocation3 + $0x139] sm:$0xff]
      %v2764 = vld [vmem:[#allocation3 + $0x141] sm:$0xff]
      %v2765 = vld [vmem:[#allocation3 + $0x151] sm:$0xff]
      %v2766 = vld [vmem:[#allocation3 + $0x159] sm:$0xff]
      %v2767 = vld [vmem:[#allocation3 + $0x169] sm:$0xff]
      %v2768 = vld [vmem:[#allocation3 + $0x171] sm:$0xff]
      %v2769 = vpack.c.bf16 %v2738, %v2737
      %v2770 = vpack.c.bf16 %v2740, %v2739
      %v2771 = vpack.c.bf16 %v2742, %v2741
      %v2772 = vpack.c.bf16 %v2744, %v2743
      %v2773 = vpack.c.bf16 %v2746, %v2745
      %v2774 = vpack.c.bf16 %v2748, %v2747
      %v2775 = vpack.c.bf16 %v2750, %v2749
      %v2776 = vpack.c.bf16 %v2752, %v2751
      %v2777 = vpack.c.bf16 %v2754, %v2753
      %v2778 = vpack.c.bf16 %v2756, %v2755
      %v2779 = vpack.c.bf16 %v2758, %v2757
      %v2780 = vpack.c.bf16 %v2760, %v2759
      %v2781 = vpack.c.bf16 %v2762, %v2761
      %v2782 = vpack.c.bf16 %v2764, %v2763
      %v2783 = vpack.c.bf16 %v2766, %v2765
      %v2784 = vpack.c.bf16 %v2768, %v2767
      %s2785 = scalar_lea.vmem %s3, 16
      %v2786 = vld [vmem:[%s2785] sm:$0xf]
      %v2787 = vld [vmem:[%s2785 + $0x4] sm:$0xf]
      %v2788 = vld [vmem:[%s2785 + $0x8] sm:$0xf]
      %v2789 = vld [vmem:[%s2785 + $0xc] sm:$0xf]
      %v2794 = vunpack.c.l.b16 %v2786
      %v2795 = vunpack.c.l.b16 %v2787
      %v2796 = vunpack.c.l.b16 %v2788
      %v2797 = vunpack.c.l.b16 %v2789
      %v2798 = vpack.c.b16 %v2795, %v2794
      %v2799 = vpack.c.b16 %v2797, %v2796
      %v2803 = vsel %vm471, %v2769, 0
      %v2806 = vsel %vm471, %v2770, 0
      %v2809 = vsel %vm471, %v2771, 0
      %v2812 = vsel %vm471, %v2772, 0
      %v2815 = vsel %vm471, %v2773, 0
      %v2818 = vsel %vm471, %v2774, 0
      %v2821 = vsel %vm471, %v2775, 0
      %v2824 = vsel %vm471, %v2776, 0
      %v2827 = vsel %vm471, %v2777, 0
      %v2830 = vsel %vm471, %v2778, 0
      %v2833 = vsel %vm471, %v2779, 0
      %v2836 = vsel %vm471, %v2780, 0
      %v2839 = vsel %vm471, %v2781, 0
      %v2842 = vsel %vm471, %v2782, 0
      %v2845 = vsel %vm471, %v2783, 0
      %v2848 = vsel %vm471, %v2784, 0
      %2850 = vmatpush.bf16.msra.mxu0 0
      %2851 = vmatpush.bf16.msra.mxu0 0
      %2852 = vmatpush.bf16.msra.mxu0 0
      %2853 = vmatpush.bf16.msra.mxu0 0
      %2854 = vmatpush.bf16.msra.mxu0 0
      %2855 = vmatpush.bf16.msra.mxu0 0
      %2856 = vmatpush.bf16.msra.mxu0 %v2799
      %2857 = vmatpush.bf16.msra.mxu0 %v2798
      %2858 = vmatmul.bf16.gmra.mxu0 %v2803
      %v2859 = vpop.f32.mrf.mxu0
      %v2860 = vadd.f32 0.0, %v2859
      %v2861 = vpop.f32.mrf.mxu0
      %v2862 = vadd.f32 0.0, %v2861
      %2863 = vmatmul.bf16.gmra.mxu0 %v2806
      %v2864 = vpop.f32.mrf.mxu0
      %v2865 = vadd.f32 0.0, %v2864
      %v2866 = vpop.f32.mrf.mxu0
      %v2867 = vadd.f32 0.0, %v2866
      %2868 = vmatmul.bf16.gmra.mxu0 %v2809
      %v2869 = vpop.f32.mrf.mxu0
      %v2870 = vadd.f32 0.0, %v2869
      %v2871 = vpop.f32.mrf.mxu0
      %v2872 = vadd.f32 0.0, %v2871
      %2873 = vmatmul.bf16.gmra.mxu0 %v2812
      %v2874 = vpop.f32.mrf.mxu0
      %v2875 = vadd.f32 0.0, %v2874
      %v2876 = vpop.f32.mrf.mxu0
      %v2877 = vadd.f32 0.0, %v2876
      %2878 = vmatmul.bf16.gmra.mxu0 %v2815
      %v2879 = vpop.f32.mrf.mxu0
      %v2880 = vadd.f32 0.0, %v2879
      %v2881 = vpop.f32.mrf.mxu0
      %v2882 = vadd.f32 0.0, %v2881
      %2883 = vmatmul.bf16.gmra.mxu0 %v2818
      %v2884 = vpop.f32.mrf.mxu0
      %v2885 = vadd.f32 0.0, %v2884
      %v2886 = vpop.f32.mrf.mxu0
      %v2887 = vadd.f32 0.0, %v2886
      %2888 = vmatmul.bf16.gmra.mxu0 %v2821
      %v2889 = vpop.f32.mrf.mxu0
      %v2890 = vadd.f32 0.0, %v2889
      %v2891 = vpop.f32.mrf.mxu0
      %v2892 = vadd.f32 0.0, %v2891
      %2893 = vmatmul.bf16.gmra.mxu0 %v2824
      %v2894 = vpop.f32.mrf.mxu0
      %v2895 = vadd.f32 0.0, %v2894
      %v2896 = vpop.f32.mrf.mxu0
      %v2897 = vadd.f32 0.0, %v2896
      %2898 = vmatmul.bf16.gmra.mxu0 %v2827
      %v2899 = vpop.f32.mrf.mxu0
      %v2900 = vadd.f32 0.0, %v2899
      %v2901 = vpop.f32.mrf.mxu0
      %v2902 = vadd.f32 0.0, %v2901
      %2903 = vmatmul.bf16.gmra.mxu0 %v2830
      %v2904 = vpop.f32.mrf.mxu0
      %v2905 = vadd.f32 0.0, %v2904
      %v2906 = vpop.f32.mrf.mxu0
      %v2907 = vadd.f32 0.0, %v2906
      %2908 = vmatmul.bf16.gmra.mxu0 %v2833
      %v2909 = vpop.f32.mrf.mxu0
      %v2910 = vadd.f32 0.0, %v2909
      %v2911 = vpop.f32.mrf.mxu0
      %v2912 = vadd.f32 0.0, %v2911
      %2913 = vmatmul.bf16.gmra.mxu0 %v2836
      %v2914 = vpop.f32.mrf.mxu0
      %v2915 = vadd.f32 0.0, %v2914
      %v2916 = vpop.f32.mrf.mxu0
      %v2917 = vadd.f32 0.0, %v2916
      %2918 = vmatmul.bf16.gmra.mxu0 %v2839
      %v2919 = vpop.f32.mrf.mxu0
      %v2920 = vadd.f32 0.0, %v2919
      %v2921 = vpop.f32.mrf.mxu0
      %v2922 = vadd.f32 0.0, %v2921
      %2923 = vmatmul.bf16.gmra.mxu0 %v2842
      %v2924 = vpop.f32.mrf.mxu0
      %v2925 = vadd.f32 0.0, %v2924
      %v2926 = vpop.f32.mrf.mxu0
      %v2927 = vadd.f32 0.0, %v2926
      %2928 = vmatmul.bf16.gmra.mxu0 %v2845
      %v2929 = vpop.f32.mrf.mxu0
      %v2930 = vadd.f32 0.0, %v2929
      %v2931 = vpop.f32.mrf.mxu0
      %v2932 = vadd.f32 0.0, %v2931
      %2933 = vmatmul.bf16.gmra.mxu0 %v2848
      %v2934 = vpop.f32.mrf.mxu0
      %v2935 = vadd.f32 0.0, %v2934
      %v2936 = vpop.f32.mrf.mxu0
      %v2937 = vadd.f32 0.0, %v2936
      %2938 = vdwg.mxu0
      %v2943 = vunpack.c.l.b16 %v2733
      %v2944 = vunpack.c.l.b16 %v2734
      %v2945 = vunpack.c.l.b16 %v2735
      %v2946 = vunpack.c.l.b16 %v2736
      %v2947 = vpack.c.b16 %v2944, %v2943
      %v2948 = vpack.c.b16 %v2946, %v2945
      %v2952 = vsel %vm471, %v2717, 0
      %v2955 = vsel %vm471, %v2718, 0
      %v2958 = vsel %vm471, %v2719, 0
      %v2961 = vsel %vm471, %v2720, 0
      %v2964 = vsel %vm471, %v2721, 0
      %v2967 = vsel %vm471, %v2722, 0
      %v2970 = vsel %vm471, %v2723, 0
      %v2973 = vsel %vm471, %v2724, 0
      %v2976 = vsel %vm471, %v2725, 0
      %v2979 = vsel %vm471, %v2726, 0
      %v2982 = vsel %vm471, %v2727, 0
      %v2985 = vsel %vm471, %v2728, 0
      %v2988 = vsel %vm471, %v2729, 0
      %v2991 = vsel %vm471, %v2730, 0
      %v2994 = vsel %vm471, %v2731, 0
      %v2997 = vsel %vm471, %v2732, 0
      %2999 = vmatpush.bf16.msra.mxu0 0
      %3000 = vmatpush.bf16.msra.mxu0 0
      %3001 = vmatpush.bf16.msra.mxu0 0
      %3002 = vmatpush.bf16.msra.mxu0 0
      %3003 = vmatpush.bf16.msra.mxu0 0
      %3004 = vmatpush.bf16.msra.mxu0 0
      %3005 = vmatpush.bf16.msra.mxu0 %v2948
      %3006 = vmatpush.bf16.msra.mxu0 %v2947
      %3007 = vmatmul.bf16.gmra.mxu0 %v2952
      %v3008 = vpop.f32.mrf.mxu0
      %v3009 = vadd.f32 %v2860, %v3008
      %v3010 = vpop.f32.mrf.mxu0
      %v3011 = vadd.f32 %v2862, %v3010
      %3012 = vmatmul.bf16.gmra.mxu0 %v2955
      %v3013 = vpop.f32.mrf.mxu0
      %v3014 = vadd.f32 %v2865, %v3013
      %v3015 = vpop.f32.mrf.mxu0
      %v3016 = vadd.f32 %v2867, %v3015
      %3017 = vmatmul.bf16.gmra.mxu0 %v2958
      %v3018 = vpop.f32.mrf.mxu0
      %v3019 = vadd.f32 %v2870, %v3018
      %v3020 = vpop.f32.mrf.mxu0
      %v3021 = vadd.f32 %v2872, %v3020
      %3022 = vmatmul.bf16.gmra.mxu0 %v2961
      %v3023 = vpop.f32.mrf.mxu0
      %v3024 = vadd.f32 %v2875, %v3023
      %v3025 = vpop.f32.mrf.mxu0
      %v3026 = vadd.f32 %v2877, %v3025
      %3027 = vmatmul.bf16.gmra.mxu0 %v2964
      %v3028 = vpop.f32.mrf.mxu0
      %v3029 = vadd.f32 %v2880, %v3028
      %v3030 = vpop.f32.mrf.mxu0
      %v3031 = vadd.f32 %v2882, %v3030
      %3032 = vmatmul.bf16.gmra.mxu0 %v2967
      %v3033 = vpop.f32.mrf.mxu0
      %v3034 = vadd.f32 %v2885, %v3033
      %v3035 = vpop.f32.mrf.mxu0
      %v3036 = vadd.f32 %v2887, %v3035
      %3037 = vmatmul.bf16.gmra.mxu0 %v2970
      %v3038 = vpop.f32.mrf.mxu0
      %v3039 = vadd.f32 %v2890, %v3038
      %v3040 = vpop.f32.mrf.mxu0
      %v3041 = vadd.f32 %v2892, %v3040
      %3042 = vmatmul.bf16.gmra.mxu0 %v2973
      %v3043 = vpop.f32.mrf.mxu0
      %v3044 = vadd.f32 %v2895, %v3043
      %v3045 = vpop.f32.mrf.mxu0
      %v3046 = vadd.f32 %v2897, %v3045
      %3047 = vmatmul.bf16.gmra.mxu0 %v2976
      %v3048 = vpop.f32.mrf.mxu0
      %v3049 = vadd.f32 %v2900, %v3048
      %v3050 = vpop.f32.mrf.mxu0
      %v3051 = vadd.f32 %v2902, %v3050
      %3052 = vmatmul.bf16.gmra.mxu0 %v2979
      %v3053 = vpop.f32.mrf.mxu0
      %v3054 = vadd.f32 %v2905, %v3053
      %v3055 = vpop.f32.mrf.mxu0
      %v3056 = vadd.f32 %v2907, %v3055
      %3057 = vmatmul.bf16.gmra.mxu0 %v2982
      %v3058 = vpop.f32.mrf.mxu0
      %v3059 = vadd.f32 %v2910, %v3058
      %v3060 = vpop.f32.mrf.mxu0
      %v3061 = vadd.f32 %v2912, %v3060
      %3062 = vmatmul.bf16.gmra.mxu0 %v2985
      %v3063 = vpop.f32.mrf.mxu0
      %v3064 = vadd.f32 %v2915, %v3063
      %v3065 = vpop.f32.mrf.mxu0
      %v3066 = vadd.f32 %v2917, %v3065
      %3067 = vmatmul.bf16.gmra.mxu0 %v2988
      %v3068 = vpop.f32.mrf.mxu0
      %v3069 = vadd.f32 %v2920, %v3068
      %v3070 = vpop.f32.mrf.mxu0
      %v3071 = vadd.f32 %v2922, %v3070
      %3072 = vmatmul.bf16.gmra.mxu0 %v2991
      %v3073 = vpop.f32.mrf.mxu0
      %v3074 = vadd.f32 %v2925, %v3073
      %v3075 = vpop.f32.mrf.mxu0
      %v3076 = vadd.f32 %v2927, %v3075
      %3077 = vmatmul.bf16.gmra.mxu0 %v2994
      %v3078 = vpop.f32.mrf.mxu0
      %v3079 = vadd.f32 %v2930, %v3078
      %v3080 = vpop.f32.mrf.mxu0
      %v3081 = vadd.f32 %v2932, %v3080
      %3082 = vmatmul.bf16.gmra.mxu0 %v2997
      %v3083 = vpop.f32.mrf.mxu0
      %v3084 = vadd.f32 %v2935, %v3083
      %v3085 = vpop.f32.mrf.mxu0
      %v3086 = vadd.f32 %v2937, %v3085
      %3087 = vdwg.mxu0
      %v3088 = vld [vmem:[#allocation3 + $0x2] sm:$0xff]
      %v3089 = vld [vmem:[#allocation3 + $0xa] sm:$0xff]
      %v3090 = vld [vmem:[#allocation3 + $0x1a] sm:$0xff]
      %v3091 = vld [vmem:[#allocation3 + $0x22] sm:$0xff]
      %v3092 = vld [vmem:[#allocation3 + $0x32] sm:$0xff]
      %v3093 = vld [vmem:[#allocation3 + $0x3a] sm:$0xff]
      %v3094 = vld [vmem:[#allocation3 + $0x4a] sm:$0xff]
      %v3095 = vld [vmem:[#allocation3 + $0x52] sm:$0xff]
      %v3096 = vld [vmem:[#allocation3 + $0x62] sm:$0xff]
      %v3097 = vld [vmem:[#allocation3 + $0x6a] sm:$0xff]
      %v3098 = vld [vmem:[#allocation3 + $0x7a] sm:$0xff]
      %v3099 = vld [vmem:[#allocation3 + $0x82] sm:$0xff]
      %v3100 = vld [vmem:[#allocation3 + $0x92] sm:$0xff]
      %v3101 = vld [vmem:[#allocation3 + $0x9a] sm:$0xff]
      %v3102 = vld [vmem:[#allocation3 + $0xaa] sm:$0xff]
      %v3103 = vld [vmem:[#allocation3 + $0xb2] sm:$0xff]
      %v3104 = vld [vmem:[#allocation3 + $0xc2] sm:$0xff]
      %v3105 = vld [vmem:[#allocation3 + $0xca] sm:$0xff]
      %v3106 = vld [vmem:[#allocation3 + $0xda] sm:$0xff]
      %v3107 = vld [vmem:[#allocation3 + $0xe2] sm:$0xff]
      %v3108 = vld [vmem:[#allocation3 + $0xf2] sm:$0xff]
      %v3109 = vld [vmem:[#allocation3 + $0xfa] sm:$0xff]
      %v3110 = vld [vmem:[#allocation3 + $0x10a] sm:$0xff]
      %v3111 = vld [vmem:[#allocation3 + $0x112] sm:$0xff]
      %v3112 = vld [vmem:[#allocation3 + $0x122] sm:$0xff]
      %v3113 = vld [vmem:[#allocation3 + $0x12a] sm:$0xff]
      %v3114 = vld [vmem:[#allocation3 + $0x13a] sm:$0xff]
      %v3115 = vld [vmem:[#allocation3 + $0x142] sm:$0xff]
      %v3116 = vld [vmem:[#allocation3 + $0x152] sm:$0xff]
      %v3117 = vld [vmem:[#allocation3 + $0x15a] sm:$0xff]
      %v3118 = vld [vmem:[#allocation3 + $0x16a] sm:$0xff]
      %v3119 = vld [vmem:[#allocation3 + $0x172] sm:$0xff]
      %v3120 = vpack.c.bf16 %v3089, %v3088
      %v3121 = vpack.c.bf16 %v3091, %v3090
      %v3122 = vpack.c.bf16 %v3093, %v3092
      %v3123 = vpack.c.bf16 %v3095, %v3094
      %v3124 = vpack.c.bf16 %v3097, %v3096
      %v3125 = vpack.c.bf16 %v3099, %v3098
      %v3126 = vpack.c.bf16 %v3101, %v3100
      %v3127 = vpack.c.bf16 %v3103, %v3102
      %v3128 = vpack.c.bf16 %v3105, %v3104
      %v3129 = vpack.c.bf16 %v3107, %v3106
      %v3130 = vpack.c.bf16 %v3109, %v3108
      %v3131 = vpack.c.bf16 %v3111, %v3110
      %v3132 = vpack.c.bf16 %v3113, %v3112
      %v3133 = vpack.c.bf16 %v3115, %v3114
      %v3134 = vpack.c.bf16 %v3117, %v3116
      %v3135 = vpack.c.bf16 %v3119, %v3118
      %s3136 = scalar_lea.vmem %s3, 32
      %v3137 = vld [vmem:[%s3136] sm:$0xf]
      %v3138 = vld [vmem:[%s3136 + $0x4] sm:$0xf]
      %v3139 = vld [vmem:[%s3136 + $0x8] sm:$0xf]
      %v3140 = vld [vmem:[%s3136 + $0xc] sm:$0xf]
      %v3145 = vunpack.c.l.b16 %v3137
      %v3146 = vunpack.c.l.b16 %v3138
      %v3147 = vunpack.c.l.b16 %v3139
      %v3148 = vunpack.c.l.b16 %v3140
      %v3149 = vpack.c.b16 %v3146, %v3145
      %v3150 = vpack.c.b16 %v3148, %v3147
      %v3154 = vsel %vm471, %v3120, 0
      %v3157 = vsel %vm471, %v3121, 0
      %v3160 = vsel %vm471, %v3122, 0
      %v3163 = vsel %vm471, %v3123, 0
      %v3166 = vsel %vm471, %v3124, 0
      %v3169 = vsel %vm471, %v3125, 0
      %v3172 = vsel %vm471, %v3126, 0
      %v3175 = vsel %vm471, %v3127, 0
      %v3178 = vsel %vm471, %v3128, 0
      %v3181 = vsel %vm471, %v3129, 0
      %v3184 = vsel %vm471, %v3130, 0
      %v3187 = vsel %vm471, %v3131, 0
      %v3190 = vsel %vm471, %v3132, 0
      %v3193 = vsel %vm471, %v3133, 0
      %v3196 = vsel %vm471, %v3134, 0
      %v3199 = vsel %vm471, %v3135, 0
      %3201 = vmatpush.bf16.msra.mxu0 0
      %3202 = vmatpush.bf16.msra.mxu0 0
      %3203 = vmatpush.bf16.msra.mxu0 0
      %3204 = vmatpush.bf16.msra.mxu0 0
      %3205 = vmatpush.bf16.msra.mxu0 0
      %3206 = vmatpush.bf16.msra.mxu0 0
      %3207 = vmatpush.bf16.msra.mxu0 %v3150
      %3208 = vmatpush.bf16.msra.mxu0 %v3149
      %3209 = vmatmul.bf16.gmra.mxu0 %v3154
      %v3210 = vpop.f32.mrf.mxu0
      %v3211 = vadd.f32 0.0, %v3210
      %v3212 = vpop.f32.mrf.mxu0
      %v3213 = vadd.f32 0.0, %v3212
      %3214 = vmatmul.bf16.gmra.mxu0 %v3157
      %v3215 = vpop.f32.mrf.mxu0
      %v3216 = vadd.f32 0.0, %v3215
      %v3217 = vpop.f32.mrf.mxu0
      %v3218 = vadd.f32 0.0, %v3217
      %3219 = vmatmul.bf16.gmra.mxu0 %v3160
      %v3220 = vpop.f32.mrf.mxu0
      %v3221 = vadd.f32 0.0, %v3220
      %v3222 = vpop.f32.mrf.mxu0
      %v3223 = vadd.f32 0.0, %v3222
      %3224 = vmatmul.bf16.gmra.mxu0 %v3163
      %v3225 = vpop.f32.mrf.mxu0
      %v3226 = vadd.f32 0.0, %v3225
      %v3227 = vpop.f32.mrf.mxu0
      %v3228 = vadd.f32 0.0, %v3227
      %3229 = vmatmul.bf16.gmra.mxu0 %v3166
      %v3230 = vpop.f32.mrf.mxu0
      %v3231 = vadd.f32 0.0, %v3230
      %v3232 = vpop.f32.mrf.mxu0
      %v3233 = vadd.f32 0.0, %v3232
      %3234 = vmatmul.bf16.gmra.mxu0 %v3169
      %v3235 = vpop.f32.mrf.mxu0
      %v3236 = vadd.f32 0.0, %v3235
      %v3237 = vpop.f32.mrf.mxu0
      %v3238 = vadd.f32 0.0, %v3237
      %3239 = vmatmul.bf16.gmra.mxu0 %v3172
      %v3240 = vpop.f32.mrf.mxu0
      %v3241 = vadd.f32 0.0, %v3240
      %v3242 = vpop.f32.mrf.mxu0
      %v3243 = vadd.f32 0.0, %v3242
      %3244 = vmatmul.bf16.gmra.mxu0 %v3175
      %v3245 = vpop.f32.mrf.mxu0
      %v3246 = vadd.f32 0.0, %v3245
      %v3247 = vpop.f32.mrf.mxu0
      %v3248 = vadd.f32 0.0, %v3247
      %3249 = vmatmul.bf16.gmra.mxu0 %v3178
      %v3250 = vpop.f32.mrf.mxu0
      %v3251 = vadd.f32 0.0, %v3250
      %v3252 = vpop.f32.mrf.mxu0
      %v3253 = vadd.f32 0.0, %v3252
      %3254 = vmatmul.bf16.gmra.mxu0 %v3181
      %v3255 = vpop.f32.mrf.mxu0
      %v3256 = vadd.f32 0.0, %v3255
      %v3257 = vpop.f32.mrf.mxu0
      %v3258 = vadd.f32 0.0, %v3257
      %3259 = vmatmul.bf16.gmra.mxu0 %v3184
      %v3260 = vpop.f32.mrf.mxu0
      %v3261 = vadd.f32 0.0, %v3260
      %v3262 = vpop.f32.mrf.mxu0
      %v3263 = vadd.f32 0.0, %v3262
      %3264 = vmatmul.bf16.gmra.mxu0 %v3187
      %v3265 = vpop.f32.mrf.mxu0
      %v3266 = vadd.f32 0.0, %v3265
      %v3267 = vpop.f32.mrf.mxu0
      %v3268 = vadd.f32 0.0, %v3267
      %3269 = vmatmul.bf16.gmra.mxu0 %v3190
      %v3270 = vpop.f32.mrf.mxu0
      %v3271 = vadd.f32 0.0, %v3270
      %v3272 = vpop.f32.mrf.mxu0
      %v3273 = vadd.f32 0.0, %v3272
      %3274 = vmatmul.bf16.gmra.mxu0 %v3193
      %v3275 = vpop.f32.mrf.mxu0
      %v3276 = vadd.f32 0.0, %v3275
      %v3277 = vpop.f32.mrf.mxu0
      %v3278 = vadd.f32 0.0, %v3277
      %3279 = vmatmul.bf16.gmra.mxu0 %v3196
      %v3280 = vpop.f32.mrf.mxu0
      %v3281 = vadd.f32 0.0, %v3280
      %v3282 = vpop.f32.mrf.mxu0
      %v3283 = vadd.f32 0.0, %v3282
      %3284 = vmatmul.bf16.gmra.mxu0 %v3199
      %v3285 = vpop.f32.mrf.mxu0
      %v3286 = vadd.f32 0.0, %v3285
      %v3287 = vpop.f32.mrf.mxu0
      %v3288 = vadd.f32 0.0, %v3287
      %3289 = vdwg.mxu0
      %v3290 = vadd.f32 %v3009, %v3211
      %v3291 = vadd.f32 %v3011, %v3213
      %v3292 = vadd.f32 %v3014, %v3216
      %v3293 = vadd.f32 %v3016, %v3218
      %v3294 = vadd.f32 %v3019, %v3221
      %v3295 = vadd.f32 %v3021, %v3223
      %v3296 = vadd.f32 %v3024, %v3226
      %v3297 = vadd.f32 %v3026, %v3228
      %v3298 = vadd.f32 %v3029, %v3231
      %v3299 = vadd.f32 %v3031, %v3233
      %v3300 = vadd.f32 %v3034, %v3236
      %v3301 = vadd.f32 %v3036, %v3238
      %v3302 = vadd.f32 %v3039, %v3241
      %v3303 = vadd.f32 %v3041, %v3243
      %v3304 = vadd.f32 %v3044, %v3246
      %v3305 = vadd.f32 %v3046, %v3248
      %v3306 = vadd.f32 %v3049, %v3251
      %v3307 = vadd.f32 %v3051, %v3253
      %v3308 = vadd.f32 %v3054, %v3256
      %v3309 = vadd.f32 %v3056, %v3258
      %v3310 = vadd.f32 %v3059, %v3261
      %v3311 = vadd.f32 %v3061, %v3263
      %v3312 = vadd.f32 %v3064, %v3266
      %v3313 = vadd.f32 %v3066, %v3268
      %v3314 = vadd.f32 %v3069, %v3271
      %v3315 = vadd.f32 %v3071, %v3273
      %v3316 = vadd.f32 %v3074, %v3276
      %v3317 = vadd.f32 %v3076, %v3278
      %v3318 = vadd.f32 %v3079, %v3281
      %v3319 = vadd.f32 %v3081, %v3283
      %v3320 = vadd.f32 %v3084, %v3286
      %v3321 = vadd.f32 %v3086, %v3288
      %v3322 = vld [vmem:[%s2652] sm:$0xff]
      %v3323 = vld [vmem:[%s2652 + $0x8] sm:$0xff]
      %v3324 = vld [vmem:[%s2652 + $0x18] sm:$0xff]
      %v3325 = vld [vmem:[%s2652 + $0x20] sm:$0xff]
      %v3326 = vld [vmem:[%s2652 + $0x30] sm:$0xff]
      %v3327 = vld [vmem:[%s2652 + $0x38] sm:$0xff]
      %v3328 = vld [vmem:[%s2652 + $0x48] sm:$0xff]
      %v3329 = vld [vmem:[%s2652 + $0x50] sm:$0xff]
      %v3330 = vld [vmem:[%s2652 + $0x60] sm:$0xff]
      %v3331 = vld [vmem:[%s2652 + $0x68] sm:$0xff]
      %v3332 = vld [vmem:[%s2652 + $0x78] sm:$0xff]
      %v3333 = vld [vmem:[%s2652 + $0x80] sm:$0xff]
      %v3334 = vld [vmem:[%s2652 + $0x90] sm:$0xff]
      %v3335 = vld [vmem:[%s2652 + $0x98] sm:$0xff]
      %v3336 = vld [vmem:[%s2652 + $0xa8] sm:$0xff]
      %v3337 = vld [vmem:[%s2652 + $0xb0] sm:$0xff]
      %v3338 = vld [vmem:[%s2652 + $0xc0] sm:$0xff]
      %v3339 = vld [vmem:[%s2652 + $0xc8] sm:$0xff]
      %v3340 = vld [vmem:[%s2652 + $0xd8] sm:$0xff]
      %v3341 = vld [vmem:[%s2652 + $0xe0] sm:$0xff]
      %v3342 = vld [vmem:[%s2652 + $0xf0] sm:$0xff]
      %v3343 = vld [vmem:[%s2652 + $0xf8] sm:$0xff]
      %v3344 = vld [vmem:[%s2652 + $0x108] sm:$0xff]
      %v3345 = vld [vmem:[%s2652 + $0x110] sm:$0xff]
      %v3346 = vld [vmem:[%s2652 + $0x120] sm:$0xff]
      %v3347 = vld [vmem:[%s2652 + $0x128] sm:$0xff]
      %v3348 = vld [vmem:[%s2652 + $0x138] sm:$0xff]
      %v3349 = vld [vmem:[%s2652 + $0x140] sm:$0xff]
      %v3350 = vld [vmem:[%s2652 + $0x150] sm:$0xff]
      %v3351 = vld [vmem:[%s2652 + $0x158] sm:$0xff]
      %v3352 = vld [vmem:[%s2652 + $0x168] sm:$0xff]
      %v3353 = vld [vmem:[%s2652 + $0x170] sm:$0xff]
      %v3354 = vpack.c.bf16 %v3323, %v3322
      %v3355 = vpack.c.bf16 %v3325, %v3324
      %v3356 = vpack.c.bf16 %v3327, %v3326
      %v3357 = vpack.c.bf16 %v3329, %v3328
      %v3358 = vpack.c.bf16 %v3331, %v3330
      %v3359 = vpack.c.bf16 %v3333, %v3332
      %v3360 = vpack.c.bf16 %v3335, %v3334
      %v3361 = vpack.c.bf16 %v3337, %v3336
      %v3362 = vpack.c.bf16 %v3339, %v3338
      %v3363 = vpack.c.bf16 %v3341, %v3340
      %v3364 = vpack.c.bf16 %v3343, %v3342
      %v3365 = vpack.c.bf16 %v3345, %v3344
      %v3366 = vpack.c.bf16 %v3347, %v3346
      %v3367 = vpack.c.bf16 %v3349, %v3348
      %v3368 = vpack.c.bf16 %v3351, %v3350
      %v3369 = vpack.c.bf16 %v3353, %v3352
      %s3370 = scalar_lea.vmem %s3, 48
      %v3371 = vld [vmem:[%s3370] sm:$0xf]
      %v3372 = vld [vmem:[%s3370 + $0x4] sm:$0xf]
      %v3373 = vld [vmem:[%s3370 + $0x8] sm:$0xf]
      %v3374 = vld [vmem:[%s3370 + $0xc] sm:$0xf]
      %v3379 = vunpack.c.l.b16 %v3371
      %v3380 = vunpack.c.l.b16 %v3372
      %v3381 = vunpack.c.l.b16 %v3373
      %v3382 = vunpack.c.l.b16 %v3374
      %v3383 = vpack.c.b16 %v3380, %v3379
      %v3384 = vpack.c.b16 %v3382, %v3381
      %v3388 = vsel %vm471, %v3354, 0
      %v3391 = vsel %vm471, %v3355, 0
      %v3394 = vsel %vm471, %v3356, 0
      %v3397 = vsel %vm471, %v3357, 0
      %v3400 = vsel %vm471, %v3358, 0
      %v3403 = vsel %vm471, %v3359, 0
      %v3406 = vsel %vm471, %v3360, 0
      %v3409 = vsel %vm471, %v3361, 0
      %v3412 = vsel %vm471, %v3362, 0
      %v3415 = vsel %vm471, %v3363, 0
      %v3418 = vsel %vm471, %v3364, 0
      %v3421 = vsel %vm471, %v3365, 0
      %v3424 = vsel %vm471, %v3366, 0
      %v3427 = vsel %vm471, %v3367, 0
      %v3430 = vsel %vm471, %v3368, 0
      %v3433 = vsel %vm471, %v3369, 0
      %3435 = vmatpush.bf16.msra.mxu0 0
      %3436 = vmatpush.bf16.msra.mxu0 0
      %3437 = vmatpush.bf16.msra.mxu0 0
      %3438 = vmatpush.bf16.msra.mxu0 0
      %3439 = vmatpush.bf16.msra.mxu0 0
      %3440 = vmatpush.bf16.msra.mxu0 0
      %3441 = vmatpush.bf16.msra.mxu0 %v3384
      %3442 = vmatpush.bf16.msra.mxu0 %v3383
      %3443 = vmatmul.bf16.gmra.mxu0 %v3388
      %v3444 = vpop.f32.mrf.mxu0
      %v3445 = vadd.f32 0.0, %v3444
      %v3446 = vpop.f32.mrf.mxu0
      %v3447 = vadd.f32 0.0, %v3446
      %3448 = vmatmul.bf16.gmra.mxu0 %v3391
      %v3449 = vpop.f32.mrf.mxu0
      %v3450 = vadd.f32 0.0, %v3449
      %v3451 = vpop.f32.mrf.mxu0
      %v3452 = vadd.f32 0.0, %v3451
      %3453 = vmatmul.bf16.gmra.mxu0 %v3394
      %v3454 = vpop.f32.mrf.mxu0
      %v3455 = vadd.f32 0.0, %v3454
      %v3456 = vpop.f32.mrf.mxu0
      %v3457 = vadd.f32 0.0, %v3456
      %3458 = vmatmul.bf16.gmra.mxu0 %v3397
      %v3459 = vpop.f32.mrf.mxu0
      %v3460 = vadd.f32 0.0, %v3459
      %v3461 = vpop.f32.mrf.mxu0
      %v3462 = vadd.f32 0.0, %v3461
      %3463 = vmatmul.bf16.gmra.mxu0 %v3400
      %v3464 = vpop.f32.mrf.mxu0
      %v3465 = vadd.f32 0.0, %v3464
      %v3466 = vpop.f32.mrf.mxu0
      %v3467 = vadd.f32 0.0, %v3466
      %3468 = vmatmul.bf16.gmra.mxu0 %v3403
      %v3469 = vpop.f32.mrf.mxu0
      %v3470 = vadd.f32 0.0, %v3469
      %v3471 = vpop.f32.mrf.mxu0
      %v3472 = vadd.f32 0.0, %v3471
      %3473 = vmatmul.bf16.gmra.mxu0 %v3406
      %v3474 = vpop.f32.mrf.mxu0
      %v3475 = vadd.f32 0.0, %v3474
      %v3476 = vpop.f32.mrf.mxu0
      %v3477 = vadd.f32 0.0, %v3476
      %3478 = vmatmul.bf16.gmra.mxu0 %v3409
      %v3479 = vpop.f32.mrf.mxu0
      %v3480 = vadd.f32 0.0, %v3479
      %v3481 = vpop.f32.mrf.mxu0
      %v3482 = vadd.f32 0.0, %v3481
      %3483 = vmatmul.bf16.gmra.mxu0 %v3412
      %v3484 = vpop.f32.mrf.mxu0
      %v3485 = vadd.f32 0.0, %v3484
      %v3486 = vpop.f32.mrf.mxu0
      %v3487 = vadd.f32 0.0, %v3486
      %3488 = vmatmul.bf16.gmra.mxu0 %v3415
      %v3489 = vpop.f32.mrf.mxu0
      %v3490 = vadd.f32 0.0, %v3489
      %v3491 = vpop.f32.mrf.mxu0
      %v3492 = vadd.f32 0.0, %v3491
      %3493 = vmatmul.bf16.gmra.mxu0 %v3418
      %v3494 = vpop.f32.mrf.mxu0
      %v3495 = vadd.f32 0.0, %v3494
      %v3496 = vpop.f32.mrf.mxu0
      %v3497 = vadd.f32 0.0, %v3496
      %3498 = vmatmul.bf16.gmra.mxu0 %v3421
      %v3499 = vpop.f32.mrf.mxu0
      %v3500 = vadd.f32 0.0, %v3499
      %v3501 = vpop.f32.mrf.mxu0
      %v3502 = vadd.f32 0.0, %v3501
      %3503 = vmatmul.bf16.gmra.mxu0 %v3424
      %v3504 = vpop.f32.mrf.mxu0
      %v3505 = vadd.f32 0.0, %v3504
      %v3506 = vpop.f32.mrf.mxu0
      %v3507 = vadd.f32 0.0, %v3506
      %3508 = vmatmul.bf16.gmra.mxu0 %v3427
      %v3509 = vpop.f32.mrf.mxu0
      %v3510 = vadd.f32 0.0, %v3509
      %v3511 = vpop.f32.mrf.mxu0
      %v3512 = vadd.f32 0.0, %v3511
      %3513 = vmatmul.bf16.gmra.mxu0 %v3430
      %v3514 = vpop.f32.mrf.mxu0
      %v3515 = vadd.f32 0.0, %v3514
      %v3516 = vpop.f32.mrf.mxu0
      %v3517 = vadd.f32 0.0, %v3516
      %3518 = vmatmul.bf16.gmra.mxu0 %v3433
      %v3519 = vpop.f32.mrf.mxu0
      %v3520 = vadd.f32 0.0, %v3519
      %v3521 = vpop.f32.mrf.mxu0
      %v3522 = vadd.f32 0.0, %v3521
      %3523 = vdwg.mxu0
      %v3524 = vadd.f32 %v3290, %v3445
      %v3525 = vadd.f32 %v3291, %v3447
      %v3526 = vadd.f32 %v3292, %v3450
      %v3527 = vadd.f32 %v3293, %v3452
      %v3528 = vadd.f32 %v3294, %v3455
      %v3529 = vadd.f32 %v3295, %v3457
      %v3530 = vadd.f32 %v3296, %v3460
      %v3531 = vadd.f32 %v3297, %v3462
      %v3532 = vadd.f32 %v3298, %v3465
      %v3533 = vadd.f32 %v3299, %v3467
      %v3534 = vadd.f32 %v3300, %v3470
      %v3535 = vadd.f32 %v3301, %v3472
      %v3536 = vadd.f32 %v3302, %v3475
      %v3537 = vadd.f32 %v3303, %v3477
      %v3538 = vadd.f32 %v3304, %v3480
      %v3539 = vadd.f32 %v3305, %v3482
      %v3540 = vadd.f32 %v3306, %v3485
      %v3541 = vadd.f32 %v3307, %v3487
      %v3542 = vadd.f32 %v3308, %v3490
      %v3543 = vadd.f32 %v3309, %v3492
      %v3544 = vadd.f32 %v3310, %v3495
      %v3545 = vadd.f32 %v3311, %v3497
      %v3546 = vadd.f32 %v3312, %v3500
      %v3547 = vadd.f32 %v3313, %v3502
      %v3548 = vadd.f32 %v3314, %v3505
      %v3549 = vadd.f32 %v3315, %v3507
      %v3550 = vadd.f32 %v3316, %v3510
      %v3551 = vadd.f32 %v3317, %v3512
      %v3552 = vadd.f32 %v3318, %v3515
      %v3553 = vadd.f32 %v3319, %v3517
      %v3554 = vadd.f32 %v3320, %v3520
      %v3555 = vadd.f32 %v3321, %v3522
      %v3556 = vld [vmem:[%s2652 + $0x1] sm:$0xff]
      %v3557 = vld [vmem:[%s2652 + $0x9] sm:$0xff]
      %v3558 = vld [vmem:[%s2652 + $0x19] sm:$0xff]
      %v3559 = vld [vmem:[%s2652 + $0x21] sm:$0xff]
      %v3560 = vld [vmem:[%s2652 + $0x31] sm:$0xff]
      %v3561 = vld [vmem:[%s2652 + $0x39] sm:$0xff]
      %v3562 = vld [vmem:[%s2652 + $0x49] sm:$0xff]
      %v3563 = vld [vmem:[%s2652 + $0x51] sm:$0xff]
      %v3564 = vld [vmem:[%s2652 + $0x61] sm:$0xff]
      %v3565 = vld [vmem:[%s2652 + $0x69] sm:$0xff]
      %v3566 = vld [vmem:[%s2652 + $0x79] sm:$0xff]
      %v3567 = vld [vmem:[%s2652 + $0x81] sm:$0xff]
      %v3568 = vld [vmem:[%s2652 + $0x91] sm:$0xff]
      %v3569 = vld [vmem:[%s2652 + $0x99] sm:$0xff]
      %v3570 = vld [vmem:[%s2652 + $0xa9] sm:$0xff]
      %v3571 = vld [vmem:[%s2652 + $0xb1] sm:$0xff]
      %v3572 = vld [vmem:[%s2652 + $0xc1] sm:$0xff]
      %v3573 = vld [vmem:[%s2652 + $0xc9] sm:$0xff]
      %v3574 = vld [vmem:[%s2652 + $0xd9] sm:$0xff]
      %v3575 = vld [vmem:[%s2652 + $0xe1] sm:$0xff]
      %v3576 = vld [vmem:[%s2652 + $0xf1] sm:$0xff]
      %v3577 = vld [vmem:[%s2652 + $0xf9] sm:$0xff]
      %v3578 = vld [vmem:[%s2652 + $0x109] sm:$0xff]
      %v3579 = vld [vmem:[%s2652 + $0x111] sm:$0xff]
      %v3580 = vld [vmem:[%s2652 + $0x121] sm:$0xff]
      %v3581 = vld [vmem:[%s2652 + $0x129] sm:$0xff]
      %v3582 = vld [vmem:[%s2652 + $0x139] sm:$0xff]
      %v3583 = vld [vmem:[%s2652 + $0x141] sm:$0xff]
      %v3584 = vld [vmem:[%s2652 + $0x151] sm:$0xff]
      %v3585 = vld [vmem:[%s2652 + $0x159] sm:$0xff]
      %v3586 = vld [vmem:[%s2652 + $0x169] sm:$0xff]
      %v3587 = vld [vmem:[%s2652 + $0x171] sm:$0xff]
      %v3588 = vpack.c.bf16 %v3557, %v3556
      %v3589 = vpack.c.bf16 %v3559, %v3558
      %v3590 = vpack.c.bf16 %v3561, %v3560
      %v3591 = vpack.c.bf16 %v3563, %v3562
      %v3592 = vpack.c.bf16 %v3565, %v3564
      %v3593 = vpack.c.bf16 %v3567, %v3566
      %v3594 = vpack.c.bf16 %v3569, %v3568
      %v3595 = vpack.c.bf16 %v3571, %v3570
      %v3596 = vpack.c.bf16 %v3573, %v3572
      %v3597 = vpack.c.bf16 %v3575, %v3574
      %v3598 = vpack.c.bf16 %v3577, %v3576
      %v3599 = vpack.c.bf16 %v3579, %v3578
      %v3600 = vpack.c.bf16 %v3581, %v3580
      %v3601 = vpack.c.bf16 %v3583, %v3582
      %v3602 = vpack.c.bf16 %v3585, %v3584
      %v3603 = vpack.c.bf16 %v3587, %v3586
      %s3604 = scalar_lea.vmem %s3, 64
      %v3605 = vld [vmem:[%s3604] sm:$0xf]
      %v3606 = vld [vmem:[%s3604 + $0x4] sm:$0xf]
      %v3607 = vld [vmem:[%s3604 + $0x8] sm:$0xf]
      %v3608 = vld [vmem:[%s3604 + $0xc] sm:$0xf]
      %v3613 = vunpack.c.l.b16 %v3605
      %v3614 = vunpack.c.l.b16 %v3606
      %v3615 = vunpack.c.l.b16 %v3607
      %v3616 = vunpack.c.l.b16 %v3608
      %v3617 = vpack.c.b16 %v3614, %v3613
      %v3618 = vpack.c.b16 %v3616, %v3615
      %v3622 = vsel %vm471, %v3588, 0
      %v3625 = vsel %vm471, %v3589, 0
      %v3628 = vsel %vm471, %v3590, 0
      %v3631 = vsel %vm471, %v3591, 0
      %v3634 = vsel %vm471, %v3592, 0
      %v3637 = vsel %vm471, %v3593, 0
      %v3640 = vsel %vm471, %v3594, 0
      %v3643 = vsel %vm471, %v3595, 0
      %v3646 = vsel %vm471, %v3596, 0
      %v3649 = vsel %vm471, %v3597, 0
      %v3652 = vsel %vm471, %v3598, 0
      %v3655 = vsel %vm471, %v3599, 0
      %v3658 = vsel %vm471, %v3600, 0
      %v3661 = vsel %vm471, %v3601, 0
      %v3664 = vsel %vm471, %v3602, 0
      %v3667 = vsel %vm471, %v3603, 0
      %3669 = vmatpush.bf16.msra.mxu0 0
      %3670 = vmatpush.bf16.msra.mxu0 0
      %3671 = vmatpush.bf16.msra.mxu0 0
      %3672 = vmatpush.bf16.msra.mxu0 0
      %3673 = vmatpush.bf16.msra.mxu0 0
      %3674 = vmatpush.bf16.msra.mxu0 0
      %3675 = vmatpush.bf16.msra.mxu0 %v3618
      %3676 = vmatpush.bf16.msra.mxu0 %v3617
      %3677 = vmatmul.bf16.gmra.mxu0 %v3622
      %v3678 = vpop.f32.mrf.mxu0
      %v3679 = vadd.f32 0.0, %v3678
      %v3680 = vpop.f32.mrf.mxu0
      %v3681 = vadd.f32 0.0, %v3680
      %3682 = vmatmul.bf16.gmra.mxu0 %v3625
      %v3683 = vpop.f32.mrf.mxu0
      %v3684 = vadd.f32 0.0, %v3683
      %v3685 = vpop.f32.mrf.mxu0
      %v3686 = vadd.f32 0.0, %v3685
      %3687 = vmatmul.bf16.gmra.mxu0 %v3628
      %v3688 = vpop.f32.mrf.mxu0
      %v3689 = vadd.f32 0.0, %v3688
      %v3690 = vpop.f32.mrf.mxu0
      %v3691 = vadd.f32 0.0, %v3690
      %3692 = vmatmul.bf16.gmra.mxu0 %v3631
      %v3693 = vpop.f32.mrf.mxu0
      %v3694 = vadd.f32 0.0, %v3693
      %v3695 = vpop.f32.mrf.mxu0
      %v3696 = vadd.f32 0.0, %v3695
      %3697 = vmatmul.bf16.gmra.mxu0 %v3634
      %v3698 = vpop.f32.mrf.mxu0
      %v3699 = vadd.f32 0.0, %v3698
      %v3700 = vpop.f32.mrf.mxu0
      %v3701 = vadd.f32 0.0, %v3700
      %3702 = vmatmul.bf16.gmra.mxu0 %v3637
      %v3703 = vpop.f32.mrf.mxu0
      %v3704 = vadd.f32 0.0, %v3703
      %v3705 = vpop.f32.mrf.mxu0
      %v3706 = vadd.f32 0.0, %v3705
      %3707 = vmatmul.bf16.gmra.mxu0 %v3640
      %v3708 = vpop.f32.mrf.mxu0
      %v3709 = vadd.f32 0.0, %v3708
      %v3710 = vpop.f32.mrf.mxu0
      %v3711 = vadd.f32 0.0, %v3710
      %3712 = vmatmul.bf16.gmra.mxu0 %v3643
      %v3713 = vpop.f32.mrf.mxu0
      %v3714 = vadd.f32 0.0, %v3713
      %v3715 = vpop.f32.mrf.mxu0
      %v3716 = vadd.f32 0.0, %v3715
      %3717 = vmatmul.bf16.gmra.mxu0 %v3646
      %v3718 = vpop.f32.mrf.mxu0
      %v3719 = vadd.f32 0.0, %v3718
      %v3720 = vpop.f32.mrf.mxu0
      %v3721 = vadd.f32 0.0, %v3720
      %3722 = vmatmul.bf16.gmra.mxu0 %v3649
      %v3723 = vpop.f32.mrf.mxu0
      %v3724 = vadd.f32 0.0, %v3723
      %v3725 = vpop.f32.mrf.mxu0
      %v3726 = vadd.f32 0.0, %v3725
      %3727 = vmatmul.bf16.gmra.mxu0 %v3652
      %v3728 = vpop.f32.mrf.mxu0
      %v3729 = vadd.f32 0.0, %v3728
      %v3730 = vpop.f32.mrf.mxu0
      %v3731 = vadd.f32 0.0, %v3730
      %3732 = vmatmul.bf16.gmra.mxu0 %v3655
      %v3733 = vpop.f32.mrf.mxu0
      %v3734 = vadd.f32 0.0, %v3733
      %v3735 = vpop.f32.mrf.mxu0
      %v3736 = vadd.f32 0.0, %v3735
      %3737 = vmatmul.bf16.gmra.mxu0 %v3658
      %v3738 = vpop.f32.mrf.mxu0
      %v3739 = vadd.f32 0.0, %v3738
      %v3740 = vpop.f32.mrf.mxu0
      %v3741 = vadd.f32 0.0, %v3740
      %3742 = vmatmul.bf16.gmra.mxu0 %v3661
      %v3743 = vpop.f32.mrf.mxu0
      %v3744 = vadd.f32 0.0, %v3743
      %v3745 = vpop.f32.mrf.mxu0
      %v3746 = vadd.f32 0.0, %v3745
      %3747 = vmatmul.bf16.gmra.mxu0 %v3664
      %v3748 = vpop.f32.mrf.mxu0
      %v3749 = vadd.f32 0.0, %v3748
      %v3750 = vpop.f32.mrf.mxu0
      %v3751 = vadd.f32 0.0, %v3750
      %3752 = vmatmul.bf16.gmra.mxu0 %v3667
      %v3753 = vpop.f32.mrf.mxu0
      %v3754 = vadd.f32 0.0, %v3753
      %v3755 = vpop.f32.mrf.mxu0
      %v3756 = vadd.f32 0.0, %v3755
      %3757 = vdwg.mxu0
      %v3758 = vadd.f32 %v3524, %v3679
      %v3759 = vadd.f32 %v3525, %v3681
      %v3760 = vadd.f32 %v3526, %v3684
      %v3761 = vadd.f32 %v3527, %v3686
      %v3762 = vadd.f32 %v3528, %v3689
      %v3763 = vadd.f32 %v3529, %v3691
      %v3764 = vadd.f32 %v3530, %v3694
      %v3765 = vadd.f32 %v3531, %v3696
      %v3766 = vadd.f32 %v3532, %v3699
      %v3767 = vadd.f32 %v3533, %v3701
      %v3768 = vadd.f32 %v3534, %v3704
      %v3769 = vadd.f32 %v3535, %v3706
      %v3770 = vadd.f32 %v3536, %v3709
      %v3771 = vadd.f32 %v3537, %v3711
      %v3772 = vadd.f32 %v3538, %v3714
      %v3773 = vadd.f32 %v3539, %v3716
      %v3774 = vadd.f32 %v3540, %v3719
      %v3775 = vadd.f32 %v3541, %v3721
      %v3776 = vadd.f32 %v3542, %v3724
      %v3777 = vadd.f32 %v3543, %v3726
      %v3778 = vadd.f32 %v3544, %v3729
      %v3779 = vadd.f32 %v3545, %v3731
      %v3780 = vadd.f32 %v3546, %v3734
      %v3781 = vadd.f32 %v3547, %v3736
      %v3782 = vadd.f32 %v3548, %v3739
      %v3783 = vadd.f32 %v3549, %v3741
      %v3784 = vadd.f32 %v3550, %v3744
      %v3785 = vadd.f32 %v3551, %v3746
      %v3786 = vadd.f32 %v3552, %v3749
      %v3787 = vadd.f32 %v3553, %v3751
      %v3788 = vadd.f32 %v3554, %v3754
      %v3789 = vadd.f32 %v3555, %v3756
      %v3790 = vld [vmem:[%s2652 + $0x2] sm:$0xff]
      %v3791 = vld [vmem:[%s2652 + $0xa] sm:$0xff]
      %v3792 = vld [vmem:[%s2652 + $0x1a] sm:$0xff]
      %v3793 = vld [vmem:[%s2652 + $0x22] sm:$0xff]
      %v3794 = vld [vmem:[%s2652 + $0x32] sm:$0xff]
      %v3795 = vld [vmem:[%s2652 + $0x3a] sm:$0xff]
      %v3796 = vld [vmem:[%s2652 + $0x4a] sm:$0xff]
      %v3797 = vld [vmem:[%s2652 + $0x52] sm:$0xff]
      %v3798 = vld [vmem:[%s2652 + $0x62] sm:$0xff]
      %v3799 = vld [vmem:[%s2652 + $0x6a] sm:$0xff]
      %v3800 = vld [vmem:[%s2652 + $0x7a] sm:$0xff]
      %v3801 = vld [vmem:[%s2652 + $0x82] sm:$0xff]
      %v3802 = vld [vmem:[%s2652 + $0x92] sm:$0xff]
      %v3803 = vld [vmem:[%s2652 + $0x9a] sm:$0xff]
      %v3804 = vld [vmem:[%s2652 + $0xaa] sm:$0xff]
      %v3805 = vld [vmem:[%s2652 + $0xb2] sm:$0xff]
      %v3806 = vld [vmem:[%s2652 + $0xc2] sm:$0xff]
      %v3807 = vld [vmem:[%s2652 + $0xca] sm:$0xff]
      %v3808 = vld [vmem:[%s2652 + $0xda] sm:$0xff]
      %v3809 = vld [vmem:[%s2652 + $0xe2] sm:$0xff]
      %v3810 = vld [vmem:[%s2652 + $0xf2] sm:$0xff]
      %v3811 = vld [vmem:[%s2652 + $0xfa] sm:$0xff]
      %v3812 = vld [vmem:[%s2652 + $0x10a] sm:$0xff]
      %v3813 = vld [vmem:[%s2652 + $0x112] sm:$0xff]
      %v3814 = vld [vmem:[%s2652 + $0x122] sm:$0xff]
      %v3815 = vld [vmem:[%s2652 + $0x12a] sm:$0xff]
      %v3816 = vld [vmem:[%s2652 + $0x13a] sm:$0xff]
      %v3817 = vld [vmem:[%s2652 + $0x142] sm:$0xff]
      %v3818 = vld [vmem:[%s2652 + $0x152] sm:$0xff]
      %v3819 = vld [vmem:[%s2652 + $0x15a] sm:$0xff]
      %v3820 = vld [vmem:[%s2652 + $0x16a] sm:$0xff]
      %v3821 = vld [vmem:[%s2652 + $0x172] sm:$0xff]
      %v3822 = vpack.c.bf16 %v3791, %v3790
      %v3823 = vpack.c.bf16 %v3793, %v3792
      %v3824 = vpack.c.bf16 %v3795, %v3794
      %v3825 = vpack.c.bf16 %v3797, %v3796
      %v3826 = vpack.c.bf16 %v3799, %v3798
      %v3827 = vpack.c.bf16 %v3801, %v3800
      %v3828 = vpack.c.bf16 %v3803, %v3802
      %v3829 = vpack.c.bf16 %v3805, %v3804
      %v3830 = vpack.c.bf16 %v3807, %v3806
      %v3831 = vpack.c.bf16 %v3809, %v3808
      %v3832 = vpack.c.bf16 %v3811, %v3810
      %v3833 = vpack.c.bf16 %v3813, %v3812
      %v3834 = vpack.c.bf16 %v3815, %v3814
      %v3835 = vpack.c.bf16 %v3817, %v3816
      %v3836 = vpack.c.bf16 %v3819, %v3818
      %v3837 = vpack.c.bf16 %v3821, %v3820
      %s3838 = scalar_lea.vmem %s3, 80
      %v3839 = vld [vmem:[%s3838] sm:$0xf]
      %v3840 = vld [vmem:[%s3838 + $0x4] sm:$0xf]
      %v3841 = vld [vmem:[%s3838 + $0x8] sm:$0xf]
      %v3842 = vld [vmem:[%s3838 + $0xc] sm:$0xf]
      %v3847 = vunpack.c.l.b16 %v3839
      %v3848 = vunpack.c.l.b16 %v3840
      %v3849 = vunpack.c.l.b16 %v3841
      %v3850 = vunpack.c.l.b16 %v3842
      %v3851 = vpack.c.b16 %v3848, %v3847
      %v3852 = vpack.c.b16 %v3850, %v3849
      %v3856 = vsel %vm471, %v3822, 0
      %v3859 = vsel %vm471, %v3823, 0
      %v3862 = vsel %vm471, %v3824, 0
      %v3865 = vsel %vm471, %v3825, 0
      %v3868 = vsel %vm471, %v3826, 0
      %v3871 = vsel %vm471, %v3827, 0
      %v3874 = vsel %vm471, %v3828, 0
      %v3877 = vsel %vm471, %v3829, 0
      %v3880 = vsel %vm471, %v3830, 0
      %v3883 = vsel %vm471, %v3831, 0
      %v3886 = vsel %vm471, %v3832, 0
      %v3889 = vsel %vm471, %v3833, 0
      %v3892 = vsel %vm471, %v3834, 0
      %v3895 = vsel %vm471, %v3835, 0
      %v3898 = vsel %vm471, %v3836, 0
      %v3901 = vsel %vm471, %v3837, 0
      %3903 = vmatpush.bf16.msra.mxu0 0
      %3904 = vmatpush.bf16.msra.mxu0 0
      %3905 = vmatpush.bf16.msra.mxu0 0
      %3906 = vmatpush.bf16.msra.mxu0 0
      %3907 = vmatpush.bf16.msra.mxu0 0
      %3908 = vmatpush.bf16.msra.mxu0 0
      %3909 = vmatpush.bf16.msra.mxu0 %v3852
      %3910 = vmatpush.bf16.msra.mxu0 %v3851
      %3911 = vmatmul.bf16.gmra.mxu0 %v3856
      %v3912 = vpop.f32.mrf.mxu0
      %v3913 = vadd.f32 0.0, %v3912
      %v3914 = vpop.f32.mrf.mxu0
      %v3915 = vadd.f32 0.0, %v3914
      %3916 = vmatmul.bf16.gmra.mxu0 %v3859
      %v3917 = vpop.f32.mrf.mxu0
      %v3918 = vadd.f32 0.0, %v3917
      %v3919 = vpop.f32.mrf.mxu0
      %v3920 = vadd.f32 0.0, %v3919
      %3921 = vmatmul.bf16.gmra.mxu0 %v3862
      %v3922 = vpop.f32.mrf.mxu0
      %v3923 = vadd.f32 0.0, %v3922
      %v3924 = vpop.f32.mrf.mxu0
      %v3925 = vadd.f32 0.0, %v3924
      %3926 = vmatmul.bf16.gmra.mxu0 %v3865
      %v3927 = vpop.f32.mrf.mxu0
      %v3928 = vadd.f32 0.0, %v3927
      %v3929 = vpop.f32.mrf.mxu0
      %v3930 = vadd.f32 0.0, %v3929
      %3931 = vmatmul.bf16.gmra.mxu0 %v3868
      %v3932 = vpop.f32.mrf.mxu0
      %v3933 = vadd.f32 0.0, %v3932
      %v3934 = vpop.f32.mrf.mxu0
      %v3935 = vadd.f32 0.0, %v3934
      %3936 = vmatmul.bf16.gmra.mxu0 %v3871
      %v3937 = vpop.f32.mrf.mxu0
      %v3938 = vadd.f32 0.0, %v3937
      %v3939 = vpop.f32.mrf.mxu0
      %v3940 = vadd.f32 0.0, %v3939
      %3941 = vmatmul.bf16.gmra.mxu0 %v3874
      %v3942 = vpop.f32.mrf.mxu0
      %v3943 = vadd.f32 0.0, %v3942
      %v3944 = vpop.f32.mrf.mxu0
      %v3945 = vadd.f32 0.0, %v3944
      %3946 = vmatmul.bf16.gmra.mxu0 %v3877
      %v3947 = vpop.f32.mrf.mxu0
      %v3948 = vadd.f32 0.0, %v3947
      %v3949 = vpop.f32.mrf.mxu0
      %v3950 = vadd.f32 0.0, %v3949
      %3951 = vmatmul.bf16.gmra.mxu0 %v3880
      %v3952 = vpop.f32.mrf.mxu0
      %v3953 = vadd.f32 0.0, %v3952
      %v3954 = vpop.f32.mrf.mxu0
      %v3955 = vadd.f32 0.0, %v3954
      %3956 = vmatmul.bf16.gmra.mxu0 %v3883
      %v3957 = vpop.f32.mrf.mxu0
      %v3958 = vadd.f32 0.0, %v3957
      %v3959 = vpop.f32.mrf.mxu0
      %v3960 = vadd.f32 0.0, %v3959
      %3961 = vmatmul.bf16.gmra.mxu0 %v3886
      %v3962 = vpop.f32.mrf.mxu0
      %v3963 = vadd.f32 0.0, %v3962
      %v3964 = vpop.f32.mrf.mxu0
      %v3965 = vadd.f32 0.0, %v3964
      %3966 = vmatmul.bf16.gmra.mxu0 %v3889
      %v3967 = vpop.f32.mrf.mxu0
      %v3968 = vadd.f32 0.0, %v3967
      %v3969 = vpop.f32.mrf.mxu0
      %v3970 = vadd.f32 0.0, %v3969
      %3971 = vmatmul.bf16.gmra.mxu0 %v3892
      %v3972 = vpop.f32.mrf.mxu0
      %v3973 = vadd.f32 0.0, %v3972
      %v3974 = vpop.f32.mrf.mxu0
      %v3975 = vadd.f32 0.0, %v3974
      %3976 = vmatmul.bf16.gmra.mxu0 %v3895
      %v3977 = vpop.f32.mrf.mxu0
      %v3978 = vadd.f32 0.0, %v3977
      %v3979 = vpop.f32.mrf.mxu0
      %v3980 = vadd.f32 0.0, %v3979
      %3981 = vmatmul.bf16.gmra.mxu0 %v3898
      %v3982 = vpop.f32.mrf.mxu0
      %v3983 = vadd.f32 0.0, %v3982
      %v3984 = vpop.f32.mrf.mxu0
      %v3985 = vadd.f32 0.0, %v3984
      %3986 = vmatmul.bf16.gmra.mxu0 %v3901
      %v3987 = vpop.f32.mrf.mxu0
      %v3988 = vadd.f32 0.0, %v3987
      %v3989 = vpop.f32.mrf.mxu0
      %v3990 = vadd.f32 0.0, %v3989
      %3991 = vdwg.mxu0
      %v3992 = vadd.f32 %v3758, %v3913
      %v3993 = vadd.f32 %v3759, %v3915
      %v3994 = vadd.f32 %v3760, %v3918
      %v3995 = vadd.f32 %v3761, %v3920
      %v3996 = vadd.f32 %v3762, %v3923
      %v3997 = vadd.f32 %v3763, %v3925
      %v3998 = vadd.f32 %v3764, %v3928
      %v3999 = vadd.f32 %v3765, %v3930
      %v4000 = vadd.f32 %v3766, %v3933
      %v4001 = vadd.f32 %v3767, %v3935
      %v4002 = vadd.f32 %v3768, %v3938
      %v4003 = vadd.f32 %v3769, %v3940
      %v4004 = vadd.f32 %v3770, %v3943
      %v4005 = vadd.f32 %v3771, %v3945
      %v4006 = vadd.f32 %v3772, %v3948
      %v4007 = vadd.f32 %v3773, %v3950
      %v4008 = vadd.f32 %v3774, %v3953
      %v4009 = vadd.f32 %v3775, %v3955
      %v4010 = vadd.f32 %v3776, %v3958
      %v4011 = vadd.f32 %v3777, %v3960
      %v4012 = vadd.f32 %v3778, %v3963
      %v4013 = vadd.f32 %v3779, %v3965
      %v4014 = vadd.f32 %v3780, %v3968
      %v4015 = vadd.f32 %v3781, %v3970
      %v4016 = vadd.f32 %v3782, %v3973
      %v4017 = vadd.f32 %v3783, %v3975
      %v4018 = vadd.f32 %v3784, %v3978
      %v4019 = vadd.f32 %v3785, %v3980
      %v4020 = vadd.f32 %v3786, %v3983
      %v4021 = vadd.f32 %v3787, %v3985
      %v4022 = vadd.f32 %v3788, %v3988
      %v4023 = vadd.f32 %v3789, %v3990
      %s4024 = scalar_lea.vmem [#allocation3], 48
      %v4025 = vld [vmem:[%s4024] sm:$0xff]
      %v4026 = vld [vmem:[%s4024 + $0x8] sm:$0xff]
      %v4027 = vld [vmem:[%s4024 + $0x18] sm:$0xff]
      %v4028 = vld [vmem:[%s4024 + $0x20] sm:$0xff]
      %v4029 = vld [vmem:[%s4024 + $0x30] sm:$0xff]
      %v4030 = vld [vmem:[%s4024 + $0x38] sm:$0xff]
      %v4031 = vld [vmem:[%s4024 + $0x48] sm:$0xff]
      %v4032 = vld [vmem:[%s4024 + $0x50] sm:$0xff]
      %v4033 = vld [vmem:[%s4024 + $0x60] sm:$0xff]
      %v4034 = vld [vmem:[%s4024 + $0x68] sm:$0xff]
      %v4035 = vld [vmem:[%s4024 + $0x78] sm:$0xff]
      %v4036 = vld [vmem:[%s4024 + $0x80] sm:$0xff]
      %v4037 = vld [vmem:[%s4024 + $0x90] sm:$0xff]
      %v4038 = vld [vmem:[%s4024 + $0x98] sm:$0xff]
      %v4039 = vld [vmem:[%s4024 + $0xa8] sm:$0xff]
      %v4040 = vld [vmem:[%s4024 + $0xb0] sm:$0xff]
      %v4041 = vld [vmem:[%s4024 + $0xc0] sm:$0xff]
      %v4042 = vld [vmem:[%s4024 + $0xc8] sm:$0xff]
      %v4043 = vld [vmem:[%s4024 + $0xd8] sm:$0xff]
      %v4044 = vld [vmem:[%s4024 + $0xe0] sm:$0xff]
      %v4045 = vld [vmem:[%s4024 + $0xf0] sm:$0xff]
      %v4046 = vld [vmem:[%s4024 + $0xf8] sm:$0xff]
      %v4047 = vld [vmem:[%s4024 + $0x108] sm:$0xff]
      %v4048 = vld [vmem:[%s4024 + $0x110] sm:$0xff]
      %v4049 = vld [vmem:[%s4024 + $0x120] sm:$0xff]
      %v4050 = vld [vmem:[%s4024 + $0x128] sm:$0xff]
      %v4051 = vld [vmem:[%s4024 + $0x138] sm:$0xff]
      %v4052 = vld [vmem:[%s4024 + $0x140] sm:$0xff]
      %v4053 = vld [vmem:[%s4024 + $0x150] sm:$0xff]
      %v4054 = vld [vmem:[%s4024 + $0x158] sm:$0xff]
      %v4055 = vld [vmem:[%s4024 + $0x168] sm:$0xff]
      %v4056 = vld [vmem:[%s4024 + $0x170] sm:$0xff]
      %v4057 = vpack.c.bf16 %v4026, %v4025
      %v4058 = vpack.c.bf16 %v4028, %v4027
      %v4059 = vpack.c.bf16 %v4030, %v4029
      %v4060 = vpack.c.bf16 %v4032, %v4031
      %v4061 = vpack.c.bf16 %v4034, %v4033
      %v4062 = vpack.c.bf16 %v4036, %v4035
      %v4063 = vpack.c.bf16 %v4038, %v4037
      %v4064 = vpack.c.bf16 %v4040, %v4039
      %v4065 = vpack.c.bf16 %v4042, %v4041
      %v4066 = vpack.c.bf16 %v4044, %v4043
      %v4067 = vpack.c.bf16 %v4046, %v4045
      %v4068 = vpack.c.bf16 %v4048, %v4047
      %v4069 = vpack.c.bf16 %v4050, %v4049
      %v4070 = vpack.c.bf16 %v4052, %v4051
      %v4071 = vpack.c.bf16 %v4054, %v4053
      %v4072 = vpack.c.bf16 %v4056, %v4055
      %s4073 = scalar_lea.vmem %s3, 96
      %v4074 = vld [vmem:[%s4073] sm:$0xf]
      %v4075 = vld [vmem:[%s4073 + $0x4] sm:$0xf]
      %v4076 = vld [vmem:[%s4073 + $0x8] sm:$0xf]
      %v4077 = vld [vmem:[%s4073 + $0xc] sm:$0xf]
      %v4082 = vunpack.c.l.b16 %v4074
      %v4083 = vunpack.c.l.b16 %v4075
      %v4084 = vunpack.c.l.b16 %v4076
      %v4085 = vunpack.c.l.b16 %v4077
      %v4086 = vpack.c.b16 %v4083, %v4082
      %v4087 = vpack.c.b16 %v4085, %v4084
      %v4091 = vsel %vm471, %v4057, 0
      %v4094 = vsel %vm471, %v4058, 0
      %v4097 = vsel %vm471, %v4059, 0
      %v4100 = vsel %vm471, %v4060, 0
      %v4103 = vsel %vm471, %v4061, 0
      %v4106 = vsel %vm471, %v4062, 0
      %v4109 = vsel %vm471, %v4063, 0
      %v4112 = vsel %vm471, %v4064, 0
      %v4115 = vsel %vm471, %v4065, 0
      %v4118 = vsel %vm471, %v4066, 0
      %v4121 = vsel %vm471, %v4067, 0
      %v4124 = vsel %vm471, %v4068, 0
      %v4127 = vsel %vm471, %v4069, 0
      %v4130 = vsel %vm471, %v4070, 0
      %v4133 = vsel %vm471, %v4071, 0
      %v4136 = vsel %vm471, %v4072, 0
      %4138 = vmatpush.bf16.msra.mxu0 0
      %4139 = vmatpush.bf16.msra.mxu0 0
      %4140 = vmatpush.bf16.msra.mxu0 0
      %4141 = vmatpush.bf16.msra.mxu0 0
      %4142 = vmatpush.bf16.msra.mxu0 0
      %4143 = vmatpush.bf16.msra.mxu0 0
      %4144 = vmatpush.bf16.msra.mxu0 %v4087
      %4145 = vmatpush.bf16.msra.mxu0 %v4086
      %4146 = vmatmul.bf16.gmra.mxu0 %v4091
      %v4147 = vpop.f32.mrf.mxu0
      %v4148 = vadd.f32 0.0, %v4147
      %v4149 = vpop.f32.mrf.mxu0
      %v4150 = vadd.f32 0.0, %v4149
      %4151 = vmatmul.bf16.gmra.mxu0 %v4094
      %v4152 = vpop.f32.mrf.mxu0
      %v4153 = vadd.f32 0.0, %v4152
      %v4154 = vpop.f32.mrf.mxu0
      %v4155 = vadd.f32 0.0, %v4154
      %4156 = vmatmul.bf16.gmra.mxu0 %v4097
      %v4157 = vpop.f32.mrf.mxu0
      %v4158 = vadd.f32 0.0, %v4157
      %v4159 = vpop.f32.mrf.mxu0
      %v4160 = vadd.f32 0.0, %v4159
      %4161 = vmatmul.bf16.gmra.mxu0 %v4100
      %v4162 = vpop.f32.mrf.mxu0
      %v4163 = vadd.f32 0.0, %v4162
      %v4164 = vpop.f32.mrf.mxu0
      %v4165 = vadd.f32 0.0, %v4164
      %4166 = vmatmul.bf16.gmra.mxu0 %v4103
      %v4167 = vpop.f32.mrf.mxu0
      %v4168 = vadd.f32 0.0, %v4167
      %v4169 = vpop.f32.mrf.mxu0
      %v4170 = vadd.f32 0.0, %v4169
      %4171 = vmatmul.bf16.gmra.mxu0 %v4106
      %v4172 = vpop.f32.mrf.mxu0
      %v4173 = vadd.f32 0.0, %v4172
      %v4174 = vpop.f32.mrf.mxu0
      %v4175 = vadd.f32 0.0, %v4174
      %4176 = vmatmul.bf16.gmra.mxu0 %v4109
      %v4177 = vpop.f32.mrf.mxu0
      %v4178 = vadd.f32 0.0, %v4177
      %v4179 = vpop.f32.mrf.mxu0
      %v4180 = vadd.f32 0.0, %v4179
      %4181 = vmatmul.bf16.gmra.mxu0 %v4112
      %v4182 = vpop.f32.mrf.mxu0
      %v4183 = vadd.f32 0.0, %v4182
      %v4184 = vpop.f32.mrf.mxu0
      %v4185 = vadd.f32 0.0, %v4184
      %4186 = vmatmul.bf16.gmra.mxu0 %v4115
      %v4187 = vpop.f32.mrf.mxu0
      %v4188 = vadd.f32 0.0, %v4187
      %v4189 = vpop.f32.mrf.mxu0
      %v4190 = vadd.f32 0.0, %v4189
      %4191 = vmatmul.bf16.gmra.mxu0 %v4118
      %v4192 = vpop.f32.mrf.mxu0
      %v4193 = vadd.f32 0.0, %v4192
      %v4194 = vpop.f32.mrf.mxu0
      %v4195 = vadd.f32 0.0, %v4194
      %4196 = vmatmul.bf16.gmra.mxu0 %v4121
      %v4197 = vpop.f32.mrf.mxu0
      %v4198 = vadd.f32 0.0, %v4197
      %v4199 = vpop.f32.mrf.mxu0
      %v4200 = vadd.f32 0.0, %v4199
      %4201 = vmatmul.bf16.gmra.mxu0 %v4124
      %v4202 = vpop.f32.mrf.mxu0
      %v4203 = vadd.f32 0.0, %v4202
      %v4204 = vpop.f32.mrf.mxu0
      %v4205 = vadd.f32 0.0, %v4204
      %4206 = vmatmul.bf16.gmra.mxu0 %v4127
      %v4207 = vpop.f32.mrf.mxu0
      %v4208 = vadd.f32 0.0, %v4207
      %v4209 = vpop.f32.mrf.mxu0
      %v4210 = vadd.f32 0.0, %v4209
      %4211 = vmatmul.bf16.gmra.mxu0 %v4130
      %v4212 = vpop.f32.mrf.mxu0
      %v4213 = vadd.f32 0.0, %v4212
      %v4214 = vpop.f32.mrf.mxu0
      %v4215 = vadd.f32 0.0, %v4214
      %4216 = vmatmul.bf16.gmra.mxu0 %v4133
      %v4217 = vpop.f32.mrf.mxu0
      %v4218 = vadd.f32 0.0, %v4217
      %v4219 = vpop.f32.mrf.mxu0
      %v4220 = vadd.f32 0.0, %v4219
      %4221 = vmatmul.bf16.gmra.mxu0 %v4136
      %v4222 = vpop.f32.mrf.mxu0
      %v4223 = vadd.f32 0.0, %v4222
      %v4224 = vpop.f32.mrf.mxu0
      %v4225 = vadd.f32 0.0, %v4224
      %4226 = vdwg.mxu0
      %v4227 = vadd.f32 %v3992, %v4148
      %v4228 = vadd.f32 %v3993, %v4150
      %v4229 = vadd.f32 %v3994, %v4153
      %v4230 = vadd.f32 %v3995, %v4155
      %v4231 = vadd.f32 %v3996, %v4158
      %v4232 = vadd.f32 %v3997, %v4160
      %v4233 = vadd.f32 %v3998, %v4163
      %v4234 = vadd.f32 %v3999, %v4165
      %v4235 = vadd.f32 %v4000, %v4168
      %v4236 = vadd.f32 %v4001, %v4170
      %v4237 = vadd.f32 %v4002, %v4173
      %v4238 = vadd.f32 %v4003, %v4175
      %v4239 = vadd.f32 %v4004, %v4178
      %v4240 = vadd.f32 %v4005, %v4180
      %v4241 = vadd.f32 %v4006, %v4183
      %v4242 = vadd.f32 %v4007, %v4185
      %v4243 = vadd.f32 %v4008, %v4188
      %v4244 = vadd.f32 %v4009, %v4190
      %v4245 = vadd.f32 %v4010, %v4193
      %v4246 = vadd.f32 %v4011, %v4195
      %v4247 = vadd.f32 %v4012, %v4198
      %v4248 = vadd.f32 %v4013, %v4200
      %v4249 = vadd.f32 %v4014, %v4203
      %v4250 = vadd.f32 %v4015, %v4205
      %v4251 = vadd.f32 %v4016, %v4208
      %v4252 = vadd.f32 %v4017, %v4210
      %v4253 = vadd.f32 %v4018, %v4213
      %v4254 = vadd.f32 %v4019, %v4215
      %v4255 = vadd.f32 %v4020, %v4218
      %v4256 = vadd.f32 %v4021, %v4220
      %v4257 = vadd.f32 %v4022, %v4223
      %v4258 = vadd.f32 %v4023, %v4225
      %v4259 = vld [vmem:[%s4024 + $0x1] sm:$0xff]
      %v4260 = vld [vmem:[%s4024 + $0x9] sm:$0xff]
      %v4261 = vld [vmem:[%s4024 + $0x19] sm:$0xff]
      %v4262 = vld [vmem:[%s4024 + $0x21] sm:$0xff]
      %v4263 = vld [vmem:[%s4024 + $0x31] sm:$0xff]
      %v4264 = vld [vmem:[%s4024 + $0x39] sm:$0xff]
      %v4265 = vld [vmem:[%s4024 + $0x49] sm:$0xff]
      %v4266 = vld [vmem:[%s4024 + $0x51] sm:$0xff]
      %v4267 = vld [vmem:[%s4024 + $0x61] sm:$0xff]
      %v4268 = vld [vmem:[%s4024 + $0x69] sm:$0xff]
      %v4269 = vld [vmem:[%s4024 + $0x79] sm:$0xff]
      %v4270 = vld [vmem:[%s4024 + $0x81] sm:$0xff]
      %v4271 = vld [vmem:[%s4024 + $0x91] sm:$0xff]
      %v4272 = vld [vmem:[%s4024 + $0x99] sm:$0xff]
      %v4273 = vld [vmem:[%s4024 + $0xa9] sm:$0xff]
      %v4274 = vld [vmem:[%s4024 + $0xb1] sm:$0xff]
      %v4275 = vld [vmem:[%s4024 + $0xc1] sm:$0xff]
      %v4276 = vld [vmem:[%s4024 + $0xc9] sm:$0xff]
      %v4277 = vld [vmem:[%s4024 + $0xd9] sm:$0xff]
      %v4278 = vld [vmem:[%s4024 + $0xe1] sm:$0xff]
      %v4279 = vld [vmem:[%s4024 + $0xf1] sm:$0xff]
      %v4280 = vld [vmem:[%s4024 + $0xf9] sm:$0xff]
      %v4281 = vld [vmem:[%s4024 + $0x109] sm:$0xff]
      %v4282 = vld [vmem:[%s4024 + $0x111] sm:$0xff]
      %v4283 = vld [vmem:[%s4024 + $0x121] sm:$0xff]
      %v4284 = vld [vmem:[%s4024 + $0x129] sm:$0xff]
      %v4285 = vld [vmem:[%s4024 + $0x139] sm:$0xff]
      %v4286 = vld [vmem:[%s4024 + $0x141] sm:$0xff]
      %v4287 = vld [vmem:[%s4024 + $0x151] sm:$0xff]
      %v4288 = vld [vmem:[%s4024 + $0x159] sm:$0xff]
      %v4289 = vld [vmem:[%s4024 + $0x169] sm:$0xff]
      %v4290 = vld [vmem:[%s4024 + $0x171] sm:$0xff]
      %v4291 = vpack.c.bf16 %v4260, %v4259
      %v4292 = vpack.c.bf16 %v4262, %v4261
      %v4293 = vpack.c.bf16 %v4264, %v4263
      %v4294 = vpack.c.bf16 %v4266, %v4265
      %v4295 = vpack.c.bf16 %v4268, %v4267
      %v4296 = vpack.c.bf16 %v4270, %v4269
      %v4297 = vpack.c.bf16 %v4272, %v4271
      %v4298 = vpack.c.bf16 %v4274, %v4273
      %v4299 = vpack.c.bf16 %v4276, %v4275
      %v4300 = vpack.c.bf16 %v4278, %v4277
      %v4301 = vpack.c.bf16 %v4280, %v4279
      %v4302 = vpack.c.bf16 %v4282, %v4281
      %v4303 = vpack.c.bf16 %v4284, %v4283
      %v4304 = vpack.c.bf16 %v4286, %v4285
      %v4305 = vpack.c.bf16 %v4288, %v4287
      %v4306 = vpack.c.bf16 %v4290, %v4289
      %s4307 = scalar_lea.vmem %s3, 112
      %v4308 = vld [vmem:[%s4307] sm:$0xf]
      %v4309 = vld [vmem:[%s4307 + $0x4] sm:$0xf]
      %v4310 = vld [vmem:[%s4307 + $0x8] sm:$0xf]
      %v4311 = vld [vmem:[%s4307 + $0xc] sm:$0xf]
      %v4316 = vunpack.c.l.b16 %v4308
      %v4317 = vunpack.c.l.b16 %v4309
      %v4318 = vunpack.c.l.b16 %v4310
      %v4319 = vunpack.c.l.b16 %v4311
      %v4320 = vpack.c.b16 %v4317, %v4316
      %v4321 = vpack.c.b16 %v4319, %v4318
      %v4325 = vsel %vm471, %v4291, 0
      %v4328 = vsel %vm471, %v4292, 0
      %v4331 = vsel %vm471, %v4293, 0
      %v4334 = vsel %vm471, %v4294, 0
      %v4337 = vsel %vm471, %v4295, 0
      %v4340 = vsel %vm471, %v4296, 0
      %v4343 = vsel %vm471, %v4297, 0
      %v4346 = vsel %vm471, %v4298, 0
      %v4349 = vsel %vm471, %v4299, 0
      %v4352 = vsel %vm471, %v4300, 0
      %v4355 = vsel %vm471, %v4301, 0
      %v4358 = vsel %vm471, %v4302, 0
      %v4361 = vsel %vm471, %v4303, 0
      %v4364 = vsel %vm471, %v4304, 0
      %v4367 = vsel %vm471, %v4305, 0
      %v4370 = vsel %vm471, %v4306, 0
      %4372 = vmatpush.bf16.msra.mxu0 0
      %4373 = vmatpush.bf16.msra.mxu0 0
      %4374 = vmatpush.bf16.msra.mxu0 0
      %4375 = vmatpush.bf16.msra.mxu0 0
      %4376 = vmatpush.bf16.msra.mxu0 0
      %4377 = vmatpush.bf16.msra.mxu0 0
      %4378 = vmatpush.bf16.msra.mxu0 %v4321
      %4379 = vmatpush.bf16.msra.mxu0 %v4320
      %4380 = vmatmul.bf16.gmra.mxu0 %v4325
      %v4381 = vpop.f32.mrf.mxu0
      %v4382 = vadd.f32 0.0, %v4381
      %v4383 = vpop.f32.mrf.mxu0
      %v4384 = vadd.f32 0.0, %v4383
      %4385 = vmatmul.bf16.gmra.mxu0 %v4328
      %v4386 = vpop.f32.mrf.mxu0
      %v4387 = vadd.f32 0.0, %v4386
      %v4388 = vpop.f32.mrf.mxu0
      %v4389 = vadd.f32 0.0, %v4388
      %4390 = vmatmul.bf16.gmra.mxu0 %v4331
      %v4391 = vpop.f32.mrf.mxu0
      %v4392 = vadd.f32 0.0, %v4391
      %v4393 = vpop.f32.mrf.mxu0
      %v4394 = vadd.f32 0.0, %v4393
      %4395 = vmatmul.bf16.gmra.mxu0 %v4334
      %v4396 = vpop.f32.mrf.mxu0
      %v4397 = vadd.f32 0.0, %v4396
      %v4398 = vpop.f32.mrf.mxu0
      %v4399 = vadd.f32 0.0, %v4398
      %4400 = vmatmul.bf16.gmra.mxu0 %v4337
      %v4401 = vpop.f32.mrf.mxu0
      %v4402 = vadd.f32 0.0, %v4401
      %v4403 = vpop.f32.mrf.mxu0
      %v4404 = vadd.f32 0.0, %v4403
      %4405 = vmatmul.bf16.gmra.mxu0 %v4340
      %v4406 = vpop.f32.mrf.mxu0
      %v4407 = vadd.f32 0.0, %v4406
      %v4408 = vpop.f32.mrf.mxu0
      %v4409 = vadd.f32 0.0, %v4408
      %4410 = vmatmul.bf16.gmra.mxu0 %v4343
      %v4411 = vpop.f32.mrf.mxu0
      %v4412 = vadd.f32 0.0, %v4411
      %v4413 = vpop.f32.mrf.mxu0
      %v4414 = vadd.f32 0.0, %v4413
      %4415 = vmatmul.bf16.gmra.mxu0 %v4346
      %v4416 = vpop.f32.mrf.mxu0
      %v4417 = vadd.f32 0.0, %v4416
      %v4418 = vpop.f32.mrf.mxu0
      %v4419 = vadd.f32 0.0, %v4418
      %4420 = vmatmul.bf16.gmra.mxu0 %v4349
      %v4421 = vpop.f32.mrf.mxu0
      %v4422 = vadd.f32 0.0, %v4421
      %v4423 = vpop.f32.mrf.mxu0
      %v4424 = vadd.f32 0.0, %v4423
      %4425 = vmatmul.bf16.gmra.mxu0 %v4352
      %v4426 = vpop.f32.mrf.mxu0
      %v4427 = vadd.f32 0.0, %v4426
      %v4428 = vpop.f32.mrf.mxu0
      %v4429 = vadd.f32 0.0, %v4428
      %4430 = vmatmul.bf16.gmra.mxu0 %v4355
      %v4431 = vpop.f32.mrf.mxu0
      %v4432 = vadd.f32 0.0, %v4431
      %v4433 = vpop.f32.mrf.mxu0
      %v4434 = vadd.f32 0.0, %v4433
      %4435 = vmatmul.bf16.gmra.mxu0 %v4358
      %v4436 = vpop.f32.mrf.mxu0
      %v4437 = vadd.f32 0.0, %v4436
      %v4438 = vpop.f32.mrf.mxu0
      %v4439 = vadd.f32 0.0, %v4438
      %4440 = vmatmul.bf16.gmra.mxu0 %v4361
      %v4441 = vpop.f32.mrf.mxu0
      %v4442 = vadd.f32 0.0, %v4441
      %v4443 = vpop.f32.mrf.mxu0
      %v4444 = vadd.f32 0.0, %v4443
      %4445 = vmatmul.bf16.gmra.mxu0 %v4364
      %v4446 = vpop.f32.mrf.mxu0
      %v4447 = vadd.f32 0.0, %v4446
      %v4448 = vpop.f32.mrf.mxu0
      %v4449 = vadd.f32 0.0, %v4448
      %4450 = vmatmul.bf16.gmra.mxu0 %v4367
      %v4451 = vpop.f32.mrf.mxu0
      %v4452 = vadd.f32 0.0, %v4451
      %v4453 = vpop.f32.mrf.mxu0
      %v4454 = vadd.f32 0.0, %v4453
      %4455 = vmatmul.bf16.gmra.mxu0 %v4370
      %v4456 = vpop.f32.mrf.mxu0
      %v4457 = vadd.f32 0.0, %v4456
      %v4458 = vpop.f32.mrf.mxu0
      %v4459 = vadd.f32 0.0, %v4458
      %4460 = vdwg.mxu0
      %v4461 = vadd.f32 %v4227, %v4382
      %v4462 = vadd.f32 %v4228, %v4384
      %v4463 = vadd.f32 %v4229, %v4387
      %v4464 = vadd.f32 %v4230, %v4389
      %v4465 = vadd.f32 %v4231, %v4392
      %v4466 = vadd.f32 %v4232, %v4394
      %v4467 = vadd.f32 %v4233, %v4397
      %v4468 = vadd.f32 %v4234, %v4399
      %v4469 = vadd.f32 %v4235, %v4402
      %v4470 = vadd.f32 %v4236, %v4404
      %v4471 = vadd.f32 %v4237, %v4407
      %v4472 = vadd.f32 %v4238, %v4409
      %v4473 = vadd.f32 %v4239, %v4412
      %v4474 = vadd.f32 %v4240, %v4414
      %v4475 = vadd.f32 %v4241, %v4417
      %v4476 = vadd.f32 %v4242, %v4419
      %v4477 = vadd.f32 %v4243, %v4422
      %v4478 = vadd.f32 %v4244, %v4424
      %v4479 = vadd.f32 %v4245, %v4427
      %v4480 = vadd.f32 %v4246, %v4429
      %v4481 = vadd.f32 %v4247, %v4432
      %v4482 = vadd.f32 %v4248, %v4434
      %v4483 = vadd.f32 %v4249, %v4437
      %v4484 = vadd.f32 %v4250, %v4439
      %v4485 = vadd.f32 %v4251, %v4442
      %v4486 = vadd.f32 %v4252, %v4444
      %v4487 = vadd.f32 %v4253, %v4447
      %v4488 = vadd.f32 %v4254, %v4449
      %v4489 = vadd.f32 %v4255, %v4452
      %v4490 = vadd.f32 %v4256, %v4454
      %v4491 = vadd.f32 %v4257, %v4457
      %v4492 = vadd.f32 %v4258, %v4459
      %v4493 = vld [vmem:[%s4024 + $0x2] sm:$0xff]
      %v4494 = vld [vmem:[%s4024 + $0xa] sm:$0xff]
      %v4495 = vld [vmem:[%s4024 + $0x1a] sm:$0xff]
      %v4496 = vld [vmem:[%s4024 + $0x22] sm:$0xff]
      %v4497 = vld [vmem:[%s4024 + $0x32] sm:$0xff]
      %v4498 = vld [vmem:[%s4024 + $0x3a] sm:$0xff]
      %v4499 = vld [vmem:[%s4024 + $0x4a] sm:$0xff]
      %v4500 = vld [vmem:[%s4024 + $0x52] sm:$0xff]
      %v4501 = vld [vmem:[%s4024 + $0x62] sm:$0xff]
      %v4502 = vld [vmem:[%s4024 + $0x6a] sm:$0xff]
      %v4503 = vld [vmem:[%s4024 + $0x7a] sm:$0xff]
      %v4504 = vld [vmem:[%s4024 + $0x82] sm:$0xff]
      %v4505 = vld [vmem:[%s4024 + $0x92] sm:$0xff]
      %v4506 = vld [vmem:[%s4024 + $0x9a] sm:$0xff]
      %v4507 = vld [vmem:[%s4024 + $0xaa] sm:$0xff]
      %v4508 = vld [vmem:[%s4024 + $0xb2] sm:$0xff]
      %v4509 = vld [vmem:[%s4024 + $0xc2] sm:$0xff]
      %v4510 = vld [vmem:[%s4024 + $0xca] sm:$0xff]
      %v4511 = vld [vmem:[%s4024 + $0xda] sm:$0xff]
      %v4512 = vld [vmem:[%s4024 + $0xe2] sm:$0xff]
      %v4513 = vld [vmem:[%s4024 + $0xf2] sm:$0xff]
      %v4514 = vld [vmem:[%s4024 + $0xfa] sm:$0xff]
      %v4515 = vld [vmem:[%s4024 + $0x10a] sm:$0xff]
      %v4516 = vld [vmem:[%s4024 + $0x112] sm:$0xff]
      %v4517 = vld [vmem:[%s4024 + $0x122] sm:$0xff]
      %v4518 = vld [vmem:[%s4024 + $0x12a] sm:$0xff]
      %v4519 = vld [vmem:[%s4024 + $0x13a] sm:$0xff]
      %v4520 = vld [vmem:[%s4024 + $0x142] sm:$0xff]
      %v4521 = vld [vmem:[%s4024 + $0x152] sm:$0xff]
      %v4522 = vld [vmem:[%s4024 + $0x15a] sm:$0xff]
      %v4523 = vld [vmem:[%s4024 + $0x16a] sm:$0xff]
      %v4524 = vld [vmem:[%s4024 + $0x172] sm:$0xff]
      %v4525 = vpack.c.bf16 %v4494, %v4493
      %v4526 = vpack.c.bf16 %v4496, %v4495
      %v4527 = vpack.c.bf16 %v4498, %v4497
      %v4528 = vpack.c.bf16 %v4500, %v4499
      %v4529 = vpack.c.bf16 %v4502, %v4501
      %v4530 = vpack.c.bf16 %v4504, %v4503
      %v4531 = vpack.c.bf16 %v4506, %v4505
      %v4532 = vpack.c.bf16 %v4508, %v4507
      %v4533 = vpack.c.bf16 %v4510, %v4509
      %v4534 = vpack.c.bf16 %v4512, %v4511
      %v4535 = vpack.c.bf16 %v4514, %v4513
      %v4536 = vpack.c.bf16 %v4516, %v4515
      %v4537 = vpack.c.bf16 %v4518, %v4517
      %v4538 = vpack.c.bf16 %v4520, %v4519
      %v4539 = vpack.c.bf16 %v4522, %v4521
      %v4540 = vpack.c.bf16 %v4524, %v4523
      %s4541 = scalar_lea.vmem %s3, 128
      %v4542 = vld [vmem:[%s4541] sm:$0xf]
      %v4543 = vld [vmem:[%s4541 + $0x4] sm:$0xf]
      %v4544 = vld [vmem:[%s4541 + $0x8] sm:$0xf]
      %v4545 = vld [vmem:[%s4541 + $0xc] sm:$0xf]
      %v4550 = vunpack.c.l.b16 %v4542
      %v4551 = vunpack.c.l.b16 %v4543
      %v4552 = vunpack.c.l.b16 %v4544
      %v4553 = vunpack.c.l.b16 %v4545
      %v4554 = vpack.c.b16 %v4551, %v4550
      %v4555 = vpack.c.b16 %v4553, %v4552
      %v4559 = vsel %vm471, %v4525, 0
      %v4562 = vsel %vm471, %v4526, 0
      %v4565 = vsel %vm471, %v4527, 0
      %v4568 = vsel %vm471, %v4528, 0
      %v4571 = vsel %vm471, %v4529, 0
      %v4574 = vsel %vm471, %v4530, 0
      %v4577 = vsel %vm471, %v4531, 0
      %v4580 = vsel %vm471, %v4532, 0
      %v4583 = vsel %vm471, %v4533, 0
      %v4586 = vsel %vm471, %v4534, 0
      %v4589 = vsel %vm471, %v4535, 0
      %v4592 = vsel %vm471, %v4536, 0
      %v4595 = vsel %vm471, %v4537, 0
      %v4598 = vsel %vm471, %v4538, 0
      %v4601 = vsel %vm471, %v4539, 0
      %v4604 = vsel %vm471, %v4540, 0
      %4606 = vmatpush.bf16.msra.mxu0 0
      %4607 = vmatpush.bf16.msra.mxu0 0
      %4608 = vmatpush.bf16.msra.mxu0 0
      %4609 = vmatpush.bf16.msra.mxu0 0
      %4610 = vmatpush.bf16.msra.mxu0 0
      %4611 = vmatpush.bf16.msra.mxu0 0
      %4612 = vmatpush.bf16.msra.mxu0 %v4555
      %4613 = vmatpush.bf16.msra.mxu0 %v4554
      %4614 = vmatmul.bf16.gmra.mxu0 %v4559
      %v4615 = vpop.f32.mrf.mxu0
      %v4616 = vadd.f32 0.0, %v4615
      %v4617 = vpop.f32.mrf.mxu0
      %v4618 = vadd.f32 0.0, %v4617
      %4619 = vmatmul.bf16.gmra.mxu0 %v4562
      %v4620 = vpop.f32.mrf.mxu0
      %v4621 = vadd.f32 0.0, %v4620
      %v4622 = vpop.f32.mrf.mxu0
      %v4623 = vadd.f32 0.0, %v4622
      %4624 = vmatmul.bf16.gmra.mxu0 %v4565
      %v4625 = vpop.f32.mrf.mxu0
      %v4626 = vadd.f32 0.0, %v4625
      %v4627 = vpop.f32.mrf.mxu0
      %v4628 = vadd.f32 0.0, %v4627
      %4629 = vmatmul.bf16.gmra.mxu0 %v4568
      %v4630 = vpop.f32.mrf.mxu0
      %v4631 = vadd.f32 0.0, %v4630
      %v4632 = vpop.f32.mrf.mxu0
      %v4633 = vadd.f32 0.0, %v4632
      %4634 = vmatmul.bf16.gmra.mxu0 %v4571
      %v4635 = vpop.f32.mrf.mxu0
      %v4636 = vadd.f32 0.0, %v4635
      %v4637 = vpop.f32.mrf.mxu0
      %v4638 = vadd.f32 0.0, %v4637
      %4639 = vmatmul.bf16.gmra.mxu0 %v4574
      %v4640 = vpop.f32.mrf.mxu0
      %v4641 = vadd.f32 0.0, %v4640
      %v4642 = vpop.f32.mrf.mxu0
      %v4643 = vadd.f32 0.0, %v4642
      %4644 = vmatmul.bf16.gmra.mxu0 %v4577
      %v4645 = vpop.f32.mrf.mxu0
      %v4646 = vadd.f32 0.0, %v4645
      %v4647 = vpop.f32.mrf.mxu0
      %v4648 = vadd.f32 0.0, %v4647
      %4649 = vmatmul.bf16.gmra.mxu0 %v4580
      %v4650 = vpop.f32.mrf.mxu0
      %v4651 = vadd.f32 0.0, %v4650
      %v4652 = vpop.f32.mrf.mxu0
      %v4653 = vadd.f32 0.0, %v4652
      %4654 = vmatmul.bf16.gmra.mxu0 %v4583
      %v4655 = vpop.f32.mrf.mxu0
      %v4656 = vadd.f32 0.0, %v4655
      %v4657 = vpop.f32.mrf.mxu0
      %v4658 = vadd.f32 0.0, %v4657
      %4659 = vmatmul.bf16.gmra.mxu0 %v4586
      %v4660 = vpop.f32.mrf.mxu0
      %v4661 = vadd.f32 0.0, %v4660
      %v4662 = vpop.f32.mrf.mxu0
      %v4663 = vadd.f32 0.0, %v4662
      %4664 = vmatmul.bf16.gmra.mxu0 %v4589
      %v4665 = vpop.f32.mrf.mxu0
      %v4666 = vadd.f32 0.0, %v4665
      %v4667 = vpop.f32.mrf.mxu0
      %v4668 = vadd.f32 0.0, %v4667
      %4669 = vmatmul.bf16.gmra.mxu0 %v4592
      %v4670 = vpop.f32.mrf.mxu0
      %v4671 = vadd.f32 0.0, %v4670
      %v4672 = vpop.f32.mrf.mxu0
      %v4673 = vadd.f32 0.0, %v4672
      %4674 = vmatmul.bf16.gmra.mxu0 %v4595
      %v4675 = vpop.f32.mrf.mxu0
      %v4676 = vadd.f32 0.0, %v4675
      %v4677 = vpop.f32.mrf.mxu0
      %v4678 = vadd.f32 0.0, %v4677
      %4679 = vmatmul.bf16.gmra.mxu0 %v4598
      %v4680 = vpop.f32.mrf.mxu0
      %v4681 = vadd.f32 0.0, %v4680
      %v4682 = vpop.f32.mrf.mxu0
      %v4683 = vadd.f32 0.0, %v4682
      %4684 = vmatmul.bf16.gmra.mxu0 %v4601
      %v4685 = vpop.f32.mrf.mxu0
      %v4686 = vadd.f32 0.0, %v4685
      %v4687 = vpop.f32.mrf.mxu0
      %v4688 = vadd.f32 0.0, %v4687
      %4689 = vmatmul.bf16.gmra.mxu0 %v4604
      %v4690 = vpop.f32.mrf.mxu0
      %v4691 = vadd.f32 0.0, %v4690
      %v4692 = vpop.f32.mrf.mxu0
      %v4693 = vadd.f32 0.0, %v4692
      %4694 = vdwg.mxu0
      %v4695 = vadd.f32 %v4461, %v4616
      %v4696 = vadd.f32 %v4462, %v4618
      %v4697 = vadd.f32 %v4463, %v4621
      %v4698 = vadd.f32 %v4464, %v4623
      %v4699 = vadd.f32 %v4465, %v4626
      %v4700 = vadd.f32 %v4466, %v4628
      %v4701 = vadd.f32 %v4467, %v4631
      %v4702 = vadd.f32 %v4468, %v4633
      %v4703 = vadd.f32 %v4469, %v4636
      %v4704 = vadd.f32 %v4470, %v4638
      %v4705 = vadd.f32 %v4471, %v4641
      %v4706 = vadd.f32 %v4472, %v4643
      %v4707 = vadd.f32 %v4473, %v4646
      %v4708 = vadd.f32 %v4474, %v4648
      %v4709 = vadd.f32 %v4475, %v4651
      %v4710 = vadd.f32 %v4476, %v4653
      %v4711 = vadd.f32 %v4477, %v4656
      %v4712 = vadd.f32 %v4478, %v4658
      %v4713 = vadd.f32 %v4479, %v4661
      %v4714 = vadd.f32 %v4480, %v4663
      %v4715 = vadd.f32 %v4481, %v4666
      %v4716 = vadd.f32 %v4482, %v4668
      %v4717 = vadd.f32 %v4483, %v4671
      %v4718 = vadd.f32 %v4484, %v4673
      %v4719 = vadd.f32 %v4485, %v4676
      %v4720 = vadd.f32 %v4486, %v4678
      %v4721 = vadd.f32 %v4487, %v4681
      %v4722 = vadd.f32 %v4488, %v4683
      %v4723 = vadd.f32 %v4489, %v4686
      %v4724 = vadd.f32 %v4490, %v4688
      %v4725 = vadd.f32 %v4491, %v4691
      %v4726 = vadd.f32 %v4492, %v4693
      %v4727 = vld [vmem:[%s4] sm:$0x1]
      %v4729 = vperm.slane %v4727, 0
      %v4731 = vadd.f32 %v4695, %v4729
      %v4732 = vadd.f32 %v4696, %v4729
      %v4733 = vadd.f32 %v4697, %v4729
      %v4734 = vadd.f32 %v4698, %v4729
      %v4735 = vadd.f32 %v4699, %v4729
      %v4736 = vadd.f32 %v4700, %v4729
      %v4737 = vadd.f32 %v4701, %v4729
      %v4738 = vadd.f32 %v4702, %v4729
      %v4739 = vadd.f32 %v4703, %v4729
      %v4740 = vadd.f32 %v4704, %v4729
      %v4741 = vadd.f32 %v4705, %v4729
      %v4742 = vadd.f32 %v4706, %v4729
      %v4743 = vadd.f32 %v4707, %v4729
      %v4744 = vadd.f32 %v4708, %v4729
      %v4745 = vadd.f32 %v4709, %v4729
      %v4746 = vadd.f32 %v4710, %v4729
      %v4747 = vadd.f32 %v4711, %v4729
      %v4748 = vadd.f32 %v4712, %v4729
      %v4749 = vadd.f32 %v4713, %v4729
      %v4750 = vadd.f32 %v4714, %v4729
      %v4751 = vadd.f32 %v4715, %v4729
      %v4752 = vadd.f32 %v4716, %v4729
      %v4753 = vadd.f32 %v4717, %v4729
      %v4754 = vadd.f32 %v4718, %v4729
      %v4755 = vadd.f32 %v4719, %v4729
      %v4756 = vadd.f32 %v4720, %v4729
      %v4757 = vadd.f32 %v4721, %v4729
      %v4758 = vadd.f32 %v4722, %v4729
      %v4759 = vadd.f32 %v4723, %v4729
      %v4760 = vadd.f32 %v4724, %v4729
      %v4761 = vadd.f32 %v4725, %v4729
      %v4762 = vadd.f32 %v4726, %v4729
      %v4763 = vmax.f32 %v4731, 0.0
      %v4764 = vmax.f32 %v4732, 0.0
      %v4765 = vmax.f32 %v4733, 0.0
      %v4766 = vmax.f32 %v4734, 0.0
      %v4767 = vmax.f32 %v4735, 0.0
      %v4768 = vmax.f32 %v4736, 0.0
      %v4769 = vmax.f32 %v4737, 0.0
      %v4770 = vmax.f32 %v4738, 0.0
      %v4771 = vmax.f32 %v4739, 0.0
      %v4772 = vmax.f32 %v4740, 0.0
      %v4773 = vmax.f32 %v4741, 0.0
      %v4774 = vmax.f32 %v4742, 0.0
      %v4775 = vmax.f32 %v4743, 0.0
      %v4776 = vmax.f32 %v4744, 0.0
      %v4777 = vmax.f32 %v4745, 0.0
      %v4778 = vmax.f32 %v4746, 0.0
      %v4779 = vmax.f32 %v4747, 0.0
      %v4780 = vmax.f32 %v4748, 0.0
      %v4781 = vmax.f32 %v4749, 0.0
      %v4782 = vmax.f32 %v4750, 0.0
      %v4783 = vmax.f32 %v4751, 0.0
      %v4784 = vmax.f32 %v4752, 0.0
      %v4785 = vmax.f32 %v4753, 0.0
      %v4786 = vmax.f32 %v4754, 0.0
      %v4787 = vmax.f32 %v4755, 0.0
      %v4788 = vmax.f32 %v4756, 0.0
      %v4789 = vmax.f32 %v4757, 0.0
      %v4790 = vmax.f32 %v4758, 0.0
      %v4791 = vmax.f32 %v4759, 0.0
      %v4792 = vmax.f32 %v4760, 0.0
      %v4793 = vmax.f32 %v4761, 0.0
      %v4794 = vmax.f32 %v4762, 0.0
      %4795 = vst.msk [vmem:[%s2652 + $0x1] sm:$0xff] %vm471, %v4763
      %4796 = vst.msk [vmem:[%s2652 + $0x9] sm:$0xff] %vm471, %v4764
      %4797 = vst.msk [vmem:[%s2652 + $0x19] sm:$0xff] %vm471, %v4765
      %4798 = vst.msk [vmem:[%s2652 + $0x21] sm:$0xff] %vm471, %v4766
      %4799 = vst.msk [vmem:[%s2652 + $0x31] sm:$0xff] %vm471, %v4767
      %4800 = vst.msk [vmem:[%s2652 + $0x39] sm:$0xff] %vm471, %v4768
      %4801 = vst.msk [vmem:[%s2652 + $0x49] sm:$0xff] %vm471, %v4769
      %4802 = vst.msk [vmem:[%s2652 + $0x51] sm:$0xff] %vm471, %v4770
      %4803 = vst.msk [vmem:[%s2652 + $0x61] sm:$0xff] %vm471, %v4771
      %4804 = vst.msk [vmem:[%s2652 + $0x69] sm:$0xff] %vm471, %v4772
      %4805 = vst.msk [vmem:[%s2652 + $0x79] sm:$0xff] %vm471, %v4773
      %4806 = vst.msk [vmem:[%s2652 + $0x81] sm:$0xff] %vm471, %v4774
      %4807 = vst.msk [vmem:[%s2652 + $0x91] sm:$0xff] %vm471, %v4775
      %4808 = vst.msk [vmem:[%s2652 + $0x99] sm:$0xff] %vm471, %v4776
      %4809 = vst.msk [vmem:[%s2652 + $0xa9] sm:$0xff] %vm471, %v4777
      %4810 = vst.msk [vmem:[%s2652 + $0xb1] sm:$0xff] %vm471, %v4778
      %4811 = vst.msk [vmem:[%s2652 + $0xc1] sm:$0xff] %vm471, %v4779
      %4812 = vst.msk [vmem:[%s2652 + $0xc9] sm:$0xff] %vm471, %v4780
      %4813 = vst.msk [vmem:[%s2652 + $0xd9] sm:$0xff] %vm471, %v4781
      %4814 = vst.msk [vmem:[%s2652 + $0xe1] sm:$0xff] %vm471, %v4782
      %4815 = vst.msk [vmem:[%s2652 + $0xf1] sm:$0xff] %vm471, %v4783
      %4816 = vst.msk [vmem:[%s2652 + $0xf9] sm:$0xff] %vm471, %v4784
      %4817 = vst.msk [vmem:[%s2652 + $0x109] sm:$0xff] %vm471, %v4785
      %4818 = vst.msk [vmem:[%s2652 + $0x111] sm:$0xff] %vm471, %v4786
      %4819 = vst.msk [vmem:[%s2652 + $0x121] sm:$0xff] %vm471, %v4787
      %4820 = vst.msk [vmem:[%s2652 + $0x129] sm:$0xff] %vm471, %v4788
      %4821 = vst.msk [vmem:[%s2652 + $0x139] sm:$0xff] %vm471, %v4789
      %4822 = vst.msk [vmem:[%s2652 + $0x141] sm:$0xff] %vm471, %v4790
      %4823 = vst.msk [vmem:[%s2652 + $0x151] sm:$0xff] %vm471, %v4791
      %4824 = vst.msk [vmem:[%s2652 + $0x159] sm:$0xff] %vm471, %v4792
      %4825 = vst.msk [vmem:[%s2652 + $0x169] sm:$0xff] %vm471, %v4793
      %4826 = vst.msk [vmem:[%s2652 + $0x171] sm:$0xff] %vm471, %v4794
      %v4827 = vld [vmem:[#allocation3] sm:$0xff]
      %v4828 = vld [vmem:[#allocation3 + $0x8] sm:$0xff]
      %v4829 = vld [vmem:[#allocation3 + $0x18] sm:$0xff]
      %v4830 = vld [vmem:[#allocation3 + $0x20] sm:$0xff]
      %v4831 = vld [vmem:[#allocation3 + $0x30] sm:$0xff]
      %v4832 = vld [vmem:[#allocation3 + $0x38] sm:$0xff]
      %v4833 = vld [vmem:[#allocation3 + $0x48] sm:$0xff]
      %v4834 = vld [vmem:[#allocation3 + $0x50] sm:$0xff]
      %v4835 = vld [vmem:[#allocation3 + $0x60] sm:$0xff]
      %v4836 = vld [vmem:[#allocation3 + $0x68] sm:$0xff]
      %v4837 = vld [vmem:[#allocation3 + $0x78] sm:$0xff]
      %v4838 = vld [vmem:[#allocation3 + $0x80] sm:$0xff]
      %v4839 = vld [vmem:[#allocation3 + $0x90] sm:$0xff]
      %v4840 = vld [vmem:[#allocation3 + $0x98] sm:$0xff]
      %v4841 = vld [vmem:[#allocation3 + $0xa8] sm:$0xff]
      %v4842 = vld [vmem:[#allocation3 + $0xb0] sm:$0xff]
      %v4843 = vld [vmem:[#allocation3 + $0xc0] sm:$0xff]
      %v4844 = vld [vmem:[#allocation3 + $0xc8] sm:$0xff]
      %v4845 = vld [vmem:[#allocation3 + $0xd8] sm:$0xff]
      %v4846 = vld [vmem:[#allocation3 + $0xe0] sm:$0xff]
      %v4847 = vld [vmem:[#allocation3 + $0xf0] sm:$0xff]
      %v4848 = vld [vmem:[#allocation3 + $0xf8] sm:$0xff]
      %v4849 = vld [vmem:[#allocation3 + $0x108] sm:$0xff]
      %v4850 = vld [vmem:[#allocation3 + $0x110] sm:$0xff]
      %v4851 = vld [vmem:[#allocation3 + $0x120] sm:$0xff]
      %v4852 = vld [vmem:[#allocation3 + $0x128] sm:$0xff]
      %v4853 = vld [vmem:[#allocation3 + $0x138] sm:$0xff]
      %v4854 = vld [vmem:[#allocation3 + $0x140] sm:$0xff]
      %v4855 = vld [vmem:[#allocation3 + $0x150] sm:$0xff]
      %v4856 = vld [vmem:[#allocation3 + $0x158] sm:$0xff]
      %v4857 = vld [vmem:[#allocation3 + $0x168] sm:$0xff]
      %v4858 = vld [vmem:[#allocation3 + $0x170] sm:$0xff]
      %v4859 = vpack.c.bf16 %v4828, %v4827
      %v4860 = vpack.c.bf16 %v4830, %v4829
      %v4861 = vpack.c.bf16 %v4832, %v4831
      %v4862 = vpack.c.bf16 %v4834, %v4833
      %v4863 = vpack.c.bf16 %v4836, %v4835
      %v4864 = vpack.c.bf16 %v4838, %v4837
      %v4865 = vpack.c.bf16 %v4840, %v4839
      %v4866 = vpack.c.bf16 %v4842, %v4841
      %v4867 = vpack.c.bf16 %v4844, %v4843
      %v4868 = vpack.c.bf16 %v4846, %v4845
      %v4869 = vpack.c.bf16 %v4848, %v4847
      %v4870 = vpack.c.bf16 %v4850, %v4849
      %v4871 = vpack.c.bf16 %v4852, %v4851
      %v4872 = vpack.c.bf16 %v4854, %v4853
      %v4873 = vpack.c.bf16 %v4856, %v4855
      %v4874 = vpack.c.bf16 %v4858, %v4857
      %v4875 = vld [vmem:[%s5] sm:$0xf]
      %v4876 = vld [vmem:[%s5 + $0x4] sm:$0xf]
      %v4877 = vld [vmem:[%s5 + $0x8] sm:$0xf]
      %v4878 = vld [vmem:[%s5 + $0xc] sm:$0xf]
      %v4879 = vld [vmem:[#allocation3 + $0x1] sm:$0xff]
      %v4880 = vld [vmem:[#allocation3 + $0x9] sm:$0xff]
      %v4881 = vld [vmem:[#allocation3 + $0x19] sm:$0xff]
      %v4882 = vld [vmem:[#allocation3 + $0x21] sm:$0xff]
      %v4883 = vld [vmem:[#allocation3 + $0x31] sm:$0xff]
      %v4884 = vld [vmem:[#allocation3 + $0x39] sm:$0xff]
      %v4885 = vld [vmem:[#allocation3 + $0x49] sm:$0xff]
      %v4886 = vld [vmem:[#allocation3 + $0x51] sm:$0xff]
      %v4887 = vld [vmem:[#allocation3 + $0x61] sm:$0xff]
      %v4888 = vld [vmem:[#allocation3 + $0x69] sm:$0xff]
      %v4889 = vld [vmem:[#allocation3 + $0x79] sm:$0xff]
      %v4890 = vld [vmem:[#allocation3 + $0x81] sm:$0xff]
      %v4891 = vld [vmem:[#allocation3 + $0x91] sm:$0xff]
      %v4892 = vld [vmem:[#allocation3 + $0x99] sm:$0xff]
      %v4893 = vld [vmem:[#allocation3 + $0xa9] sm:$0xff]
      %v4894 = vld [vmem:[#allocation3 + $0xb1] sm:$0xff]
      %v4895 = vld [vmem:[#allocation3 + $0xc1] sm:$0xff]
      %v4896 = vld [vmem:[#allocation3 + $0xc9] sm:$0xff]
      %v4897 = vld [vmem:[#allocation3 + $0xd9] sm:$0xff]
      %v4898 = vld [vmem:[#allocation3 + $0xe1] sm:$0xff]
      %v4899 = vld [vmem:[#allocation3 + $0xf1] sm:$0xff]
      %v4900 = vld [vmem:[#allocation3 + $0xf9] sm:$0xff]
      %v4901 = vld [vmem:[#allocation3 + $0x109] sm:$0xff]
      %v4902 = vld [vmem:[#allocation3 + $0x111] sm:$0xff]
      %v4903 = vld [vmem:[#allocation3 + $0x121] sm:$0xff]
      %v4904 = vld [vmem:[#allocation3 + $0x129] sm:$0xff]
      %v4905 = vld [vmem:[#allocation3 + $0x139] sm:$0xff]
      %v4906 = vld [vmem:[#allocation3 + $0x141] sm:$0xff]
      %v4907 = vld [vmem:[#allocation3 + $0x151] sm:$0xff]
      %v4908 = vld [vmem:[#allocation3 + $0x159] sm:$0xff]
      %v4909 = vld [vmem:[#allocation3 + $0x169] sm:$0xff]
      %v4910 = vld [vmem:[#allocation3 + $0x171] sm:$0xff]
      %v4911 = vpack.c.bf16 %v4880, %v4879
      %v4912 = vpack.c.bf16 %v4882, %v4881
      %v4913 = vpack.c.bf16 %v4884, %v4883
      %v4914 = vpack.c.bf16 %v4886, %v4885
      %v4915 = vpack.c.bf16 %v4888, %v4887
      %v4916 = vpack.c.bf16 %v4890, %v4889
      %v4917 = vpack.c.bf16 %v4892, %v4891
      %v4918 = vpack.c.bf16 %v4894, %v4893
      %v4919 = vpack.c.bf16 %v4896, %v4895
      %v4920 = vpack.c.bf16 %v4898, %v4897
      %v4921 = vpack.c.bf16 %v4900, %v4899
      %v4922 = vpack.c.bf16 %v4902, %v4901
      %v4923 = vpack.c.bf16 %v4904, %v4903
      %v4924 = vpack.c.bf16 %v4906, %v4905
      %v4925 = vpack.c.bf16 %v4908, %v4907
      %v4926 = vpack.c.bf16 %v4910, %v4909
      %s4927 = scalar_lea.vmem %s5, 16
      %v4928 = vld [vmem:[%s4927] sm:$0xf]
      %v4929 = vld [vmem:[%s4927 + $0x4] sm:$0xf]
      %v4930 = vld [vmem:[%s4927 + $0x8] sm:$0xf]
      %v4931 = vld [vmem:[%s4927 + $0xc] sm:$0xf]
      %v4936 = vunpack.c.l.b16 %v4928
      %v4937 = vunpack.c.l.b16 %v4929
      %v4938 = vunpack.c.l.b16 %v4930
      %v4939 = vunpack.c.l.b16 %v4931
      %v4940 = vpack.c.b16 %v4937, %v4936
      %v4941 = vpack.c.b16 %v4939, %v4938
      %v4945 = vsel %vm471, %v4911, 0
      %v4948 = vsel %vm471, %v4912, 0
      %v4951 = vsel %vm471, %v4913, 0
      %v4954 = vsel %vm471, %v4914, 0
      %v4957 = vsel %vm471, %v4915, 0
      %v4960 = vsel %vm471, %v4916, 0
      %v4963 = vsel %vm471, %v4917, 0
      %v4966 = vsel %vm471, %v4918, 0
      %v4969 = vsel %vm471, %v4919, 0
      %v4972 = vsel %vm471, %v4920, 0
      %v4975 = vsel %vm471, %v4921, 0
      %v4978 = vsel %vm471, %v4922, 0
      %v4981 = vsel %vm471, %v4923, 0
      %v4984 = vsel %vm471, %v4924, 0
      %v4987 = vsel %vm471, %v4925, 0
      %v4990 = vsel %vm471, %v4926, 0
      %4992 = vmatpush.bf16.msra.mxu0 0
      %4993 = vmatpush.bf16.msra.mxu0 0
      %4994 = vmatpush.bf16.msra.mxu0 0
      %4995 = vmatpush.bf16.msra.mxu0 0
      %4996 = vmatpush.bf16.msra.mxu0 0
      %4997 = vmatpush.bf16.msra.mxu0 0
      %4998 = vmatpush.bf16.msra.mxu0 %v4941
      %4999 = vmatpush.bf16.msra.mxu0 %v4940
      %5000 = vmatmul.bf16.gmra.mxu0 %v4945
      %v5001 = vpop.f32.mrf.mxu0
      %v5002 = vadd.f32 0.0, %v5001
      %v5003 = vpop.f32.mrf.mxu0
      %v5004 = vadd.f32 0.0, %v5003
      %5005 = vmatmul.bf16.gmra.mxu0 %v4948
      %v5006 = vpop.f32.mrf.mxu0
      %v5007 = vadd.f32 0.0, %v5006
      %v5008 = vpop.f32.mrf.mxu0
      %v5009 = vadd.f32 0.0, %v5008
      %5010 = vmatmul.bf16.gmra.mxu0 %v4951
      %v5011 = vpop.f32.mrf.mxu0
      %v5012 = vadd.f32 0.0, %v5011
      %v5013 = vpop.f32.mrf.mxu0
      %v5014 = vadd.f32 0.0, %v5013
      %5015 = vmatmul.bf16.gmra.mxu0 %v4954
      %v5016 = vpop.f32.mrf.mxu0
      %v5017 = vadd.f32 0.0, %v5016
      %v5018 = vpop.f32.mrf.mxu0
      %v5019 = vadd.f32 0.0, %v5018
      %5020 = vmatmul.bf16.gmra.mxu0 %v4957
      %v5021 = vpop.f32.mrf.mxu0
      %v5022 = vadd.f32 0.0, %v5021
      %v5023 = vpop.f32.mrf.mxu0
      %v5024 = vadd.f32 0.0, %v5023
      %5025 = vmatmul.bf16.gmra.mxu0 %v4960
      %v5026 = vpop.f32.mrf.mxu0
      %v5027 = vadd.f32 0.0, %v5026
      %v5028 = vpop.f32.mrf.mxu0
      %v5029 = vadd.f32 0.0, %v5028
      %5030 = vmatmul.bf16.gmra.mxu0 %v4963
      %v5031 = vpop.f32.mrf.mxu0
      %v5032 = vadd.f32 0.0, %v5031
      %v5033 = vpop.f32.mrf.mxu0
      %v5034 = vadd.f32 0.0, %v5033
      %5035 = vmatmul.bf16.gmra.mxu0 %v4966
      %v5036 = vpop.f32.mrf.mxu0
      %v5037 = vadd.f32 0.0, %v5036
      %v5038 = vpop.f32.mrf.mxu0
      %v5039 = vadd.f32 0.0, %v5038
      %5040 = vmatmul.bf16.gmra.mxu0 %v4969
      %v5041 = vpop.f32.mrf.mxu0
      %v5042 = vadd.f32 0.0, %v5041
      %v5043 = vpop.f32.mrf.mxu0
      %v5044 = vadd.f32 0.0, %v5043
      %5045 = vmatmul.bf16.gmra.mxu0 %v4972
      %v5046 = vpop.f32.mrf.mxu0
      %v5047 = vadd.f32 0.0, %v5046
      %v5048 = vpop.f32.mrf.mxu0
      %v5049 = vadd.f32 0.0, %v5048
      %5050 = vmatmul.bf16.gmra.mxu0 %v4975
      %v5051 = vpop.f32.mrf.mxu0
      %v5052 = vadd.f32 0.0, %v5051
      %v5053 = vpop.f32.mrf.mxu0
      %v5054 = vadd.f32 0.0, %v5053
      %5055 = vmatmul.bf16.gmra.mxu0 %v4978
      %v5056 = vpop.f32.mrf.mxu0
      %v5057 = vadd.f32 0.0, %v5056
      %v5058 = vpop.f32.mrf.mxu0
      %v5059 = vadd.f32 0.0, %v5058
      %5060 = vmatmul.bf16.gmra.mxu0 %v4981
      %v5061 = vpop.f32.mrf.mxu0
      %v5062 = vadd.f32 0.0, %v5061
      %v5063 = vpop.f32.mrf.mxu0
      %v5064 = vadd.f32 0.0, %v5063
      %5065 = vmatmul.bf16.gmra.mxu0 %v4984
      %v5066 = vpop.f32.mrf.mxu0
      %v5067 = vadd.f32 0.0, %v5066
      %v5068 = vpop.f32.mrf.mxu0
      %v5069 = vadd.f32 0.0, %v5068
      %5070 = vmatmul.bf16.gmra.mxu0 %v4987
      %v5071 = vpop.f32.mrf.mxu0
      %v5072 = vadd.f32 0.0, %v5071
      %v5073 = vpop.f32.mrf.mxu0
      %v5074 = vadd.f32 0.0, %v5073
      %5075 = vmatmul.bf16.gmra.mxu0 %v4990
      %v5076 = vpop.f32.mrf.mxu0
      %v5077 = vadd.f32 0.0, %v5076
      %v5078 = vpop.f32.mrf.mxu0
      %v5079 = vadd.f32 0.0, %v5078
      %5080 = vdwg.mxu0
      %v5085 = vunpack.c.l.b16 %v4875
      %v5086 = vunpack.c.l.b16 %v4876
      %v5087 = vunpack.c.l.b16 %v4877
      %v5088 = vunpack.c.l.b16 %v4878
      %v5089 = vpack.c.b16 %v5086, %v5085
      %v5090 = vpack.c.b16 %v5088, %v5087
      %v5094 = vsel %vm471, %v4859, 0
      %v5097 = vsel %vm471, %v4860, 0
      %v5100 = vsel %vm471, %v4861, 0
      %v5103 = vsel %vm471, %v4862, 0
      %v5106 = vsel %vm471, %v4863, 0
      %v5109 = vsel %vm471, %v4864, 0
      %v5112 = vsel %vm471, %v4865, 0
      %v5115 = vsel %vm471, %v4866, 0
      %v5118 = vsel %vm471, %v4867, 0
      %v5121 = vsel %vm471, %v4868, 0
      %v5124 = vsel %vm471, %v4869, 0
      %v5127 = vsel %vm471, %v4870, 0
      %v5130 = vsel %vm471, %v4871, 0
      %v5133 = vsel %vm471, %v4872, 0
      %v5136 = vsel %vm471, %v4873, 0
      %v5139 = vsel %vm471, %v4874, 0
      %5141 = vmatpush.bf16.msra.mxu0 0
      %5142 = vmatpush.bf16.msra.mxu0 0
      %5143 = vmatpush.bf16.msra.mxu0 0
      %5144 = vmatpush.bf16.msra.mxu0 0
      %5145 = vmatpush.bf16.msra.mxu0 0
      %5146 = vmatpush.bf16.msra.mxu0 0
      %5147 = vmatpush.bf16.msra.mxu0 %v5090
      %5148 = vmatpush.bf16.msra.mxu0 %v5089
      %5149 = vmatmul.bf16.gmra.mxu0 %v5094
      %v5150 = vpop.f32.mrf.mxu0
      %v5151 = vadd.f32 %v5002, %v5150
      %v5152 = vpop.f32.mrf.mxu0
      %v5153 = vadd.f32 %v5004, %v5152
      %5154 = vmatmul.bf16.gmra.mxu0 %v5097
      %v5155 = vpop.f32.mrf.mxu0
      %v5156 = vadd.f32 %v5007, %v5155
      %v5157 = vpop.f32.mrf.mxu0
      %v5158 = vadd.f32 %v5009, %v5157
      %5159 = vmatmul.bf16.gmra.mxu0 %v5100
      %v5160 = vpop.f32.mrf.mxu0
      %v5161 = vadd.f32 %v5012, %v5160
      %v5162 = vpop.f32.mrf.mxu0
      %v5163 = vadd.f32 %v5014, %v5162
      %5164 = vmatmul.bf16.gmra.mxu0 %v5103
      %v5165 = vpop.f32.mrf.mxu0
      %v5166 = vadd.f32 %v5017, %v5165
      %v5167 = vpop.f32.mrf.mxu0
      %v5168 = vadd.f32 %v5019, %v5167
      %5169 = vmatmul.bf16.gmra.mxu0 %v5106
      %v5170 = vpop.f32.mrf.mxu0
      %v5171 = vadd.f32 %v5022, %v5170
      %v5172 = vpop.f32.mrf.mxu0
      %v5173 = vadd.f32 %v5024, %v5172
      %5174 = vmatmul.bf16.gmra.mxu0 %v5109
      %v5175 = vpop.f32.mrf.mxu0
      %v5176 = vadd.f32 %v5027, %v5175
      %v5177 = vpop.f32.mrf.mxu0
      %v5178 = vadd.f32 %v5029, %v5177
      %5179 = vmatmul.bf16.gmra.mxu0 %v5112
      %v5180 = vpop.f32.mrf.mxu0
      %v5181 = vadd.f32 %v5032, %v5180
      %v5182 = vpop.f32.mrf.mxu0
      %v5183 = vadd.f32 %v5034, %v5182
      %5184 = vmatmul.bf16.gmra.mxu0 %v5115
      %v5185 = vpop.f32.mrf.mxu0
      %v5186 = vadd.f32 %v5037, %v5185
      %v5187 = vpop.f32.mrf.mxu0
      %v5188 = vadd.f32 %v5039, %v5187
      %5189 = vmatmul.bf16.gmra.mxu0 %v5118
      %v5190 = vpop.f32.mrf.mxu0
      %v5191 = vadd.f32 %v5042, %v5190
      %v5192 = vpop.f32.mrf.mxu0
      %v5193 = vadd.f32 %v5044, %v5192
      %5194 = vmatmul.bf16.gmra.mxu0 %v5121
      %v5195 = vpop.f32.mrf.mxu0
      %v5196 = vadd.f32 %v5047, %v5195
      %v5197 = vpop.f32.mrf.mxu0
      %v5198 = vadd.f32 %v5049, %v5197
      %5199 = vmatmul.bf16.gmra.mxu0 %v5124
      %v5200 = vpop.f32.mrf.mxu0
      %v5201 = vadd.f32 %v5052, %v5200
      %v5202 = vpop.f32.mrf.mxu0
      %v5203 = vadd.f32 %v5054, %v5202
      %5204 = vmatmul.bf16.gmra.mxu0 %v5127
      %v5205 = vpop.f32.mrf.mxu0
      %v5206 = vadd.f32 %v5057, %v5205
      %v5207 = vpop.f32.mrf.mxu0
      %v5208 = vadd.f32 %v5059, %v5207
      %5209 = vmatmul.bf16.gmra.mxu0 %v5130
      %v5210 = vpop.f32.mrf.mxu0
      %v5211 = vadd.f32 %v5062, %v5210
      %v5212 = vpop.f32.mrf.mxu0
      %v5213 = vadd.f32 %v5064, %v5212
      %5214 = vmatmul.bf16.gmra.mxu0 %v5133
      %v5215 = vpop.f32.mrf.mxu0
      %v5216 = vadd.f32 %v5067, %v5215
      %v5217 = vpop.f32.mrf.mxu0
      %v5218 = vadd.f32 %v5069, %v5217
      %5219 = vmatmul.bf16.gmra.mxu0 %v5136
      %v5220 = vpop.f32.mrf.mxu0
      %v5221 = vadd.f32 %v5072, %v5220
      %v5222 = vpop.f32.mrf.mxu0
      %v5223 = vadd.f32 %v5074, %v5222
      %5224 = vmatmul.bf16.gmra.mxu0 %v5139
      %v5225 = vpop.f32.mrf.mxu0
      %v5226 = vadd.f32 %v5077, %v5225
      %v5227 = vpop.f32.mrf.mxu0
      %v5228 = vadd.f32 %v5079, %v5227
      %5229 = vdwg.mxu0
      %v5230 = vld [vmem:[#allocation3 + $0x2] sm:$0xff]
      %v5231 = vld [vmem:[#allocation3 + $0xa] sm:$0xff]
      %v5232 = vld [vmem:[#allocation3 + $0x1a] sm:$0xff]
      %v5233 = vld [vmem:[#allocation3 + $0x22] sm:$0xff]
      %v5234 = vld [vmem:[#allocation3 + $0x32] sm:$0xff]
      %v5235 = vld [vmem:[#allocation3 + $0x3a] sm:$0xff]
      %v5236 = vld [vmem:[#allocation3 + $0x4a] sm:$0xff]
      %v5237 = vld [vmem:[#allocation3 + $0x52] sm:$0xff]
      %v5238 = vld [vmem:[#allocation3 + $0x62] sm:$0xff]
      %v5239 = vld [vmem:[#allocation3 + $0x6a] sm:$0xff]
      %v5240 = vld [vmem:[#allocation3 + $0x7a] sm:$0xff]
      %v5241 = vld [vmem:[#allocation3 + $0x82] sm:$0xff]
      %v5242 = vld [vmem:[#allocation3 + $0x92] sm:$0xff]
      %v5243 = vld [vmem:[#allocation3 + $0x9a] sm:$0xff]
      %v5244 = vld [vmem:[#allocation3 + $0xaa] sm:$0xff]
      %v5245 = vld [vmem:[#allocation3 + $0xb2] sm:$0xff]
      %v5246 = vld [vmem:[#allocation3 + $0xc2] sm:$0xff]
      %v5247 = vld [vmem:[#allocation3 + $0xca] sm:$0xff]
      %v5248 = vld [vmem:[#allocation3 + $0xda] sm:$0xff]
      %v5249 = vld [vmem:[#allocation3 + $0xe2] sm:$0xff]
      %v5250 = vld [vmem:[#allocation3 + $0xf2] sm:$0xff]
      %v5251 = vld [vmem:[#allocation3 + $0xfa] sm:$0xff]
      %v5252 = vld [vmem:[#allocation3 + $0x10a] sm:$0xff]
      %v5253 = vld [vmem:[#allocation3 + $0x112] sm:$0xff]
      %v5254 = vld [vmem:[#allocation3 + $0x122] sm:$0xff]
      %v5255 = vld [vmem:[#allocation3 + $0x12a] sm:$0xff]
      %v5256 = vld [vmem:[#allocation3 + $0x13a] sm:$0xff]
      %v5257 = vld [vmem:[#allocation3 + $0x142] sm:$0xff]
      %v5258 = vld [vmem:[#allocation3 + $0x152] sm:$0xff]
      %v5259 = vld [vmem:[#allocation3 + $0x15a] sm:$0xff]
      %v5260 = vld [vmem:[#allocation3 + $0x16a] sm:$0xff]
      %v5261 = vld [vmem:[#allocation3 + $0x172] sm:$0xff]
      %v5262 = vpack.c.bf16 %v5231, %v5230
      %v5263 = vpack.c.bf16 %v5233, %v5232
      %v5264 = vpack.c.bf16 %v5235, %v5234
      %v5265 = vpack.c.bf16 %v5237, %v5236
      %v5266 = vpack.c.bf16 %v5239, %v5238
      %v5267 = vpack.c.bf16 %v5241, %v5240
      %v5268 = vpack.c.bf16 %v5243, %v5242
      %v5269 = vpack.c.bf16 %v5245, %v5244
      %v5270 = vpack.c.bf16 %v5247, %v5246
      %v5271 = vpack.c.bf16 %v5249, %v5248
      %v5272 = vpack.c.bf16 %v5251, %v5250
      %v5273 = vpack.c.bf16 %v5253, %v5252
      %v5274 = vpack.c.bf16 %v5255, %v5254
      %v5275 = vpack.c.bf16 %v5257, %v5256
      %v5276 = vpack.c.bf16 %v5259, %v5258
      %v5277 = vpack.c.bf16 %v5261, %v5260
      %s5278 = scalar_lea.vmem %s5, 32
      %v5279 = vld [vmem:[%s5278] sm:$0xf]
      %v5280 = vld [vmem:[%s5278 + $0x4] sm:$0xf]
      %v5281 = vld [vmem:[%s5278 + $0x8] sm:$0xf]
      %v5282 = vld [vmem:[%s5278 + $0xc] sm:$0xf]
      %v5287 = vunpack.c.l.b16 %v5279
      %v5288 = vunpack.c.l.b16 %v5280
      %v5289 = vunpack.c.l.b16 %v5281
      %v5290 = vunpack.c.l.b16 %v5282
      %v5291 = vpack.c.b16 %v5288, %v5287
      %v5292 = vpack.c.b16 %v5290, %v5289
      %v5296 = vsel %vm471, %v5262, 0
      %v5299 = vsel %vm471, %v5263, 0
      %v5302 = vsel %vm471, %v5264, 0
      %v5305 = vsel %vm471, %v5265, 0
      %v5308 = vsel %vm471, %v5266, 0
      %v5311 = vsel %vm471, %v5267, 0
      %v5314 = vsel %vm471, %v5268, 0
      %v5317 = vsel %vm471, %v5269, 0
      %v5320 = vsel %vm471, %v5270, 0
      %v5323 = vsel %vm471, %v5271, 0
      %v5326 = vsel %vm471, %v5272, 0
      %v5329 = vsel %vm471, %v5273, 0
      %v5332 = vsel %vm471, %v5274, 0
      %v5335 = vsel %vm471, %v5275, 0
      %v5338 = vsel %vm471, %v5276, 0
      %v5341 = vsel %vm471, %v5277, 0
      %5343 = vmatpush.bf16.msra.mxu0 0
      %5344 = vmatpush.bf16.msra.mxu0 0
      %5345 = vmatpush.bf16.msra.mxu0 0
      %5346 = vmatpush.bf16.msra.mxu0 0
      %5347 = vmatpush.bf16.msra.mxu0 0
      %5348 = vmatpush.bf16.msra.mxu0 0
      %5349 = vmatpush.bf16.msra.mxu0 %v5292
      %5350 = vmatpush.bf16.msra.mxu0 %v5291
      %5351 = vmatmul.bf16.gmra.mxu0 %v5296
      %v5352 = vpop.f32.mrf.mxu0
      %v5353 = vadd.f32 0.0, %v5352
      %v5354 = vpop.f32.mrf.mxu0
      %v5355 = vadd.f32 0.0, %v5354
      %5356 = vmatmul.bf16.gmra.mxu0 %v5299
      %v5357 = vpop.f32.mrf.mxu0
      %v5358 = vadd.f32 0.0, %v5357
      %v5359 = vpop.f32.mrf.mxu0
      %v5360 = vadd.f32 0.0, %v5359
      %5361 = vmatmul.bf16.gmra.mxu0 %v5302
      %v5362 = vpop.f32.mrf.mxu0
      %v5363 = vadd.f32 0.0, %v5362
      %v5364 = vpop.f32.mrf.mxu0
      %v5365 = vadd.f32 0.0, %v5364
      %5366 = vmatmul.bf16.gmra.mxu0 %v5305
      %v5367 = vpop.f32.mrf.mxu0
      %v5368 = vadd.f32 0.0, %v5367
      %v5369 = vpop.f32.mrf.mxu0
      %v5370 = vadd.f32 0.0, %v5369
      %5371 = vmatmul.bf16.gmra.mxu0 %v5308
      %v5372 = vpop.f32.mrf.mxu0
      %v5373 = vadd.f32 0.0, %v5372
      %v5374 = vpop.f32.mrf.mxu0
      %v5375 = vadd.f32 0.0, %v5374
      %5376 = vmatmul.bf16.gmra.mxu0 %v5311
      %v5377 = vpop.f32.mrf.mxu0
      %v5378 = vadd.f32 0.0, %v5377
      %v5379 = vpop.f32.mrf.mxu0
      %v5380 = vadd.f32 0.0, %v5379
      %5381 = vmatmul.bf16.gmra.mxu0 %v5314
      %v5382 = vpop.f32.mrf.mxu0
      %v5383 = vadd.f32 0.0, %v5382
      %v5384 = vpop.f32.mrf.mxu0
      %v5385 = vadd.f32 0.0, %v5384
      %5386 = vmatmul.bf16.gmra.mxu0 %v5317
      %v5387 = vpop.f32.mrf.mxu0
      %v5388 = vadd.f32 0.0, %v5387
      %v5389 = vpop.f32.mrf.mxu0
      %v5390 = vadd.f32 0.0, %v5389
      %5391 = vmatmul.bf16.gmra.mxu0 %v5320
      %v5392 = vpop.f32.mrf.mxu0
      %v5393 = vadd.f32 0.0, %v5392
      %v5394 = vpop.f32.mrf.mxu0
      %v5395 = vadd.f32 0.0, %v5394
      %5396 = vmatmul.bf16.gmra.mxu0 %v5323
      %v5397 = vpop.f32.mrf.mxu0
      %v5398 = vadd.f32 0.0, %v5397
      %v5399 = vpop.f32.mrf.mxu0
      %v5400 = vadd.f32 0.0, %v5399
      %5401 = vmatmul.bf16.gmra.mxu0 %v5326
      %v5402 = vpop.f32.mrf.mxu0
      %v5403 = vadd.f32 0.0, %v5402
      %v5404 = vpop.f32.mrf.mxu0
      %v5405 = vadd.f32 0.0, %v5404
      %5406 = vmatmul.bf16.gmra.mxu0 %v5329
      %v5407 = vpop.f32.mrf.mxu0
      %v5408 = vadd.f32 0.0, %v5407
      %v5409 = vpop.f32.mrf.mxu0
      %v5410 = vadd.f32 0.0, %v5409
      %5411 = vmatmul.bf16.gmra.mxu0 %v5332
      %v5412 = vpop.f32.mrf.mxu0
      %v5413 = vadd.f32 0.0, %v5412
      %v5414 = vpop.f32.mrf.mxu0
      %v5415 = vadd.f32 0.0, %v5414
      %5416 = vmatmul.bf16.gmra.mxu0 %v5335
      %v5417 = vpop.f32.mrf.mxu0
      %v5418 = vadd.f32 0.0, %v5417
      %v5419 = vpop.f32.mrf.mxu0
      %v5420 = vadd.f32 0.0, %v5419
      %5421 = vmatmul.bf16.gmra.mxu0 %v5338
      %v5422 = vpop.f32.mrf.mxu0
      %v5423 = vadd.f32 0.0, %v5422
      %v5424 = vpop.f32.mrf.mxu0
      %v5425 = vadd.f32 0.0, %v5424
      %5426 = vmatmul.bf16.gmra.mxu0 %v5341
      %v5427 = vpop.f32.mrf.mxu0
      %v5428 = vadd.f32 0.0, %v5427
      %v5429 = vpop.f32.mrf.mxu0
      %v5430 = vadd.f32 0.0, %v5429
      %5431 = vdwg.mxu0
      %v5432 = vadd.f32 %v5151, %v5353
      %v5433 = vadd.f32 %v5153, %v5355
      %v5434 = vadd.f32 %v5156, %v5358
      %v5435 = vadd.f32 %v5158, %v5360
      %v5436 = vadd.f32 %v5161, %v5363
      %v5437 = vadd.f32 %v5163, %v5365
      %v5438 = vadd.f32 %v5166, %v5368
      %v5439 = vadd.f32 %v5168, %v5370
      %v5440 = vadd.f32 %v5171, %v5373
      %v5441 = vadd.f32 %v5173, %v5375
      %v5442 = vadd.f32 %v5176, %v5378
      %v5443 = vadd.f32 %v5178, %v5380
      %v5444 = vadd.f32 %v5181, %v5383
      %v5445 = vadd.f32 %v5183, %v5385
      %v5446 = vadd.f32 %v5186, %v5388
      %v5447 = vadd.f32 %v5188, %v5390
      %v5448 = vadd.f32 %v5191, %v5393
      %v5449 = vadd.f32 %v5193, %v5395
      %v5450 = vadd.f32 %v5196, %v5398
      %v5451 = vadd.f32 %v5198, %v5400
      %v5452 = vadd.f32 %v5201, %v5403
      %v5453 = vadd.f32 %v5203, %v5405
      %v5454 = vadd.f32 %v5206, %v5408
      %v5455 = vadd.f32 %v5208, %v5410
      %v5456 = vadd.f32 %v5211, %v5413
      %v5457 = vadd.f32 %v5213, %v5415
      %v5458 = vadd.f32 %v5216, %v5418
      %v5459 = vadd.f32 %v5218, %v5420
      %v5460 = vadd.f32 %v5221, %v5423
      %v5461 = vadd.f32 %v5223, %v5425
      %v5462 = vadd.f32 %v5226, %v5428
      %v5463 = vadd.f32 %v5228, %v5430
      %v5464 = vld [vmem:[%s2652] sm:$0xff]
      %v5465 = vld [vmem:[%s2652 + $0x8] sm:$0xff]
      %v5466 = vld [vmem:[%s2652 + $0x18] sm:$0xff]
      %v5467 = vld [vmem:[%s2652 + $0x20] sm:$0xff]
      %v5468 = vld [vmem:[%s2652 + $0x30] sm:$0xff]
      %v5469 = vld [vmem:[%s2652 + $0x38] sm:$0xff]
      %v5470 = vld [vmem:[%s2652 + $0x48] sm:$0xff]
      %v5471 = vld [vmem:[%s2652 + $0x50] sm:$0xff]
      %v5472 = vld [vmem:[%s2652 + $0x60] sm:$0xff]
      %v5473 = vld [vmem:[%s2652 + $0x68] sm:$0xff]
      %v5474 = vld [vmem:[%s2652 + $0x78] sm:$0xff]
      %v5475 = vld [vmem:[%s2652 + $0x80] sm:$0xff]
      %v5476 = vld [vmem:[%s2652 + $0x90] sm:$0xff]
      %v5477 = vld [vmem:[%s2652 + $0x98] sm:$0xff]
      %v5478 = vld [vmem:[%s2652 + $0xa8] sm:$0xff]
      %v5479 = vld [vmem:[%s2652 + $0xb0] sm:$0xff]
      %v5480 = vld [vmem:[%s2652 + $0xc0] sm:$0xff]
      %v5481 = vld [vmem:[%s2652 + $0xc8] sm:$0xff]
      %v5482 = vld [vmem:[%s2652 + $0xd8] sm:$0xff]
      %v5483 = vld [vmem:[%s2652 + $0xe0] sm:$0xff]
      %v5484 = vld [vmem:[%s2652 + $0xf0] sm:$0xff]
      %v5485 = vld [vmem:[%s2652 + $0xf8] sm:$0xff]
      %v5486 = vld [vmem:[%s2652 + $0x108] sm:$0xff]
      %v5487 = vld [vmem:[%s2652 + $0x110] sm:$0xff]
      %v5488 = vld [vmem:[%s2652 + $0x120] sm:$0xff]
      %v5489 = vld [vmem:[%s2652 + $0x128] sm:$0xff]
      %v5490 = vld [vmem:[%s2652 + $0x138] sm:$0xff]
      %v5491 = vld [vmem:[%s2652 + $0x140] sm:$0xff]
      %v5492 = vld [vmem:[%s2652 + $0x150] sm:$0xff]
      %v5493 = vld [vmem:[%s2652 + $0x158] sm:$0xff]
      %v5494 = vld [vmem:[%s2652 + $0x168] sm:$0xff]
      %v5495 = vld [vmem:[%s2652 + $0x170] sm:$0xff]
      %v5496 = vpack.c.bf16 %v5465, %v5464
      %v5497 = vpack.c.bf16 %v5467, %v5466
      %v5498 = vpack.c.bf16 %v5469, %v5468
      %v5499 = vpack.c.bf16 %v5471, %v5470
      %v5500 = vpack.c.bf16 %v5473, %v5472
      %v5501 = vpack.c.bf16 %v5475, %v5474
      %v5502 = vpack.c.bf16 %v5477, %v5476
      %v5503 = vpack.c.bf16 %v5479, %v5478
      %v5504 = vpack.c.bf16 %v5481, %v5480
      %v5505 = vpack.c.bf16 %v5483, %v5482
      %v5506 = vpack.c.bf16 %v5485, %v5484
      %v5507 = vpack.c.bf16 %v5487, %v5486
      %v5508 = vpack.c.bf16 %v5489, %v5488
      %v5509 = vpack.c.bf16 %v5491, %v5490
      %v5510 = vpack.c.bf16 %v5493, %v5492
      %v5511 = vpack.c.bf16 %v5495, %v5494
      %s5512 = scalar_lea.vmem %s5, 48
      %v5513 = vld [vmem:[%s5512] sm:$0xf]
      %v5514 = vld [vmem:[%s5512 + $0x4] sm:$0xf]
      %v5515 = vld [vmem:[%s5512 + $0x8] sm:$0xf]
      %v5516 = vld [vmem:[%s5512 + $0xc] sm:$0xf]
      %v5521 = vunpack.c.l.b16 %v5513
      %v5522 = vunpack.c.l.b16 %v5514
      %v5523 = vunpack.c.l.b16 %v5515
      %v5524 = vunpack.c.l.b16 %v5516
      %v5525 = vpack.c.b16 %v5522, %v5521
      %v5526 = vpack.c.b16 %v5524, %v5523
      %v5530 = vsel %vm471, %v5496, 0
      %v5533 = vsel %vm471, %v5497, 0
      %v5536 = vsel %vm471, %v5498, 0
      %v5539 = vsel %vm471, %v5499, 0
      %v5542 = vsel %vm471, %v5500, 0
      %v5545 = vsel %vm471, %v5501, 0
      %v5548 = vsel %vm471, %v5502, 0
      %v5551 = vsel %vm471, %v5503, 0
      %v5554 = vsel %vm471, %v5504, 0
      %v5557 = vsel %vm471, %v5505, 0
      %v5560 = vsel %vm471, %v5506, 0
      %v5563 = vsel %vm471, %v5507, 0
      %v5566 = vsel %vm471, %v5508, 0
      %v5569 = vsel %vm471, %v5509, 0
      %v5572 = vsel %vm471, %v5510, 0
      %v5575 = vsel %vm471, %v5511, 0
      %5577 = vmatpush.bf16.msra.mxu0 0
      %5578 = vmatpush.bf16.msra.mxu0 0
      %5579 = vmatpush.bf16.msra.mxu0 0
      %5580 = vmatpush.bf16.msra.mxu0 0
      %5581 = vmatpush.bf16.msra.mxu0 0
      %5582 = vmatpush.bf16.msra.mxu0 0
      %5583 = vmatpush.bf16.msra.mxu0 %v5526
      %5584 = vmatpush.bf16.msra.mxu0 %v5525
      %5585 = vmatmul.bf16.gmra.mxu0 %v5530
      %v5586 = vpop.f32.mrf.mxu0
      %v5587 = vadd.f32 0.0, %v5586
      %v5588 = vpop.f32.mrf.mxu0
      %v5589 = vadd.f32 0.0, %v5588
      %5590 = vmatmul.bf16.gmra.mxu0 %v5533
      %v5591 = vpop.f32.mrf.mxu0
      %v5592 = vadd.f32 0.0, %v5591
      %v5593 = vpop.f32.mrf.mxu0
      %v5594 = vadd.f32 0.0, %v5593
      %5595 = vmatmul.bf16.gmra.mxu0 %v5536
      %v5596 = vpop.f32.mrf.mxu0
      %v5597 = vadd.f32 0.0, %v5596
      %v5598 = vpop.f32.mrf.mxu0
      %v5599 = vadd.f32 0.0, %v5598
      %5600 = vmatmul.bf16.gmra.mxu0 %v5539
      %v5601 = vpop.f32.mrf.mxu0
      %v5602 = vadd.f32 0.0, %v5601
      %v5603 = vpop.f32.mrf.mxu0
      %v5604 = vadd.f32 0.0, %v5603
      %5605 = vmatmul.bf16.gmra.mxu0 %v5542
      %v5606 = vpop.f32.mrf.mxu0
      %v5607 = vadd.f32 0.0, %v5606
      %v5608 = vpop.f32.mrf.mxu0
      %v5609 = vadd.f32 0.0, %v5608
      %5610 = vmatmul.bf16.gmra.mxu0 %v5545
      %v5611 = vpop.f32.mrf.mxu0
      %v5612 = vadd.f32 0.0, %v5611
      %v5613 = vpop.f32.mrf.mxu0
      %v5614 = vadd.f32 0.0, %v5613
      %5615 = vmatmul.bf16.gmra.mxu0 %v5548
      %v5616 = vpop.f32.mrf.mxu0
      %v5617 = vadd.f32 0.0, %v5616
      %v5618 = vpop.f32.mrf.mxu0
      %v5619 = vadd.f32 0.0, %v5618
      %5620 = vmatmul.bf16.gmra.mxu0 %v5551
      %v5621 = vpop.f32.mrf.mxu0
      %v5622 = vadd.f32 0.0, %v5621
      %v5623 = vpop.f32.mrf.mxu0
      %v5624 = vadd.f32 0.0, %v5623
      %5625 = vmatmul.bf16.gmra.mxu0 %v5554
      %v5626 = vpop.f32.mrf.mxu0
      %v5627 = vadd.f32 0.0, %v5626
      %v5628 = vpop.f32.mrf.mxu0
      %v5629 = vadd.f32 0.0, %v5628
      %5630 = vmatmul.bf16.gmra.mxu0 %v5557
      %v5631 = vpop.f32.mrf.mxu0
      %v5632 = vadd.f32 0.0, %v5631
      %v5633 = vpop.f32.mrf.mxu0
      %v5634 = vadd.f32 0.0, %v5633
      %5635 = vmatmul.bf16.gmra.mxu0 %v5560
      %v5636 = vpop.f32.mrf.mxu0
      %v5637 = vadd.f32 0.0, %v5636
      %v5638 = vpop.f32.mrf.mxu0
      %v5639 = vadd.f32 0.0, %v5638
      %5640 = vmatmul.bf16.gmra.mxu0 %v5563
      %v5641 = vpop.f32.mrf.mxu0
      %v5642 = vadd.f32 0.0, %v5641
      %v5643 = vpop.f32.mrf.mxu0
      %v5644 = vadd.f32 0.0, %v5643
      %5645 = vmatmul.bf16.gmra.mxu0 %v5566
      %v5646 = vpop.f32.mrf.mxu0
      %v5647 = vadd.f32 0.0, %v5646
      %v5648 = vpop.f32.mrf.mxu0
      %v5649 = vadd.f32 0.0, %v5648
      %5650 = vmatmul.bf16.gmra.mxu0 %v5569
      %v5651 = vpop.f32.mrf.mxu0
      %v5652 = vadd.f32 0.0, %v5651
      %v5653 = vpop.f32.mrf.mxu0
      %v5654 = vadd.f32 0.0, %v5653
      %5655 = vmatmul.bf16.gmra.mxu0 %v5572
      %v5656 = vpop.f32.mrf.mxu0
      %v5657 = vadd.f32 0.0, %v5656
      %v5658 = vpop.f32.mrf.mxu0
      %v5659 = vadd.f32 0.0, %v5658
      %5660 = vmatmul.bf16.gmra.mxu0 %v5575
      %v5661 = vpop.f32.mrf.mxu0
      %v5662 = vadd.f32 0.0, %v5661
      %v5663 = vpop.f32.mrf.mxu0
      %v5664 = vadd.f32 0.0, %v5663
      %5665 = vdwg.mxu0
      %v5666 = vadd.f32 %v5432, %v5587
      %v5667 = vadd.f32 %v5433, %v5589
      %v5668 = vadd.f32 %v5434, %v5592
      %v5669 = vadd.f32 %v5435, %v5594
      %v5670 = vadd.f32 %v5436, %v5597
      %v5671 = vadd.f32 %v5437, %v5599
      %v5672 = vadd.f32 %v5438, %v5602
      %v5673 = vadd.f32 %v5439, %v5604
      %v5674 = vadd.f32 %v5440, %v5607
      %v5675 = vadd.f32 %v5441, %v5609
      %v5676 = vadd.f32 %v5442, %v5612
      %v5677 = vadd.f32 %v5443, %v5614
      %v5678 = vadd.f32 %v5444, %v5617
      %v5679 = vadd.f32 %v5445, %v5619
      %v5680 = vadd.f32 %v5446, %v5622
      %v5681 = vadd.f32 %v5447, %v5624
      %v5682 = vadd.f32 %v5448, %v5627
      %v5683 = vadd.f32 %v5449, %v5629
      %v5684 = vadd.f32 %v5450, %v5632
      %v5685 = vadd.f32 %v5451, %v5634
      %v5686 = vadd.f32 %v5452, %v5637
      %v5687 = vadd.f32 %v5453, %v5639
      %v5688 = vadd.f32 %v5454, %v5642
      %v5689 = vadd.f32 %v5455, %v5644
      %v5690 = vadd.f32 %v5456, %v5647
      %v5691 = vadd.f32 %v5457, %v5649
      %v5692 = vadd.f32 %v5458, %v5652
      %v5693 = vadd.f32 %v5459, %v5654
      %v5694 = vadd.f32 %v5460, %v5657
      %v5695 = vadd.f32 %v5461, %v5659
      %v5696 = vadd.f32 %v5462, %v5662
      %v5697 = vadd.f32 %v5463, %v5664
      %v5698 = vld [vmem:[%s2652 + $0x1] sm:$0xff]
      %v5699 = vld [vmem:[%s2652 + $0x9] sm:$0xff]
      %v5700 = vld [vmem:[%s2652 + $0x19] sm:$0xff]
      %v5701 = vld [vmem:[%s2652 + $0x21] sm:$0xff]
      %v5702 = vld [vmem:[%s2652 + $0x31] sm:$0xff]
      %v5703 = vld [vmem:[%s2652 + $0x39] sm:$0xff]
      %v5704 = vld [vmem:[%s2652 + $0x49] sm:$0xff]
      %v5705 = vld [vmem:[%s2652 + $0x51] sm:$0xff]
      %v5706 = vld [vmem:[%s2652 + $0x61] sm:$0xff]
      %v5707 = vld [vmem:[%s2652 + $0x69] sm:$0xff]
      %v5708 = vld [vmem:[%s2652 + $0x79] sm:$0xff]
      %v5709 = vld [vmem:[%s2652 + $0x81] sm:$0xff]
      %v5710 = vld [vmem:[%s2652 + $0x91] sm:$0xff]
      %v5711 = vld [vmem:[%s2652 + $0x99] sm:$0xff]
      %v5712 = vld [vmem:[%s2652 + $0xa9] sm:$0xff]
      %v5713 = vld [vmem:[%s2652 + $0xb1] sm:$0xff]
      %v5714 = vld [vmem:[%s2652 + $0xc1] sm:$0xff]
      %v5715 = vld [vmem:[%s2652 + $0xc9] sm:$0xff]
      %v5716 = vld [vmem:[%s2652 + $0xd9] sm:$0xff]
      %v5717 = vld [vmem:[%s2652 + $0xe1] sm:$0xff]
      %v5718 = vld [vmem:[%s2652 + $0xf1] sm:$0xff]
      %v5719 = vld [vmem:[%s2652 + $0xf9] sm:$0xff]
      %v5720 = vld [vmem:[%s2652 + $0x109] sm:$0xff]
      %v5721 = vld [vmem:[%s2652 + $0x111] sm:$0xff]
      %v5722 = vld [vmem:[%s2652 + $0x121] sm:$0xff]
      %v5723 = vld [vmem:[%s2652 + $0x129] sm:$0xff]
      %v5724 = vld [vmem:[%s2652 + $0x139] sm:$0xff]
      %v5725 = vld [vmem:[%s2652 + $0x141] sm:$0xff]
      %v5726 = vld [vmem:[%s2652 + $0x151] sm:$0xff]
      %v5727 = vld [vmem:[%s2652 + $0x159] sm:$0xff]
      %v5728 = vld [vmem:[%s2652 + $0x169] sm:$0xff]
      %v5729 = vld [vmem:[%s2652 + $0x171] sm:$0xff]
      %v5730 = vpack.c.bf16 %v5699, %v5698
      %v5731 = vpack.c.bf16 %v5701, %v5700
      %v5732 = vpack.c.bf16 %v5703, %v5702
      %v5733 = vpack.c.bf16 %v5705, %v5704
      %v5734 = vpack.c.bf16 %v5707, %v5706
      %v5735 = vpack.c.bf16 %v5709, %v5708
      %v5736 = vpack.c.bf16 %v5711, %v5710
      %v5737 = vpack.c.bf16 %v5713, %v5712
      %v5738 = vpack.c.bf16 %v5715, %v5714
      %v5739 = vpack.c.bf16 %v5717, %v5716
      %v5740 = vpack.c.bf16 %v5719, %v5718
      %v5741 = vpack.c.bf16 %v5721, %v5720
      %v5742 = vpack.c.bf16 %v5723, %v5722
      %v5743 = vpack.c.bf16 %v5725, %v5724
      %v5744 = vpack.c.bf16 %v5727, %v5726
      %v5745 = vpack.c.bf16 %v5729, %v5728
      %s5746 = scalar_lea.vmem %s5, 64
      %v5747 = vld [vmem:[%s5746] sm:$0xf]
      %v5748 = vld [vmem:[%s5746 + $0x4] sm:$0xf]
      %v5749 = vld [vmem:[%s5746 + $0x8] sm:$0xf]
      %v5750 = vld [vmem:[%s5746 + $0xc] sm:$0xf]
      %v5755 = vunpack.c.l.b16 %v5747
      %v5756 = vunpack.c.l.b16 %v5748
      %v5757 = vunpack.c.l.b16 %v5749
      %v5758 = vunpack.c.l.b16 %v5750
      %v5759 = vpack.c.b16 %v5756, %v5755
      %v5760 = vpack.c.b16 %v5758, %v5757
      %v5764 = vsel %vm471, %v5730, 0
      %v5767 = vsel %vm471, %v5731, 0
      %v5770 = vsel %vm471, %v5732, 0
      %v5773 = vsel %vm471, %v5733, 0
      %v5776 = vsel %vm471, %v5734, 0
      %v5779 = vsel %vm471, %v5735, 0
      %v5782 = vsel %vm471, %v5736, 0
      %v5785 = vsel %vm471, %v5737, 0
      %v5788 = vsel %vm471, %v5738, 0
      %v5791 = vsel %vm471, %v5739, 0
      %v5794 = vsel %vm471, %v5740, 0
      %v5797 = vsel %vm471, %v5741, 0
      %v5800 = vsel %vm471, %v5742, 0
      %v5803 = vsel %vm471, %v5743, 0
      %v5806 = vsel %vm471, %v5744, 0
      %v5809 = vsel %vm471, %v5745, 0
      %5811 = vmatpush.bf16.msra.mxu0 0
      %5812 = vmatpush.bf16.msra.mxu0 0
      %5813 = vmatpush.bf16.msra.mxu0 0
      %5814 = vmatpush.bf16.msra.mxu0 0
      %5815 = vmatpush.bf16.msra.mxu0 0
      %5816 = vmatpush.bf16.msra.mxu0 0
      %5817 = vmatpush.bf16.msra.mxu0 %v5760
      %5818 = vmatpush.bf16.msra.mxu0 %v5759
      %5819 = vmatmul.bf16.gmra.mxu0 %v5764
      %v5820 = vpop.f32.mrf.mxu0
      %v5821 = vadd.f32 0.0, %v5820
      %v5822 = vpop.f32.mrf.mxu0
      %v5823 = vadd.f32 0.0, %v5822
      %5824 = vmatmul.bf16.gmra.mxu0 %v5767
      %v5825 = vpop.f32.mrf.mxu0
      %v5826 = vadd.f32 0.0, %v5825
      %v5827 = vpop.f32.mrf.mxu0
      %v5828 = vadd.f32 0.0, %v5827
      %5829 = vmatmul.bf16.gmra.mxu0 %v5770
      %v5830 = vpop.f32.mrf.mxu0
      %v5831 = vadd.f32 0.0, %v5830
      %v5832 = vpop.f32.mrf.mxu0
      %v5833 = vadd.f32 0.0, %v5832
      %5834 = vmatmul.bf16.gmra.mxu0 %v5773
      %v5835 = vpop.f32.mrf.mxu0
      %v5836 = vadd.f32 0.0, %v5835
      %v5837 = vpop.f32.mrf.mxu0
      %v5838 = vadd.f32 0.0, %v5837
      %5839 = vmatmul.bf16.gmra.mxu0 %v5776
      %v5840 = vpop.f32.mrf.mxu0
      %v5841 = vadd.f32 0.0, %v5840
      %v5842 = vpop.f32.mrf.mxu0
      %v5843 = vadd.f32 0.0, %v5842
      %5844 = vmatmul.bf16.gmra.mxu0 %v5779
      %v5845 = vpop.f32.mrf.mxu0
      %v5846 = vadd.f32 0.0, %v5845
      %v5847 = vpop.f32.mrf.mxu0
      %v5848 = vadd.f32 0.0, %v5847
      %5849 = vmatmul.bf16.gmra.mxu0 %v5782
      %v5850 = vpop.f32.mrf.mxu0
      %v5851 = vadd.f32 0.0, %v5850
      %v5852 = vpop.f32.mrf.mxu0
      %v5853 = vadd.f32 0.0, %v5852
      %5854 = vmatmul.bf16.gmra.mxu0 %v5785
      %v5855 = vpop.f32.mrf.mxu0
      %v5856 = vadd.f32 0.0, %v5855
      %v5857 = vpop.f32.mrf.mxu0
      %v5858 = vadd.f32 0.0, %v5857
      %5859 = vmatmul.bf16.gmra.mxu0 %v5788
      %v5860 = vpop.f32.mrf.mxu0
      %v5861 = vadd.f32 0.0, %v5860
      %v5862 = vpop.f32.mrf.mxu0
      %v5863 = vadd.f32 0.0, %v5862
      %5864 = vmatmul.bf16.gmra.mxu0 %v5791
      %v5865 = vpop.f32.mrf.mxu0
      %v5866 = vadd.f32 0.0, %v5865
      %v5867 = vpop.f32.mrf.mxu0
      %v5868 = vadd.f32 0.0, %v5867
      %5869 = vmatmul.bf16.gmra.mxu0 %v5794
      %v5870 = vpop.f32.mrf.mxu0
      %v5871 = vadd.f32 0.0, %v5870
      %v5872 = vpop.f32.mrf.mxu0
      %v5873 = vadd.f32 0.0, %v5872
      %5874 = vmatmul.bf16.gmra.mxu0 %v5797
      %v5875 = vpop.f32.mrf.mxu0
      %v5876 = vadd.f32 0.0, %v5875
      %v5877 = vpop.f32.mrf.mxu0
      %v5878 = vadd.f32 0.0, %v5877
      %5879 = vmatmul.bf16.gmra.mxu0 %v5800
      %v5880 = vpop.f32.mrf.mxu0
      %v5881 = vadd.f32 0.0, %v5880
      %v5882 = vpop.f32.mrf.mxu0
      %v5883 = vadd.f32 0.0, %v5882
      %5884 = vmatmul.bf16.gmra.mxu0 %v5803
      %v5885 = vpop.f32.mrf.mxu0
      %v5886 = vadd.f32 0.0, %v5885
      %v5887 = vpop.f32.mrf.mxu0
      %v5888 = vadd.f32 0.0, %v5887
      %5889 = vmatmul.bf16.gmra.mxu0 %v5806
      %v5890 = vpop.f32.mrf.mxu0
      %v5891 = vadd.f32 0.0, %v5890
      %v5892 = vpop.f32.mrf.mxu0
      %v5893 = vadd.f32 0.0, %v5892
      %5894 = vmatmul.bf16.gmra.mxu0 %v5809
      %v5895 = vpop.f32.mrf.mxu0
      %v5896 = vadd.f32 0.0, %v5895
      %v5897 = vpop.f32.mrf.mxu0
      %v5898 = vadd.f32 0.0, %v5897
      %5899 = vdwg.mxu0
      %v5900 = vadd.f32 %v5666, %v5821
      %v5901 = vadd.f32 %v5667, %v5823
      %v5902 = vadd.f32 %v5668, %v5826
      %v5903 = vadd.f32 %v5669, %v5828
      %v5904 = vadd.f32 %v5670, %v5831
      %v5905 = vadd.f32 %v5671, %v5833
      %v5906 = vadd.f32 %v5672, %v5836
      %v5907 = vadd.f32 %v5673, %v5838
      %v5908 = vadd.f32 %v5674, %v5841
      %v5909 = vadd.f32 %v5675, %v5843
      %v5910 = vadd.f32 %v5676, %v5846
      %v5911 = vadd.f32 %v5677, %v5848
      %v5912 = vadd.f32 %v5678, %v5851
      %v5913 = vadd.f32 %v5679, %v5853
      %v5914 = vadd.f32 %v5680, %v5856
      %v5915 = vadd.f32 %v5681, %v5858
      %v5916 = vadd.f32 %v5682, %v5861
      %v5917 = vadd.f32 %v5683, %v5863
      %v5918 = vadd.f32 %v5684, %v5866
      %v5919 = vadd.f32 %v5685, %v5868
      %v5920 = vadd.f32 %v5686, %v5871
      %v5921 = vadd.f32 %v5687, %v5873
      %v5922 = vadd.f32 %v5688, %v5876
      %v5923 = vadd.f32 %v5689, %v5878
      %v5924 = vadd.f32 %v5690, %v5881
      %v5925 = vadd.f32 %v5691, %v5883
      %v5926 = vadd.f32 %v5692, %v5886
      %v5927 = vadd.f32 %v5693, %v5888
      %v5928 = vadd.f32 %v5694, %v5891
      %v5929 = vadd.f32 %v5695, %v5893
      %v5930 = vadd.f32 %v5696, %v5896
      %v5931 = vadd.f32 %v5697, %v5898
      %v5932 = vld [vmem:[%s2652 + $0x2] sm:$0xff]
      %v5933 = vld [vmem:[%s2652 + $0xa] sm:$0xff]
      %v5934 = vld [vmem:[%s2652 + $0x1a] sm:$0xff]
      %v5935 = vld [vmem:[%s2652 + $0x22] sm:$0xff]
      %v5936 = vld [vmem:[%s2652 + $0x32] sm:$0xff]
      %v5937 = vld [vmem:[%s2652 + $0x3a] sm:$0xff]
      %v5938 = vld [vmem:[%s2652 + $0x4a] sm:$0xff]
      %v5939 = vld [vmem:[%s2652 + $0x52] sm:$0xff]
      %v5940 = vld [vmem:[%s2652 + $0x62] sm:$0xff]
      %v5941 = vld [vmem:[%s2652 + $0x6a] sm:$0xff]
      %v5942 = vld [vmem:[%s2652 + $0x7a] sm:$0xff]
      %v5943 = vld [vmem:[%s2652 + $0x82] sm:$0xff]
      %v5944 = vld [vmem:[%s2652 + $0x92] sm:$0xff]
      %v5945 = vld [vmem:[%s2652 + $0x9a] sm:$0xff]
      %v5946 = vld [vmem:[%s2652 + $0xaa] sm:$0xff]
      %v5947 = vld [vmem:[%s2652 + $0xb2] sm:$0xff]
      %v5948 = vld [vmem:[%s2652 + $0xc2] sm:$0xff]
      %v5949 = vld [vmem:[%s2652 + $0xca] sm:$0xff]
      %v5950 = vld [vmem:[%s2652 + $0xda] sm:$0xff]
      %v5951 = vld [vmem:[%s2652 + $0xe2] sm:$0xff]
      %v5952 = vld [vmem:[%s2652 + $0xf2] sm:$0xff]
      %v5953 = vld [vmem:[%s2652 + $0xfa] sm:$0xff]
      %v5954 = vld [vmem:[%s2652 + $0x10a] sm:$0xff]
      %v5955 = vld [vmem:[%s2652 + $0x112] sm:$0xff]
      %v5956 = vld [vmem:[%s2652 + $0x122] sm:$0xff]
      %v5957 = vld [vmem:[%s2652 + $0x12a] sm:$0xff]
      %v5958 = vld [vmem:[%s2652 + $0x13a] sm:$0xff]
      %v5959 = vld [vmem:[%s2652 + $0x142] sm:$0xff]
      %v5960 = vld [vmem:[%s2652 + $0x152] sm:$0xff]
      %v5961 = vld [vmem:[%s2652 + $0x15a] sm:$0xff]
      %v5962 = vld [vmem:[%s2652 + $0x16a] sm:$0xff]
      %v5963 = vld [vmem:[%s2652 + $0x172] sm:$0xff]
      %v5964 = vpack.c.bf16 %v5933, %v5932
      %v5965 = vpack.c.bf16 %v5935, %v5934
      %v5966 = vpack.c.bf16 %v5937, %v5936
      %v5967 = vpack.c.bf16 %v5939, %v5938
      %v5968 = vpack.c.bf16 %v5941, %v5940
      %v5969 = vpack.c.bf16 %v5943, %v5942
      %v5970 = vpack.c.bf16 %v5945, %v5944
      %v5971 = vpack.c.bf16 %v5947, %v5946
      %v5972 = vpack.c.bf16 %v5949, %v5948
      %v5973 = vpack.c.bf16 %v5951, %v5950
      %v5974 = vpack.c.bf16 %v5953, %v5952
      %v5975 = vpack.c.bf16 %v5955, %v5954
      %v5976 = vpack.c.bf16 %v5957, %v5956
      %v5977 = vpack.c.bf16 %v5959, %v5958
      %v5978 = vpack.c.bf16 %v5961, %v5960
      %v5979 = vpack.c.bf16 %v5963, %v5962
      %s5980 = scalar_lea.vmem %s5, 80
      %v5981 = vld [vmem:[%s5980] sm:$0xf]
      %v5982 = vld [vmem:[%s5980 + $0x4] sm:$0xf]
      %v5983 = vld [vmem:[%s5980 + $0x8] sm:$0xf]
      %v5984 = vld [vmem:[%s5980 + $0xc] sm:$0xf]
      %v5989 = vunpack.c.l.b16 %v5981
      %v5990 = vunpack.c.l.b16 %v5982
      %v5991 = vunpack.c.l.b16 %v5983
      %v5992 = vunpack.c.l.b16 %v5984
      %v5993 = vpack.c.b16 %v5990, %v5989
      %v5994 = vpack.c.b16 %v5992, %v5991
      %v5998 = vsel %vm471, %v5964, 0
      %v6001 = vsel %vm471, %v5965, 0
      %v6004 = vsel %vm471, %v5966, 0
      %v6007 = vsel %vm471, %v5967, 0
      %v6010 = vsel %vm471, %v5968, 0
      %v6013 = vsel %vm471, %v5969, 0
      %v6016 = vsel %vm471, %v5970, 0
      %v6019 = vsel %vm471, %v5971, 0
      %v6022 = vsel %vm471, %v5972, 0
      %v6025 = vsel %vm471, %v5973, 0
      %v6028 = vsel %vm471, %v5974, 0
      %v6031 = vsel %vm471, %v5975, 0
      %v6034 = vsel %vm471, %v5976, 0
      %v6037 = vsel %vm471, %v5977, 0
      %v6040 = vsel %vm471, %v5978, 0
      %v6043 = vsel %vm471, %v5979, 0
      %6045 = vmatpush.bf16.msra.mxu0 0
      %6046 = vmatpush.bf16.msra.mxu0 0
      %6047 = vmatpush.bf16.msra.mxu0 0
      %6048 = vmatpush.bf16.msra.mxu0 0
      %6049 = vmatpush.bf16.msra.mxu0 0
      %6050 = vmatpush.bf16.msra.mxu0 0
      %6051 = vmatpush.bf16.msra.mxu0 %v5994
      %6052 = vmatpush.bf16.msra.mxu0 %v5993
      %6053 = vmatmul.bf16.gmra.mxu0 %v5998
      %v6054 = vpop.f32.mrf.mxu0
      %v6055 = vadd.f32 0.0, %v6054
      %v6056 = vpop.f32.mrf.mxu0
      %v6057 = vadd.f32 0.0, %v6056
      %6058 = vmatmul.bf16.gmra.mxu0 %v6001
      %v6059 = vpop.f32.mrf.mxu0
      %v6060 = vadd.f32 0.0, %v6059
      %v6061 = vpop.f32.mrf.mxu0
      %v6062 = vadd.f32 0.0, %v6061
      %6063 = vmatmul.bf16.gmra.mxu0 %v6004
      %v6064 = vpop.f32.mrf.mxu0
      %v6065 = vadd.f32 0.0, %v6064
      %v6066 = vpop.f32.mrf.mxu0
      %v6067 = vadd.f32 0.0, %v6066
      %6068 = vmatmul.bf16.gmra.mxu0 %v6007
      %v6069 = vpop.f32.mrf.mxu0
      %v6070 = vadd.f32 0.0, %v6069
      %v6071 = vpop.f32.mrf.mxu0
      %v6072 = vadd.f32 0.0, %v6071
      %6073 = vmatmul.bf16.gmra.mxu0 %v6010
      %v6074 = vpop.f32.mrf.mxu0
      %v6075 = vadd.f32 0.0, %v6074
      %v6076 = vpop.f32.mrf.mxu0
      %v6077 = vadd.f32 0.0, %v6076
      %6078 = vmatmul.bf16.gmra.mxu0 %v6013
      %v6079 = vpop.f32.mrf.mxu0
      %v6080 = vadd.f32 0.0, %v6079
      %v6081 = vpop.f32.mrf.mxu0
      %v6082 = vadd.f32 0.0, %v6081
      %6083 = vmatmul.bf16.gmra.mxu0 %v6016
      %v6084 = vpop.f32.mrf.mxu0
      %v6085 = vadd.f32 0.0, %v6084
      %v6086 = vpop.f32.mrf.mxu0
      %v6087 = vadd.f32 0.0, %v6086
      %6088 = vmatmul.bf16.gmra.mxu0 %v6019
      %v6089 = vpop.f32.mrf.mxu0
      %v6090 = vadd.f32 0.0, %v6089
      %v6091 = vpop.f32.mrf.mxu0
      %v6092 = vadd.f32 0.0, %v6091
      %6093 = vmatmul.bf16.gmra.mxu0 %v6022
      %v6094 = vpop.f32.mrf.mxu0
      %v6095 = vadd.f32 0.0, %v6094
      %v6096 = vpop.f32.mrf.mxu0
      %v6097 = vadd.f32 0.0, %v6096
      %6098 = vmatmul.bf16.gmra.mxu0 %v6025
      %v6099 = vpop.f32.mrf.mxu0
      %v6100 = vadd.f32 0.0, %v6099
      %v6101 = vpop.f32.mrf.mxu0
      %v6102 = vadd.f32 0.0, %v6101
      %6103 = vmatmul.bf16.gmra.mxu0 %v6028
      %v6104 = vpop.f32.mrf.mxu0
      %v6105 = vadd.f32 0.0, %v6104
      %v6106 = vpop.f32.mrf.mxu0
      %v6107 = vadd.f32 0.0, %v6106
      %6108 = vmatmul.bf16.gmra.mxu0 %v6031
      %v6109 = vpop.f32.mrf.mxu0
      %v6110 = vadd.f32 0.0, %v6109
      %v6111 = vpop.f32.mrf.mxu0
      %v6112 = vadd.f32 0.0, %v6111
      %6113 = vmatmul.bf16.gmra.mxu0 %v6034
      %v6114 = vpop.f32.mrf.mxu0
      %v6115 = vadd.f32 0.0, %v6114
      %v6116 = vpop.f32.mrf.mxu0
      %v6117 = vadd.f32 0.0, %v6116
      %6118 = vmatmul.bf16.gmra.mxu0 %v6037
      %v6119 = vpop.f32.mrf.mxu0
      %v6120 = vadd.f32 0.0, %v6119
      %v6121 = vpop.f32.mrf.mxu0
      %v6122 = vadd.f32 0.0, %v6121
      %6123 = vmatmul.bf16.gmra.mxu0 %v6040
      %v6124 = vpop.f32.mrf.mxu0
      %v6125 = vadd.f32 0.0, %v6124
      %v6126 = vpop.f32.mrf.mxu0
      %v6127 = vadd.f32 0.0, %v6126
      %6128 = vmatmul.bf16.gmra.mxu0 %v6043
      %v6129 = vpop.f32.mrf.mxu0
      %v6130 = vadd.f32 0.0, %v6129
      %v6131 = vpop.f32.mrf.mxu0
      %v6132 = vadd.f32 0.0, %v6131
      %6133 = vdwg.mxu0
      %v6134 = vadd.f32 %v5900, %v6055
      %v6135 = vadd.f32 %v5901, %v6057
      %v6136 = vadd.f32 %v5902, %v6060
      %v6137 = vadd.f32 %v5903, %v6062
      %v6138 = vadd.f32 %v5904, %v6065
      %v6139 = vadd.f32 %v5905, %v6067
      %v6140 = vadd.f32 %v5906, %v6070
      %v6141 = vadd.f32 %v5907, %v6072
      %v6142 = vadd.f32 %v5908, %v6075
      %v6143 = vadd.f32 %v5909, %v6077
      %v6144 = vadd.f32 %v5910, %v6080
      %v6145 = vadd.f32 %v5911, %v6082
      %v6146 = vadd.f32 %v5912, %v6085
      %v6147 = vadd.f32 %v5913, %v6087
      %v6148 = vadd.f32 %v5914, %v6090
      %v6149 = vadd.f32 %v5915, %v6092
      %v6150 = vadd.f32 %v5916, %v6095
      %v6151 = vadd.f32 %v5917, %v6097
      %v6152 = vadd.f32 %v5918, %v6100
      %v6153 = vadd.f32 %v5919, %v6102
      %v6154 = vadd.f32 %v5920, %v6105
      %v6155 = vadd.f32 %v5921, %v6107
      %v6156 = vadd.f32 %v5922, %v6110
      %v6157 = vadd.f32 %v5923, %v6112
      %v6158 = vadd.f32 %v5924, %v6115
      %v6159 = vadd.f32 %v5925, %v6117
      %v6160 = vadd.f32 %v5926, %v6120
      %v6161 = vadd.f32 %v5927, %v6122
      %v6162 = vadd.f32 %v5928, %v6125
      %v6163 = vadd.f32 %v5929, %v6127
      %v6164 = vadd.f32 %v5930, %v6130
      %v6165 = vadd.f32 %v5931, %v6132
      %v6166 = vld [vmem:[%s4024] sm:$0xff]
      %v6167 = vld [vmem:[%s4024 + $0x8] sm:$0xff]
      %v6168 = vld [vmem:[%s4024 + $0x18] sm:$0xff]
      %v6169 = vld [vmem:[%s4024 + $0x20] sm:$0xff]
      %v6170 = vld [vmem:[%s4024 + $0x30] sm:$0xff]
      %v6171 = vld [vmem:[%s4024 + $0x38] sm:$0xff]
      %v6172 = vld [vmem:[%s4024 + $0x48] sm:$0xff]
      %v6173 = vld [vmem:[%s4024 + $0x50] sm:$0xff]
      %v6174 = vld [vmem:[%s4024 + $0x60] sm:$0xff]
      %v6175 = vld [vmem:[%s4024 + $0x68] sm:$0xff]
      %v6176 = vld [vmem:[%s4024 + $0x78] sm:$0xff]
      %v6177 = vld [vmem:[%s4024 + $0x80] sm:$0xff]
      %v6178 = vld [vmem:[%s4024 + $0x90] sm:$0xff]
      %v6179 = vld [vmem:[%s4024 + $0x98] sm:$0xff]
      %v6180 = vld [vmem:[%s4024 + $0xa8] sm:$0xff]
      %v6181 = vld [vmem:[%s4024 + $0xb0] sm:$0xff]
      %v6182 = vld [vmem:[%s4024 + $0xc0] sm:$0xff]
      %v6183 = vld [vmem:[%s4024 + $0xc8] sm:$0xff]
      %v6184 = vld [vmem:[%s4024 + $0xd8] sm:$0xff]
      %v6185 = vld [vmem:[%s4024 + $0xe0] sm:$0xff]
      %v6186 = vld [vmem:[%s4024 + $0xf0] sm:$0xff]
      %v6187 = vld [vmem:[%s4024 + $0xf8] sm:$0xff]
      %v6188 = vld [vmem:[%s4024 + $0x108] sm:$0xff]
      %v6189 = vld [vmem:[%s4024 + $0x110] sm:$0xff]
      %v6190 = vld [vmem:[%s4024 + $0x120] sm:$0xff]
      %v6191 = vld [vmem:[%s4024 + $0x128] sm:$0xff]
      %v6192 = vld [vmem:[%s4024 + $0x138] sm:$0xff]
      %v6193 = vld [vmem:[%s4024 + $0x140] sm:$0xff]
      %v6194 = vld [vmem:[%s4024 + $0x150] sm:$0xff]
      %v6195 = vld [vmem:[%s4024 + $0x158] sm:$0xff]
      %v6196 = vld [vmem:[%s4024 + $0x168] sm:$0xff]
      %v6197 = vld [vmem:[%s4024 + $0x170] sm:$0xff]
      %v6198 = vpack.c.bf16 %v6167, %v6166
      %v6199 = vpack.c.bf16 %v6169, %v6168
      %v6200 = vpack.c.bf16 %v6171, %v6170
      %v6201 = vpack.c.bf16 %v6173, %v6172
      %v6202 = vpack.c.bf16 %v6175, %v6174
      %v6203 = vpack.c.bf16 %v6177, %v6176
      %v6204 = vpack.c.bf16 %v6179, %v6178
      %v6205 = vpack.c.bf16 %v6181, %v6180
      %v6206 = vpack.c.bf16 %v6183, %v6182
      %v6207 = vpack.c.bf16 %v6185, %v6184
      %v6208 = vpack.c.bf16 %v6187, %v6186
      %v6209 = vpack.c.bf16 %v6189, %v6188
      %v6210 = vpack.c.bf16 %v6191, %v6190
      %v6211 = vpack.c.bf16 %v6193, %v6192
      %v6212 = vpack.c.bf16 %v6195, %v6194
      %v6213 = vpack.c.bf16 %v6197, %v6196
      %s6214 = scalar_lea.vmem %s5, 96
      %v6215 = vld [vmem:[%s6214] sm:$0xf]
      %v6216 = vld [vmem:[%s6214 + $0x4] sm:$0xf]
      %v6217 = vld [vmem:[%s6214 + $0x8] sm:$0xf]
      %v6218 = vld [vmem:[%s6214 + $0xc] sm:$0xf]
      %v6223 = vunpack.c.l.b16 %v6215
      %v6224 = vunpack.c.l.b16 %v6216
      %v6225 = vunpack.c.l.b16 %v6217
      %v6226 = vunpack.c.l.b16 %v6218
      %v6227 = vpack.c.b16 %v6224, %v6223
      %v6228 = vpack.c.b16 %v6226, %v6225
      %v6232 = vsel %vm471, %v6198, 0
      %v6235 = vsel %vm471, %v6199, 0
      %v6238 = vsel %vm471, %v6200, 0
      %v6241 = vsel %vm471, %v6201, 0
      %v6244 = vsel %vm471, %v6202, 0
      %v6247 = vsel %vm471, %v6203, 0
      %v6250 = vsel %vm471, %v6204, 0
      %v6253 = vsel %vm471, %v6205, 0
      %v6256 = vsel %vm471, %v6206, 0
      %v6259 = vsel %vm471, %v6207, 0
      %v6262 = vsel %vm471, %v6208, 0
      %v6265 = vsel %vm471, %v6209, 0
      %v6268 = vsel %vm471, %v6210, 0
      %v6271 = vsel %vm471, %v6211, 0
      %v6274 = vsel %vm471, %v6212, 0
      %v6277 = vsel %vm471, %v6213, 0
      %6279 = vmatpush.bf16.msra.mxu0 0
      %6280 = vmatpush.bf16.msra.mxu0 0
      %6281 = vmatpush.bf16.msra.mxu0 0
      %6282 = vmatpush.bf16.msra.mxu0 0
      %6283 = vmatpush.bf16.msra.mxu0 0
      %6284 = vmatpush.bf16.msra.mxu0 0
      %6285 = vmatpush.bf16.msra.mxu0 %v6228
      %6286 = vmatpush.bf16.msra.mxu0 %v6227
      %6287 = vmatmul.bf16.gmra.mxu0 %v6232
      %v6288 = vpop.f32.mrf.mxu0
      %v6289 = vadd.f32 0.0, %v6288
      %v6290 = vpop.f32.mrf.mxu0
      %v6291 = vadd.f32 0.0, %v6290
      %6292 = vmatmul.bf16.gmra.mxu0 %v6235
      %v6293 = vpop.f32.mrf.mxu0
      %v6294 = vadd.f32 0.0, %v6293
      %v6295 = vpop.f32.mrf.mxu0
      %v6296 = vadd.f32 0.0, %v6295
      %6297 = vmatmul.bf16.gmra.mxu0 %v6238
      %v6298 = vpop.f32.mrf.mxu0
      %v6299 = vadd.f32 0.0, %v6298
      %v6300 = vpop.f32.mrf.mxu0
      %v6301 = vadd.f32 0.0, %v6300
      %6302 = vmatmul.bf16.gmra.mxu0 %v6241
      %v6303 = vpop.f32.mrf.mxu0
      %v6304 = vadd.f32 0.0, %v6303
      %v6305 = vpop.f32.mrf.mxu0
      %v6306 = vadd.f32 0.0, %v6305
      %6307 = vmatmul.bf16.gmra.mxu0 %v6244
      %v6308 = vpop.f32.mrf.mxu0
      %v6309 = vadd.f32 0.0, %v6308
      %v6310 = vpop.f32.mrf.mxu0
      %v6311 = vadd.f32 0.0, %v6310
      %6312 = vmatmul.bf16.gmra.mxu0 %v6247
      %v6313 = vpop.f32.mrf.mxu0
      %v6314 = vadd.f32 0.0, %v6313
      %v6315 = vpop.f32.mrf.mxu0
      %v6316 = vadd.f32 0.0, %v6315
      %6317 = vmatmul.bf16.gmra.mxu0 %v6250
      %v6318 = vpop.f32.mrf.mxu0
      %v6319 = vadd.f32 0.0, %v6318
      %v6320 = vpop.f32.mrf.mxu0
      %v6321 = vadd.f32 0.0, %v6320
      %6322 = vmatmul.bf16.gmra.mxu0 %v6253
      %v6323 = vpop.f32.mrf.mxu0
      %v6324 = vadd.f32 0.0, %v6323
      %v6325 = vpop.f32.mrf.mxu0
      %v6326 = vadd.f32 0.0, %v6325
      %6327 = vmatmul.bf16.gmra.mxu0 %v6256
      %v6328 = vpop.f32.mrf.mxu0
      %v6329 = vadd.f32 0.0, %v6328
      %v6330 = vpop.f32.mrf.mxu0
      %v6331 = vadd.f32 0.0, %v6330
      %6332 = vmatmul.bf16.gmra.mxu0 %v6259
      %v6333 = vpop.f32.mrf.mxu0
      %v6334 = vadd.f32 0.0, %v6333
      %v6335 = vpop.f32.mrf.mxu0
      %v6336 = vadd.f32 0.0, %v6335
      %6337 = vmatmul.bf16.gmra.mxu0 %v6262
      %v6338 = vpop.f32.mrf.mxu0
      %v6339 = vadd.f32 0.0, %v6338
      %v6340 = vpop.f32.mrf.mxu0
      %v6341 = vadd.f32 0.0, %v6340
      %6342 = vmatmul.bf16.gmra.mxu0 %v6265
      %v6343 = vpop.f32.mrf.mxu0
      %v6344 = vadd.f32 0.0, %v6343
      %v6345 = vpop.f32.mrf.mxu0
      %v6346 = vadd.f32 0.0, %v6345
      %6347 = vmatmul.bf16.gmra.mxu0 %v6268
      %v6348 = vpop.f32.mrf.mxu0
      %v6349 = vadd.f32 0.0, %v6348
      %v6350 = vpop.f32.mrf.mxu0
      %v6351 = vadd.f32 0.0, %v6350
      %6352 = vmatmul.bf16.gmra.mxu0 %v6271
      %v6353 = vpop.f32.mrf.mxu0
      %v6354 = vadd.f32 0.0, %v6353
      %v6355 = vpop.f32.mrf.mxu0
      %v6356 = vadd.f32 0.0, %v6355
      %6357 = vmatmul.bf16.gmra.mxu0 %v6274
      %v6358 = vpop.f32.mrf.mxu0
      %v6359 = vadd.f32 0.0, %v6358
      %v6360 = vpop.f32.mrf.mxu0
      %v6361 = vadd.f32 0.0, %v6360
      %6362 = vmatmul.bf16.gmra.mxu0 %v6277
      %v6363 = vpop.f32.mrf.mxu0
      %v6364 = vadd.f32 0.0, %v6363
      %v6365 = vpop.f32.mrf.mxu0
      %v6366 = vadd.f32 0.0, %v6365
      %6367 = vdwg.mxu0
      %v6368 = vadd.f32 %v6134, %v6289
      %v6369 = vadd.f32 %v6135, %v6291
      %v6370 = vadd.f32 %v6136, %v6294
      %v6371 = vadd.f32 %v6137, %v6296
      %v6372 = vadd.f32 %v6138, %v6299
      %v6373 = vadd.f32 %v6139, %v6301
      %v6374 = vadd.f32 %v6140, %v6304
      %v6375 = vadd.f32 %v6141, %v6306
      %v6376 = vadd.f32 %v6142, %v6309
      %v6377 = vadd.f32 %v6143, %v6311
      %v6378 = vadd.f32 %v6144, %v6314
      %v6379 = vadd.f32 %v6145, %v6316
      %v6380 = vadd.f32 %v6146, %v6319
      %v6381 = vadd.f32 %v6147, %v6321
      %v6382 = vadd.f32 %v6148, %v6324
      %v6383 = vadd.f32 %v6149, %v6326
      %v6384 = vadd.f32 %v6150, %v6329
      %v6385 = vadd.f32 %v6151, %v6331
      %v6386 = vadd.f32 %v6152, %v6334
      %v6387 = vadd.f32 %v6153, %v6336
      %v6388 = vadd.f32 %v6154, %v6339
      %v6389 = vadd.f32 %v6155, %v6341
      %v6390 = vadd.f32 %v6156, %v6344
      %v6391 = vadd.f32 %v6157, %v6346
      %v6392 = vadd.f32 %v6158, %v6349
      %v6393 = vadd.f32 %v6159, %v6351
      %v6394 = vadd.f32 %v6160, %v6354
      %v6395 = vadd.f32 %v6161, %v6356
      %v6396 = vadd.f32 %v6162, %v6359
      %v6397 = vadd.f32 %v6163, %v6361
      %v6398 = vadd.f32 %v6164, %v6364
      %v6399 = vadd.f32 %v6165, %v6366
      %v6400 = vld [vmem:[%s4024 + $0x1] sm:$0xff]
      %v6401 = vld [vmem:[%s4024 + $0x9] sm:$0xff]
      %v6402 = vld [vmem:[%s4024 + $0x19] sm:$0xff]
      %v6403 = vld [vmem:[%s4024 + $0x21] sm:$0xff]
      %v6404 = vld [vmem:[%s4024 + $0x31] sm:$0xff]
      %v6405 = vld [vmem:[%s4024 + $0x39] sm:$0xff]
      %v6406 = vld [vmem:[%s4024 + $0x49] sm:$0xff]
      %v6407 = vld [vmem:[%s4024 + $0x51] sm:$0xff]
      %v6408 = vld [vmem:[%s4024 + $0x61] sm:$0xff]
      %v6409 = vld [vmem:[%s4024 + $0x69] sm:$0xff]
      %v6410 = vld [vmem:[%s4024 + $0x79] sm:$0xff]
      %v6411 = vld [vmem:[%s4024 + $0x81] sm:$0xff]
      %v6412 = vld [vmem:[%s4024 + $0x91] sm:$0xff]
      %v6413 = vld [vmem:[%s4024 + $0x99] sm:$0xff]
      %v6414 = vld [vmem:[%s4024 + $0xa9] sm:$0xff]
      %v6415 = vld [vmem:[%s4024 + $0xb1] sm:$0xff]
      %v6416 = vld [vmem:[%s4024 + $0xc1] sm:$0xff]
      %v6417 = vld [vmem:[%s4024 + $0xc9] sm:$0xff]
      %v6418 = vld [vmem:[%s4024 + $0xd9] sm:$0xff]
      %v6419 = vld [vmem:[%s4024 + $0xe1] sm:$0xff]
      %v6420 = vld [vmem:[%s4024 + $0xf1] sm:$0xff]
      %v6421 = vld [vmem:[%s4024 + $0xf9] sm:$0xff]
      %v6422 = vld [vmem:[%s4024 + $0x109] sm:$0xff]
      %v6423 = vld [vmem:[%s4024 + $0x111] sm:$0xff]
      %v6424 = vld [vmem:[%s4024 + $0x121] sm:$0xff]
      %v6425 = vld [vmem:[%s4024 + $0x129] sm:$0xff]
      %v6426 = vld [vmem:[%s4024 + $0x139] sm:$0xff]
      %v6427 = vld [vmem:[%s4024 + $0x141] sm:$0xff]
      %v6428 = vld [vmem:[%s4024 + $0x151] sm:$0xff]
      %v6429 = vld [vmem:[%s4024 + $0x159] sm:$0xff]
      %v6430 = vld [vmem:[%s4024 + $0x169] sm:$0xff]
      %v6431 = vld [vmem:[%s4024 + $0x171] sm:$0xff]
      %v6432 = vpack.c.bf16 %v6401, %v6400
      %v6433 = vpack.c.bf16 %v6403, %v6402
      %v6434 = vpack.c.bf16 %v6405, %v6404
      %v6435 = vpack.c.bf16 %v6407, %v6406
      %v6436 = vpack.c.bf16 %v6409, %v6408
      %v6437 = vpack.c.bf16 %v6411, %v6410
      %v6438 = vpack.c.bf16 %v6413, %v6412
      %v6439 = vpack.c.bf16 %v6415, %v6414
      %v6440 = vpack.c.bf16 %v6417, %v6416
      %v6441 = vpack.c.bf16 %v6419, %v6418
      %v6442 = vpack.c.bf16 %v6421, %v6420
      %v6443 = vpack.c.bf16 %v6423, %v6422
      %v6444 = vpack.c.bf16 %v6425, %v6424
      %v6445 = vpack.c.bf16 %v6427, %v6426
      %v6446 = vpack.c.bf16 %v6429, %v6428
      %v6447 = vpack.c.bf16 %v6431, %v6430
      %s6448 = scalar_lea.vmem %s5, 112
      %v6449 = vld [vmem:[%s6448] sm:$0xf]
      %v6450 = vld [vmem:[%s6448 + $0x4] sm:$0xf]
      %v6451 = vld [vmem:[%s6448 + $0x8] sm:$0xf]
      %v6452 = vld [vmem:[%s6448 + $0xc] sm:$0xf]
      %v6457 = vunpack.c.l.b16 %v6449
      %v6458 = vunpack.c.l.b16 %v6450
      %v6459 = vunpack.c.l.b16 %v6451
      %v6460 = vunpack.c.l.b16 %v6452
      %v6461 = vpack.c.b16 %v6458, %v6457
      %v6462 = vpack.c.b16 %v6460, %v6459
      %v6466 = vsel %vm471, %v6432, 0
      %v6469 = vsel %vm471, %v6433, 0
      %v6472 = vsel %vm471, %v6434, 0
      %v6475 = vsel %vm471, %v6435, 0
      %v6478 = vsel %vm471, %v6436, 0
      %v6481 = vsel %vm471, %v6437, 0
      %v6484 = vsel %vm471, %v6438, 0
      %v6487 = vsel %vm471, %v6439, 0
      %v6490 = vsel %vm471, %v6440, 0
      %v6493 = vsel %vm471, %v6441, 0
      %v6496 = vsel %vm471, %v6442, 0
      %v6499 = vsel %vm471, %v6443, 0
      %v6502 = vsel %vm471, %v6444, 0
      %v6505 = vsel %vm471, %v6445, 0
      %v6508 = vsel %vm471, %v6446, 0
      %v6511 = vsel %vm471, %v6447, 0
      %6513 = vmatpush.bf16.msra.mxu0 0
      %6514 = vmatpush.bf16.msra.mxu0 0
      %6515 = vmatpush.bf16.msra.mxu0 0
      %6516 = vmatpush.bf16.msra.mxu0 0
      %6517 = vmatpush.bf16.msra.mxu0 0
      %6518 = vmatpush.bf16.msra.mxu0 0
      %6519 = vmatpush.bf16.msra.mxu0 %v6462
      %6520 = vmatpush.bf16.msra.mxu0 %v6461
      %6521 = vmatmul.bf16.gmra.mxu0 %v6466
      %v6522 = vpop.f32.mrf.mxu0
      %v6523 = vadd.f32 0.0, %v6522
      %v6524 = vpop.f32.mrf.mxu0
      %v6525 = vadd.f32 0.0, %v6524
      %6526 = vmatmul.bf16.gmra.mxu0 %v6469
      %v6527 = vpop.f32.mrf.mxu0
      %v6528 = vadd.f32 0.0, %v6527
      %v6529 = vpop.f32.mrf.mxu0
      %v6530 = vadd.f32 0.0, %v6529
      %6531 = vmatmul.bf16.gmra.mxu0 %v6472
      %v6532 = vpop.f32.mrf.mxu0
      %v6533 = vadd.f32 0.0, %v6532
      %v6534 = vpop.f32.mrf.mxu0
      %v6535 = vadd.f32 0.0, %v6534
      %6536 = vmatmul.bf16.gmra.mxu0 %v6475
      %v6537 = vpop.f32.mrf.mxu0
      %v6538 = vadd.f32 0.0, %v6537
      %v6539 = vpop.f32.mrf.mxu0
      %v6540 = vadd.f32 0.0, %v6539
      %6541 = vmatmul.bf16.gmra.mxu0 %v6478
      %v6542 = vpop.f32.mrf.mxu0
      %v6543 = vadd.f32 0.0, %v6542
      %v6544 = vpop.f32.mrf.mxu0
      %v6545 = vadd.f32 0.0, %v6544
      %6546 = vmatmul.bf16.gmra.mxu0 %v6481
      %v6547 = vpop.f32.mrf.mxu0
      %v6548 = vadd.f32 0.0, %v6547
      %v6549 = vpop.f32.mrf.mxu0
      %v6550 = vadd.f32 0.0, %v6549
      %6551 = vmatmul.bf16.gmra.mxu0 %v6484
      %v6552 = vpop.f32.mrf.mxu0
      %v6553 = vadd.f32 0.0, %v6552
      %v6554 = vpop.f32.mrf.mxu0
      %v6555 = vadd.f32 0.0, %v6554
      %6556 = vmatmul.bf16.gmra.mxu0 %v6487
      %v6557 = vpop.f32.mrf.mxu0
      %v6558 = vadd.f32 0.0, %v6557
      %v6559 = vpop.f32.mrf.mxu0
      %v6560 = vadd.f32 0.0, %v6559
      %6561 = vmatmul.bf16.gmra.mxu0 %v6490
      %v6562 = vpop.f32.mrf.mxu0
      %v6563 = vadd.f32 0.0, %v6562
      %v6564 = vpop.f32.mrf.mxu0
      %v6565 = vadd.f32 0.0, %v6564
      %6566 = vmatmul.bf16.gmra.mxu0 %v6493
      %v6567 = vpop.f32.mrf.mxu0
      %v6568 = vadd.f32 0.0, %v6567
      %v6569 = vpop.f32.mrf.mxu0
      %v6570 = vadd.f32 0.0, %v6569
      %6571 = vmatmul.bf16.gmra.mxu0 %v6496
      %v6572 = vpop.f32.mrf.mxu0
      %v6573 = vadd.f32 0.0, %v6572
      %v6574 = vpop.f32.mrf.mxu0
      %v6575 = vadd.f32 0.0, %v6574
      %6576 = vmatmul.bf16.gmra.mxu0 %v6499
      %v6577 = vpop.f32.mrf.mxu0
      %v6578 = vadd.f32 0.0, %v6577
      %v6579 = vpop.f32.mrf.mxu0
      %v6580 = vadd.f32 0.0, %v6579
      %6581 = vmatmul.bf16.gmra.mxu0 %v6502
      %v6582 = vpop.f32.mrf.mxu0
      %v6583 = vadd.f32 0.0, %v6582
      %v6584 = vpop.f32.mrf.mxu0
      %v6585 = vadd.f32 0.0, %v6584
      %6586 = vmatmul.bf16.gmra.mxu0 %v6505
      %v6587 = vpop.f32.mrf.mxu0
      %v6588 = vadd.f32 0.0, %v6587
      %v6589 = vpop.f32.mrf.mxu0
      %v6590 = vadd.f32 0.0, %v6589
      %6591 = vmatmul.bf16.gmra.mxu0 %v6508
      %v6592 = vpop.f32.mrf.mxu0
      %v6593 = vadd.f32 0.0, %v6592
      %v6594 = vpop.f32.mrf.mxu0
      %v6595 = vadd.f32 0.0, %v6594
      %6596 = vmatmul.bf16.gmra.mxu0 %v6511
      %v6597 = vpop.f32.mrf.mxu0
      %v6598 = vadd.f32 0.0, %v6597
      %v6599 = vpop.f32.mrf.mxu0
      %v6600 = vadd.f32 0.0, %v6599
      %6601 = vdwg.mxu0
      %v6602 = vadd.f32 %v6368, %v6523
      %v6603 = vadd.f32 %v6369, %v6525
      %v6604 = vadd.f32 %v6370, %v6528
      %v6605 = vadd.f32 %v6371, %v6530
      %v6606 = vadd.f32 %v6372, %v6533
      %v6607 = vadd.f32 %v6373, %v6535
      %v6608 = vadd.f32 %v6374, %v6538
      %v6609 = vadd.f32 %v6375, %v6540
      %v6610 = vadd.f32 %v6376, %v6543
      %v6611 = vadd.f32 %v6377, %v6545
      %v6612 = vadd.f32 %v6378, %v6548
      %v6613 = vadd.f32 %v6379, %v6550
      %v6614 = vadd.f32 %v6380, %v6553
      %v6615 = vadd.f32 %v6381, %v6555
      %v6616 = vadd.f32 %v6382, %v6558
      %v6617 = vadd.f32 %v6383, %v6560
      %v6618 = vadd.f32 %v6384, %v6563
      %v6619 = vadd.f32 %v6385, %v6565
      %v6620 = vadd.f32 %v6386, %v6568
      %v6621 = vadd.f32 %v6387, %v6570
      %v6622 = vadd.f32 %v6388, %v6573
      %v6623 = vadd.f32 %v6389, %v6575
      %v6624 = vadd.f32 %v6390, %v6578
      %v6625 = vadd.f32 %v6391, %v6580
      %v6626 = vadd.f32 %v6392, %v6583
      %v6627 = vadd.f32 %v6393, %v6585
      %v6628 = vadd.f32 %v6394, %v6588
      %v6629 = vadd.f32 %v6395, %v6590
      %v6630 = vadd.f32 %v6396, %v6593
      %v6631 = vadd.f32 %v6397, %v6595
      %v6632 = vadd.f32 %v6398, %v6598
      %v6633 = vadd.f32 %v6399, %v6600
      %v6634 = vld [vmem:[%s4024 + $0x2] sm:$0xff]
      %v6635 = vld [vmem:[%s4024 + $0xa] sm:$0xff]
      %v6636 = vld [vmem:[%s4024 + $0x1a] sm:$0xff]
      %v6637 = vld [vmem:[%s4024 + $0x22] sm:$0xff]
      %v6638 = vld [vmem:[%s4024 + $0x32] sm:$0xff]
      %v6639 = vld [vmem:[%s4024 + $0x3a] sm:$0xff]
      %v6640 = vld [vmem:[%s4024 + $0x4a] sm:$0xff]
      %v6641 = vld [vmem:[%s4024 + $0x52] sm:$0xff]
      %v6642 = vld [vmem:[%s4024 + $0x62] sm:$0xff]
      %v6643 = vld [vmem:[%s4024 + $0x6a] sm:$0xff]
      %v6644 = vld [vmem:[%s4024 + $0x7a] sm:$0xff]
      %v6645 = vld [vmem:[%s4024 + $0x82] sm:$0xff]
      %v6646 = vld [vmem:[%s4024 + $0x92] sm:$0xff]
      %v6647 = vld [vmem:[%s4024 + $0x9a] sm:$0xff]
      %v6648 = vld [vmem:[%s4024 + $0xaa] sm:$0xff]
      %v6649 = vld [vmem:[%s4024 + $0xb2] sm:$0xff]
      %v6650 = vld [vmem:[%s4024 + $0xc2] sm:$0xff]
      %v6651 = vld [vmem:[%s4024 + $0xca] sm:$0xff]
      %v6652 = vld [vmem:[%s4024 + $0xda] sm:$0xff]
      %v6653 = vld [vmem:[%s4024 + $0xe2] sm:$0xff]
      %v6654 = vld [vmem:[%s4024 + $0xf2] sm:$0xff]
      %v6655 = vld [vmem:[%s4024 + $0xfa] sm:$0xff]
      %v6656 = vld [vmem:[%s4024 + $0x10a] sm:$0xff]
      %v6657 = vld [vmem:[%s4024 + $0x112] sm:$0xff]
      %v6658 = vld [vmem:[%s4024 + $0x122] sm:$0xff]
      %v6659 = vld [vmem:[%s4024 + $0x12a] sm:$0xff]
      %v6660 = vld [vmem:[%s4024 + $0x13a] sm:$0xff]
      %v6661 = vld [vmem:[%s4024 + $0x142] sm:$0xff]
      %v6662 = vld [vmem:[%s4024 + $0x152] sm:$0xff]
      %v6663 = vld [vmem:[%s4024 + $0x15a] sm:$0xff]
      %v6664 = vld [vmem:[%s4024 + $0x16a] sm:$0xff]
      %v6665 = vld [vmem:[%s4024 + $0x172] sm:$0xff]
      %v6666 = vpack.c.bf16 %v6635, %v6634
      %v6667 = vpack.c.bf16 %v6637, %v6636
      %v6668 = vpack.c.bf16 %v6639, %v6638
      %v6669 = vpack.c.bf16 %v6641, %v6640
      %v6670 = vpack.c.bf16 %v6643, %v6642
      %v6671 = vpack.c.bf16 %v6645, %v6644
      %v6672 = vpack.c.bf16 %v6647, %v6646
      %v6673 = vpack.c.bf16 %v6649, %v6648
      %v6674 = vpack.c.bf16 %v6651, %v6650
      %v6675 = vpack.c.bf16 %v6653, %v6652
      %v6676 = vpack.c.bf16 %v6655, %v6654
      %v6677 = vpack.c.bf16 %v6657, %v6656
      %v6678 = vpack.c.bf16 %v6659, %v6658
      %v6679 = vpack.c.bf16 %v6661, %v6660
      %v6680 = vpack.c.bf16 %v6663, %v6662
      %v6681 = vpack.c.bf16 %v6665, %v6664
      %s6682 = scalar_lea.vmem %s5, 128
      %v6683 = vld [vmem:[%s6682] sm:$0xf]
      %v6684 = vld [vmem:[%s6682 + $0x4] sm:$0xf]
      %v6685 = vld [vmem:[%s6682 + $0x8] sm:$0xf]
      %v6686 = vld [vmem:[%s6682 + $0xc] sm:$0xf]
      %v6691 = vunpack.c.l.b16 %v6683
      %v6692 = vunpack.c.l.b16 %v6684
      %v6693 = vunpack.c.l.b16 %v6685
      %v6694 = vunpack.c.l.b16 %v6686
      %v6695 = vpack.c.b16 %v6692, %v6691
      %v6696 = vpack.c.b16 %v6694, %v6693
      %v6700 = vsel %vm471, %v6666, 0
      %v6703 = vsel %vm471, %v6667, 0
      %v6706 = vsel %vm471, %v6668, 0
      %v6709 = vsel %vm471, %v6669, 0
      %v6712 = vsel %vm471, %v6670, 0
      %v6715 = vsel %vm471, %v6671, 0
      %v6718 = vsel %vm471, %v6672, 0
      %v6721 = vsel %vm471, %v6673, 0
      %v6724 = vsel %vm471, %v6674, 0
      %v6727 = vsel %vm471, %v6675, 0
      %v6730 = vsel %vm471, %v6676, 0
      %v6733 = vsel %vm471, %v6677, 0
      %v6736 = vsel %vm471, %v6678, 0
      %v6739 = vsel %vm471, %v6679, 0
      %v6742 = vsel %vm471, %v6680, 0
      %v6745 = vsel %vm471, %v6681, 0
      %6747 = vmatpush.bf16.msra.mxu0 0
      %6748 = vmatpush.bf16.msra.mxu0 0
      %6749 = vmatpush.bf16.msra.mxu0 0
      %6750 = vmatpush.bf16.msra.mxu0 0
      %6751 = vmatpush.bf16.msra.mxu0 0
      %6752 = vmatpush.bf16.msra.mxu0 0
      %6753 = vmatpush.bf16.msra.mxu0 %v6696
      %6754 = vmatpush.bf16.msra.mxu0 %v6695
      %6755 = vmatmul.bf16.gmra.mxu0 %v6700
      %v6756 = vpop.f32.mrf.mxu0
      %v6757 = vadd.f32 0.0, %v6756
      %v6758 = vpop.f32.mrf.mxu0
      %v6759 = vadd.f32 0.0, %v6758
      %6760 = vmatmul.bf16.gmra.mxu0 %v6703
      %v6761 = vpop.f32.mrf.mxu0
      %v6762 = vadd.f32 0.0, %v6761
      %v6763 = vpop.f32.mrf.mxu0
      %v6764 = vadd.f32 0.0, %v6763
      %6765 = vmatmul.bf16.gmra.mxu0 %v6706
      %v6766 = vpop.f32.mrf.mxu0
      %v6767 = vadd.f32 0.0, %v6766
      %v6768 = vpop.f32.mrf.mxu0
      %v6769 = vadd.f32 0.0, %v6768
      %6770 = vmatmul.bf16.gmra.mxu0 %v6709
      %v6771 = vpop.f32.mrf.mxu0
      %v6772 = vadd.f32 0.0, %v6771
      %v6773 = vpop.f32.mrf.mxu0
      %v6774 = vadd.f32 0.0, %v6773
      %6775 = vmatmul.bf16.gmra.mxu0 %v6712
      %v6776 = vpop.f32.mrf.mxu0
      %v6777 = vadd.f32 0.0, %v6776
      %v6778 = vpop.f32.mrf.mxu0
      %v6779 = vadd.f32 0.0, %v6778
      %6780 = vmatmul.bf16.gmra.mxu0 %v6715
      %v6781 = vpop.f32.mrf.mxu0
      %v6782 = vadd.f32 0.0, %v6781
      %v6783 = vpop.f32.mrf.mxu0
      %v6784 = vadd.f32 0.0, %v6783
      %6785 = vmatmul.bf16.gmra.mxu0 %v6718
      %v6786 = vpop.f32.mrf.mxu0
      %v6787 = vadd.f32 0.0, %v6786
      %v6788 = vpop.f32.mrf.mxu0
      %v6789 = vadd.f32 0.0, %v6788
      %6790 = vmatmul.bf16.gmra.mxu0 %v6721
      %v6791 = vpop.f32.mrf.mxu0
      %v6792 = vadd.f32 0.0, %v6791
      %v6793 = vpop.f32.mrf.mxu0
      %v6794 = vadd.f32 0.0, %v6793
      %6795 = vmatmul.bf16.gmra.mxu0 %v6724
      %v6796 = vpop.f32.mrf.mxu0
      %v6797 = vadd.f32 0.0, %v6796
      %v6798 = vpop.f32.mrf.mxu0
      %v6799 = vadd.f32 0.0, %v6798
      %6800 = vmatmul.bf16.gmra.mxu0 %v6727
      %v6801 = vpop.f32.mrf.mxu0
      %v6802 = vadd.f32 0.0, %v6801
      %v6803 = vpop.f32.mrf.mxu0
      %v6804 = vadd.f32 0.0, %v6803
      %6805 = vmatmul.bf16.gmra.mxu0 %v6730
      %v6806 = vpop.f32.mrf.mxu0
      %v6807 = vadd.f32 0.0, %v6806
      %v6808 = vpop.f32.mrf.mxu0
      %v6809 = vadd.f32 0.0, %v6808
      %6810 = vmatmul.bf16.gmra.mxu0 %v6733
      %v6811 = vpop.f32.mrf.mxu0
      %v6812 = vadd.f32 0.0, %v6811
      %v6813 = vpop.f32.mrf.mxu0
      %v6814 = vadd.f32 0.0, %v6813
      %6815 = vmatmul.bf16.gmra.mxu0 %v6736
      %v6816 = vpop.f32.mrf.mxu0
      %v6817 = vadd.f32 0.0, %v6816
      %v6818 = vpop.f32.mrf.mxu0
      %v6819 = vadd.f32 0.0, %v6818
      %6820 = vmatmul.bf16.gmra.mxu0 %v6739
      %v6821 = vpop.f32.mrf.mxu0
      %v6822 = vadd.f32 0.0, %v6821
      %v6823 = vpop.f32.mrf.mxu0
      %v6824 = vadd.f32 0.0, %v6823
      %6825 = vmatmul.bf16.gmra.mxu0 %v6742
      %v6826 = vpop.f32.mrf.mxu0
      %v6827 = vadd.f32 0.0, %v6826
      %v6828 = vpop.f32.mrf.mxu0
      %v6829 = vadd.f32 0.0, %v6828
      %6830 = vmatmul.bf16.gmra.mxu0 %v6745
      %v6831 = vpop.f32.mrf.mxu0
      %v6832 = vadd.f32 0.0, %v6831
      %v6833 = vpop.f32.mrf.mxu0
      %v6834 = vadd.f32 0.0, %v6833
      %6835 = vdwg.mxu0
      %v6836 = vadd.f32 %v6602, %v6757
      %v6837 = vadd.f32 %v6603, %v6759
      %v6838 = vadd.f32 %v6604, %v6762
      %v6839 = vadd.f32 %v6605, %v6764
      %v6840 = vadd.f32 %v6606, %v6767
      %v6841 = vadd.f32 %v6607, %v6769
      %v6842 = vadd.f32 %v6608, %v6772
      %v6843 = vadd.f32 %v6609, %v6774
      %v6844 = vadd.f32 %v6610, %v6777
      %v6845 = vadd.f32 %v6611, %v6779
      %v6846 = vadd.f32 %v6612, %v6782
      %v6847 = vadd.f32 %v6613, %v6784
      %v6848 = vadd.f32 %v6614, %v6787
      %v6849 = vadd.f32 %v6615, %v6789
      %v6850 = vadd.f32 %v6616, %v6792
      %v6851 = vadd.f32 %v6617, %v6794
      %v6852 = vadd.f32 %v6618, %v6797
      %v6853 = vadd.f32 %v6619, %v6799
      %v6854 = vadd.f32 %v6620, %v6802
      %v6855 = vadd.f32 %v6621, %v6804
      %v6856 = vadd.f32 %v6622, %v6807
      %v6857 = vadd.f32 %v6623, %v6809
      %v6858 = vadd.f32 %v6624, %v6812
      %v6859 = vadd.f32 %v6625, %v6814
      %v6860 = vadd.f32 %v6626, %v6817
      %v6861 = vadd.f32 %v6627, %v6819
      %v6862 = vadd.f32 %v6628, %v6822
      %v6863 = vadd.f32 %v6629, %v6824
      %v6864 = vadd.f32 %v6630, %v6827
      %v6865 = vadd.f32 %v6631, %v6829
      %v6866 = vadd.f32 %v6632, %v6832
      %v6867 = vadd.f32 %v6633, %v6834
      %v6868 = vld [vmem:[#allocation2] sm:$0xff]
      %v6869 = vld [vmem:[#allocation2 + $0x8] sm:$0xff]
      %v6870 = vld [vmem:[#allocation2 + $0x18] sm:$0xff]
      %v6871 = vld [vmem:[#allocation2 + $0x20] sm:$0xff]
      %v6872 = vld [vmem:[#allocation2 + $0x30] sm:$0xff]
      %v6873 = vld [vmem:[#allocation2 + $0x38] sm:$0xff]
      %v6874 = vld [vmem:[#allocation2 + $0x48] sm:$0xff]
      %v6875 = vld [vmem:[#allocation2 + $0x50] sm:$0xff]
      %v6876 = vld [vmem:[#allocation2 + $0x60] sm:$0xff]
      %v6877 = vld [vmem:[#allocation2 + $0x68] sm:$0xff]
      %v6878 = vld [vmem:[#allocation2 + $0x78] sm:$0xff]
      %v6879 = vld [vmem:[#allocation2 + $0x80] sm:$0xff]
      %v6880 = vld [vmem:[#allocation2 + $0x90] sm:$0xff]
      %v6881 = vld [vmem:[#allocation2 + $0x98] sm:$0xff]
      %v6882 = vld [vmem:[#allocation2 + $0xa8] sm:$0xff]
      %v6883 = vld [vmem:[#allocation2 + $0xb0] sm:$0xff]
      %v6884 = vld [vmem:[#allocation2 + $0xc0] sm:$0xff]
      %v6885 = vld [vmem:[#allocation2 + $0xc8] sm:$0xff]
      %v6886 = vld [vmem:[#allocation2 + $0xd8] sm:$0xff]
      %v6887 = vld [vmem:[#allocation2 + $0xe0] sm:$0xff]
      %v6888 = vld [vmem:[#allocation2 + $0xf0] sm:$0xff]
      %v6889 = vld [vmem:[#allocation2 + $0xf8] sm:$0xff]
      %v6890 = vld [vmem:[#allocation2 + $0x108] sm:$0xff]
      %v6891 = vld [vmem:[#allocation2 + $0x110] sm:$0xff]
      %v6892 = vld [vmem:[#allocation2 + $0x120] sm:$0xff]
      %v6893 = vld [vmem:[#allocation2 + $0x128] sm:$0xff]
      %v6894 = vld [vmem:[#allocation2 + $0x138] sm:$0xff]
      %v6895 = vld [vmem:[#allocation2 + $0x140] sm:$0xff]
      %v6896 = vld [vmem:[#allocation2 + $0x150] sm:$0xff]
      %v6897 = vld [vmem:[#allocation2 + $0x158] sm:$0xff]
      %v6898 = vld [vmem:[#allocation2 + $0x168] sm:$0xff]
      %v6899 = vld [vmem:[#allocation2 + $0x170] sm:$0xff]
      %v6900 = vpack.c.bf16 %v6869, %v6868
      %v6901 = vpack.c.bf16 %v6871, %v6870
      %v6902 = vpack.c.bf16 %v6873, %v6872
      %v6903 = vpack.c.bf16 %v6875, %v6874
      %v6904 = vpack.c.bf16 %v6877, %v6876
      %v6905 = vpack.c.bf16 %v6879, %v6878
      %v6906 = vpack.c.bf16 %v6881, %v6880
      %v6907 = vpack.c.bf16 %v6883, %v6882
      %v6908 = vpack.c.bf16 %v6885, %v6884
      %v6909 = vpack.c.bf16 %v6887, %v6886
      %v6910 = vpack.c.bf16 %v6889, %v6888
      %v6911 = vpack.c.bf16 %v6891, %v6890
      %v6912 = vpack.c.bf16 %v6893, %v6892
      %v6913 = vpack.c.bf16 %v6895, %v6894
      %v6914 = vpack.c.bf16 %v6897, %v6896
      %v6915 = vpack.c.bf16 %v6899, %v6898
      %v6916 = vld [vmem:[%s6] sm:$0xf]
      %v6917 = vld [vmem:[%s6 + $0x4] sm:$0x3]
      %v6920 = vunpack.c.l.b16 %v6916
      %v6921 = vunpack.c.l.b16 %v6917
      %v6922 = vpack.c.b16 %v6921, %v6920
      %v6924 = vsel %vm415, %v6900, 0
      %v6927 = vsel %vm415, %v6901, 0
      %v6930 = vsel %vm415, %v6902, 0
      %v6933 = vsel %vm415, %v6903, 0
      %v6936 = vsel %vm415, %v6904, 0
      %v6939 = vsel %vm415, %v6905, 0
      %v6942 = vsel %vm415, %v6906, 0
      %v6945 = vsel %vm415, %v6907, 0
      %v6948 = vsel %vm415, %v6908, 0
      %v6951 = vsel %vm415, %v6909, 0
      %v6954 = vsel %vm415, %v6910, 0
      %v6957 = vsel %vm415, %v6911, 0
      %v6960 = vsel %vm415, %v6912, 0
      %v6963 = vsel %vm415, %v6913, 0
      %v6966 = vsel %vm415, %v6914, 0
      %v6969 = vsel %vm415, %v6915, 0
      %v6972 = vand.u32 %v6922, %v749
      %6974 = vmatpush.bf16.msra.mxu0 0
      %6975 = vmatpush.bf16.msra.mxu0 0
      %6976 = vmatpush.bf16.msra.mxu0 0
      %6977 = vmatpush.bf16.msra.mxu0 0
      %6978 = vmatpush.bf16.msra.mxu0 0
      %6979 = vmatpush.bf16.msra.mxu0 0
      %6980 = vmatpush.bf16.msra.mxu0 0
      %6981 = vmatpush.bf16.msra.mxu0 %v6972
      %6982 = vmatmul.bf16.gmra.mxu0 %v6924
      %v6983 = vpop.f32.mrf.mxu0
      %v6984 = vadd.f32 0.0, %v6983
      %v6985 = vpop.f32.mrf.mxu0
      %v6986 = vadd.f32 0.0, %v6985
      %6987 = vmatmul.bf16.gmra.mxu0 %v6927
      %v6988 = vpop.f32.mrf.mxu0
      %v6989 = vadd.f32 0.0, %v6988
      %v6990 = vpop.f32.mrf.mxu0
      %v6991 = vadd.f32 0.0, %v6990
      %6992 = vmatmul.bf16.gmra.mxu0 %v6930
      %v6993 = vpop.f32.mrf.mxu0
      %v6994 = vadd.f32 0.0, %v6993
      %v6995 = vpop.f32.mrf.mxu0
      %v6996 = vadd.f32 0.0, %v6995
      %6997 = vmatmul.bf16.gmra.mxu0 %v6933
      %v6998 = vpop.f32.mrf.mxu0
      %v6999 = vadd.f32 0.0, %v6998
      %v7000 = vpop.f32.mrf.mxu0
      %v7001 = vadd.f32 0.0, %v7000
      %7002 = vmatmul.bf16.gmra.mxu0 %v6936
      %v7003 = vpop.f32.mrf.mxu0
      %v7004 = vadd.f32 0.0, %v7003
      %v7005 = vpop.f32.mrf.mxu0
      %v7006 = vadd.f32 0.0, %v7005
      %7007 = vmatmul.bf16.gmra.mxu0 %v6939
      %v7008 = vpop.f32.mrf.mxu0
      %v7009 = vadd.f32 0.0, %v7008
      %v7010 = vpop.f32.mrf.mxu0
      %v7011 = vadd.f32 0.0, %v7010
      %7012 = vmatmul.bf16.gmra.mxu0 %v6942
      %v7013 = vpop.f32.mrf.mxu0
      %v7014 = vadd.f32 0.0, %v7013
      %v7015 = vpop.f32.mrf.mxu0
      %v7016 = vadd.f32 0.0, %v7015
      %7017 = vmatmul.bf16.gmra.mxu0 %v6945
      %v7018 = vpop.f32.mrf.mxu0
      %v7019 = vadd.f32 0.0, %v7018
      %v7020 = vpop.f32.mrf.mxu0
      %v7021 = vadd.f32 0.0, %v7020
      %7022 = vmatmul.bf16.gmra.mxu0 %v6948
      %v7023 = vpop.f32.mrf.mxu0
      %v7024 = vadd.f32 0.0, %v7023
      %v7025 = vpop.f32.mrf.mxu0
      %v7026 = vadd.f32 0.0, %v7025
      %7027 = vmatmul.bf16.gmra.mxu0 %v6951
      %v7028 = vpop.f32.mrf.mxu0
      %v7029 = vadd.f32 0.0, %v7028
      %v7030 = vpop.f32.mrf.mxu0
      %v7031 = vadd.f32 0.0, %v7030
      %7032 = vmatmul.bf16.gmra.mxu0 %v6954
      %v7033 = vpop.f32.mrf.mxu0
      %v7034 = vadd.f32 0.0, %v7033
      %v7035 = vpop.f32.mrf.mxu0
      %v7036 = vadd.f32 0.0, %v7035
      %7037 = vmatmul.bf16.gmra.mxu0 %v6957
      %v7038 = vpop.f32.mrf.mxu0
      %v7039 = vadd.f32 0.0, %v7038
      %v7040 = vpop.f32.mrf.mxu0
      %v7041 = vadd.f32 0.0, %v7040
      %7042 = vmatmul.bf16.gmra.mxu0 %v6960
      %v7043 = vpop.f32.mrf.mxu0
      %v7044 = vadd.f32 0.0, %v7043
      %v7045 = vpop.f32.mrf.mxu0
      %v7046 = vadd.f32 0.0, %v7045
      %7047 = vmatmul.bf16.gmra.mxu0 %v6963
      %v7048 = vpop.f32.mrf.mxu0
      %v7049 = vadd.f32 0.0, %v7048
      %v7050 = vpop.f32.mrf.mxu0
      %v7051 = vadd.f32 0.0, %v7050
      %7052 = vmatmul.bf16.gmra.mxu0 %v6966
      %v7053 = vpop.f32.mrf.mxu0
      %v7054 = vadd.f32 0.0, %v7053
      %v7055 = vpop.f32.mrf.mxu0
      %v7056 = vadd.f32 0.0, %v7055
      %7057 = vmatmul.bf16.gmra.mxu0 %v6969
      %v7058 = vpop.f32.mrf.mxu0
      %v7059 = vadd.f32 0.0, %v7058
      %v7060 = vpop.f32.mrf.mxu0
      %v7061 = vadd.f32 0.0, %v7060
      %7062 = vdwg.mxu0
      %v7063 = vadd.f32 %v6836, %v6984
      %v7064 = vadd.f32 %v6837, %v6986
      %v7065 = vadd.f32 %v6838, %v6989
      %v7066 = vadd.f32 %v6839, %v6991
      %v7067 = vadd.f32 %v6840, %v6994
      %v7068 = vadd.f32 %v6841, %v6996
      %v7069 = vadd.f32 %v6842, %v6999
      %v7070 = vadd.f32 %v6843, %v7001
      %v7071 = vadd.f32 %v6844, %v7004
      %v7072 = vadd.f32 %v6845, %v7006
      %v7073 = vadd.f32 %v6846, %v7009
      %v7074 = vadd.f32 %v6847, %v7011
      %v7075 = vadd.f32 %v6848, %v7014
      %v7076 = vadd.f32 %v6849, %v7016
      %v7077 = vadd.f32 %v6850, %v7019
      %v7078 = vadd.f32 %v6851, %v7021
      %v7079 = vadd.f32 %v6852, %v7024
      %v7080 = vadd.f32 %v6853, %v7026
      %v7081 = vadd.f32 %v6854, %v7029
      %v7082 = vadd.f32 %v6855, %v7031
      %v7083 = vadd.f32 %v6856, %v7034
      %v7084 = vadd.f32 %v6857, %v7036
      %v7085 = vadd.f32 %v6858, %v7039
      %v7086 = vadd.f32 %v6859, %v7041
      %v7087 = vadd.f32 %v6860, %v7044
      %v7088 = vadd.f32 %v6861, %v7046
      %v7089 = vadd.f32 %v6862, %v7049
      %v7090 = vadd.f32 %v6863, %v7051
      %v7091 = vadd.f32 %v6864, %v7054
      %v7092 = vadd.f32 %v6865, %v7056
      %v7093 = vadd.f32 %v6866, %v7059
      %v7094 = vadd.f32 %v6867, %v7061
      %v7095 = vld [vmem:[#allocation2 + $0x1] sm:$0xff]
      %v7096 = vld [vmem:[#allocation2 + $0x9] sm:$0xff]
      %v7097 = vld [vmem:[#allocation2 + $0x19] sm:$0xff]
      %v7098 = vld [vmem:[#allocation2 + $0x21] sm:$0xff]
      %v7099 = vld [vmem:[#allocation2 + $0x31] sm:$0xff]
      %v7100 = vld [vmem:[#allocation2 + $0x39] sm:$0xff]
      %v7101 = vld [vmem:[#allocation2 + $0x49] sm:$0xff]
      %v7102 = vld [vmem:[#allocation2 + $0x51] sm:$0xff]
      %v7103 = vld [vmem:[#allocation2 + $0x61] sm:$0xff]
      %v7104 = vld [vmem:[#allocation2 + $0x69] sm:$0xff]
      %v7105 = vld [vmem:[#allocation2 + $0x79] sm:$0xff]
      %v7106 = vld [vmem:[#allocation2 + $0x81] sm:$0xff]
      %v7107 = vld [vmem:[#allocation2 + $0x91] sm:$0xff]
      %v7108 = vld [vmem:[#allocation2 + $0x99] sm:$0xff]
      %v7109 = vld [vmem:[#allocation2 + $0xa9] sm:$0xff]
      %v7110 = vld [vmem:[#allocation2 + $0xb1] sm:$0xff]
      %v7111 = vld [vmem:[#allocation2 + $0xc1] sm:$0xff]
      %v7112 = vld [vmem:[#allocation2 + $0xc9] sm:$0xff]
      %v7113 = vld [vmem:[#allocation2 + $0xd9] sm:$0xff]
      %v7114 = vld [vmem:[#allocation2 + $0xe1] sm:$0xff]
      %v7115 = vld [vmem:[#allocation2 + $0xf1] sm:$0xff]
      %v7116 = vld [vmem:[#allocation2 + $0xf9] sm:$0xff]
      %v7117 = vld [vmem:[#allocation2 + $0x109] sm:$0xff]
      %v7118 = vld [vmem:[#allocation2 + $0x111] sm:$0xff]
      %v7119 = vld [vmem:[#allocation2 + $0x121] sm:$0xff]
      %v7120 = vld [vmem:[#allocation2 + $0x129] sm:$0xff]
      %v7121 = vld [vmem:[#allocation2 + $0x139] sm:$0xff]
      %v7122 = vld [vmem:[#allocation2 + $0x141] sm:$0xff]
      %v7123 = vld [vmem:[#allocation2 + $0x151] sm:$0xff]
      %v7124 = vld [vmem:[#allocation2 + $0x159] sm:$0xff]
      %v7125 = vld [vmem:[#allocation2 + $0x169] sm:$0xff]
      %v7126 = vld [vmem:[#allocation2 + $0x171] sm:$0xff]
      %v7127 = vpack.c.bf16 %v7096, %v7095
      %v7128 = vpack.c.bf16 %v7098, %v7097
      %v7129 = vpack.c.bf16 %v7100, %v7099
      %v7130 = vpack.c.bf16 %v7102, %v7101
      %v7131 = vpack.c.bf16 %v7104, %v7103
      %v7132 = vpack.c.bf16 %v7106, %v7105
      %v7133 = vpack.c.bf16 %v7108, %v7107
      %v7134 = vpack.c.bf16 %v7110, %v7109
      %v7135 = vpack.c.bf16 %v7112, %v7111
      %v7136 = vpack.c.bf16 %v7114, %v7113
      %v7137 = vpack.c.bf16 %v7116, %v7115
      %v7138 = vpack.c.bf16 %v7118, %v7117
      %v7139 = vpack.c.bf16 %v7120, %v7119
      %v7140 = vpack.c.bf16 %v7122, %v7121
      %v7141 = vpack.c.bf16 %v7124, %v7123
      %v7142 = vpack.c.bf16 %v7126, %v7125
      %s7143 = scalar_lea.vmem %s6, 8
      %v7144 = vld [vmem:[%s7143] sm:$0xf]
      %v7145 = vld [vmem:[%s7143 + $0x4] sm:$0x3]
      %v7148 = vunpack.c.l.b16 %v7144
      %v7149 = vunpack.c.l.b16 %v7145
      %v7150 = vpack.c.b16 %v7149, %v7148
      %v7152 = vsel %vm415, %v7127, 0
      %v7155 = vsel %vm415, %v7128, 0
      %v7158 = vsel %vm415, %v7129, 0
      %v7161 = vsel %vm415, %v7130, 0
      %v7164 = vsel %vm415, %v7131, 0
      %v7167 = vsel %vm415, %v7132, 0
      %v7170 = vsel %vm415, %v7133, 0
      %v7173 = vsel %vm415, %v7134, 0
      %v7176 = vsel %vm415, %v7135, 0
      %v7179 = vsel %vm415, %v7136, 0
      %v7182 = vsel %vm415, %v7137, 0
      %v7185 = vsel %vm415, %v7138, 0
      %v7188 = vsel %vm415, %v7139, 0
      %v7191 = vsel %vm415, %v7140, 0
      %v7194 = vsel %vm415, %v7141, 0
      %v7197 = vsel %vm415, %v7142, 0
      %v7200 = vand.u32 %v7150, %v749
      %7202 = vmatpush.bf16.msra.mxu0 0
      %7203 = vmatpush.bf16.msra.mxu0 0
      %7204 = vmatpush.bf16.msra.mxu0 0
      %7205 = vmatpush.bf16.msra.mxu0 0
      %7206 = vmatpush.bf16.msra.mxu0 0
      %7207 = vmatpush.bf16.msra.mxu0 0
      %7208 = vmatpush.bf16.msra.mxu0 0
      %7209 = vmatpush.bf16.msra.mxu0 %v7200
      %7210 = vmatmul.bf16.gmra.mxu0 %v7152
      %v7211 = vpop.f32.mrf.mxu0
      %v7212 = vadd.f32 0.0, %v7211
      %v7213 = vpop.f32.mrf.mxu0
      %v7214 = vadd.f32 0.0, %v7213
      %7215 = vmatmul.bf16.gmra.mxu0 %v7155
      %v7216 = vpop.f32.mrf.mxu0
      %v7217 = vadd.f32 0.0, %v7216
      %v7218 = vpop.f32.mrf.mxu0
      %v7219 = vadd.f32 0.0, %v7218
      %7220 = vmatmul.bf16.gmra.mxu0 %v7158
      %v7221 = vpop.f32.mrf.mxu0
      %v7222 = vadd.f32 0.0, %v7221
      %v7223 = vpop.f32.mrf.mxu0
      %v7224 = vadd.f32 0.0, %v7223
      %7225 = vmatmul.bf16.gmra.mxu0 %v7161
      %v7226 = vpop.f32.mrf.mxu0
      %v7227 = vadd.f32 0.0, %v7226
      %v7228 = vpop.f32.mrf.mxu0
      %v7229 = vadd.f32 0.0, %v7228
      %7230 = vmatmul.bf16.gmra.mxu0 %v7164
      %v7231 = vpop.f32.mrf.mxu0
      %v7232 = vadd.f32 0.0, %v7231
      %v7233 = vpop.f32.mrf.mxu0
      %v7234 = vadd.f32 0.0, %v7233
      %7235 = vmatmul.bf16.gmra.mxu0 %v7167
      %v7236 = vpop.f32.mrf.mxu0
      %v7237 = vadd.f32 0.0, %v7236
      %v7238 = vpop.f32.mrf.mxu0
      %v7239 = vadd.f32 0.0, %v7238
      %7240 = vmatmul.bf16.gmra.mxu0 %v7170
      %v7241 = vpop.f32.mrf.mxu0
      %v7242 = vadd.f32 0.0, %v7241
      %v7243 = vpop.f32.mrf.mxu0
      %v7244 = vadd.f32 0.0, %v7243
      %7245 = vmatmul.bf16.gmra.mxu0 %v7173
      %v7246 = vpop.f32.mrf.mxu0
      %v7247 = vadd.f32 0.0, %v7246
      %v7248 = vpop.f32.mrf.mxu0
      %v7249 = vadd.f32 0.0, %v7248
      %7250 = vmatmul.bf16.gmra.mxu0 %v7176
      %v7251 = vpop.f32.mrf.mxu0
      %v7252 = vadd.f32 0.0, %v7251
      %v7253 = vpop.f32.mrf.mxu0
      %v7254 = vadd.f32 0.0, %v7253
      %7255 = vmatmul.bf16.gmra.mxu0 %v7179
      %v7256 = vpop.f32.mrf.mxu0
      %v7257 = vadd.f32 0.0, %v7256
      %v7258 = vpop.f32.mrf.mxu0
      %v7259 = vadd.f32 0.0, %v7258
      %7260 = vmatmul.bf16.gmra.mxu0 %v7182
      %v7261 = vpop.f32.mrf.mxu0
      %v7262 = vadd.f32 0.0, %v7261
      %v7263 = vpop.f32.mrf.mxu0
      %v7264 = vadd.f32 0.0, %v7263
      %7265 = vmatmul.bf16.gmra.mxu0 %v7185
      %v7266 = vpop.f32.mrf.mxu0
      %v7267 = vadd.f32 0.0, %v7266
      %v7268 = vpop.f32.mrf.mxu0
      %v7269 = vadd.f32 0.0, %v7268
      %7270 = vmatmul.bf16.gmra.mxu0 %v7188
      %v7271 = vpop.f32.mrf.mxu0
      %v7272 = vadd.f32 0.0, %v7271
      %v7273 = vpop.f32.mrf.mxu0
      %v7274 = vadd.f32 0.0, %v7273
      %7275 = vmatmul.bf16.gmra.mxu0 %v7191
      %v7276 = vpop.f32.mrf.mxu0
      %v7277 = vadd.f32 0.0, %v7276
      %v7278 = vpop.f32.mrf.mxu0
      %v7279 = vadd.f32 0.0, %v7278
      %7280 = vmatmul.bf16.gmra.mxu0 %v7194
      %v7281 = vpop.f32.mrf.mxu0
      %v7282 = vadd.f32 0.0, %v7281
      %v7283 = vpop.f32.mrf.mxu0
      %v7284 = vadd.f32 0.0, %v7283
      %7285 = vmatmul.bf16.gmra.mxu0 %v7197
      %v7286 = vpop.f32.mrf.mxu0
      %v7287 = vadd.f32 0.0, %v7286
      %v7288 = vpop.f32.mrf.mxu0
      %v7289 = vadd.f32 0.0, %v7288
      %7290 = vdwg.mxu0
      %v7291 = vadd.f32 %v7063, %v7212
      %v7292 = vadd.f32 %v7064, %v7214
      %v7293 = vadd.f32 %v7065, %v7217
      %v7294 = vadd.f32 %v7066, %v7219
      %v7295 = vadd.f32 %v7067, %v7222
      %v7296 = vadd.f32 %v7068, %v7224
      %v7297 = vadd.f32 %v7069, %v7227
      %v7298 = vadd.f32 %v7070, %v7229
      %v7299 = vadd.f32 %v7071, %v7232
      %v7300 = vadd.f32 %v7072, %v7234
      %v7301 = vadd.f32 %v7073, %v7237
      %v7302 = vadd.f32 %v7074, %v7239
      %v7303 = vadd.f32 %v7075, %v7242
      %v7304 = vadd.f32 %v7076, %v7244
      %v7305 = vadd.f32 %v7077, %v7247
      %v7306 = vadd.f32 %v7078, %v7249
      %v7307 = vadd.f32 %v7079, %v7252
      %v7308 = vadd.f32 %v7080, %v7254
      %v7309 = vadd.f32 %v7081, %v7257
      %v7310 = vadd.f32 %v7082, %v7259
      %v7311 = vadd.f32 %v7083, %v7262
      %v7312 = vadd.f32 %v7084, %v7264
      %v7313 = vadd.f32 %v7085, %v7267
      %v7314 = vadd.f32 %v7086, %v7269
      %v7315 = vadd.f32 %v7087, %v7272
      %v7316 = vadd.f32 %v7088, %v7274
      %v7317 = vadd.f32 %v7089, %v7277
      %v7318 = vadd.f32 %v7090, %v7279
      %v7319 = vadd.f32 %v7091, %v7282
      %v7320 = vadd.f32 %v7092, %v7284
      %v7321 = vadd.f32 %v7093, %v7287
      %v7322 = vadd.f32 %v7094, %v7289
      %v7323 = vld [vmem:[#allocation2 + $0x2] sm:$0xff]
      %v7324 = vld [vmem:[#allocation2 + $0xa] sm:$0xff]
      %v7325 = vld [vmem:[#allocation2 + $0x1a] sm:$0xff]
      %v7326 = vld [vmem:[#allocation2 + $0x22] sm:$0xff]
      %v7327 = vld [vmem:[#allocation2 + $0x32] sm:$0xff]
      %v7328 = vld [vmem:[#allocation2 + $0x3a] sm:$0xff]
      %v7329 = vld [vmem:[#allocation2 + $0x4a] sm:$0xff]
      %v7330 = vld [vmem:[#allocation2 + $0x52] sm:$0xff]
      %v7331 = vld [vmem:[#allocation2 + $0x62] sm:$0xff]
      %v7332 = vld [vmem:[#allocation2 + $0x6a] sm:$0xff]
      %v7333 = vld [vmem:[#allocation2 + $0x7a] sm:$0xff]
      %v7334 = vld [vmem:[#allocation2 + $0x82] sm:$0xff]
      %v7335 = vld [vmem:[#allocation2 + $0x92] sm:$0xff]
      %v7336 = vld [vmem:[#allocation2 + $0x9a] sm:$0xff]
      %v7337 = vld [vmem:[#allocation2 + $0xaa] sm:$0xff]
      %v7338 = vld [vmem:[#allocation2 + $0xb2] sm:$0xff]
      %v7339 = vld [vmem:[#allocation2 + $0xc2] sm:$0xff]
      %v7340 = vld [vmem:[#allocation2 + $0xca] sm:$0xff]
      %v7341 = vld [vmem:[#allocation2 + $0xda] sm:$0xff]
      %v7342 = vld [vmem:[#allocation2 + $0xe2] sm:$0xff]
      %v7343 = vld [vmem:[#allocation2 + $0xf2] sm:$0xff]
      %v7344 = vld [vmem:[#allocation2 + $0xfa] sm:$0xff]
      %v7345 = vld [vmem:[#allocation2 + $0x10a] sm:$0xff]
      %v7346 = vld [vmem:[#allocation2 + $0x112] sm:$0xff]
      %v7347 = vld [vmem:[#allocation2 + $0x122] sm:$0xff]
      %v7348 = vld [vmem:[#allocation2 + $0x12a] sm:$0xff]
      %v7349 = vld [vmem:[#allocation2 + $0x13a] sm:$0xff]
      %v7350 = vld [vmem:[#allocation2 + $0x142] sm:$0xff]
      %v7351 = vld [vmem:[#allocation2 + $0x152] sm:$0xff]
      %v7352 = vld [vmem:[#allocation2 + $0x15a] sm:$0xff]
      %v7353 = vld [vmem:[#allocation2 + $0x16a] sm:$0xff]
      %v7354 = vld [vmem:[#allocation2 + $0x172] sm:$0xff]
      %v7355 = vpack.c.bf16 %v7324, %v7323
      %v7356 = vpack.c.bf16 %v7326, %v7325
      %v7357 = vpack.c.bf16 %v7328, %v7327
      %v7358 = vpack.c.bf16 %v7330, %v7329
      %v7359 = vpack.c.bf16 %v7332, %v7331
      %v7360 = vpack.c.bf16 %v7334, %v7333
      %v7361 = vpack.c.bf16 %v7336, %v7335
      %v7362 = vpack.c.bf16 %v7338, %v7337
      %v7363 = vpack.c.bf16 %v7340, %v7339
      %v7364 = vpack.c.bf16 %v7342, %v7341
      %v7365 = vpack.c.bf16 %v7344, %v7343
      %v7366 = vpack.c.bf16 %v7346, %v7345
      %v7367 = vpack.c.bf16 %v7348, %v7347
      %v7368 = vpack.c.bf16 %v7350, %v7349
      %v7369 = vpack.c.bf16 %v7352, %v7351
      %v7370 = vpack.c.bf16 %v7354, %v7353
      %s7371 = scalar_lea.vmem %s6, 16
      %v7372 = vld [vmem:[%s7371] sm:$0xf]
      %v7373 = vld [vmem:[%s7371 + $0x4] sm:$0x3]
      %v7376 = vunpack.c.l.b16 %v7372
      %v7377 = vunpack.c.l.b16 %v7373
      %v7378 = vpack.c.b16 %v7377, %v7376
      %v7380 = vsel %vm415, %v7355, 0
      %v7383 = vsel %vm415, %v7356, 0
      %v7386 = vsel %vm415, %v7357, 0
      %v7389 = vsel %vm415, %v7358, 0
      %v7392 = vsel %vm415, %v7359, 0
      %v7395 = vsel %vm415, %v7360, 0
      %v7398 = vsel %vm415, %v7361, 0
      %v7401 = vsel %vm415, %v7362, 0
      %v7404 = vsel %vm415, %v7363, 0
      %v7407 = vsel %vm415, %v7364, 0
      %v7410 = vsel %vm415, %v7365, 0
      %v7413 = vsel %vm415, %v7366, 0
      %v7416 = vsel %vm415, %v7367, 0
      %v7419 = vsel %vm415, %v7368, 0
      %v7422 = vsel %vm415, %v7369, 0
      %v7425 = vsel %vm415, %v7370, 0
      %v7428 = vand.u32 %v7378, %v749
      %7430 = vmatpush.bf16.msra.mxu0 0
      %7431 = vmatpush.bf16.msra.mxu0 0
      %7432 = vmatpush.bf16.msra.mxu0 0
      %7433 = vmatpush.bf16.msra.mxu0 0
      %7434 = vmatpush.bf16.msra.mxu0 0
      %7435 = vmatpush.bf16.msra.mxu0 0
      %7436 = vmatpush.bf16.msra.mxu0 0
      %7437 = vmatpush.bf16.msra.mxu0 %v7428
      %7438 = vmatmul.bf16.gmra.mxu0 %v7380
      %v7439 = vpop.f32.mrf.mxu0
      %v7440 = vadd.f32 0.0, %v7439
      %v7441 = vpop.f32.mrf.mxu0
      %v7442 = vadd.f32 0.0, %v7441
      %7443 = vmatmul.bf16.gmra.mxu0 %v7383
      %v7444 = vpop.f32.mrf.mxu0
      %v7445 = vadd.f32 0.0, %v7444
      %v7446 = vpop.f32.mrf.mxu0
      %v7447 = vadd.f32 0.0, %v7446
      %7448 = vmatmul.bf16.gmra.mxu0 %v7386
      %v7449 = vpop.f32.mrf.mxu0
      %v7450 = vadd.f32 0.0, %v7449
      %v7451 = vpop.f32.mrf.mxu0
      %v7452 = vadd.f32 0.0, %v7451
      %7453 = vmatmul.bf16.gmra.mxu0 %v7389
      %v7454 = vpop.f32.mrf.mxu0
      %v7455 = vadd.f32 0.0, %v7454
      %v7456 = vpop.f32.mrf.mxu0
      %v7457 = vadd.f32 0.0, %v7456
      %7458 = vmatmul.bf16.gmra.mxu0 %v7392
      %v7459 = vpop.f32.mrf.mxu0
      %v7460 = vadd.f32 0.0, %v7459
      %v7461 = vpop.f32.mrf.mxu0
      %v7462 = vadd.f32 0.0, %v7461
      %7463 = vmatmul.bf16.gmra.mxu0 %v7395
      %v7464 = vpop.f32.mrf.mxu0
      %v7465 = vadd.f32 0.0, %v7464
      %v7466 = vpop.f32.mrf.mxu0
      %v7467 = vadd.f32 0.0, %v7466
      %7468 = vmatmul.bf16.gmra.mxu0 %v7398
      %v7469 = vpop.f32.mrf.mxu0
      %v7470 = vadd.f32 0.0, %v7469
      %v7471 = vpop.f32.mrf.mxu0
      %v7472 = vadd.f32 0.0, %v7471
      %7473 = vmatmul.bf16.gmra.mxu0 %v7401
      %v7474 = vpop.f32.mrf.mxu0
      %v7475 = vadd.f32 0.0, %v7474
      %v7476 = vpop.f32.mrf.mxu0
      %v7477 = vadd.f32 0.0, %v7476
      %7478 = vmatmul.bf16.gmra.mxu0 %v7404
      %v7479 = vpop.f32.mrf.mxu0
      %v7480 = vadd.f32 0.0, %v7479
      %v7481 = vpop.f32.mrf.mxu0
      %v7482 = vadd.f32 0.0, %v7481
      %7483 = vmatmul.bf16.gmra.mxu0 %v7407
      %v7484 = vpop.f32.mrf.mxu0
      %v7485 = vadd.f32 0.0, %v7484
      %v7486 = vpop.f32.mrf.mxu0
      %v7487 = vadd.f32 0.0, %v7486
      %7488 = vmatmul.bf16.gmra.mxu0 %v7410
      %v7489 = vpop.f32.mrf.mxu0
      %v7490 = vadd.f32 0.0, %v7489
      %v7491 = vpop.f32.mrf.mxu0
      %v7492 = vadd.f32 0.0, %v7491
      %7493 = vmatmul.bf16.gmra.mxu0 %v7413
      %v7494 = vpop.f32.mrf.mxu0
      %v7495 = vadd.f32 0.0, %v7494
      %v7496 = vpop.f32.mrf.mxu0
      %v7497 = vadd.f32 0.0, %v7496
      %7498 = vmatmul.bf16.gmra.mxu0 %v7416
      %v7499 = vpop.f32.mrf.mxu0
      %v7500 = vadd.f32 0.0, %v7499
      %v7501 = vpop.f32.mrf.mxu0
      %v7502 = vadd.f32 0.0, %v7501
      %7503 = vmatmul.bf16.gmra.mxu0 %v7419
      %v7504 = vpop.f32.mrf.mxu0
      %v7505 = vadd.f32 0.0, %v7504
      %v7506 = vpop.f32.mrf.mxu0
      %v7507 = vadd.f32 0.0, %v7506
      %7508 = vmatmul.bf16.gmra.mxu0 %v7422
      %v7509 = vpop.f32.mrf.mxu0
      %v7510 = vadd.f32 0.0, %v7509
      %v7511 = vpop.f32.mrf.mxu0
      %v7512 = vadd.f32 0.0, %v7511
      %7513 = vmatmul.bf16.gmra.mxu0 %v7425
      %v7514 = vpop.f32.mrf.mxu0
      %v7515 = vadd.f32 0.0, %v7514
      %v7516 = vpop.f32.mrf.mxu0
      %v7517 = vadd.f32 0.0, %v7516
      %7518 = vdwg.mxu0
      %v7519 = vadd.f32 %v7291, %v7440
      %v7520 = vadd.f32 %v7292, %v7442
      %v7521 = vadd.f32 %v7293, %v7445
      %v7522 = vadd.f32 %v7294, %v7447
      %v7523 = vadd.f32 %v7295, %v7450
      %v7524 = vadd.f32 %v7296, %v7452
      %v7525 = vadd.f32 %v7297, %v7455
      %v7526 = vadd.f32 %v7298, %v7457
      %v7527 = vadd.f32 %v7299, %v7460
      %v7528 = vadd.f32 %v7300, %v7462
      %v7529 = vadd.f32 %v7301, %v7465
      %v7530 = vadd.f32 %v7302, %v7467
      %v7531 = vadd.f32 %v7303, %v7470
      %v7532 = vadd.f32 %v7304, %v7472
      %v7533 = vadd.f32 %v7305, %v7475
      %v7534 = vadd.f32 %v7306, %v7477
      %v7535 = vadd.f32 %v7307, %v7480
      %v7536 = vadd.f32 %v7308, %v7482
      %v7537 = vadd.f32 %v7309, %v7485
      %v7538 = vadd.f32 %v7310, %v7487
      %v7539 = vadd.f32 %v7311, %v7490
      %v7540 = vadd.f32 %v7312, %v7492
      %v7541 = vadd.f32 %v7313, %v7495
      %v7542 = vadd.f32 %v7314, %v7497
      %v7543 = vadd.f32 %v7315, %v7500
      %v7544 = vadd.f32 %v7316, %v7502
      %v7545 = vadd.f32 %v7317, %v7505
      %v7546 = vadd.f32 %v7318, %v7507
      %v7547 = vadd.f32 %v7319, %v7510
      %v7548 = vadd.f32 %v7320, %v7512
      %v7549 = vadd.f32 %v7321, %v7515
      %v7550 = vadd.f32 %v7322, %v7517
      %v7551 = vld [vmem:[%s559] sm:$0xff]
      %v7552 = vld [vmem:[%s559 + $0x8] sm:$0xff]
      %v7553 = vld [vmem:[%s559 + $0x18] sm:$0xff]
      %v7554 = vld [vmem:[%s559 + $0x20] sm:$0xff]
      %v7555 = vld [vmem:[%s559 + $0x30] sm:$0xff]
      %v7556 = vld [vmem:[%s559 + $0x38] sm:$0xff]
      %v7557 = vld [vmem:[%s559 + $0x48] sm:$0xff]
      %v7558 = vld [vmem:[%s559 + $0x50] sm:$0xff]
      %v7559 = vld [vmem:[%s559 + $0x60] sm:$0xff]
      %v7560 = vld [vmem:[%s559 + $0x68] sm:$0xff]
      %v7561 = vld [vmem:[%s559 + $0x78] sm:$0xff]
      %v7562 = vld [vmem:[%s559 + $0x80] sm:$0xff]
      %v7563 = vld [vmem:[%s559 + $0x90] sm:$0xff]
      %v7564 = vld [vmem:[%s559 + $0x98] sm:$0xff]
      %v7565 = vld [vmem:[%s559 + $0xa8] sm:$0xff]
      %v7566 = vld [vmem:[%s559 + $0xb0] sm:$0xff]
      %v7567 = vld [vmem:[%s559 + $0xc0] sm:$0xff]
      %v7568 = vld [vmem:[%s559 + $0xc8] sm:$0xff]
      %v7569 = vld [vmem:[%s559 + $0xd8] sm:$0xff]
      %v7570 = vld [vmem:[%s559 + $0xe0] sm:$0xff]
      %v7571 = vld [vmem:[%s559 + $0xf0] sm:$0xff]
      %v7572 = vld [vmem:[%s559 + $0xf8] sm:$0xff]
      %v7573 = vld [vmem:[%s559 + $0x108] sm:$0xff]
      %v7574 = vld [vmem:[%s559 + $0x110] sm:$0xff]
      %v7575 = vld [vmem:[%s559 + $0x120] sm:$0xff]
      %v7576 = vld [vmem:[%s559 + $0x128] sm:$0xff]
      %v7577 = vld [vmem:[%s559 + $0x138] sm:$0xff]
      %v7578 = vld [vmem:[%s559 + $0x140] sm:$0xff]
      %v7579 = vld [vmem:[%s559 + $0x150] sm:$0xff]
      %v7580 = vld [vmem:[%s559 + $0x158] sm:$0xff]
      %v7581 = vld [vmem:[%s559 + $0x168] sm:$0xff]
      %v7582 = vld [vmem:[%s559 + $0x170] sm:$0xff]
      %v7583 = vpack.c.bf16 %v7552, %v7551
      %v7584 = vpack.c.bf16 %v7554, %v7553
      %v7585 = vpack.c.bf16 %v7556, %v7555
      %v7586 = vpack.c.bf16 %v7558, %v7557
      %v7587 = vpack.c.bf16 %v7560, %v7559
      %v7588 = vpack.c.bf16 %v7562, %v7561
      %v7589 = vpack.c.bf16 %v7564, %v7563
      %v7590 = vpack.c.bf16 %v7566, %v7565
      %v7591 = vpack.c.bf16 %v7568, %v7567
      %v7592 = vpack.c.bf16 %v7570, %v7569
      %v7593 = vpack.c.bf16 %v7572, %v7571
      %v7594 = vpack.c.bf16 %v7574, %v7573
      %v7595 = vpack.c.bf16 %v7576, %v7575
      %v7596 = vpack.c.bf16 %v7578, %v7577
      %v7597 = vpack.c.bf16 %v7580, %v7579
      %v7598 = vpack.c.bf16 %v7582, %v7581
      %s7599 = scalar_lea.vmem %s6, 24
      %v7600 = vld [vmem:[%s7599] sm:$0xf]
      %v7601 = vld [vmem:[%s7599 + $0x4] sm:$0x3]
      %v7604 = vunpack.c.l.b16 %v7600
      %v7605 = vunpack.c.l.b16 %v7601
      %v7606 = vpack.c.b16 %v7605, %v7604
      %v7608 = vsel %vm415, %v7583, 0
      %v7611 = vsel %vm415, %v7584, 0
      %v7614 = vsel %vm415, %v7585, 0
      %v7617 = vsel %vm415, %v7586, 0
      %v7620 = vsel %vm415, %v7587, 0
      %v7623 = vsel %vm415, %v7588, 0
      %v7626 = vsel %vm415, %v7589, 0
      %v7629 = vsel %vm415, %v7590, 0
      %v7632 = vsel %vm415, %v7591, 0
      %v7635 = vsel %vm415, %v7592, 0
      %v7638 = vsel %vm415, %v7593, 0
      %v7641 = vsel %vm415, %v7594, 0
      %v7644 = vsel %vm415, %v7595, 0
      %v7647 = vsel %vm415, %v7596, 0
      %v7650 = vsel %vm415, %v7597, 0
      %v7653 = vsel %vm415, %v7598, 0
      %v7656 = vand.u32 %v7606, %v749
      %7658 = vmatpush.bf16.msra.mxu0 0
      %7659 = vmatpush.bf16.msra.mxu0 0
      %7660 = vmatpush.bf16.msra.mxu0 0
      %7661 = vmatpush.bf16.msra.mxu0 0
      %7662 = vmatpush.bf16.msra.mxu0 0
      %7663 = vmatpush.bf16.msra.mxu0 0
      %7664 = vmatpush.bf16.msra.mxu0 0
      %7665 = vmatpush.bf16.msra.mxu0 %v7656
      %7666 = vmatmul.bf16.gmra.mxu0 %v7608
      %v7667 = vpop.f32.mrf.mxu0
      %v7668 = vadd.f32 0.0, %v7667
      %v7669 = vpop.f32.mrf.mxu0
      %v7670 = vadd.f32 0.0, %v7669
      %7671 = vmatmul.bf16.gmra.mxu0 %v7611
      %v7672 = vpop.f32.mrf.mxu0
      %v7673 = vadd.f32 0.0, %v7672
      %v7674 = vpop.f32.mrf.mxu0
      %v7675 = vadd.f32 0.0, %v7674
      %7676 = vmatmul.bf16.gmra.mxu0 %v7614
      %v7677 = vpop.f32.mrf.mxu0
      %v7678 = vadd.f32 0.0, %v7677
      %v7679 = vpop.f32.mrf.mxu0
      %v7680 = vadd.f32 0.0, %v7679
      %7681 = vmatmul.bf16.gmra.mxu0 %v7617
      %v7682 = vpop.f32.mrf.mxu0
      %v7683 = vadd.f32 0.0, %v7682
      %v7684 = vpop.f32.mrf.mxu0
      %v7685 = vadd.f32 0.0, %v7684
      %7686 = vmatmul.bf16.gmra.mxu0 %v7620
      %v7687 = vpop.f32.mrf.mxu0
      %v7688 = vadd.f32 0.0, %v7687
      %v7689 = vpop.f32.mrf.mxu0
      %v7690 = vadd.f32 0.0, %v7689
      %7691 = vmatmul.bf16.gmra.mxu0 %v7623
      %v7692 = vpop.f32.mrf.mxu0
      %v7693 = vadd.f32 0.0, %v7692
      %v7694 = vpop.f32.mrf.mxu0
      %v7695 = vadd.f32 0.0, %v7694
      %7696 = vmatmul.bf16.gmra.mxu0 %v7626
      %v7697 = vpop.f32.mrf.mxu0
      %v7698 = vadd.f32 0.0, %v7697
      %v7699 = vpop.f32.mrf.mxu0
      %v7700 = vadd.f32 0.0, %v7699
      %7701 = vmatmul.bf16.gmra.mxu0 %v7629
      %v7702 = vpop.f32.mrf.mxu0
      %v7703 = vadd.f32 0.0, %v7702
      %v7704 = vpop.f32.mrf.mxu0
      %v7705 = vadd.f32 0.0, %v7704
      %7706 = vmatmul.bf16.gmra.mxu0 %v7632
      %v7707 = vpop.f32.mrf.mxu0
      %v7708 = vadd.f32 0.0, %v7707
      %v7709 = vpop.f32.mrf.mxu0
      %v7710 = vadd.f32 0.0, %v7709
      %7711 = vmatmul.bf16.gmra.mxu0 %v7635
      %v7712 = vpop.f32.mrf.mxu0
      %v7713 = vadd.f32 0.0, %v7712
      %v7714 = vpop.f32.mrf.mxu0
      %v7715 = vadd.f32 0.0, %v7714
      %7716 = vmatmul.bf16.gmra.mxu0 %v7638
      %v7717 = vpop.f32.mrf.mxu0
      %v7718 = vadd.f32 0.0, %v7717
      %v7719 = vpop.f32.mrf.mxu0
      %v7720 = vadd.f32 0.0, %v7719
      %7721 = vmatmul.bf16.gmra.mxu0 %v7641
      %v7722 = vpop.f32.mrf.mxu0
      %v7723 = vadd.f32 0.0, %v7722
      %v7724 = vpop.f32.mrf.mxu0
      %v7725 = vadd.f32 0.0, %v7724
      %7726 = vmatmul.bf16.gmra.mxu0 %v7644
      %v7727 = vpop.f32.mrf.mxu0
      %v7728 = vadd.f32 0.0, %v7727
      %v7729 = vpop.f32.mrf.mxu0
      %v7730 = vadd.f32 0.0, %v7729
      %7731 = vmatmul.bf16.gmra.mxu0 %v7647
      %v7732 = vpop.f32.mrf.mxu0
      %v7733 = vadd.f32 0.0, %v7732
      %v7734 = vpop.f32.mrf.mxu0
      %v7735 = vadd.f32 0.0, %v7734
      %7736 = vmatmul.bf16.gmra.mxu0 %v7650
      %v7737 = vpop.f32.mrf.mxu0
      %v7738 = vadd.f32 0.0, %v7737
      %v7739 = vpop.f32.mrf.mxu0
      %v7740 = vadd.f32 0.0, %v7739
      %7741 = vmatmul.bf16.gmra.mxu0 %v7653
      %v7742 = vpop.f32.mrf.mxu0
      %v7743 = vadd.f32 0.0, %v7742
      %v7744 = vpop.f32.mrf.mxu0
      %v7745 = vadd.f32 0.0, %v7744
      %7746 = vdwg.mxu0
      %v7747 = vadd.f32 %v7519, %v7668
      %v7748 = vadd.f32 %v7520, %v7670
      %v7749 = vadd.f32 %v7521, %v7673
      %v7750 = vadd.f32 %v7522, %v7675
      %v7751 = vadd.f32 %v7523, %v7678
      %v7752 = vadd.f32 %v7524, %v7680
      %v7753 = vadd.f32 %v7525, %v7683
      %v7754 = vadd.f32 %v7526, %v7685
      %v7755 = vadd.f32 %v7527, %v7688
      %v7756 = vadd.f32 %v7528, %v7690
      %v7757 = vadd.f32 %v7529, %v7693
      %v7758 = vadd.f32 %v7530, %v7695
      %v7759 = vadd.f32 %v7531, %v7698
      %v7760 = vadd.f32 %v7532, %v7700
      %v7761 = vadd.f32 %v7533, %v7703
      %v7762 = vadd.f32 %v7534, %v7705
      %v7763 = vadd.f32 %v7535, %v7708
      %v7764 = vadd.f32 %v7536, %v7710
      %v7765 = vadd.f32 %v7537, %v7713
      %v7766 = vadd.f32 %v7538, %v7715
      %v7767 = vadd.f32 %v7539, %v7718
      %v7768 = vadd.f32 %v7540, %v7720
      %v7769 = vadd.f32 %v7541, %v7723
      %v7770 = vadd.f32 %v7542, %v7725
      %v7771 = vadd.f32 %v7543, %v7728
      %v7772 = vadd.f32 %v7544, %v7730
      %v7773 = vadd.f32 %v7545, %v7733
      %v7774 = vadd.f32 %v7546, %v7735
      %v7775 = vadd.f32 %v7547, %v7738
      %v7776 = vadd.f32 %v7548, %v7740
      %v7777 = vadd.f32 %v7549, %v7743
      %v7778 = vadd.f32 %v7550, %v7745
      %v7779 = vld [vmem:[%s559 + $0x1] sm:$0xff]
      %v7780 = vld [vmem:[%s559 + $0x9] sm:$0xff]
      %v7781 = vld [vmem:[%s559 + $0x19] sm:$0xff]
      %v7782 = vld [vmem:[%s559 + $0x21] sm:$0xff]
      %v7783 = vld [vmem:[%s559 + $0x31] sm:$0xff]
      %v7784 = vld [vmem:[%s559 + $0x39] sm:$0xff]
      %v7785 = vld [vmem:[%s559 + $0x49] sm:$0xff]
      %v7786 = vld [vmem:[%s559 + $0x51] sm:$0xff]
      %v7787 = vld [vmem:[%s559 + $0x61] sm:$0xff]
      %v7788 = vld [vmem:[%s559 + $0x69] sm:$0xff]
      %v7789 = vld [vmem:[%s559 + $0x79] sm:$0xff]
      %v7790 = vld [vmem:[%s559 + $0x81] sm:$0xff]
      %v7791 = vld [vmem:[%s559 + $0x91] sm:$0xff]
      %v7792 = vld [vmem:[%s559 + $0x99] sm:$0xff]
      %v7793 = vld [vmem:[%s559 + $0xa9] sm:$0xff]
      %v7794 = vld [vmem:[%s559 + $0xb1] sm:$0xff]
      %v7795 = vld [vmem:[%s559 + $0xc1] sm:$0xff]
      %v7796 = vld [vmem:[%s559 + $0xc9] sm:$0xff]
      %v7797 = vld [vmem:[%s559 + $0xd9] sm:$0xff]
      %v7798 = vld [vmem:[%s559 + $0xe1] sm:$0xff]
      %v7799 = vld [vmem:[%s559 + $0xf1] sm:$0xff]
      %v7800 = vld [vmem:[%s559 + $0xf9] sm:$0xff]
      %v7801 = vld [vmem:[%s559 + $0x109] sm:$0xff]
      %v7802 = vld [vmem:[%s559 + $0x111] sm:$0xff]
      %v7803 = vld [vmem:[%s559 + $0x121] sm:$0xff]
      %v7804 = vld [vmem:[%s559 + $0x129] sm:$0xff]
      %v7805 = vld [vmem:[%s559 + $0x139] sm:$0xff]
      %v7806 = vld [vmem:[%s559 + $0x141] sm:$0xff]
      %v7807 = vld [vmem:[%s559 + $0x151] sm:$0xff]
      %v7808 = vld [vmem:[%s559 + $0x159] sm:$0xff]
      %v7809 = vld [vmem:[%s559 + $0x169] sm:$0xff]
      %v7810 = vld [vmem:[%s559 + $0x171] sm:$0xff]
      %v7811 = vpack.c.bf16 %v7780, %v7779
      %v7812 = vpack.c.bf16 %v7782, %v7781
      %v7813 = vpack.c.bf16 %v7784, %v7783
      %v7814 = vpack.c.bf16 %v7786, %v7785
      %v7815 = vpack.c.bf16 %v7788, %v7787
      %v7816 = vpack.c.bf16 %v7790, %v7789
      %v7817 = vpack.c.bf16 %v7792, %v7791
      %v7818 = vpack.c.bf16 %v7794, %v7793
      %v7819 = vpack.c.bf16 %v7796, %v7795
      %v7820 = vpack.c.bf16 %v7798, %v7797
      %v7821 = vpack.c.bf16 %v7800, %v7799
      %v7822 = vpack.c.bf16 %v7802, %v7801
      %v7823 = vpack.c.bf16 %v7804, %v7803
      %v7824 = vpack.c.bf16 %v7806, %v7805
      %v7825 = vpack.c.bf16 %v7808, %v7807
      %v7826 = vpack.c.bf16 %v7810, %v7809
      %s7827 = scalar_lea.vmem %s6, 32
      %v7828 = vld [vmem:[%s7827] sm:$0xf]
      %v7829 = vld [vmem:[%s7827 + $0x4] sm:$0x3]
      %v7832 = vunpack.c.l.b16 %v7828
      %v7833 = vunpack.c.l.b16 %v7829
      %v7834 = vpack.c.b16 %v7833, %v7832
      %v7836 = vsel %vm415, %v7811, 0
      %v7839 = vsel %vm415, %v7812, 0
      %v7842 = vsel %vm415, %v7813, 0
      %v7845 = vsel %vm415, %v7814, 0
      %v7848 = vsel %vm415, %v7815, 0
      %v7851 = vsel %vm415, %v7816, 0
      %v7854 = vsel %vm415, %v7817, 0
      %v7857 = vsel %vm415, %v7818, 0
      %v7860 = vsel %vm415, %v7819, 0
      %v7863 = vsel %vm415, %v7820, 0
      %v7866 = vsel %vm415, %v7821, 0
      %v7869 = vsel %vm415, %v7822, 0
      %v7872 = vsel %vm415, %v7823, 0
      %v7875 = vsel %vm415, %v7824, 0
      %v7878 = vsel %vm415, %v7825, 0
      %v7881 = vsel %vm415, %v7826, 0
      %v7884 = vand.u32 %v7834, %v749
      %7886 = vmatpush.bf16.msra.mxu0 0
      %7887 = vmatpush.bf16.msra.mxu0 0
      %7888 = vmatpush.bf16.msra.mxu0 0
      %7889 = vmatpush.bf16.msra.mxu0 0
      %7890 = vmatpush.bf16.msra.mxu0 0
      %7891 = vmatpush.bf16.msra.mxu0 0
      %7892 = vmatpush.bf16.msra.mxu0 0
      %7893 = vmatpush.bf16.msra.mxu0 %v7884
      %7894 = vmatmul.bf16.gmra.mxu0 %v7836
      %v7895 = vpop.f32.mrf.mxu0
      %v7896 = vadd.f32 0.0, %v7895
      %v7897 = vpop.f32.mrf.mxu0
      %v7898 = vadd.f32 0.0, %v7897
      %7899 = vmatmul.bf16.gmra.mxu0 %v7839
      %v7900 = vpop.f32.mrf.mxu0
      %v7901 = vadd.f32 0.0, %v7900
      %v7902 = vpop.f32.mrf.mxu0
      %v7903 = vadd.f32 0.0, %v7902
      %7904 = vmatmul.bf16.gmra.mxu0 %v7842
      %v7905 = vpop.f32.mrf.mxu0
      %v7906 = vadd.f32 0.0, %v7905
      %v7907 = vpop.f32.mrf.mxu0
      %v7908 = vadd.f32 0.0, %v7907
      %7909 = vmatmul.bf16.gmra.mxu0 %v7845
      %v7910 = vpop.f32.mrf.mxu0
      %v7911 = vadd.f32 0.0, %v7910
      %v7912 = vpop.f32.mrf.mxu0
      %v7913 = vadd.f32 0.0, %v7912
      %7914 = vmatmul.bf16.gmra.mxu0 %v7848
      %v7915 = vpop.f32.mrf.mxu0
      %v7916 = vadd.f32 0.0, %v7915
      %v7917 = vpop.f32.mrf.mxu0
      %v7918 = vadd.f32 0.0, %v7917
      %7919 = vmatmul.bf16.gmra.mxu0 %v7851
      %v7920 = vpop.f32.mrf.mxu0
      %v7921 = vadd.f32 0.0, %v7920
      %v7922 = vpop.f32.mrf.mxu0
      %v7923 = vadd.f32 0.0, %v7922
      %7924 = vmatmul.bf16.gmra.mxu0 %v7854
      %v7925 = vpop.f32.mrf.mxu0
      %v7926 = vadd.f32 0.0, %v7925
      %v7927 = vpop.f32.mrf.mxu0
      %v7928 = vadd.f32 0.0, %v7927
      %7929 = vmatmul.bf16.gmra.mxu0 %v7857
      %v7930 = vpop.f32.mrf.mxu0
      %v7931 = vadd.f32 0.0, %v7930
      %v7932 = vpop.f32.mrf.mxu0
      %v7933 = vadd.f32 0.0, %v7932
      %7934 = vmatmul.bf16.gmra.mxu0 %v7860
      %v7935 = vpop.f32.mrf.mxu0
      %v7936 = vadd.f32 0.0, %v7935
      %v7937 = vpop.f32.mrf.mxu0
      %v7938 = vadd.f32 0.0, %v7937
      %7939 = vmatmul.bf16.gmra.mxu0 %v7863
      %v7940 = vpop.f32.mrf.mxu0
      %v7941 = vadd.f32 0.0, %v7940
      %v7942 = vpop.f32.mrf.mxu0
      %v7943 = vadd.f32 0.0, %v7942
      %7944 = vmatmul.bf16.gmra.mxu0 %v7866
      %v7945 = vpop.f32.mrf.mxu0
      %v7946 = vadd.f32 0.0, %v7945
      %v7947 = vpop.f32.mrf.mxu0
      %v7948 = vadd.f32 0.0, %v7947
      %7949 = vmatmul.bf16.gmra.mxu0 %v7869
      %v7950 = vpop.f32.mrf.mxu0
      %v7951 = vadd.f32 0.0, %v7950
      %v7952 = vpop.f32.mrf.mxu0
      %v7953 = vadd.f32 0.0, %v7952
      %7954 = vmatmul.bf16.gmra.mxu0 %v7872
      %v7955 = vpop.f32.mrf.mxu0
      %v7956 = vadd.f32 0.0, %v7955
      %v7957 = vpop.f32.mrf.mxu0
      %v7958 = vadd.f32 0.0, %v7957
      %7959 = vmatmul.bf16.gmra.mxu0 %v7875
      %v7960 = vpop.f32.mrf.mxu0
      %v7961 = vadd.f32 0.0, %v7960
      %v7962 = vpop.f32.mrf.mxu0
      %v7963 = vadd.f32 0.0, %v7962
      %7964 = vmatmul.bf16.gmra.mxu0 %v7878
      %v7965 = vpop.f32.mrf.mxu0
      %v7966 = vadd.f32 0.0, %v7965
      %v7967 = vpop.f32.mrf.mxu0
      %v7968 = vadd.f32 0.0, %v7967
      %7969 = vmatmul.bf16.gmra.mxu0 %v7881
      %v7970 = vpop.f32.mrf.mxu0
      %v7971 = vadd.f32 0.0, %v7970
      %v7972 = vpop.f32.mrf.mxu0
      %v7973 = vadd.f32 0.0, %v7972
      %7974 = vdwg.mxu0
      %v7975 = vadd.f32 %v7747, %v7896
      %v7976 = vadd.f32 %v7748, %v7898
      %v7977 = vadd.f32 %v7749, %v7901
      %v7978 = vadd.f32 %v7750, %v7903
      %v7979 = vadd.f32 %v7751, %v7906
      %v7980 = vadd.f32 %v7752, %v7908
      %v7981 = vadd.f32 %v7753, %v7911
      %v7982 = vadd.f32 %v7754, %v7913
      %v7983 = vadd.f32 %v7755, %v7916
      %v7984 = vadd.f32 %v7756, %v7918
      %v7985 = vadd.f32 %v7757, %v7921
      %v7986 = vadd.f32 %v7758, %v7923
      %v7987 = vadd.f32 %v7759, %v7926
      %v7988 = vadd.f32 %v7760, %v7928
      %v7989 = vadd.f32 %v7761, %v7931
      %v7990 = vadd.f32 %v7762, %v7933
      %v7991 = vadd.f32 %v7763, %v7936
      %v7992 = vadd.f32 %v7764, %v7938
      %v7993 = vadd.f32 %v7765, %v7941
      %v7994 = vadd.f32 %v7766, %v7943
      %v7995 = vadd.f32 %v7767, %v7946
      %v7996 = vadd.f32 %v7768, %v7948
      %v7997 = vadd.f32 %v7769, %v7951
      %v7998 = vadd.f32 %v7770, %v7953
      %v7999 = vadd.f32 %v7771, %v7956
      %v8000 = vadd.f32 %v7772, %v7958
      %v8001 = vadd.f32 %v7773, %v7961
      %v8002 = vadd.f32 %v7774, %v7963
      %v8003 = vadd.f32 %v7775, %v7966
      %v8004 = vadd.f32 %v7776, %v7968
      %v8005 = vadd.f32 %v7777, %v7971
      %v8006 = vadd.f32 %v7778, %v7973
      %v8007 = vld [vmem:[%s559 + $0x2] sm:$0xff]
      %v8008 = vld [vmem:[%s559 + $0xa] sm:$0xff]
      %v8009 = vld [vmem:[%s559 + $0x1a] sm:$0xff]
      %v8010 = vld [vmem:[%s559 + $0x22] sm:$0xff]
      %v8011 = vld [vmem:[%s559 + $0x32] sm:$0xff]
      %v8012 = vld [vmem:[%s559 + $0x3a] sm:$0xff]
      %v8013 = vld [vmem:[%s559 + $0x4a] sm:$0xff]
      %v8014 = vld [vmem:[%s559 + $0x52] sm:$0xff]
      %v8015 = vld [vmem:[%s559 + $0x62] sm:$0xff]
      %v8016 = vld [vmem:[%s559 + $0x6a] sm:$0xff]
      %v8017 = vld [vmem:[%s559 + $0x7a] sm:$0xff]
      %v8018 = vld [vmem:[%s559 + $0x82] sm:$0xff]
      %v8019 = vld [vmem:[%s559 + $0x92] sm:$0xff]
      %v8020 = vld [vmem:[%s559 + $0x9a] sm:$0xff]
      %v8021 = vld [vmem:[%s559 + $0xaa] sm:$0xff]
      %v8022 = vld [vmem:[%s559 + $0xb2] sm:$0xff]
      %v8023 = vld [vmem:[%s559 + $0xc2] sm:$0xff]
      %v8024 = vld [vmem:[%s559 + $0xca] sm:$0xff]
      %v8025 = vld [vmem:[%s559 + $0xda] sm:$0xff]
      %v8026 = vld [vmem:[%s559 + $0xe2] sm:$0xff]
      %v8027 = vld [vmem:[%s559 + $0xf2] sm:$0xff]
      %v8028 = vld [vmem:[%s559 + $0xfa] sm:$0xff]
      %v8029 = vld [vmem:[%s559 + $0x10a] sm:$0xff]
      %v8030 = vld [vmem:[%s559 + $0x112] sm:$0xff]
      %v8031 = vld [vmem:[%s559 + $0x122] sm:$0xff]
      %v8032 = vld [vmem:[%s559 + $0x12a] sm:$0xff]
      %v8033 = vld [vmem:[%s559 + $0x13a] sm:$0xff]
      %v8034 = vld [vmem:[%s559 + $0x142] sm:$0xff]
      %v8035 = vld [vmem:[%s559 + $0x152] sm:$0xff]
      %v8036 = vld [vmem:[%s559 + $0x15a] sm:$0xff]
      %v8037 = vld [vmem:[%s559 + $0x16a] sm:$0xff]
      %v8038 = vld [vmem:[%s559 + $0x172] sm:$0xff]
      %v8039 = vpack.c.bf16 %v8008, %v8007
      %v8040 = vpack.c.bf16 %v8010, %v8009
      %v8041 = vpack.c.bf16 %v8012, %v8011
      %v8042 = vpack.c.bf16 %v8014, %v8013
      %v8043 = vpack.c.bf16 %v8016, %v8015
      %v8044 = vpack.c.bf16 %v8018, %v8017
      %v8045 = vpack.c.bf16 %v8020, %v8019
      %v8046 = vpack.c.bf16 %v8022, %v8021
      %v8047 = vpack.c.bf16 %v8024, %v8023
      %v8048 = vpack.c.bf16 %v8026, %v8025
      %v8049 = vpack.c.bf16 %v8028, %v8027
      %v8050 = vpack.c.bf16 %v8030, %v8029
      %v8051 = vpack.c.bf16 %v8032, %v8031
      %v8052 = vpack.c.bf16 %v8034, %v8033
      %v8053 = vpack.c.bf16 %v8036, %v8035
      %v8054 = vpack.c.bf16 %v8038, %v8037
      %s8055 = scalar_lea.vmem %s6, 40
      %v8056 = vld [vmem:[%s8055] sm:$0xf]
      %v8057 = vld [vmem:[%s8055 + $0x4] sm:$0x3]
      %v8060 = vunpack.c.l.b16 %v8056
      %v8061 = vunpack.c.l.b16 %v8057
      %v8062 = vpack.c.b16 %v8061, %v8060
      %v8064 = vsel %vm415, %v8039, 0
      %v8067 = vsel %vm415, %v8040, 0
      %v8070 = vsel %vm415, %v8041, 0
      %v8073 = vsel %vm415, %v8042, 0
      %v8076 = vsel %vm415, %v8043, 0
      %v8079 = vsel %vm415, %v8044, 0
      %v8082 = vsel %vm415, %v8045, 0
      %v8085 = vsel %vm415, %v8046, 0
      %v8088 = vsel %vm415, %v8047, 0
      %v8091 = vsel %vm415, %v8048, 0
      %v8094 = vsel %vm415, %v8049, 0
      %v8097 = vsel %vm415, %v8050, 0
      %v8100 = vsel %vm415, %v8051, 0
      %v8103 = vsel %vm415, %v8052, 0
      %v8106 = vsel %vm415, %v8053, 0
      %v8109 = vsel %vm415, %v8054, 0
      %v8112 = vand.u32 %v8062, %v749
      %8114 = vmatpush.bf16.msra.mxu0 0
      %8115 = vmatpush.bf16.msra.mxu0 0
      %8116 = vmatpush.bf16.msra.mxu0 0
      %8117 = vmatpush.bf16.msra.mxu0 0
      %8118 = vmatpush.bf16.msra.mxu0 0
      %8119 = vmatpush.bf16.msra.mxu0 0
      %8120 = vmatpush.bf16.msra.mxu0 0
      %8121 = vmatpush.bf16.msra.mxu0 %v8112
      %8122 = vmatmul.bf16.gmra.mxu0 %v8064
      %v8123 = vpop.f32.mrf.mxu0
      %v8124 = vadd.f32 0.0, %v8123
      %v8125 = vpop.f32.mrf.mxu0
      %v8126 = vadd.f32 0.0, %v8125
      %8127 = vmatmul.bf16.gmra.mxu0 %v8067
      %v8128 = vpop.f32.mrf.mxu0
      %v8129 = vadd.f32 0.0, %v8128
      %v8130 = vpop.f32.mrf.mxu0
      %v8131 = vadd.f32 0.0, %v8130
      %8132 = vmatmul.bf16.gmra.mxu0 %v8070
      %v8133 = vpop.f32.mrf.mxu0
      %v8134 = vadd.f32 0.0, %v8133
      %v8135 = vpop.f32.mrf.mxu0
      %v8136 = vadd.f32 0.0, %v8135
      %8137 = vmatmul.bf16.gmra.mxu0 %v8073
      %v8138 = vpop.f32.mrf.mxu0
      %v8139 = vadd.f32 0.0, %v8138
      %v8140 = vpop.f32.mrf.mxu0
      %v8141 = vadd.f32 0.0, %v8140
      %8142 = vmatmul.bf16.gmra.mxu0 %v8076
      %v8143 = vpop.f32.mrf.mxu0
      %v8144 = vadd.f32 0.0, %v8143
      %v8145 = vpop.f32.mrf.mxu0
      %v8146 = vadd.f32 0.0, %v8145
      %8147 = vmatmul.bf16.gmra.mxu0 %v8079
      %v8148 = vpop.f32.mrf.mxu0
      %v8149 = vadd.f32 0.0, %v8148
      %v8150 = vpop.f32.mrf.mxu0
      %v8151 = vadd.f32 0.0, %v8150
      %8152 = vmatmul.bf16.gmra.mxu0 %v8082
      %v8153 = vpop.f32.mrf.mxu0
      %v8154 = vadd.f32 0.0, %v8153
      %v8155 = vpop.f32.mrf.mxu0
      %v8156 = vadd.f32 0.0, %v8155
      %8157 = vmatmul.bf16.gmra.mxu0 %v8085
      %v8158 = vpop.f32.mrf.mxu0
      %v8159 = vadd.f32 0.0, %v8158
      %v8160 = vpop.f32.mrf.mxu0
      %v8161 = vadd.f32 0.0, %v8160
      %8162 = vmatmul.bf16.gmra.mxu0 %v8088
      %v8163 = vpop.f32.mrf.mxu0
      %v8164 = vadd.f32 0.0, %v8163
      %v8165 = vpop.f32.mrf.mxu0
      %v8166 = vadd.f32 0.0, %v8165
      %8167 = vmatmul.bf16.gmra.mxu0 %v8091
      %v8168 = vpop.f32.mrf.mxu0
      %v8169 = vadd.f32 0.0, %v8168
      %v8170 = vpop.f32.mrf.mxu0
      %v8171 = vadd.f32 0.0, %v8170
      %8172 = vmatmul.bf16.gmra.mxu0 %v8094
      %v8173 = vpop.f32.mrf.mxu0
      %v8174 = vadd.f32 0.0, %v8173
      %v8175 = vpop.f32.mrf.mxu0
      %v8176 = vadd.f32 0.0, %v8175
      %8177 = vmatmul.bf16.gmra.mxu0 %v8097
      %v8178 = vpop.f32.mrf.mxu0
      %v8179 = vadd.f32 0.0, %v8178
      %v8180 = vpop.f32.mrf.mxu0
      %v8181 = vadd.f32 0.0, %v8180
      %8182 = vmatmul.bf16.gmra.mxu0 %v8100
      %v8183 = vpop.f32.mrf.mxu0
      %v8184 = vadd.f32 0.0, %v8183
      %v8185 = vpop.f32.mrf.mxu0
      %v8186 = vadd.f32 0.0, %v8185
      %8187 = vmatmul.bf16.gmra.mxu0 %v8103
      %v8188 = vpop.f32.mrf.mxu0
      %v8189 = vadd.f32 0.0, %v8188
      %v8190 = vpop.f32.mrf.mxu0
      %v8191 = vadd.f32 0.0, %v8190
      %8192 = vmatmul.bf16.gmra.mxu0 %v8106
      %v8193 = vpop.f32.mrf.mxu0
      %v8194 = vadd.f32 0.0, %v8193
      %v8195 = vpop.f32.mrf.mxu0
      %v8196 = vadd.f32 0.0, %v8195
      %8197 = vmatmul.bf16.gmra.mxu0 %v8109
      %v8198 = vpop.f32.mrf.mxu0
      %v8199 = vadd.f32 0.0, %v8198
      %v8200 = vpop.f32.mrf.mxu0
      %v8201 = vadd.f32 0.0, %v8200
      %8202 = vdwg.mxu0
      %v8203 = vadd.f32 %v7975, %v8124
      %v8204 = vadd.f32 %v7976, %v8126
      %v8205 = vadd.f32 %v7977, %v8129
      %v8206 = vadd.f32 %v7978, %v8131
      %v8207 = vadd.f32 %v7979, %v8134
      %v8208 = vadd.f32 %v7980, %v8136
      %v8209 = vadd.f32 %v7981, %v8139
      %v8210 = vadd.f32 %v7982, %v8141
      %v8211 = vadd.f32 %v7983, %v8144
      %v8212 = vadd.f32 %v7984, %v8146
      %v8213 = vadd.f32 %v7985, %v8149
      %v8214 = vadd.f32 %v7986, %v8151
      %v8215 = vadd.f32 %v7987, %v8154
      %v8216 = vadd.f32 %v7988, %v8156
      %v8217 = vadd.f32 %v7989, %v8159
      %v8218 = vadd.f32 %v7990, %v8161
      %v8219 = vadd.f32 %v7991, %v8164
      %v8220 = vadd.f32 %v7992, %v8166
      %v8221 = vadd.f32 %v7993, %v8169
      %v8222 = vadd.f32 %v7994, %v8171
      %v8223 = vadd.f32 %v7995, %v8174
      %v8224 = vadd.f32 %v7996, %v8176
      %v8225 = vadd.f32 %v7997, %v8179
      %v8226 = vadd.f32 %v7998, %v8181
      %v8227 = vadd.f32 %v7999, %v8184
      %v8228 = vadd.f32 %v8000, %v8186
      %v8229 = vadd.f32 %v8001, %v8189
      %v8230 = vadd.f32 %v8002, %v8191
      %v8231 = vadd.f32 %v8003, %v8194
      %v8232 = vadd.f32 %v8004, %v8196
      %v8233 = vadd.f32 %v8005, %v8199
      %v8234 = vadd.f32 %v8006, %v8201
      %v8235 = vld [vmem:[%s1899] sm:$0xff]
      %v8236 = vld [vmem:[%s1899 + $0x8] sm:$0xff]
      %v8237 = vld [vmem:[%s1899 + $0x18] sm:$0xff]
      %v8238 = vld [vmem:[%s1899 + $0x20] sm:$0xff]
      %v8239 = vld [vmem:[%s1899 + $0x30] sm:$0xff]
      %v8240 = vld [vmem:[%s1899 + $0x38] sm:$0xff]
      %v8241 = vld [vmem:[%s1899 + $0x48] sm:$0xff]
      %v8242 = vld [vmem:[%s1899 + $0x50] sm:$0xff]
      %v8243 = vld [vmem:[%s1899 + $0x60] sm:$0xff]
      %v8244 = vld [vmem:[%s1899 + $0x68] sm:$0xff]
      %v8245 = vld [vmem:[%s1899 + $0x78] sm:$0xff]
      %v8246 = vld [vmem:[%s1899 + $0x80] sm:$0xff]
      %v8247 = vld [vmem:[%s1899 + $0x90] sm:$0xff]
      %v8248 = vld [vmem:[%s1899 + $0x98] sm:$0xff]
      %v8249 = vld [vmem:[%s1899 + $0xa8] sm:$0xff]
      %v8250 = vld [vmem:[%s1899 + $0xb0] sm:$0xff]
      %v8251 = vld [vmem:[%s1899 + $0xc0] sm:$0xff]
      %v8252 = vld [vmem:[%s1899 + $0xc8] sm:$0xff]
      %v8253 = vld [vmem:[%s1899 + $0xd8] sm:$0xff]
      %v8254 = vld [vmem:[%s1899 + $0xe0] sm:$0xff]
      %v8255 = vld [vmem:[%s1899 + $0xf0] sm:$0xff]
      %v8256 = vld [vmem:[%s1899 + $0xf8] sm:$0xff]
      %v8257 = vld [vmem:[%s1899 + $0x108] sm:$0xff]
      %v8258 = vld [vmem:[%s1899 + $0x110] sm:$0xff]
      %v8259 = vld [vmem:[%s1899 + $0x120] sm:$0xff]
      %v8260 = vld [vmem:[%s1899 + $0x128] sm:$0xff]
      %v8261 = vld [vmem:[%s1899 + $0x138] sm:$0xff]
      %v8262 = vld [vmem:[%s1899 + $0x140] sm:$0xff]
      %v8263 = vld [vmem:[%s1899 + $0x150] sm:$0xff]
      %v8264 = vld [vmem:[%s1899 + $0x158] sm:$0xff]
      %v8265 = vld [vmem:[%s1899 + $0x168] sm:$0xff]
      %v8266 = vld [vmem:[%s1899 + $0x170] sm:$0xff]
      %v8267 = vpack.c.bf16 %v8236, %v8235
      %v8268 = vpack.c.bf16 %v8238, %v8237
      %v8269 = vpack.c.bf16 %v8240, %v8239
      %v8270 = vpack.c.bf16 %v8242, %v8241
      %v8271 = vpack.c.bf16 %v8244, %v8243
      %v8272 = vpack.c.bf16 %v8246, %v8245
      %v8273 = vpack.c.bf16 %v8248, %v8247
      %v8274 = vpack.c.bf16 %v8250, %v8249
      %v8275 = vpack.c.bf16 %v8252, %v8251
      %v8276 = vpack.c.bf16 %v8254, %v8253
      %v8277 = vpack.c.bf16 %v8256, %v8255
      %v8278 = vpack.c.bf16 %v8258, %v8257
      %v8279 = vpack.c.bf16 %v8260, %v8259
      %v8280 = vpack.c.bf16 %v8262, %v8261
      %v8281 = vpack.c.bf16 %v8264, %v8263
      %v8282 = vpack.c.bf16 %v8266, %v8265
      %s8283 = scalar_lea.vmem %s6, 48
      %v8284 = vld [vmem:[%s8283] sm:$0xf]
      %v8285 = vld [vmem:[%s8283 + $0x4] sm:$0x3]
      %v8288 = vunpack.c.l.b16 %v8284
      %v8289 = vunpack.c.l.b16 %v8285
      %v8290 = vpack.c.b16 %v8289, %v8288
      %v8292 = vsel %vm415, %v8267, 0
      %v8295 = vsel %vm415, %v8268, 0
      %v8298 = vsel %vm415, %v8269, 0
      %v8301 = vsel %vm415, %v8270, 0
      %v8304 = vsel %vm415, %v8271, 0
      %v8307 = vsel %vm415, %v8272, 0
      %v8310 = vsel %vm415, %v8273, 0
      %v8313 = vsel %vm415, %v8274, 0
      %v8316 = vsel %vm415, %v8275, 0
      %v8319 = vsel %vm415, %v8276, 0
      %v8322 = vsel %vm415, %v8277, 0
      %v8325 = vsel %vm415, %v8278, 0
      %v8328 = vsel %vm415, %v8279, 0
      %v8331 = vsel %vm415, %v8280, 0
      %v8334 = vsel %vm415, %v8281, 0
      %v8337 = vsel %vm415, %v8282, 0
      %v8340 = vand.u32 %v8290, %v749
      %8342 = vmatpush.bf16.msra.mxu0 0
      %8343 = vmatpush.bf16.msra.mxu0 0
      %8344 = vmatpush.bf16.msra.mxu0 0
      %8345 = vmatpush.bf16.msra.mxu0 0
      %8346 = vmatpush.bf16.msra.mxu0 0
      %8347 = vmatpush.bf16.msra.mxu0 0
      %8348 = vmatpush.bf16.msra.mxu0 0
      %8349 = vmatpush.bf16.msra.mxu0 %v8340
      %8350 = vmatmul.bf16.gmra.mxu0 %v8292
      %v8351 = vpop.f32.mrf.mxu0
      %v8352 = vadd.f32 0.0, %v8351
      %v8353 = vpop.f32.mrf.mxu0
      %v8354 = vadd.f32 0.0, %v8353
      %8355 = vmatmul.bf16.gmra.mxu0 %v8295
      %v8356 = vpop.f32.mrf.mxu0
      %v8357 = vadd.f32 0.0, %v8356
      %v8358 = vpop.f32.mrf.mxu0
      %v8359 = vadd.f32 0.0, %v8358
      %8360 = vmatmul.bf16.gmra.mxu0 %v8298
      %v8361 = vpop.f32.mrf.mxu0
      %v8362 = vadd.f32 0.0, %v8361
      %v8363 = vpop.f32.mrf.mxu0
      %v8364 = vadd.f32 0.0, %v8363
      %8365 = vmatmul.bf16.gmra.mxu0 %v8301
      %v8366 = vpop.f32.mrf.mxu0
      %v8367 = vadd.f32 0.0, %v8366
      %v8368 = vpop.f32.mrf.mxu0
      %v8369 = vadd.f32 0.0, %v8368
      %8370 = vmatmul.bf16.gmra.mxu0 %v8304
      %v8371 = vpop.f32.mrf.mxu0
      %v8372 = vadd.f32 0.0, %v8371
      %v8373 = vpop.f32.mrf.mxu0
      %v8374 = vadd.f32 0.0, %v8373
      %8375 = vmatmul.bf16.gmra.mxu0 %v8307
      %v8376 = vpop.f32.mrf.mxu0
      %v8377 = vadd.f32 0.0, %v8376
      %v8378 = vpop.f32.mrf.mxu0
      %v8379 = vadd.f32 0.0, %v8378
      %8380 = vmatmul.bf16.gmra.mxu0 %v8310
      %v8381 = vpop.f32.mrf.mxu0
      %v8382 = vadd.f32 0.0, %v8381
      %v8383 = vpop.f32.mrf.mxu0
      %v8384 = vadd.f32 0.0, %v8383
      %8385 = vmatmul.bf16.gmra.mxu0 %v8313
      %v8386 = vpop.f32.mrf.mxu0
      %v8387 = vadd.f32 0.0, %v8386
      %v8388 = vpop.f32.mrf.mxu0
      %v8389 = vadd.f32 0.0, %v8388
      %8390 = vmatmul.bf16.gmra.mxu0 %v8316
      %v8391 = vpop.f32.mrf.mxu0
      %v8392 = vadd.f32 0.0, %v8391
      %v8393 = vpop.f32.mrf.mxu0
      %v8394 = vadd.f32 0.0, %v8393
      %8395 = vmatmul.bf16.gmra.mxu0 %v8319
      %v8396 = vpop.f32.mrf.mxu0
      %v8397 = vadd.f32 0.0, %v8396
      %v8398 = vpop.f32.mrf.mxu0
      %v8399 = vadd.f32 0.0, %v8398
      %8400 = vmatmul.bf16.gmra.mxu0 %v8322
      %v8401 = vpop.f32.mrf.mxu0
      %v8402 = vadd.f32 0.0, %v8401
      %v8403 = vpop.f32.mrf.mxu0
      %v8404 = vadd.f32 0.0, %v8403
      %8405 = vmatmul.bf16.gmra.mxu0 %v8325
      %v8406 = vpop.f32.mrf.mxu0
      %v8407 = vadd.f32 0.0, %v8406
      %v8408 = vpop.f32.mrf.mxu0
      %v8409 = vadd.f32 0.0, %v8408
      %8410 = vmatmul.bf16.gmra.mxu0 %v8328
      %v8411 = vpop.f32.mrf.mxu0
      %v8412 = vadd.f32 0.0, %v8411
      %v8413 = vpop.f32.mrf.mxu0
      %v8414 = vadd.f32 0.0, %v8413
      %8415 = vmatmul.bf16.gmra.mxu0 %v8331
      %v8416 = vpop.f32.mrf.mxu0
      %v8417 = vadd.f32 0.0, %v8416
      %v8418 = vpop.f32.mrf.mxu0
      %v8419 = vadd.f32 0.0, %v8418
      %8420 = vmatmul.bf16.gmra.mxu0 %v8334
      %v8421 = vpop.f32.mrf.mxu0
      %v8422 = vadd.f32 0.0, %v8421
      %v8423 = vpop.f32.mrf.mxu0
      %v8424 = vadd.f32 0.0, %v8423
      %8425 = vmatmul.bf16.gmra.mxu0 %v8337
      %v8426 = vpop.f32.mrf.mxu0
      %v8427 = vadd.f32 0.0, %v8426
      %v8428 = vpop.f32.mrf.mxu0
      %v8429 = vadd.f32 0.0, %v8428
      %8430 = vdwg.mxu0
      %v8431 = vadd.f32 %v8203, %v8352
      %v8432 = vadd.f32 %v8204, %v8354
      %v8433 = vadd.f32 %v8205, %v8357
      %v8434 = vadd.f32 %v8206, %v8359
      %v8435 = vadd.f32 %v8207, %v8362
      %v8436 = vadd.f32 %v8208, %v8364
      %v8437 = vadd.f32 %v8209, %v8367
      %v8438 = vadd.f32 %v8210, %v8369
      %v8439 = vadd.f32 %v8211, %v8372
      %v8440 = vadd.f32 %v8212, %v8374
      %v8441 = vadd.f32 %v8213, %v8377
      %v8442 = vadd.f32 %v8214, %v8379
      %v8443 = vadd.f32 %v8215, %v8382
      %v8444 = vadd.f32 %v8216, %v8384
      %v8445 = vadd.f32 %v8217, %v8387
      %v8446 = vadd.f32 %v8218, %v8389
      %v8447 = vadd.f32 %v8219, %v8392
      %v8448 = vadd.f32 %v8220, %v8394
      %v8449 = vadd.f32 %v8221, %v8397
      %v8450 = vadd.f32 %v8222, %v8399
      %v8451 = vadd.f32 %v8223, %v8402
      %v8452 = vadd.f32 %v8224, %v8404
      %v8453 = vadd.f32 %v8225, %v8407
      %v8454 = vadd.f32 %v8226, %v8409
      %v8455 = vadd.f32 %v8227, %v8412
      %v8456 = vadd.f32 %v8228, %v8414
      %v8457 = vadd.f32 %v8229, %v8417
      %v8458 = vadd.f32 %v8230, %v8419
      %v8459 = vadd.f32 %v8231, %v8422
      %v8460 = vadd.f32 %v8232, %v8424
      %v8461 = vadd.f32 %v8233, %v8427
      %v8462 = vadd.f32 %v8234, %v8429
      %v8463 = vld [vmem:[%s1899 + $0x1] sm:$0xff]
      %v8464 = vld [vmem:[%s1899 + $0x9] sm:$0xff]
      %v8465 = vld [vmem:[%s1899 + $0x19] sm:$0xff]
      %v8466 = vld [vmem:[%s1899 + $0x21] sm:$0xff]
      %v8467 = vld [vmem:[%s1899 + $0x31] sm:$0xff]
      %v8468 = vld [vmem:[%s1899 + $0x39] sm:$0xff]
      %v8469 = vld [vmem:[%s1899 + $0x49] sm:$0xff]
      %v8470 = vld [vmem:[%s1899 + $0x51] sm:$0xff]
      %v8471 = vld [vmem:[%s1899 + $0x61] sm:$0xff]
      %v8472 = vld [vmem:[%s1899 + $0x69] sm:$0xff]
      %v8473 = vld [vmem:[%s1899 + $0x79] sm:$0xff]
      %v8474 = vld [vmem:[%s1899 + $0x81] sm:$0xff]
      %v8475 = vld [vmem:[%s1899 + $0x91] sm:$0xff]
      %v8476 = vld [vmem:[%s1899 + $0x99] sm:$0xff]
      %v8477 = vld [vmem:[%s1899 + $0xa9] sm:$0xff]
      %v8478 = vld [vmem:[%s1899 + $0xb1] sm:$0xff]
      %v8479 = vld [vmem:[%s1899 + $0xc1] sm:$0xff]
      %v8480 = vld [vmem:[%s1899 + $0xc9] sm:$0xff]
      %v8481 = vld [vmem:[%s1899 + $0xd9] sm:$0xff]
      %v8482 = vld [vmem:[%s1899 + $0xe1] sm:$0xff]
      %v8483 = vld [vmem:[%s1899 + $0xf1] sm:$0xff]
      %v8484 = vld [vmem:[%s1899 + $0xf9] sm:$0xff]
      %v8485 = vld [vmem:[%s1899 + $0x109] sm:$0xff]
      %v8486 = vld [vmem:[%s1899 + $0x111] sm:$0xff]
      %v8487 = vld [vmem:[%s1899 + $0x121] sm:$0xff]
      %v8488 = vld [vmem:[%s1899 + $0x129] sm:$0xff]
      %v8489 = vld [vmem:[%s1899 + $0x139] sm:$0xff]
      %v8490 = vld [vmem:[%s1899 + $0x141] sm:$0xff]
      %v8491 = vld [vmem:[%s1899 + $0x151] sm:$0xff]
      %v8492 = vld [vmem:[%s1899 + $0x159] sm:$0xff]
      %v8493 = vld [vmem:[%s1899 + $0x169] sm:$0xff]
      %v8494 = vld [vmem:[%s1899 + $0x171] sm:$0xff]
      %v8495 = vpack.c.bf16 %v8464, %v8463
      %v8496 = vpack.c.bf16 %v8466, %v8465
      %v8497 = vpack.c.bf16 %v8468, %v8467
      %v8498 = vpack.c.bf16 %v8470, %v8469
      %v8499 = vpack.c.bf16 %v8472, %v8471
      %v8500 = vpack.c.bf16 %v8474, %v8473
      %v8501 = vpack.c.bf16 %v8476, %v8475
      %v8502 = vpack.c.bf16 %v8478, %v8477
      %v8503 = vpack.c.bf16 %v8480, %v8479
      %v8504 = vpack.c.bf16 %v8482, %v8481
      %v8505 = vpack.c.bf16 %v8484, %v8483
      %v8506 = vpack.c.bf16 %v8486, %v8485
      %v8507 = vpack.c.bf16 %v8488, %v8487
      %v8508 = vpack.c.bf16 %v8490, %v8489
      %v8509 = vpack.c.bf16 %v8492, %v8491
      %v8510 = vpack.c.bf16 %v8494, %v8493
      %s8511 = scalar_lea.vmem %s6, 56
      %v8512 = vld [vmem:[%s8511] sm:$0xf]
      %v8513 = vld [vmem:[%s8511 + $0x4] sm:$0x3]
      %v8516 = vunpack.c.l.b16 %v8512
      %v8517 = vunpack.c.l.b16 %v8513
      %v8518 = vpack.c.b16 %v8517, %v8516
      %v8520 = vsel %vm415, %v8495, 0
      %v8523 = vsel %vm415, %v8496, 0
      %v8526 = vsel %vm415, %v8497, 0
      %v8529 = vsel %vm415, %v8498, 0
      %v8532 = vsel %vm415, %v8499, 0
      %v8535 = vsel %vm415, %v8500, 0
      %v8538 = vsel %vm415, %v8501, 0
      %v8541 = vsel %vm415, %v8502, 0
      %v8544 = vsel %vm415, %v8503, 0
      %v8547 = vsel %vm415, %v8504, 0
      %v8550 = vsel %vm415, %v8505, 0
      %v8553 = vsel %vm415, %v8506, 0
      %v8556 = vsel %vm415, %v8507, 0
      %v8559 = vsel %vm415, %v8508, 0
      %v8562 = vsel %vm415, %v8509, 0
      %v8565 = vsel %vm415, %v8510, 0
      %v8568 = vand.u32 %v8518, %v749
      %8570 = vmatpush.bf16.msra.mxu0 0
      %8571 = vmatpush.bf16.msra.mxu0 0
      %8572 = vmatpush.bf16.msra.mxu0 0
      %8573 = vmatpush.bf16.msra.mxu0 0
      %8574 = vmatpush.bf16.msra.mxu0 0
      %8575 = vmatpush.bf16.msra.mxu0 0
      %8576 = vmatpush.bf16.msra.mxu0 0
      %8577 = vmatpush.bf16.msra.mxu0 %v8568
      %8578 = vmatmul.bf16.gmra.mxu0 %v8520
      %v8579 = vpop.f32.mrf.mxu0
      %v8580 = vadd.f32 0.0, %v8579
      %v8581 = vpop.f32.mrf.mxu0
      %v8582 = vadd.f32 0.0, %v8581
      %8583 = vmatmul.bf16.gmra.mxu0 %v8523
      %v8584 = vpop.f32.mrf.mxu0
      %v8585 = vadd.f32 0.0, %v8584
      %v8586 = vpop.f32.mrf.mxu0
      %v8587 = vadd.f32 0.0, %v8586
      %8588 = vmatmul.bf16.gmra.mxu0 %v8526
      %v8589 = vpop.f32.mrf.mxu0
      %v8590 = vadd.f32 0.0, %v8589
      %v8591 = vpop.f32.mrf.mxu0
      %v8592 = vadd.f32 0.0, %v8591
      %8593 = vmatmul.bf16.gmra.mxu0 %v8529
      %v8594 = vpop.f32.mrf.mxu0
      %v8595 = vadd.f32 0.0, %v8594
      %v8596 = vpop.f32.mrf.mxu0
      %v8597 = vadd.f32 0.0, %v8596
      %8598 = vmatmul.bf16.gmra.mxu0 %v8532
      %v8599 = vpop.f32.mrf.mxu0
      %v8600 = vadd.f32 0.0, %v8599
      %v8601 = vpop.f32.mrf.mxu0
      %v8602 = vadd.f32 0.0, %v8601
      %8603 = vmatmul.bf16.gmra.mxu0 %v8535
      %v8604 = vpop.f32.mrf.mxu0
      %v8605 = vadd.f32 0.0, %v8604
      %v8606 = vpop.f32.mrf.mxu0
      %v8607 = vadd.f32 0.0, %v8606
      %8608 = vmatmul.bf16.gmra.mxu0 %v8538
      %v8609 = vpop.f32.mrf.mxu0
      %v8610 = vadd.f32 0.0, %v8609
      %v8611 = vpop.f32.mrf.mxu0
      %v8612 = vadd.f32 0.0, %v8611
      %8613 = vmatmul.bf16.gmra.mxu0 %v8541
      %v8614 = vpop.f32.mrf.mxu0
      %v8615 = vadd.f32 0.0, %v8614
      %v8616 = vpop.f32.mrf.mxu0
      %v8617 = vadd.f32 0.0, %v8616
      %8618 = vmatmul.bf16.gmra.mxu0 %v8544
      %v8619 = vpop.f32.mrf.mxu0
      %v8620 = vadd.f32 0.0, %v8619
      %v8621 = vpop.f32.mrf.mxu0
      %v8622 = vadd.f32 0.0, %v8621
      %8623 = vmatmul.bf16.gmra.mxu0 %v8547
      %v8624 = vpop.f32.mrf.mxu0
      %v8625 = vadd.f32 0.0, %v8624
      %v8626 = vpop.f32.mrf.mxu0
      %v8627 = vadd.f32 0.0, %v8626
      %8628 = vmatmul.bf16.gmra.mxu0 %v8550
      %v8629 = vpop.f32.mrf.mxu0
      %v8630 = vadd.f32 0.0, %v8629
      %v8631 = vpop.f32.mrf.mxu0
      %v8632 = vadd.f32 0.0, %v8631
      %8633 = vmatmul.bf16.gmra.mxu0 %v8553
      %v8634 = vpop.f32.mrf.mxu0
      %v8635 = vadd.f32 0.0, %v8634
      %v8636 = vpop.f32.mrf.mxu0
      %v8637 = vadd.f32 0.0, %v8636
      %8638 = vmatmul.bf16.gmra.mxu0 %v8556
      %v8639 = vpop.f32.mrf.mxu0
      %v8640 = vadd.f32 0.0, %v8639
      %v8641 = vpop.f32.mrf.mxu0
      %v8642 = vadd.f32 0.0, %v8641
      %8643 = vmatmul.bf16.gmra.mxu0 %v8559
      %v8644 = vpop.f32.mrf.mxu0
      %v8645 = vadd.f32 0.0, %v8644
      %v8646 = vpop.f32.mrf.mxu0
      %v8647 = vadd.f32 0.0, %v8646
      %8648 = vmatmul.bf16.gmra.mxu0 %v8562
      %v8649 = vpop.f32.mrf.mxu0
      %v8650 = vadd.f32 0.0, %v8649
      %v8651 = vpop.f32.mrf.mxu0
      %v8652 = vadd.f32 0.0, %v8651
      %8653 = vmatmul.bf16.gmra.mxu0 %v8565
      %v8654 = vpop.f32.mrf.mxu0
      %v8655 = vadd.f32 0.0, %v8654
      %v8656 = vpop.f32.mrf.mxu0
      %v8657 = vadd.f32 0.0, %v8656
      %8658 = vdwg.mxu0
      %v8659 = vadd.f32 %v8431, %v8580
      %v8660 = vadd.f32 %v8432, %v8582
      %v8661 = vadd.f32 %v8433, %v8585
      %v8662 = vadd.f32 %v8434, %v8587
      %v8663 = vadd.f32 %v8435, %v8590
      %v8664 = vadd.f32 %v8436, %v8592
      %v8665 = vadd.f32 %v8437, %v8595
      %v8666 = vadd.f32 %v8438, %v8597
      %v8667 = vadd.f32 %v8439, %v8600
      %v8668 = vadd.f32 %v8440, %v8602
      %v8669 = vadd.f32 %v8441, %v8605
      %v8670 = vadd.f32 %v8442, %v8607
      %v8671 = vadd.f32 %v8443, %v8610
      %v8672 = vadd.f32 %v8444, %v8612
      %v8673 = vadd.f32 %v8445, %v8615
      %v8674 = vadd.f32 %v8446, %v8617
      %v8675 = vadd.f32 %v8447, %v8620
      %v8676 = vadd.f32 %v8448, %v8622
      %v8677 = vadd.f32 %v8449, %v8625
      %v8678 = vadd.f32 %v8450, %v8627
      %v8679 = vadd.f32 %v8451, %v8630
      %v8680 = vadd.f32 %v8452, %v8632
      %v8681 = vadd.f32 %v8453, %v8635
      %v8682 = vadd.f32 %v8454, %v8637
      %v8683 = vadd.f32 %v8455, %v8640
      %v8684 = vadd.f32 %v8456, %v8642
      %v8685 = vadd.f32 %v8457, %v8645
      %v8686 = vadd.f32 %v8458, %v8647
      %v8687 = vadd.f32 %v8459, %v8650
      %v8688 = vadd.f32 %v8460, %v8652
      %v8689 = vadd.f32 %v8461, %v8655
      %v8690 = vadd.f32 %v8462, %v8657
      %v8691 = vld [vmem:[%s1899 + $0x2] sm:$0xff]
      %v8692 = vld [vmem:[%s1899 + $0xa] sm:$0xff]
      %v8693 = vld [vmem:[%s1899 + $0x1a] sm:$0xff]
      %v8694 = vld [vmem:[%s1899 + $0x22] sm:$0xff]
      %v8695 = vld [vmem:[%s1899 + $0x32] sm:$0xff]
      %v8696 = vld [vmem:[%s1899 + $0x3a] sm:$0xff]
      %v8697 = vld [vmem:[%s1899 + $0x4a] sm:$0xff]
      %v8698 = vld [vmem:[%s1899 + $0x52] sm:$0xff]
      %v8699 = vld [vmem:[%s1899 + $0x62] sm:$0xff]
      %v8700 = vld [vmem:[%s1899 + $0x6a] sm:$0xff]
      %v8701 = vld [vmem:[%s1899 + $0x7a] sm:$0xff]
      %v8702 = vld [vmem:[%s1899 + $0x82] sm:$0xff]
      %v8703 = vld [vmem:[%s1899 + $0x92] sm:$0xff]
      %v8704 = vld [vmem:[%s1899 + $0x9a] sm:$0xff]
      %v8705 = vld [vmem:[%s1899 + $0xaa] sm:$0xff]
      %v8706 = vld [vmem:[%s1899 + $0xb2] sm:$0xff]
      %v8707 = vld [vmem:[%s1899 + $0xc2] sm:$0xff]
      %v8708 = vld [vmem:[%s1899 + $0xca] sm:$0xff]
      %v8709 = vld [vmem:[%s1899 + $0xda] sm:$0xff]
      %v8710 = vld [vmem:[%s1899 + $0xe2] sm:$0xff]
      %v8711 = vld [vmem:[%s1899 + $0xf2] sm:$0xff]
      %v8712 = vld [vmem:[%s1899 + $0xfa] sm:$0xff]
      %v8713 = vld [vmem:[%s1899 + $0x10a] sm:$0xff]
      %v8714 = vld [vmem:[%s1899 + $0x112] sm:$0xff]
      %v8715 = vld [vmem:[%s1899 + $0x122] sm:$0xff]
      %v8716 = vld [vmem:[%s1899 + $0x12a] sm:$0xff]
      %v8717 = vld [vmem:[%s1899 + $0x13a] sm:$0xff]
      %v8718 = vld [vmem:[%s1899 + $0x142] sm:$0xff]
      %v8719 = vld [vmem:[%s1899 + $0x152] sm:$0xff]
      %v8720 = vld [vmem:[%s1899 + $0x15a] sm:$0xff]
      %v8721 = vld [vmem:[%s1899 + $0x16a] sm:$0xff]
      %v8722 = vld [vmem:[%s1899 + $0x172] sm:$0xff]
      %v8723 = vpack.c.bf16 %v8692, %v8691
      %v8724 = vpack.c.bf16 %v8694, %v8693
      %v8725 = vpack.c.bf16 %v8696, %v8695
      %v8726 = vpack.c.bf16 %v8698, %v8697
      %v8727 = vpack.c.bf16 %v8700, %v8699
      %v8728 = vpack.c.bf16 %v8702, %v8701
      %v8729 = vpack.c.bf16 %v8704, %v8703
      %v8730 = vpack.c.bf16 %v8706, %v8705
      %v8731 = vpack.c.bf16 %v8708, %v8707
      %v8732 = vpack.c.bf16 %v8710, %v8709
      %v8733 = vpack.c.bf16 %v8712, %v8711
      %v8734 = vpack.c.bf16 %v8714, %v8713
      %v8735 = vpack.c.bf16 %v8716, %v8715
      %v8736 = vpack.c.bf16 %v8718, %v8717
      %v8737 = vpack.c.bf16 %v8720, %v8719
      %v8738 = vpack.c.bf16 %v8722, %v8721
      %s8739 = scalar_lea.vmem %s6, 64
      %v8740 = vld [vmem:[%s8739] sm:$0xf]
      %v8741 = vld [vmem:[%s8739 + $0x4] sm:$0x3]
      %v8744 = vunpack.c.l.b16 %v8740
      %v8745 = vunpack.c.l.b16 %v8741
      %v8746 = vpack.c.b16 %v8745, %v8744
      %v8748 = vsel %vm415, %v8723, 0
      %v8751 = vsel %vm415, %v8724, 0
      %v8754 = vsel %vm415, %v8725, 0
      %v8757 = vsel %vm415, %v8726, 0
      %v8760 = vsel %vm415, %v8727, 0
      %v8763 = vsel %vm415, %v8728, 0
      %v8766 = vsel %vm415, %v8729, 0
      %v8769 = vsel %vm415, %v8730, 0
      %v8772 = vsel %vm415, %v8731, 0
      %v8775 = vsel %vm415, %v8732, 0
      %v8778 = vsel %vm415, %v8733, 0
      %v8781 = vsel %vm415, %v8734, 0
      %v8784 = vsel %vm415, %v8735, 0
      %v8787 = vsel %vm415, %v8736, 0
      %v8790 = vsel %vm415, %v8737, 0
      %v8793 = vsel %vm415, %v8738, 0
      %v8796 = vand.u32 %v8746, %v749
      %8798 = vmatpush.bf16.msra.mxu0 0
      %8799 = vmatpush.bf16.msra.mxu0 0
      %8800 = vmatpush.bf16.msra.mxu0 0
      %8801 = vmatpush.bf16.msra.mxu0 0
      %8802 = vmatpush.bf16.msra.mxu0 0
      %8803 = vmatpush.bf16.msra.mxu0 0
      %8804 = vmatpush.bf16.msra.mxu0 0
      %8805 = vmatpush.bf16.msra.mxu0 %v8796
      %8806 = vmatmul.bf16.gmra.mxu0 %v8748
      %v8807 = vpop.f32.mrf.mxu0
      %v8808 = vadd.f32 0.0, %v8807
      %v8809 = vpop.f32.mrf.mxu0
      %v8810 = vadd.f32 0.0, %v8809
      %8811 = vmatmul.bf16.gmra.mxu0 %v8751
      %v8812 = vpop.f32.mrf.mxu0
      %v8813 = vadd.f32 0.0, %v8812
      %v8814 = vpop.f32.mrf.mxu0
      %v8815 = vadd.f32 0.0, %v8814
      %8816 = vmatmul.bf16.gmra.mxu0 %v8754
      %v8817 = vpop.f32.mrf.mxu0
      %v8818 = vadd.f32 0.0, %v8817
      %v8819 = vpop.f32.mrf.mxu0
      %v8820 = vadd.f32 0.0, %v8819
      %8821 = vmatmul.bf16.gmra.mxu0 %v8757
      %v8822 = vpop.f32.mrf.mxu0
      %v8823 = vadd.f32 0.0, %v8822
      %v8824 = vpop.f32.mrf.mxu0
      %v8825 = vadd.f32 0.0, %v8824
      %8826 = vmatmul.bf16.gmra.mxu0 %v8760
      %v8827 = vpop.f32.mrf.mxu0
      %v8828 = vadd.f32 0.0, %v8827
      %v8829 = vpop.f32.mrf.mxu0
      %v8830 = vadd.f32 0.0, %v8829
      %8831 = vmatmul.bf16.gmra.mxu0 %v8763
      %v8832 = vpop.f32.mrf.mxu0
      %v8833 = vadd.f32 0.0, %v8832
      %v8834 = vpop.f32.mrf.mxu0
      %v8835 = vadd.f32 0.0, %v8834
      %8836 = vmatmul.bf16.gmra.mxu0 %v8766
      %v8837 = vpop.f32.mrf.mxu0
      %v8838 = vadd.f32 0.0, %v8837
      %v8839 = vpop.f32.mrf.mxu0
      %v8840 = vadd.f32 0.0, %v8839
      %8841 = vmatmul.bf16.gmra.mxu0 %v8769
      %v8842 = vpop.f32.mrf.mxu0
      %v8843 = vadd.f32 0.0, %v8842
      %v8844 = vpop.f32.mrf.mxu0
      %v8845 = vadd.f32 0.0, %v8844
      %8846 = vmatmul.bf16.gmra.mxu0 %v8772
      %v8847 = vpop.f32.mrf.mxu0
      %v8848 = vadd.f32 0.0, %v8847
      %v8849 = vpop.f32.mrf.mxu0
      %v8850 = vadd.f32 0.0, %v8849
      %8851 = vmatmul.bf16.gmra.mxu0 %v8775
      %v8852 = vpop.f32.mrf.mxu0
      %v8853 = vadd.f32 0.0, %v8852
      %v8854 = vpop.f32.mrf.mxu0
      %v8855 = vadd.f32 0.0, %v8854
      %8856 = vmatmul.bf16.gmra.mxu0 %v8778
      %v8857 = vpop.f32.mrf.mxu0
      %v8858 = vadd.f32 0.0, %v8857
      %v8859 = vpop.f32.mrf.mxu0
      %v8860 = vadd.f32 0.0, %v8859
      %8861 = vmatmul.bf16.gmra.mxu0 %v8781
      %v8862 = vpop.f32.mrf.mxu0
      %v8863 = vadd.f32 0.0, %v8862
      %v8864 = vpop.f32.mrf.mxu0
      %v8865 = vadd.f32 0.0, %v8864
      %8866 = vmatmul.bf16.gmra.mxu0 %v8784
      %v8867 = vpop.f32.mrf.mxu0
      %v8868 = vadd.f32 0.0, %v8867
      %v8869 = vpop.f32.mrf.mxu0
      %v8870 = vadd.f32 0.0, %v8869
      %8871 = vmatmul.bf16.gmra.mxu0 %v8787
      %v8872 = vpop.f32.mrf.mxu0
      %v8873 = vadd.f32 0.0, %v8872
      %v8874 = vpop.f32.mrf.mxu0
      %v8875 = vadd.f32 0.0, %v8874
      %8876 = vmatmul.bf16.gmra.mxu0 %v8790
      %v8877 = vpop.f32.mrf.mxu0
      %v8878 = vadd.f32 0.0, %v8877
      %v8879 = vpop.f32.mrf.mxu0
      %v8880 = vadd.f32 0.0, %v8879
      %8881 = vmatmul.bf16.gmra.mxu0 %v8793
      %v8882 = vpop.f32.mrf.mxu0
      %v8883 = vadd.f32 0.0, %v8882
      %v8884 = vpop.f32.mrf.mxu0
      %v8885 = vadd.f32 0.0, %v8884
      %8886 = vdwg.mxu0
      %v8887 = vadd.f32 %v8659, %v8808
      %v8888 = vadd.f32 %v8660, %v8810
      %v8889 = vadd.f32 %v8661, %v8813
      %v8890 = vadd.f32 %v8662, %v8815
      %v8891 = vadd.f32 %v8663, %v8818
      %v8892 = vadd.f32 %v8664, %v8820
      %v8893 = vadd.f32 %v8665, %v8823
      %v8894 = vadd.f32 %v8666, %v8825
      %v8895 = vadd.f32 %v8667, %v8828
      %v8896 = vadd.f32 %v8668, %v8830
      %v8897 = vadd.f32 %v8669, %v8833
      %v8898 = vadd.f32 %v8670, %v8835
      %v8899 = vadd.f32 %v8671, %v8838
      %v8900 = vadd.f32 %v8672, %v8840
      %v8901 = vadd.f32 %v8673, %v8843
      %v8902 = vadd.f32 %v8674, %v8845
      %v8903 = vadd.f32 %v8675, %v8848
      %v8904 = vadd.f32 %v8676, %v8850
      %v8905 = vadd.f32 %v8677, %v8853
      %v8906 = vadd.f32 %v8678, %v8855
      %v8907 = vadd.f32 %v8679, %v8858
      %v8908 = vadd.f32 %v8680, %v8860
      %v8909 = vadd.f32 %v8681, %v8863
      %v8910 = vadd.f32 %v8682, %v8865
      %v8911 = vadd.f32 %v8683, %v8868
      %v8912 = vadd.f32 %v8684, %v8870
      %v8913 = vadd.f32 %v8685, %v8873
      %v8914 = vadd.f32 %v8686, %v8875
      %v8915 = vadd.f32 %v8687, %v8878
      %v8916 = vadd.f32 %v8688, %v8880
      %v8917 = vadd.f32 %v8689, %v8883
      %v8918 = vadd.f32 %v8690, %v8885
      %v8919 = vld [vmem:[%s7] sm:$0x1]
      %v8921 = vperm.slane %v8919, 0
      %v8923 = vadd.f32 %v8887, %v8921
      %v8924 = vadd.f32 %v8888, %v8921
      %v8925 = vadd.f32 %v8889, %v8921
      %v8926 = vadd.f32 %v8890, %v8921
      %v8927 = vadd.f32 %v8891, %v8921
      %v8928 = vadd.f32 %v8892, %v8921
      %v8929 = vadd.f32 %v8893, %v8921
      %v8930 = vadd.f32 %v8894, %v8921
      %v8931 = vadd.f32 %v8895, %v8921
      %v8932 = vadd.f32 %v8896, %v8921
      %v8933 = vadd.f32 %v8897, %v8921
      %v8934 = vadd.f32 %v8898, %v8921
      %v8935 = vadd.f32 %v8899, %v8921
      %v8936 = vadd.f32 %v8900, %v8921
      %v8937 = vadd.f32 %v8901, %v8921
      %v8938 = vadd.f32 %v8902, %v8921
      %v8939 = vadd.f32 %v8903, %v8921
      %v8940 = vadd.f32 %v8904, %v8921
      %v8941 = vadd.f32 %v8905, %v8921
      %v8942 = vadd.f32 %v8906, %v8921
      %v8943 = vadd.f32 %v8907, %v8921
      %v8944 = vadd.f32 %v8908, %v8921
      %v8945 = vadd.f32 %v8909, %v8921
      %v8946 = vadd.f32 %v8910, %v8921
      %v8947 = vadd.f32 %v8911, %v8921
      %v8948 = vadd.f32 %v8912, %v8921
      %v8949 = vadd.f32 %v8913, %v8921
      %v8950 = vadd.f32 %v8914, %v8921
      %v8951 = vadd.f32 %v8915, %v8921
      %v8952 = vadd.f32 %v8916, %v8921
      %v8953 = vadd.f32 %v8917, %v8921
      %v8954 = vadd.f32 %v8918, %v8921
      %v8955 = vmax.f32 %v8923, 0.0
      %v8956 = vmax.f32 %v8924, 0.0
      %v8957 = vmax.f32 %v8925, 0.0
      %v8958 = vmax.f32 %v8926, 0.0
      %v8959 = vmax.f32 %v8927, 0.0
      %v8960 = vmax.f32 %v8928, 0.0
      %v8961 = vmax.f32 %v8929, 0.0
      %v8962 = vmax.f32 %v8930, 0.0
      %v8963 = vmax.f32 %v8931, 0.0
      %v8964 = vmax.f32 %v8932, 0.0
      %v8965 = vmax.f32 %v8933, 0.0
      %v8966 = vmax.f32 %v8934, 0.0
      %v8967 = vmax.f32 %v8935, 0.0
      %v8968 = vmax.f32 %v8936, 0.0
      %v8969 = vmax.f32 %v8937, 0.0
      %v8970 = vmax.f32 %v8938, 0.0
      %v8971 = vmax.f32 %v8939, 0.0
      %v8972 = vmax.f32 %v8940, 0.0
      %v8973 = vmax.f32 %v8941, 0.0
      %v8974 = vmax.f32 %v8942, 0.0
      %v8975 = vmax.f32 %v8943, 0.0
      %v8976 = vmax.f32 %v8944, 0.0
      %v8977 = vmax.f32 %v8945, 0.0
      %v8978 = vmax.f32 %v8946, 0.0
      %v8979 = vmax.f32 %v8947, 0.0
      %v8980 = vmax.f32 %v8948, 0.0
      %v8981 = vmax.f32 %v8949, 0.0
      %v8982 = vmax.f32 %v8950, 0.0
      %v8983 = vmax.f32 %v8951, 0.0
      %v8984 = vmax.f32 %v8952, 0.0
      %v8985 = vmax.f32 %v8953, 0.0
      %v8986 = vmax.f32 %v8954, 0.0
      %8987 = vst.msk [vmem:[%s2652 + $0x1] sm:$0xff] %vm471, %v8955
      %8988 = vst.msk [vmem:[%s2652 + $0x9] sm:$0xff] %vm471, %v8956
      %8989 = vst.msk [vmem:[%s2652 + $0x19] sm:$0xff] %vm471, %v8957
      %8990 = vst.msk [vmem:[%s2652 + $0x21] sm:$0xff] %vm471, %v8958
      %8991 = vst.msk [vmem:[%s2652 + $0x31] sm:$0xff] %vm471, %v8959
      %8992 = vst.msk [vmem:[%s2652 + $0x39] sm:$0xff] %vm471, %v8960
      %8993 = vst.msk [vmem:[%s2652 + $0x49] sm:$0xff] %vm471, %v8961
      %8994 = vst.msk [vmem:[%s2652 + $0x51] sm:$0xff] %vm471, %v8962
      %8995 = vst.msk [vmem:[%s2652 + $0x61] sm:$0xff] %vm471, %v8963
      %8996 = vst.msk [vmem:[%s2652 + $0x69] sm:$0xff] %vm471, %v8964
      %8997 = vst.msk [vmem:[%s2652 + $0x79] sm:$0xff] %vm471, %v8965
      %8998 = vst.msk [vmem:[%s2652 + $0x81] sm:$0xff] %vm471, %v8966
      %8999 = vst.msk [vmem:[%s2652 + $0x91] sm:$0xff] %vm471, %v8967
      %9000 = vst.msk [vmem:[%s2652 + $0x99] sm:$0xff] %vm471, %v8968
      %9001 = vst.msk [vmem:[%s2652 + $0xa9] sm:$0xff] %vm471, %v8969
      %9002 = vst.msk [vmem:[%s2652 + $0xb1] sm:$0xff] %vm471, %v8970
      %9003 = vst.msk [vmem:[%s2652 + $0xc1] sm:$0xff] %vm471, %v8971
      %9004 = vst.msk [vmem:[%s2652 + $0xc9] sm:$0xff] %vm471, %v8972
      %9005 = vst.msk [vmem:[%s2652 + $0xd9] sm:$0xff] %vm471, %v8973
      %9006 = vst.msk [vmem:[%s2652 + $0xe1] sm:$0xff] %vm471, %v8974
      %9007 = vst.msk [vmem:[%s2652 + $0xf1] sm:$0xff] %vm471, %v8975
      %9008 = vst.msk [vmem:[%s2652 + $0xf9] sm:$0xff] %vm471, %v8976
      %9009 = vst.msk [vmem:[%s2652 + $0x109] sm:$0xff] %vm471, %v8977
      %9010 = vst.msk [vmem:[%s2652 + $0x111] sm:$0xff] %vm471, %v8978
      %9011 = vst.msk [vmem:[%s2652 + $0x121] sm:$0xff] %vm471, %v8979
      %9012 = vst.msk [vmem:[%s2652 + $0x129] sm:$0xff] %vm471, %v8980
      %9013 = vst.msk [vmem:[%s2652 + $0x139] sm:$0xff] %vm471, %v8981
      %9014 = vst.msk [vmem:[%s2652 + $0x141] sm:$0xff] %vm471, %v8982
      %9015 = vst.msk [vmem:[%s2652 + $0x151] sm:$0xff] %vm471, %v8983
      %9016 = vst.msk [vmem:[%s2652 + $0x159] sm:$0xff] %vm471, %v8984
      %9017 = vst.msk [vmem:[%s2652 + $0x169] sm:$0xff] %vm471, %v8985
      %9018 = vst.msk [vmem:[%s2652 + $0x171] sm:$0xff] %vm471, %v8986
      %v9019 = vld [vmem:[#allocation3] sm:$0xff]
      %v9020 = vld [vmem:[#allocation3 + $0x8] sm:$0xff]
      %v9021 = vld [vmem:[#allocation3 + $0x18] sm:$0xff]
      %v9022 = vld [vmem:[#allocation3 + $0x20] sm:$0xff]
      %v9023 = vld [vmem:[#allocation3 + $0x30] sm:$0xff]
      %v9024 = vld [vmem:[#allocation3 + $0x38] sm:$0xff]
      %v9025 = vld [vmem:[#allocation3 + $0x48] sm:$0xff]
      %v9026 = vld [vmem:[#allocation3 + $0x50] sm:$0xff]
      %v9027 = vld [vmem:[#allocation3 + $0x60] sm:$0xff]
      %v9028 = vld [vmem:[#allocation3 + $0x68] sm:$0xff]
      %v9029 = vld [vmem:[#allocation3 + $0x78] sm:$0xff]
      %v9030 = vld [vmem:[#allocation3 + $0x80] sm:$0xff]
      %v9031 = vld [vmem:[#allocation3 + $0x90] sm:$0xff]
      %v9032 = vld [vmem:[#allocation3 + $0x98] sm:$0xff]
      %v9033 = vld [vmem:[#allocation3 + $0xa8] sm:$0xff]
      %v9034 = vld [vmem:[#allocation3 + $0xb0] sm:$0xff]
      %v9035 = vld [vmem:[#allocation3 + $0xc0] sm:$0xff]
      %v9036 = vld [vmem:[#allocation3 + $0xc8] sm:$0xff]
      %v9037 = vld [vmem:[#allocation3 + $0xd8] sm:$0xff]
      %v9038 = vld [vmem:[#allocation3 + $0xe0] sm:$0xff]
      %v9039 = vld [vmem:[#allocation3 + $0xf0] sm:$0xff]
      %v9040 = vld [vmem:[#allocation3 + $0xf8] sm:$0xff]
      %v9041 = vld [vmem:[#allocation3 + $0x108] sm:$0xff]
      %v9042 = vld [vmem:[#allocation3 + $0x110] sm:$0xff]
      %v9043 = vld [vmem:[#allocation3 + $0x120] sm:$0xff]
      %v9044 = vld [vmem:[#allocation3 + $0x128] sm:$0xff]
      %v9045 = vld [vmem:[#allocation3 + $0x138] sm:$0xff]
      %v9046 = vld [vmem:[#allocation3 + $0x140] sm:$0xff]
      %v9047 = vld [vmem:[#allocation3 + $0x150] sm:$0xff]
      %v9048 = vld [vmem:[#allocation3 + $0x158] sm:$0xff]
      %v9049 = vld [vmem:[#allocation3 + $0x168] sm:$0xff]
      %v9050 = vld [vmem:[#allocation3 + $0x170] sm:$0xff]
      %v9051 = vpack.c.bf16 %v9020, %v9019
      %v9052 = vpack.c.bf16 %v9022, %v9021
      %v9053 = vpack.c.bf16 %v9024, %v9023
      %v9054 = vpack.c.bf16 %v9026, %v9025
      %v9055 = vpack.c.bf16 %v9028, %v9027
      %v9056 = vpack.c.bf16 %v9030, %v9029
      %v9057 = vpack.c.bf16 %v9032, %v9031
      %v9058 = vpack.c.bf16 %v9034, %v9033
      %v9059 = vpack.c.bf16 %v9036, %v9035
      %v9060 = vpack.c.bf16 %v9038, %v9037
      %v9061 = vpack.c.bf16 %v9040, %v9039
      %v9062 = vpack.c.bf16 %v9042, %v9041
      %v9063 = vpack.c.bf16 %v9044, %v9043
      %v9064 = vpack.c.bf16 %v9046, %v9045
      %v9065 = vpack.c.bf16 %v9048, %v9047
      %v9066 = vpack.c.bf16 %v9050, %v9049
      %v9067 = vld [vmem:[%s8] sm:$0xf]
      %v9068 = vld [vmem:[%s8 + $0x4] sm:$0xf]
      %v9069 = vld [vmem:[%s8 + $0x8] sm:$0xf]
      %v9070 = vld [vmem:[%s8 + $0xc] sm:$0xf]
      %v9071 = vld [vmem:[#allocation3 + $0x1] sm:$0xff]
      %v9072 = vld [vmem:[#allocation3 + $0x9] sm:$0xff]
      %v9073 = vld [vmem:[#allocation3 + $0x19] sm:$0xff]
      %v9074 = vld [vmem:[#allocation3 + $0x21] sm:$0xff]
      %v9075 = vld [vmem:[#allocation3 + $0x31] sm:$0xff]
      %v9076 = vld [vmem:[#allocation3 + $0x39] sm:$0xff]
      %v9077 = vld [vmem:[#allocation3 + $0x49] sm:$0xff]
      %v9078 = vld [vmem:[#allocation3 + $0x51] sm:$0xff]
      %v9079 = vld [vmem:[#allocation3 + $0x61] sm:$0xff]
      %v9080 = vld [vmem:[#allocation3 + $0x69] sm:$0xff]
      %v9081 = vld [vmem:[#allocation3 + $0x79] sm:$0xff]
      %v9082 = vld [vmem:[#allocation3 + $0x81] sm:$0xff]
      %v9083 = vld [vmem:[#allocation3 + $0x91] sm:$0xff]
      %v9084 = vld [vmem:[#allocation3 + $0x99] sm:$0xff]
      %v9085 = vld [vmem:[#allocation3 + $0xa9] sm:$0xff]
      %v9086 = vld [vmem:[#allocation3 + $0xb1] sm:$0xff]
      %v9087 = vld [vmem:[#allocation3 + $0xc1] sm:$0xff]
      %v9088 = vld [vmem:[#allocation3 + $0xc9] sm:$0xff]
      %v9089 = vld [vmem:[#allocation3 + $0xd9] sm:$0xff]
      %v9090 = vld [vmem:[#allocation3 + $0xe1] sm:$0xff]
      %v9091 = vld [vmem:[#allocation3 + $0xf1] sm:$0xff]
      %v9092 = vld [vmem:[#allocation3 + $0xf9] sm:$0xff]
      %v9093 = vld [vmem:[#allocation3 + $0x109] sm:$0xff]
      %v9094 = vld [vmem:[#allocation3 + $0x111] sm:$0xff]
      %v9095 = vld [vmem:[#allocation3 + $0x121] sm:$0xff]
      %v9096 = vld [vmem:[#allocation3 + $0x129] sm:$0xff]
      %v9097 = vld [vmem:[#allocation3 + $0x139] sm:$0xff]
      %v9098 = vld [vmem:[#allocation3 + $0x141] sm:$0xff]
      %v9099 = vld [vmem:[#allocation3 + $0x151] sm:$0xff]
      %v9100 = vld [vmem:[#allocation3 + $0x159] sm:$0xff]
      %v9101 = vld [vmem:[#allocation3 + $0x169] sm:$0xff]
      %v9102 = vld [vmem:[#allocation3 + $0x171] sm:$0xff]
      %v9103 = vpack.c.bf16 %v9072, %v9071
      %v9104 = vpack.c.bf16 %v9074, %v9073
      %v9105 = vpack.c.bf16 %v9076, %v9075
      %v9106 = vpack.c.bf16 %v9078, %v9077
      %v9107 = vpack.c.bf16 %v9080, %v9079
      %v9108 = vpack.c.bf16 %v9082, %v9081
      %v9109 = vpack.c.bf16 %v9084, %v9083
      %v9110 = vpack.c.bf16 %v9086, %v9085
      %v9111 = vpack.c.bf16 %v9088, %v9087
      %v9112 = vpack.c.bf16 %v9090, %v9089
      %v9113 = vpack.c.bf16 %v9092, %v9091
      %v9114 = vpack.c.bf16 %v9094, %v9093
      %v9115 = vpack.c.bf16 %v9096, %v9095
      %v9116 = vpack.c.bf16 %v9098, %v9097
      %v9117 = vpack.c.bf16 %v9100, %v9099
      %v9118 = vpack.c.bf16 %v9102, %v9101
      %s9119 = scalar_lea.vmem %s8, 16
      %v9120 = vld [vmem:[%s9119] sm:$0xf]
      %v9121 = vld [vmem:[%s9119 + $0x4] sm:$0xf]
      %v9122 = vld [vmem:[%s9119 + $0x8] sm:$0xf]
      %v9123 = vld [vmem:[%s9119 + $0xc] sm:$0xf]
      %v9128 = vunpack.c.l.b16 %v9120
      %v9129 = vunpack.c.l.b16 %v9121
      %v9130 = vunpack.c.l.b16 %v9122
      %v9131 = vunpack.c.l.b16 %v9123
      %v9132 = vpack.c.b16 %v9129, %v9128
      %v9133 = vpack.c.b16 %v9131, %v9130
      %v9137 = vsel %vm471, %v9103, 0
      %v9140 = vsel %vm471, %v9104, 0
      %v9143 = vsel %vm471, %v9105, 0
      %v9146 = vsel %vm471, %v9106, 0
      %v9149 = vsel %vm471, %v9107, 0
      %v9152 = vsel %vm471, %v9108, 0
      %v9155 = vsel %vm471, %v9109, 0
      %v9158 = vsel %vm471, %v9110, 0
      %v9161 = vsel %vm471, %v9111, 0
      %v9164 = vsel %vm471, %v9112, 0
      %v9167 = vsel %vm471, %v9113, 0
      %v9170 = vsel %vm471, %v9114, 0
      %v9173 = vsel %vm471, %v9115, 0
      %v9176 = vsel %vm471, %v9116, 0
      %v9179 = vsel %vm471, %v9117, 0
      %v9182 = vsel %vm471, %v9118, 0
      %9184 = vmatpush.bf16.msra.mxu0 0
      %9185 = vmatpush.bf16.msra.mxu0 0
      %9186 = vmatpush.bf16.msra.mxu0 0
      %9187 = vmatpush.bf16.msra.mxu0 0
      %9188 = vmatpush.bf16.msra.mxu0 0
      %9189 = vmatpush.bf16.msra.mxu0 0
      %9190 = vmatpush.bf16.msra.mxu0 %v9133
      %9191 = vmatpush.bf16.msra.mxu0 %v9132
      %9192 = vmatmul.bf16.gmra.mxu0 %v9137
      %v9193 = vpop.f32.mrf.mxu0
      %v9194 = vadd.f32 0.0, %v9193
      %v9195 = vpop.f32.mrf.mxu0
      %v9196 = vadd.f32 0.0, %v9195
      %9197 = vmatmul.bf16.gmra.mxu0 %v9140
      %v9198 = vpop.f32.mrf.mxu0
      %v9199 = vadd.f32 0.0, %v9198
      %v9200 = vpop.f32.mrf.mxu0
      %v9201 = vadd.f32 0.0, %v9200
      %9202 = vmatmul.bf16.gmra.mxu0 %v9143
      %v9203 = vpop.f32.mrf.mxu0
      %v9204 = vadd.f32 0.0, %v9203
      %v9205 = vpop.f32.mrf.mxu0
      %v9206 = vadd.f32 0.0, %v9205
      %9207 = vmatmul.bf16.gmra.mxu0 %v9146
      %v9208 = vpop.f32.mrf.mxu0
      %v9209 = vadd.f32 0.0, %v9208
      %v9210 = vpop.f32.mrf.mxu0
      %v9211 = vadd.f32 0.0, %v9210
      %9212 = vmatmul.bf16.gmra.mxu0 %v9149
      %v9213 = vpop.f32.mrf.mxu0
      %v9214 = vadd.f32 0.0, %v9213
      %v9215 = vpop.f32.mrf.mxu0
      %v9216 = vadd.f32 0.0, %v9215
      %9217 = vmatmul.bf16.gmra.mxu0 %v9152
      %v9218 = vpop.f32.mrf.mxu0
      %v9219 = vadd.f32 0.0, %v9218
      %v9220 = vpop.f32.mrf.mxu0
      %v9221 = vadd.f32 0.0, %v9220
      %9222 = vmatmul.bf16.gmra.mxu0 %v9155
      %v9223 = vpop.f32.mrf.mxu0
      %v9224 = vadd.f32 0.0, %v9223
      %v9225 = vpop.f32.mrf.mxu0
      %v9226 = vadd.f32 0.0, %v9225
      %9227 = vmatmul.bf16.gmra.mxu0 %v9158
      %v9228 = vpop.f32.mrf.mxu0
      %v9229 = vadd.f32 0.0, %v9228
      %v9230 = vpop.f32.mrf.mxu0
      %v9231 = vadd.f32 0.0, %v9230
      %9232 = vmatmul.bf16.gmra.mxu0 %v9161
      %v9233 = vpop.f32.mrf.mxu0
      %v9234 = vadd.f32 0.0, %v9233
      %v9235 = vpop.f32.mrf.mxu0
      %v9236 = vadd.f32 0.0, %v9235
      %9237 = vmatmul.bf16.gmra.mxu0 %v9164
      %v9238 = vpop.f32.mrf.mxu0
      %v9239 = vadd.f32 0.0, %v9238
      %v9240 = vpop.f32.mrf.mxu0
      %v9241 = vadd.f32 0.0, %v9240
      %9242 = vmatmul.bf16.gmra.mxu0 %v9167
      %v9243 = vpop.f32.mrf.mxu0
      %v9244 = vadd.f32 0.0, %v9243
      %v9245 = vpop.f32.mrf.mxu0
      %v9246 = vadd.f32 0.0, %v9245
      %9247 = vmatmul.bf16.gmra.mxu0 %v9170
      %v9248 = vpop.f32.mrf.mxu0
      %v9249 = vadd.f32 0.0, %v9248
      %v9250 = vpop.f32.mrf.mxu0
      %v9251 = vadd.f32 0.0, %v9250
      %9252 = vmatmul.bf16.gmra.mxu0 %v9173
      %v9253 = vpop.f32.mrf.mxu0
      %v9254 = vadd.f32 0.0, %v9253
      %v9255 = vpop.f32.mrf.mxu0
      %v9256 = vadd.f32 0.0, %v9255
      %9257 = vmatmul.bf16.gmra.mxu0 %v9176
      %v9258 = vpop.f32.mrf.mxu0
      %v9259 = vadd.f32 0.0, %v9258
      %v9260 = vpop.f32.mrf.mxu0
      %v9261 = vadd.f32 0.0, %v9260
      %9262 = vmatmul.bf16.gmra.mxu0 %v9179
      %v9263 = vpop.f32.mrf.mxu0
      %v9264 = vadd.f32 0.0, %v9263
      %v9265 = vpop.f32.mrf.mxu0
      %v9266 = vadd.f32 0.0, %v9265
      %9267 = vmatmul.bf16.gmra.mxu0 %v9182
      %v9268 = vpop.f32.mrf.mxu0
      %v9269 = vadd.f32 0.0, %v9268
      %v9270 = vpop.f32.mrf.mxu0
      %v9271 = vadd.f32 0.0, %v9270
      %9272 = vdwg.mxu0
      %v9277 = vunpack.c.l.b16 %v9067
      %v9278 = vunpack.c.l.b16 %v9068
      %v9279 = vunpack.c.l.b16 %v9069
      %v9280 = vunpack.c.l.b16 %v9070
      %v9281 = vpack.c.b16 %v9278, %v9277
      %v9282 = vpack.c.b16 %v9280, %v9279
      %v9286 = vsel %vm471, %v9051, 0
      %v9289 = vsel %vm471, %v9052, 0
      %v9292 = vsel %vm471, %v9053, 0
      %v9295 = vsel %vm471, %v9054, 0
      %v9298 = vsel %vm471, %v9055, 0
      %v9301 = vsel %vm471, %v9056, 0
      %v9304 = vsel %vm471, %v9057, 0
      %v9307 = vsel %vm471, %v9058, 0
      %v9310 = vsel %vm471, %v9059, 0
      %v9313 = vsel %vm471, %v9060, 0
      %v9316 = vsel %vm471, %v9061, 0
      %v9319 = vsel %vm471, %v9062, 0
      %v9322 = vsel %vm471, %v9063, 0
      %v9325 = vsel %vm471, %v9064, 0
      %v9328 = vsel %vm471, %v9065, 0
      %v9331 = vsel %vm471, %v9066, 0
      %9333 = vmatpush.bf16.msra.mxu0 0
      %9334 = vmatpush.bf16.msra.mxu0 0
      %9335 = vmatpush.bf16.msra.mxu0 0
      %9336 = vmatpush.bf16.msra.mxu0 0
      %9337 = vmatpush.bf16.msra.mxu0 0
      %9338 = vmatpush.bf16.msra.mxu0 0
      %9339 = vmatpush.bf16.msra.mxu0 %v9282
      %9340 = vmatpush.bf16.msra.mxu0 %v9281
      %9341 = vmatmul.bf16.gmra.mxu0 %v9286
      %v9342 = vpop.f32.mrf.mxu0
      %v9343 = vadd.f32 %v9194, %v9342
      %v9344 = vpop.f32.mrf.mxu0
      %v9345 = vadd.f32 %v9196, %v9344
      %9346 = vmatmul.bf16.gmra.mxu0 %v9289
      %v9347 = vpop.f32.mrf.mxu0
      %v9348 = vadd.f32 %v9199, %v9347
      %v9349 = vpop.f32.mrf.mxu0
      %v9350 = vadd.f32 %v9201, %v9349
      %9351 = vmatmul.bf16.gmra.mxu0 %v9292
      %v9352 = vpop.f32.mrf.mxu0
      %v9353 = vadd.f32 %v9204, %v9352
      %v9354 = vpop.f32.mrf.mxu0
      %v9355 = vadd.f32 %v9206, %v9354
      %9356 = vmatmul.bf16.gmra.mxu0 %v9295
      %v9357 = vpop.f32.mrf.mxu0
      %v9358 = vadd.f32 %v9209, %v9357
      %v9359 = vpop.f32.mrf.mxu0
      %v9360 = vadd.f32 %v9211, %v9359
      %9361 = vmatmul.bf16.gmra.mxu0 %v9298
      %v9362 = vpop.f32.mrf.mxu0
      %v9363 = vadd.f32 %v9214, %v9362
      %v9364 = vpop.f32.mrf.mxu0
      %v9365 = vadd.f32 %v9216, %v9364
      %9366 = vmatmul.bf16.gmra.mxu0 %v9301
      %v9367 = vpop.f32.mrf.mxu0
      %v9368 = vadd.f32 %v9219, %v9367
      %v9369 = vpop.f32.mrf.mxu0
      %v9370 = vadd.f32 %v9221, %v9369
      %9371 = vmatmul.bf16.gmra.mxu0 %v9304
      %v9372 = vpop.f32.mrf.mxu0
      %v9373 = vadd.f32 %v9224, %v9372
      %v9374 = vpop.f32.mrf.mxu0
      %v9375 = vadd.f32 %v9226, %v9374
      %9376 = vmatmul.bf16.gmra.mxu0 %v9307
      %v9377 = vpop.f32.mrf.mxu0
      %v9378 = vadd.f32 %v9229, %v9377
      %v9379 = vpop.f32.mrf.mxu0
      %v9380 = vadd.f32 %v9231, %v9379
      %9381 = vmatmul.bf16.gmra.mxu0 %v9310
      %v9382 = vpop.f32.mrf.mxu0
      %v9383 = vadd.f32 %v9234, %v9382
      %v9384 = vpop.f32.mrf.mxu0
      %v9385 = vadd.f32 %v9236, %v9384
      %9386 = vmatmul.bf16.gmra.mxu0 %v9313
      %v9387 = vpop.f32.mrf.mxu0
      %v9388 = vadd.f32 %v9239, %v9387
      %v9389 = vpop.f32.mrf.mxu0
      %v9390 = vadd.f32 %v9241, %v9389
      %9391 = vmatmul.bf16.gmra.mxu0 %v9316
      %v9392 = vpop.f32.mrf.mxu0
      %v9393 = vadd.f32 %v9244, %v9392
      %v9394 = vpop.f32.mrf.mxu0
      %v9395 = vadd.f32 %v9246, %v9394
      %9396 = vmatmul.bf16.gmra.mxu0 %v9319
      %v9397 = vpop.f32.mrf.mxu0
      %v9398 = vadd.f32 %v9249, %v9397
      %v9399 = vpop.f32.mrf.mxu0
      %v9400 = vadd.f32 %v9251, %v9399
      %9401 = vmatmul.bf16.gmra.mxu0 %v9322
      %v9402 = vpop.f32.mrf.mxu0
      %v9403 = vadd.f32 %v9254, %v9402
      %v9404 = vpop.f32.mrf.mxu0
      %v9405 = vadd.f32 %v9256, %v9404
      %9406 = vmatmul.bf16.gmra.mxu0 %v9325
      %v9407 = vpop.f32.mrf.mxu0
      %v9408 = vadd.f32 %v9259, %v9407
      %v9409 = vpop.f32.mrf.mxu0
      %v9410 = vadd.f32 %v9261, %v9409
      %9411 = vmatmul.bf16.gmra.mxu0 %v9328
      %v9412 = vpop.f32.mrf.mxu0
      %v9413 = vadd.f32 %v9264, %v9412
      %v9414 = vpop.f32.mrf.mxu0
      %v9415 = vadd.f32 %v9266, %v9414
      %9416 = vmatmul.bf16.gmra.mxu0 %v9331
      %v9417 = vpop.f32.mrf.mxu0
      %v9418 = vadd.f32 %v9269, %v9417
      %v9419 = vpop.f32.mrf.mxu0
      %v9420 = vadd.f32 %v9271, %v9419
      %9421 = vdwg.mxu0
      %v9422 = vld [vmem:[#allocation3 + $0x2] sm:$0xff]
      %v9423 = vld [vmem:[#allocation3 + $0xa] sm:$0xff]
      %v9424 = vld [vmem:[#allocation3 + $0x1a] sm:$0xff]
      %v9425 = vld [vmem:[#allocation3 + $0x22] sm:$0xff]
      %v9426 = vld [vmem:[#allocation3 + $0x32] sm:$0xff]
      %v9427 = vld [vmem:[#allocation3 + $0x3a] sm:$0xff]
      %v9428 = vld [vmem:[#allocation3 + $0x4a] sm:$0xff]
      %v9429 = vld [vmem:[#allocation3 + $0x52] sm:$0xff]
      %v9430 = vld [vmem:[#allocation3 + $0x62] sm:$0xff]
      %v9431 = vld [vmem:[#allocation3 + $0x6a] sm:$0xff]
      %v9432 = vld [vmem:[#allocation3 + $0x7a] sm:$0xff]
      %v9433 = vld [vmem:[#allocation3 + $0x82] sm:$0xff]
      %v9434 = vld [vmem:[#allocation3 + $0x92] sm:$0xff]
      %v9435 = vld [vmem:[#allocation3 + $0x9a] sm:$0xff]
      %v9436 = vld [vmem:[#allocation3 + $0xaa] sm:$0xff]
      %v9437 = vld [vmem:[#allocation3 + $0xb2] sm:$0xff]
      %v9438 = vld [vmem:[#allocation3 + $0xc2] sm:$0xff]
      %v9439 = vld [vmem:[#allocation3 + $0xca] sm:$0xff]
      %v9440 = vld [vmem:[#allocation3 + $0xda] sm:$0xff]
      %v9441 = vld [vmem:[#allocation3 + $0xe2] sm:$0xff]
      %v9442 = vld [vmem:[#allocation3 + $0xf2] sm:$0xff]
      %v9443 = vld [vmem:[#allocation3 + $0xfa] sm:$0xff]
      %v9444 = vld [vmem:[#allocation3 + $0x10a] sm:$0xff]
      %v9445 = vld [vmem:[#allocation3 + $0x112] sm:$0xff]
      %v9446 = vld [vmem:[#allocation3 + $0x122] sm:$0xff]
      %v9447 = vld [vmem:[#allocation3 + $0x12a] sm:$0xff]
      %v9448 = vld [vmem:[#allocation3 + $0x13a] sm:$0xff]
      %v9449 = vld [vmem:[#allocation3 + $0x142] sm:$0xff]
      %v9450 = vld [vmem:[#allocation3 + $0x152] sm:$0xff]
      %v9451 = vld [vmem:[#allocation3 + $0x15a] sm:$0xff]
      %v9452 = vld [vmem:[#allocation3 + $0x16a] sm:$0xff]
      %v9453 = vld [vmem:[#allocation3 + $0x172] sm:$0xff]
      %v9454 = vpack.c.bf16 %v9423, %v9422
      %v9455 = vpack.c.bf16 %v9425, %v9424
      %v9456 = vpack.c.bf16 %v9427, %v9426
      %v9457 = vpack.c.bf16 %v9429, %v9428
      %v9458 = vpack.c.bf16 %v9431, %v9430
      %v9459 = vpack.c.bf16 %v9433, %v9432
      %v9460 = vpack.c.bf16 %v9435, %v9434
      %v9461 = vpack.c.bf16 %v9437, %v9436
      %v9462 = vpack.c.bf16 %v9439, %v9438
      %v9463 = vpack.c.bf16 %v9441, %v9440
      %v9464 = vpack.c.bf16 %v9443, %v9442
      %v9465 = vpack.c.bf16 %v9445, %v9444
      %v9466 = vpack.c.bf16 %v9447, %v9446
      %v9467 = vpack.c.bf16 %v9449, %v9448
      %v9468 = vpack.c.bf16 %v9451, %v9450
      %v9469 = vpack.c.bf16 %v9453, %v9452
      %s9470 = scalar_lea.vmem %s8, 32
      %v9471 = vld [vmem:[%s9470] sm:$0xf]
      %v9472 = vld [vmem:[%s9470 + $0x4] sm:$0xf]
      %v9473 = vld [vmem:[%s9470 + $0x8] sm:$0xf]
      %v9474 = vld [vmem:[%s9470 + $0xc] sm:$0xf]
      %v9479 = vunpack.c.l.b16 %v9471
      %v9480 = vunpack.c.l.b16 %v9472
      %v9481 = vunpack.c.l.b16 %v9473
      %v9482 = vunpack.c.l.b16 %v9474
      %v9483 = vpack.c.b16 %v9480, %v9479
      %v9484 = vpack.c.b16 %v9482, %v9481
      %v9488 = vsel %vm471, %v9454, 0
      %v9491 = vsel %vm471, %v9455, 0
      %v9494 = vsel %vm471, %v9456, 0
      %v9497 = vsel %vm471, %v9457, 0
      %v9500 = vsel %vm471, %v9458, 0
      %v9503 = vsel %vm471, %v9459, 0
      %v9506 = vsel %vm471, %v9460, 0
      %v9509 = vsel %vm471, %v9461, 0
      %v9512 = vsel %vm471, %v9462, 0
      %v9515 = vsel %vm471, %v9463, 0
      %v9518 = vsel %vm471, %v9464, 0
      %v9521 = vsel %vm471, %v9465, 0
      %v9524 = vsel %vm471, %v9466, 0
      %v9527 = vsel %vm471, %v9467, 0
      %v9530 = vsel %vm471, %v9468, 0
      %v9533 = vsel %vm471, %v9469, 0
      %9535 = vmatpush.bf16.msra.mxu0 0
      %9536 = vmatpush.bf16.msra.mxu0 0
      %9537 = vmatpush.bf16.msra.mxu0 0
      %9538 = vmatpush.bf16.msra.mxu0 0
      %9539 = vmatpush.bf16.msra.mxu0 0
      %9540 = vmatpush.bf16.msra.mxu0 0
      %9541 = vmatpush.bf16.msra.mxu0 %v9484
      %9542 = vmatpush.bf16.msra.mxu0 %v9483
      %9543 = vmatmul.bf16.gmra.mxu0 %v9488
      %v9544 = vpop.f32.mrf.mxu0
      %v9545 = vadd.f32 0.0, %v9544
      %v9546 = vpop.f32.mrf.mxu0
      %v9547 = vadd.f32 0.0, %v9546
      %9548 = vmatmul.bf16.gmra.mxu0 %v9491
      %v9549 = vpop.f32.mrf.mxu0
      %v9550 = vadd.f32 0.0, %v9549
      %v9551 = vpop.f32.mrf.mxu0
      %v9552 = vadd.f32 0.0, %v9551
      %9553 = vmatmul.bf16.gmra.mxu0 %v9494
      %v9554 = vpop.f32.mrf.mxu0
      %v9555 = vadd.f32 0.0, %v9554
      %v9556 = vpop.f32.mrf.mxu0
      %v9557 = vadd.f32 0.0, %v9556
      %9558 = vmatmul.bf16.gmra.mxu0 %v9497
      %v9559 = vpop.f32.mrf.mxu0
      %v9560 = vadd.f32 0.0, %v9559
      %v9561 = vpop.f32.mrf.mxu0
      %v9562 = vadd.f32 0.0, %v9561
      %9563 = vmatmul.bf16.gmra.mxu0 %v9500
      %v9564 = vpop.f32.mrf.mxu0
      %v9565 = vadd.f32 0.0, %v9564
      %v9566 = vpop.f32.mrf.mxu0
      %v9567 = vadd.f32 0.0, %v9566
      %9568 = vmatmul.bf16.gmra.mxu0 %v9503
      %v9569 = vpop.f32.mrf.mxu0
      %v9570 = vadd.f32 0.0, %v9569
      %v9571 = vpop.f32.mrf.mxu0
      %v9572 = vadd.f32 0.0, %v9571
      %9573 = vmatmul.bf16.gmra.mxu0 %v9506
      %v9574 = vpop.f32.mrf.mxu0
      %v9575 = vadd.f32 0.0, %v9574
      %v9576 = vpop.f32.mrf.mxu0
      %v9577 = vadd.f32 0.0, %v9576
      %9578 = vmatmul.bf16.gmra.mxu0 %v9509
      %v9579 = vpop.f32.mrf.mxu0
      %v9580 = vadd.f32 0.0, %v9579
      %v9581 = vpop.f32.mrf.mxu0
      %v9582 = vadd.f32 0.0, %v9581
      %9583 = vmatmul.bf16.gmra.mxu0 %v9512
      %v9584 = vpop.f32.mrf.mxu0
      %v9585 = vadd.f32 0.0, %v9584
      %v9586 = vpop.f32.mrf.mxu0
      %v9587 = vadd.f32 0.0, %v9586
      %9588 = vmatmul.bf16.gmra.mxu0 %v9515
      %v9589 = vpop.f32.mrf.mxu0
      %v9590 = vadd.f32 0.0, %v9589
      %v9591 = vpop.f32.mrf.mxu0
      %v9592 = vadd.f32 0.0, %v9591
      %9593 = vmatmul.bf16.gmra.mxu0 %v9518
      %v9594 = vpop.f32.mrf.mxu0
      %v9595 = vadd.f32 0.0, %v9594
      %v9596 = vpop.f32.mrf.mxu0
      %v9597 = vadd.f32 0.0, %v9596
      %9598 = vmatmul.bf16.gmra.mxu0 %v9521
      %v9599 = vpop.f32.mrf.mxu0
      %v9600 = vadd.f32 0.0, %v9599
      %v9601 = vpop.f32.mrf.mxu0
      %v9602 = vadd.f32 0.0, %v9601
      %9603 = vmatmul.bf16.gmra.mxu0 %v9524
      %v9604 = vpop.f32.mrf.mxu0
      %v9605 = vadd.f32 0.0, %v9604
      %v9606 = vpop.f32.mrf.mxu0
      %v9607 = vadd.f32 0.0, %v9606
      %9608 = vmatmul.bf16.gmra.mxu0 %v9527
      %v9609 = vpop.f32.mrf.mxu0
      %v9610 = vadd.f32 0.0, %v9609
      %v9611 = vpop.f32.mrf.mxu0
      %v9612 = vadd.f32 0.0, %v9611
      %9613 = vmatmul.bf16.gmra.mxu0 %v9530
      %v9614 = vpop.f32.mrf.mxu0
      %v9615 = vadd.f32 0.0, %v9614
      %v9616 = vpop.f32.mrf.mxu0
      %v9617 = vadd.f32 0.0, %v9616
      %9618 = vmatmul.bf16.gmra.mxu0 %v9533
      %v9619 = vpop.f32.mrf.mxu0
      %v9620 = vadd.f32 0.0, %v9619
      %v9621 = vpop.f32.mrf.mxu0
      %v9622 = vadd.f32 0.0, %v9621
      %9623 = vdwg.mxu0
      %v9624 = vadd.f32 %v9343, %v9545
      %v9625 = vadd.f32 %v9345, %v9547
      %v9626 = vadd.f32 %v9348, %v9550
      %v9627 = vadd.f32 %v9350, %v9552
      %v9628 = vadd.f32 %v9353, %v9555
      %v9629 = vadd.f32 %v9355, %v9557
      %v9630 = vadd.f32 %v9358, %v9560
      %v9631 = vadd.f32 %v9360, %v9562
      %v9632 = vadd.f32 %v9363, %v9565
      %v9633 = vadd.f32 %v9365, %v9567
      %v9634 = vadd.f32 %v9368, %v9570
      %v9635 = vadd.f32 %v9370, %v9572
      %v9636 = vadd.f32 %v9373, %v9575
      %v9637 = vadd.f32 %v9375, %v9577
      %v9638 = vadd.f32 %v9378, %v9580
      %v9639 = vadd.f32 %v9380, %v9582
      %v9640 = vadd.f32 %v9383, %v9585
      %v9641 = vadd.f32 %v9385, %v9587
      %v9642 = vadd.f32 %v9388, %v9590
      %v9643 = vadd.f32 %v9390, %v9592
      %v9644 = vadd.f32 %v9393, %v9595
      %v9645 = vadd.f32 %v9395, %v9597
      %v9646 = vadd.f32 %v9398, %v9600
      %v9647 = vadd.f32 %v9400, %v9602
      %v9648 = vadd.f32 %v9403, %v9605
      %v9649 = vadd.f32 %v9405, %v9607
      %v9650 = vadd.f32 %v9408, %v9610
      %v9651 = vadd.f32 %v9410, %v9612
      %v9652 = vadd.f32 %v9413, %v9615
      %v9653 = vadd.f32 %v9415, %v9617
      %v9654 = vadd.f32 %v9418, %v9620
      %v9655 = vadd.f32 %v9420, %v9622
      %v9656 = vld [vmem:[%s2652] sm:$0xff]
      %v9657 = vld [vmem:[%s2652 + $0x8] sm:$0xff]
      %v9658 = vld [vmem:[%s2652 + $0x18] sm:$0xff]
      %v9659 = vld [vmem:[%s2652 + $0x20] sm:$0xff]
      %v9660 = vld [vmem:[%s2652 + $0x30] sm:$0xff]
      %v9661 = vld [vmem:[%s2652 + $0x38] sm:$0xff]
      %v9662 = vld [vmem:[%s2652 + $0x48] sm:$0xff]
      %v9663 = vld [vmem:[%s2652 + $0x50] sm:$0xff]
      %v9664 = vld [vmem:[%s2652 + $0x60] sm:$0xff]
      %v9665 = vld [vmem:[%s2652 + $0x68] sm:$0xff]
      %v9666 = vld [vmem:[%s2652 + $0x78] sm:$0xff]
      %v9667 = vld [vmem:[%s2652 + $0x80] sm:$0xff]
      %v9668 = vld [vmem:[%s2652 + $0x90] sm:$0xff]
      %v9669 = vld [vmem:[%s2652 + $0x98] sm:$0xff]
      %v9670 = vld [vmem:[%s2652 + $0xa8] sm:$0xff]
      %v9671 = vld [vmem:[%s2652 + $0xb0] sm:$0xff]
      %v9672 = vld [vmem:[%s2652 + $0xc0] sm:$0xff]
      %v9673 = vld [vmem:[%s2652 + $0xc8] sm:$0xff]
      %v9674 = vld [vmem:[%s2652 + $0xd8] sm:$0xff]
      %v9675 = vld [vmem:[%s2652 + $0xe0] sm:$0xff]
      %v9676 = vld [vmem:[%s2652 + $0xf0] sm:$0xff]
      %v9677 = vld [vmem:[%s2652 + $0xf8] sm:$0xff]
      %v9678 = vld [vmem:[%s2652 + $0x108] sm:$0xff]
      %v9679 = vld [vmem:[%s2652 + $0x110] sm:$0xff]
      %v9680 = vld [vmem:[%s2652 + $0x120] sm:$0xff]
      %v9681 = vld [vmem:[%s2652 + $0x128] sm:$0xff]
      %v9682 = vld [vmem:[%s2652 + $0x138] sm:$0xff]
      %v9683 = vld [vmem:[%s2652 + $0x140] sm:$0xff]
      %v9684 = vld [vmem:[%s2652 + $0x150] sm:$0xff]
      %v9685 = vld [vmem:[%s2652 + $0x158] sm:$0xff]
      %v9686 = vld [vmem:[%s2652 + $0x168] sm:$0xff]
      %v9687 = vld [vmem:[%s2652 + $0x170] sm:$0xff]
      %v9688 = vpack.c.bf16 %v9657, %v9656
      %v9689 = vpack.c.bf16 %v9659, %v9658
      %v9690 = vpack.c.bf16 %v9661, %v9660
      %v9691 = vpack.c.bf16 %v9663, %v9662
      %v9692 = vpack.c.bf16 %v9665, %v9664
      %v9693 = vpack.c.bf16 %v9667, %v9666
      %v9694 = vpack.c.bf16 %v9669, %v9668
      %v9695 = vpack.c.bf16 %v9671, %v9670
      %v9696 = vpack.c.bf16 %v9673, %v9672
      %v9697 = vpack.c.bf16 %v9675, %v9674
      %v9698 = vpack.c.bf16 %v9677, %v9676
      %v9699 = vpack.c.bf16 %v9679, %v9678
      %v9700 = vpack.c.bf16 %v9681, %v9680
      %v9701 = vpack.c.bf16 %v9683, %v9682
      %v9702 = vpack.c.bf16 %v9685, %v9684
      %v9703 = vpack.c.bf16 %v9687, %v9686
      %s9704 = scalar_lea.vmem %s8, 48
      %v9705 = vld [vmem:[%s9704] sm:$0xf]
      %v9706 = vld [vmem:[%s9704 + $0x4] sm:$0xf]
      %v9707 = vld [vmem:[%s9704 + $0x8] sm:$0xf]
      %v9708 = vld [vmem:[%s9704 + $0xc] sm:$0xf]
      %v9713 = vunpack.c.l.b16 %v9705
      %v9714 = vunpack.c.l.b16 %v9706
      %v9715 = vunpack.c.l.b16 %v9707
      %v9716 = vunpack.c.l.b16 %v9708
      %v9717 = vpack.c.b16 %v9714, %v9713
      %v9718 = vpack.c.b16 %v9716, %v9715
      %v9722 = vsel %vm471, %v9688, 0
      %v9725 = vsel %vm471, %v9689, 0
      %v9728 = vsel %vm471, %v9690, 0
      %v9731 = vsel %vm471, %v9691, 0
      %v9734 = vsel %vm471, %v9692, 0
      %v9737 = vsel %vm471, %v9693, 0
      %v9740 = vsel %vm471, %v9694, 0
      %v9743 = vsel %vm471, %v9695, 0
      %v9746 = vsel %vm471, %v9696, 0
      %v9749 = vsel %vm471, %v9697, 0
      %v9752 = vsel %vm471, %v9698, 0
      %v9755 = vsel %vm471, %v9699, 0
      %v9758 = vsel %vm471, %v9700, 0
      %v9761 = vsel %vm471, %v9701, 0
      %v9764 = vsel %vm471, %v9702, 0
      %v9767 = vsel %vm471, %v9703, 0
      %9769 = vmatpush.bf16.msra.mxu0 0
      %9770 = vmatpush.bf16.msra.mxu0 0
      %9771 = vmatpush.bf16.msra.mxu0 0
      %9772 = vmatpush.bf16.msra.mxu0 0
      %9773 = vmatpush.bf16.msra.mxu0 0
      %9774 = vmatpush.bf16.msra.mxu0 0
      %9775 = vmatpush.bf16.msra.mxu0 %v9718
      %9776 = vmatpush.bf16.msra.mxu0 %v9717
      %9777 = vmatmul.bf16.gmra.mxu0 %v9722
      %v9778 = vpop.f32.mrf.mxu0
      %v9779 = vadd.f32 0.0, %v9778
      %v9780 = vpop.f32.mrf.mxu0
      %v9781 = vadd.f32 0.0, %v9780
      %9782 = vmatmul.bf16.gmra.mxu0 %v9725
      %v9783 = vpop.f32.mrf.mxu0
      %v9784 = vadd.f32 0.0, %v9783
      %v9785 = vpop.f32.mrf.mxu0
      %v9786 = vadd.f32 0.0, %v9785
      %9787 = vmatmul.bf16.gmra.mxu0 %v9728
      %v9788 = vpop.f32.mrf.mxu0
      %v9789 = vadd.f32 0.0, %v9788
      %v9790 = vpop.f32.mrf.mxu0
      %v9791 = vadd.f32 0.0, %v9790
      %9792 = vmatmul.bf16.gmra.mxu0 %v9731
      %v9793 = vpop.f32.mrf.mxu0
      %v9794 = vadd.f32 0.0, %v9793
      %v9795 = vpop.f32.mrf.mxu0
      %v9796 = vadd.f32 0.0, %v9795
      %9797 = vmatmul.bf16.gmra.mxu0 %v9734
      %v9798 = vpop.f32.mrf.mxu0
      %v9799 = vadd.f32 0.0, %v9798
      %v9800 = vpop.f32.mrf.mxu0
      %v9801 = vadd.f32 0.0, %v9800
      %9802 = vmatmul.bf16.gmra.mxu0 %v9737
      %v9803 = vpop.f32.mrf.mxu0
      %v9804 = vadd.f32 0.0, %v9803
      %v9805 = vpop.f32.mrf.mxu0
      %v9806 = vadd.f32 0.0, %v9805
      %9807 = vmatmul.bf16.gmra.mxu0 %v9740
      %v9808 = vpop.f32.mrf.mxu0
      %v9809 = vadd.f32 0.0, %v9808
      %v9810 = vpop.f32.mrf.mxu0
      %v9811 = vadd.f32 0.0, %v9810
      %9812 = vmatmul.bf16.gmra.mxu0 %v9743
      %v9813 = vpop.f32.mrf.mxu0
      %v9814 = vadd.f32 0.0, %v9813
      %v9815 = vpop.f32.mrf.mxu0
      %v9816 = vadd.f32 0.0, %v9815
      %9817 = vmatmul.bf16.gmra.mxu0 %v9746
      %v9818 = vpop.f32.mrf.mxu0
      %v9819 = vadd.f32 0.0, %v9818
      %v9820 = vpop.f32.mrf.mxu0
      %v9821 = vadd.f32 0.0, %v9820
      %9822 = vmatmul.bf16.gmra.mxu0 %v9749
      %v9823 = vpop.f32.mrf.mxu0
      %v9824 = vadd.f32 0.0, %v9823
      %v9825 = vpop.f32.mrf.mxu0
      %v9826 = vadd.f32 0.0, %v9825
      %9827 = vmatmul.bf16.gmra.mxu0 %v9752
      %v9828 = vpop.f32.mrf.mxu0
      %v9829 = vadd.f32 0.0, %v9828
      %v9830 = vpop.f32.mrf.mxu0
      %v9831 = vadd.f32 0.0, %v9830
      %9832 = vmatmul.bf16.gmra.mxu0 %v9755
      %v9833 = vpop.f32.mrf.mxu0
      %v9834 = vadd.f32 0.0, %v9833
      %v9835 = vpop.f32.mrf.mxu0
      %v9836 = vadd.f32 0.0, %v9835
      %9837 = vmatmul.bf16.gmra.mxu0 %v9758
      %v9838 = vpop.f32.mrf.mxu0
      %v9839 = vadd.f32 0.0, %v9838
      %v9840 = vpop.f32.mrf.mxu0
      %v9841 = vadd.f32 0.0, %v9840
      %9842 = vmatmul.bf16.gmra.mxu0 %v9761
      %v9843 = vpop.f32.mrf.mxu0
      %v9844 = vadd.f32 0.0, %v9843
      %v9845 = vpop.f32.mrf.mxu0
      %v9846 = vadd.f32 0.0, %v9845
      %9847 = vmatmul.bf16.gmra.mxu0 %v9764
      %v9848 = vpop.f32.mrf.mxu0
      %v9849 = vadd.f32 0.0, %v9848
      %v9850 = vpop.f32.mrf.mxu0
      %v9851 = vadd.f32 0.0, %v9850
      %9852 = vmatmul.bf16.gmra.mxu0 %v9767
      %v9853 = vpop.f32.mrf.mxu0
      %v9854 = vadd.f32 0.0, %v9853
      %v9855 = vpop.f32.mrf.mxu0
      %v9856 = vadd.f32 0.0, %v9855
      %9857 = vdwg.mxu0
      %v9858 = vadd.f32 %v9624, %v9779
      %v9859 = vadd.f32 %v9625, %v9781
      %v9860 = vadd.f32 %v9626, %v9784
      %v9861 = vadd.f32 %v9627, %v9786
      %v9862 = vadd.f32 %v9628, %v9789
      %v9863 = vadd.f32 %v9629, %v9791
      %v9864 = vadd.f32 %v9630, %v9794
      %v9865 = vadd.f32 %v9631, %v9796
      %v9866 = vadd.f32 %v9632, %v9799
      %v9867 = vadd.f32 %v9633, %v9801
      %v9868 = vadd.f32 %v9634, %v9804
      %v9869 = vadd.f32 %v9635, %v9806
      %v9870 = vadd.f32 %v9636, %v9809
      %v9871 = vadd.f32 %v9637, %v9811
      %v9872 = vadd.f32 %v9638, %v9814
      %v9873 = vadd.f32 %v9639, %v9816
      %v9874 = vadd.f32 %v9640, %v9819
      %v9875 = vadd.f32 %v9641, %v9821
      %v9876 = vadd.f32 %v9642, %v9824
      %v9877 = vadd.f32 %v9643, %v9826
      %v9878 = vadd.f32 %v9644, %v9829
      %v9879 = vadd.f32 %v9645, %v9831
      %v9880 = vadd.f32 %v9646, %v9834
      %v9881 = vadd.f32 %v9647, %v9836
      %v9882 = vadd.f32 %v9648, %v9839
      %v9883 = vadd.f32 %v9649, %v9841
      %v9884 = vadd.f32 %v9650, %v9844
      %v9885 = vadd.f32 %v9651, %v9846
      %v9886 = vadd.f32 %v9652, %v9849
      %v9887 = vadd.f32 %v9653, %v9851
      %v9888 = vadd.f32 %v9654, %v9854
      %v9889 = vadd.f32 %v9655, %v9856
      %v9890 = vld [vmem:[%s2652 + $0x1] sm:$0xff]
      %v9891 = vld [vmem:[%s2652 + $0x9] sm:$0xff]
      %v9892 = vld [vmem:[%s2652 + $0x19] sm:$0xff]
      %v9893 = vld [vmem:[%s2652 + $0x21] sm:$0xff]
      %v9894 = vld [vmem:[%s2652 + $0x31] sm:$0xff]
      %v9895 = vld [vmem:[%s2652 + $0x39] sm:$0xff]
      %v9896 = vld [vmem:[%s2652 + $0x49] sm:$0xff]
      %v9897 = vld [vmem:[%s2652 + $0x51] sm:$0xff]
      %v9898 = vld [vmem:[%s2652 + $0x61] sm:$0xff]
      %v9899 = vld [vmem:[%s2652 + $0x69] sm:$0xff]
      %v9900 = vld [vmem:[%s2652 + $0x79] sm:$0xff]
      %v9901 = vld [vmem:[%s2652 + $0x81] sm:$0xff]
      %v9902 = vld [vmem:[%s2652 + $0x91] sm:$0xff]
      %v9903 = vld [vmem:[%s2652 + $0x99] sm:$0xff]
      %v9904 = vld [vmem:[%s2652 + $0xa9] sm:$0xff]
      %v9905 = vld [vmem:[%s2652 + $0xb1] sm:$0xff]
      %v9906 = vld [vmem:[%s2652 + $0xc1] sm:$0xff]
      %v9907 = vld [vmem:[%s2652 + $0xc9] sm:$0xff]
      %v9908 = vld [vmem:[%s2652 + $0xd9] sm:$0xff]
      %v9909 = vld [vmem:[%s2652 + $0xe1] sm:$0xff]
      %v9910 = vld [vmem:[%s2652 + $0xf1] sm:$0xff]
      %v9911 = vld [vmem:[%s2652 + $0xf9] sm:$0xff]
      %v9912 = vld [vmem:[%s2652 + $0x109] sm:$0xff]
      %v9913 = vld [vmem:[%s2652 + $0x111] sm:$0xff]
      %v9914 = vld [vmem:[%s2652 + $0x121] sm:$0xff]
      %v9915 = vld [vmem:[%s2652 + $0x129] sm:$0xff]
      %v9916 = vld [vmem:[%s2652 + $0x139] sm:$0xff]
      %v9917 = vld [vmem:[%s2652 + $0x141] sm:$0xff]
      %v9918 = vld [vmem:[%s2652 + $0x151] sm:$0xff]
      %v9919 = vld [vmem:[%s2652 + $0x159] sm:$0xff]
      %v9920 = vld [vmem:[%s2652 + $0x169] sm:$0xff]
      %v9921 = vld [vmem:[%s2652 + $0x171] sm:$0xff]
      %v9922 = vpack.c.bf16 %v9891, %v9890
      %v9923 = vpack.c.bf16 %v9893, %v9892
      %v9924 = vpack.c.bf16 %v9895, %v9894
      %v9925 = vpack.c.bf16 %v9897, %v9896
      %v9926 = vpack.c.bf16 %v9899, %v9898
      %v9927 = vpack.c.bf16 %v9901, %v9900
      %v9928 = vpack.c.bf16 %v9903, %v9902
      %v9929 = vpack.c.bf16 %v9905, %v9904
      %v9930 = vpack.c.bf16 %v9907, %v9906
      %v9931 = vpack.c.bf16 %v9909, %v9908
      %v9932 = vpack.c.bf16 %v9911, %v9910
      %v9933 = vpack.c.bf16 %v9913, %v9912
      %v9934 = vpack.c.bf16 %v9915, %v9914
      %v9935 = vpack.c.bf16 %v9917, %v9916
      %v9936 = vpack.c.bf16 %v9919, %v9918
      %v9937 = vpack.c.bf16 %v9921, %v9920
      %s9938 = scalar_lea.vmem %s8, 64
      %v9939 = vld [vmem:[%s9938] sm:$0xf]
      %v9940 = vld [vmem:[%s9938 + $0x4] sm:$0xf]
      %v9941 = vld [vmem:[%s9938 + $0x8] sm:$0xf]
      %v9942 = vld [vmem:[%s9938 + $0xc] sm:$0xf]
      %v9947 = vunpack.c.l.b16 %v9939
      %v9948 = vunpack.c.l.b16 %v9940
      %v9949 = vunpack.c.l.b16 %v9941
      %v9950 = vunpack.c.l.b16 %v9942
      %v9951 = vpack.c.b16 %v9948, %v9947
      %v9952 = vpack.c.b16 %v9950, %v9949
      %v9956 = vsel %vm471, %v9922, 0
      %v9959 = vsel %vm471, %v9923, 0
      %v9962 = vsel %vm471, %v9924, 0
      %v9965 = vsel %vm471, %v9925, 0
      %v9968 = vsel %vm471, %v9926, 0
      %v9971 = vsel %vm471, %v9927, 0
      %v9974 = vsel %vm471, %v9928, 0
      %v9977 = vsel %vm471, %v9929, 0
      %v9980 = vsel %vm471, %v9930, 0
      %v9983 = vsel %vm471, %v9931, 0
      %v9986 = vsel %vm471, %v9932, 0
      %v9989 = vsel %vm471, %v9933, 0
      %v9992 = vsel %vm471, %v9934, 0
      %v9995 = vsel %vm471, %v9935, 0
      %v9998 = vsel %vm471, %v9936, 0
      %v10001 = vsel %vm471, %v9937, 0
      %10003 = vmatpush.bf16.msra.mxu0 0
      %10004 = vmatpush.bf16.msra.mxu0 0
      %10005 = vmatpush.bf16.msra.mxu0 0
      %10006 = vmatpush.bf16.msra.mxu0 0
      %10007 = vmatpush.bf16.msra.mxu0 0
      %10008 = vmatpush.bf16.msra.mxu0 0
      %10009 = vmatpush.bf16.msra.mxu0 %v9952
      %10010 = vmatpush.bf16.msra.mxu0 %v9951
      %10011 = vmatmul.bf16.gmra.mxu0 %v9956
      %v10012 = vpop.f32.mrf.mxu0
      %v10013 = vadd.f32 0.0, %v10012
      %v10014 = vpop.f32.mrf.mxu0
      %v10015 = vadd.f32 0.0, %v10014
      %10016 = vmatmul.bf16.gmra.mxu0 %v9959
      %v10017 = vpop.f32.mrf.mxu0
      %v10018 = vadd.f32 0.0, %v10017
      %v10019 = vpop.f32.mrf.mxu0
      %v10020 = vadd.f32 0.0, %v10019
      %10021 = vmatmul.bf16.gmra.mxu0 %v9962
      %v10022 = vpop.f32.mrf.mxu0
      %v10023 = vadd.f32 0.0, %v10022
      %v10024 = vpop.f32.mrf.mxu0
      %v10025 = vadd.f32 0.0, %v10024
      %10026 = vmatmul.bf16.gmra.mxu0 %v9965
      %v10027 = vpop.f32.mrf.mxu0
      %v10028 = vadd.f32 0.0, %v10027
      %v10029 = vpop.f32.mrf.mxu0
      %v10030 = vadd.f32 0.0, %v10029
      %10031 = vmatmul.bf16.gmra.mxu0 %v9968
      %v10032 = vpop.f32.mrf.mxu0
      %v10033 = vadd.f32 0.0, %v10032
      %v10034 = vpop.f32.mrf.mxu0
      %v10035 = vadd.f32 0.0, %v10034
      %10036 = vmatmul.bf16.gmra.mxu0 %v9971
      %v10037 = vpop.f32.mrf.mxu0
      %v10038 = vadd.f32 0.0, %v10037
      %v10039 = vpop.f32.mrf.mxu0
      %v10040 = vadd.f32 0.0, %v10039
      %10041 = vmatmul.bf16.gmra.mxu0 %v9974
      %v10042 = vpop.f32.mrf.mxu0
      %v10043 = vadd.f32 0.0, %v10042
      %v10044 = vpop.f32.mrf.mxu0
      %v10045 = vadd.f32 0.0, %v10044
      %10046 = vmatmul.bf16.gmra.mxu0 %v9977
      %v10047 = vpop.f32.mrf.mxu0
      %v10048 = vadd.f32 0.0, %v10047
      %v10049 = vpop.f32.mrf.mxu0
      %v10050 = vadd.f32 0.0, %v10049
      %10051 = vmatmul.bf16.gmra.mxu0 %v9980
      %v10052 = vpop.f32.mrf.mxu0
      %v10053 = vadd.f32 0.0, %v10052
      %v10054 = vpop.f32.mrf.mxu0
      %v10055 = vadd.f32 0.0, %v10054
      %10056 = vmatmul.bf16.gmra.mxu0 %v9983
      %v10057 = vpop.f32.mrf.mxu0
      %v10058 = vadd.f32 0.0, %v10057
      %v10059 = vpop.f32.mrf.mxu0
      %v10060 = vadd.f32 0.0, %v10059
      %10061 = vmatmul.bf16.gmra.mxu0 %v9986
      %v10062 = vpop.f32.mrf.mxu0
      %v10063 = vadd.f32 0.0, %v10062
      %v10064 = vpop.f32.mrf.mxu0
      %v10065 = vadd.f32 0.0, %v10064
      %10066 = vmatmul.bf16.gmra.mxu0 %v9989
      %v10067 = vpop.f32.mrf.mxu0
      %v10068 = vadd.f32 0.0, %v10067
      %v10069 = vpop.f32.mrf.mxu0
      %v10070 = vadd.f32 0.0, %v10069
      %10071 = vmatmul.bf16.gmra.mxu0 %v9992
      %v10072 = vpop.f32.mrf.mxu0
      %v10073 = vadd.f32 0.0, %v10072
      %v10074 = vpop.f32.mrf.mxu0
      %v10075 = vadd.f32 0.0, %v10074
      %10076 = vmatmul.bf16.gmra.mxu0 %v9995
      %v10077 = vpop.f32.mrf.mxu0
      %v10078 = vadd.f32 0.0, %v10077
      %v10079 = vpop.f32.mrf.mxu0
      %v10080 = vadd.f32 0.0, %v10079
      %10081 = vmatmul.bf16.gmra.mxu0 %v9998
      %v10082 = vpop.f32.mrf.mxu0
      %v10083 = vadd.f32 0.0, %v10082
      %v10084 = vpop.f32.mrf.mxu0
      %v10085 = vadd.f32 0.0, %v10084
      %10086 = vmatmul.bf16.gmra.mxu0 %v10001
      %v10087 = vpop.f32.mrf.mxu0
      %v10088 = vadd.f32 0.0, %v10087
      %v10089 = vpop.f32.mrf.mxu0
      %v10090 = vadd.f32 0.0, %v10089
      %10091 = vdwg.mxu0
      %v10092 = vadd.f32 %v9858, %v10013
      %v10093 = vadd.f32 %v9859, %v10015
      %v10094 = vadd.f32 %v9860, %v10018
      %v10095 = vadd.f32 %v9861, %v10020
      %v10096 = vadd.f32 %v9862, %v10023
      %v10097 = vadd.f32 %v9863, %v10025
      %v10098 = vadd.f32 %v9864, %v10028
      %v10099 = vadd.f32 %v9865, %v10030
      %v10100 = vadd.f32 %v9866, %v10033
      %v10101 = vadd.f32 %v9867, %v10035
      %v10102 = vadd.f32 %v9868, %v10038
      %v10103 = vadd.f32 %v9869, %v10040
      %v10104 = vadd.f32 %v9870, %v10043
      %v10105 = vadd.f32 %v9871, %v10045
      %v10106 = vadd.f32 %v9872, %v10048
      %v10107 = vadd.f32 %v9873, %v10050
      %v10108 = vadd.f32 %v9874, %v10053
      %v10109 = vadd.f32 %v9875, %v10055
      %v10110 = vadd.f32 %v9876, %v10058
      %v10111 = vadd.f32 %v9877, %v10060
      %v10112 = vadd.f32 %v9878, %v10063
      %v10113 = vadd.f32 %v9879, %v10065
      %v10114 = vadd.f32 %v9880, %v10068
      %v10115 = vadd.f32 %v9881, %v10070
      %v10116 = vadd.f32 %v9882, %v10073
      %v10117 = vadd.f32 %v9883, %v10075
      %v10118 = vadd.f32 %v9884, %v10078
      %v10119 = vadd.f32 %v9885, %v10080
      %v10120 = vadd.f32 %v9886, %v10083
      %v10121 = vadd.f32 %v9887, %v10085
      %v10122 = vadd.f32 %v9888, %v10088
      %v10123 = vadd.f32 %v9889, %v10090
      %v10124 = vld [vmem:[%s2652 + $0x2] sm:$0xff]
      %v10125 = vld [vmem:[%s2652 + $0xa] sm:$0xff]
      %v10126 = vld [vmem:[%s2652 + $0x1a] sm:$0xff]
      %v10127 = vld [vmem:[%s2652 + $0x22] sm:$0xff]
      %v10128 = vld [vmem:[%s2652 + $0x32] sm:$0xff]
      %v10129 = vld [vmem:[%s2652 + $0x3a] sm:$0xff]
      %v10130 = vld [vmem:[%s2652 + $0x4a] sm:$0xff]
      %v10131 = vld [vmem:[%s2652 + $0x52] sm:$0xff]
      %v10132 = vld [vmem:[%s2652 + $0x62] sm:$0xff]
      %v10133 = vld [vmem:[%s2652 + $0x6a] sm:$0xff]
      %v10134 = vld [vmem:[%s2652 + $0x7a] sm:$0xff]
      %v10135 = vld [vmem:[%s2652 + $0x82] sm:$0xff]
      %v10136 = vld [vmem:[%s2652 + $0x92] sm:$0xff]
      %v10137 = vld [vmem:[%s2652 + $0x9a] sm:$0xff]
      %v10138 = vld [vmem:[%s2652 + $0xaa] sm:$0xff]
      %v10139 = vld [vmem:[%s2652 + $0xb2] sm:$0xff]
      %v10140 = vld [vmem:[%s2652 + $0xc2] sm:$0xff]
      %v10141 = vld [vmem:[%s2652 + $0xca] sm:$0xff]
      %v10142 = vld [vmem:[%s2652 + $0xda] sm:$0xff]
      %v10143 = vld [vmem:[%s2652 + $0xe2] sm:$0xff]
      %v10144 = vld [vmem:[%s2652 + $0xf2] sm:$0xff]
      %v10145 = vld [vmem:[%s2652 + $0xfa] sm:$0xff]
      %v10146 = vld [vmem:[%s2652 + $0x10a] sm:$0xff]
      %v10147 = vld [vmem:[%s2652 + $0x112] sm:$0xff]
      %v10148 = vld [vmem:[%s2652 + $0x122] sm:$0xff]
      %v10149 = vld [vmem:[%s2652 + $0x12a] sm:$0xff]
      %v10150 = vld [vmem:[%s2652 + $0x13a] sm:$0xff]
      %v10151 = vld [vmem:[%s2652 + $0x142] sm:$0xff]
      %v10152 = vld [vmem:[%s2652 + $0x152] sm:$0xff]
      %v10153 = vld [vmem:[%s2652 + $0x15a] sm:$0xff]
      %v10154 = vld [vmem:[%s2652 + $0x16a] sm:$0xff]
      %v10155 = vld [vmem:[%s2652 + $0x172] sm:$0xff]
      %v10156 = vpack.c.bf16 %v10125, %v10124
      %v10157 = vpack.c.bf16 %v10127, %v10126
      %v10158 = vpack.c.bf16 %v10129, %v10128
      %v10159 = vpack.c.bf16 %v10131, %v10130
      %v10160 = vpack.c.bf16 %v10133, %v10132
      %v10161 = vpack.c.bf16 %v10135, %v10134
      %v10162 = vpack.c.bf16 %v10137, %v10136
      %v10163 = vpack.c.bf16 %v10139, %v10138
      %v10164 = vpack.c.bf16 %v10141, %v10140
      %v10165 = vpack.c.bf16 %v10143, %v10142
      %v10166 = vpack.c.bf16 %v10145, %v10144
      %v10167 = vpack.c.bf16 %v10147, %v10146
      %v10168 = vpack.c.bf16 %v10149, %v10148
      %v10169 = vpack.c.bf16 %v10151, %v10150
      %v10170 = vpack.c.bf16 %v10153, %v10152
      %v10171 = vpack.c.bf16 %v10155, %v10154
      %s10172 = scalar_lea.vmem %s8, 80
      %v10173 = vld [vmem:[%s10172] sm:$0xf]
      %v10174 = vld [vmem:[%s10172 + $0x4] sm:$0xf]
      %v10175 = vld [vmem:[%s10172 + $0x8] sm:$0xf]
      %v10176 = vld [vmem:[%s10172 + $0xc] sm:$0xf]
      %v10181 = vunpack.c.l.b16 %v10173
      %v10182 = vunpack.c.l.b16 %v10174
      %v10183 = vunpack.c.l.b16 %v10175
      %v10184 = vunpack.c.l.b16 %v10176
      %v10185 = vpack.c.b16 %v10182, %v10181
      %v10186 = vpack.c.b16 %v10184, %v10183
      %v10190 = vsel %vm471, %v10156, 0
      %v10193 = vsel %vm471, %v10157, 0
      %v10196 = vsel %vm471, %v10158, 0
      %v10199 = vsel %vm471, %v10159, 0
      %v10202 = vsel %vm471, %v10160, 0
      %v10205 = vsel %vm471, %v10161, 0
      %v10208 = vsel %vm471, %v10162, 0
      %v10211 = vsel %vm471, %v10163, 0
      %v10214 = vsel %vm471, %v10164, 0
      %v10217 = vsel %vm471, %v10165, 0
      %v10220 = vsel %vm471, %v10166, 0
      %v10223 = vsel %vm471, %v10167, 0
      %v10226 = vsel %vm471, %v10168, 0
      %v10229 = vsel %vm471, %v10169, 0
      %v10232 = vsel %vm471, %v10170, 0
      %v10235 = vsel %vm471, %v10171, 0
      %10237 = vmatpush.bf16.msra.mxu0 0
      %10238 = vmatpush.bf16.msra.mxu0 0
      %10239 = vmatpush.bf16.msra.mxu0 0
      %10240 = vmatpush.bf16.msra.mxu0 0
      %10241 = vmatpush.bf16.msra.mxu0 0
      %10242 = vmatpush.bf16.msra.mxu0 0
      %10243 = vmatpush.bf16.msra.mxu0 %v10186
      %10244 = vmatpush.bf16.msra.mxu0 %v10185
      %10245 = vmatmul.bf16.gmra.mxu0 %v10190
      %v10246 = vpop.f32.mrf.mxu0
      %v10247 = vadd.f32 0.0, %v10246
      %v10248 = vpop.f32.mrf.mxu0
      %v10249 = vadd.f32 0.0, %v10248
      %10250 = vmatmul.bf16.gmra.mxu0 %v10193
      %v10251 = vpop.f32.mrf.mxu0
      %v10252 = vadd.f32 0.0, %v10251
      %v10253 = vpop.f32.mrf.mxu0
      %v10254 = vadd.f32 0.0, %v10253
      %10255 = vmatmul.bf16.gmra.mxu0 %v10196
      %v10256 = vpop.f32.mrf.mxu0
      %v10257 = vadd.f32 0.0, %v10256
      %v10258 = vpop.f32.mrf.mxu0
      %v10259 = vadd.f32 0.0, %v10258
      %10260 = vmatmul.bf16.gmra.mxu0 %v10199
      %v10261 = vpop.f32.mrf.mxu0
      %v10262 = vadd.f32 0.0, %v10261
      %v10263 = vpop.f32.mrf.mxu0
      %v10264 = vadd.f32 0.0, %v10263
      %10265 = vmatmul.bf16.gmra.mxu0 %v10202
      %v10266 = vpop.f32.mrf.mxu0
      %v10267 = vadd.f32 0.0, %v10266
      %v10268 = vpop.f32.mrf.mxu0
      %v10269 = vadd.f32 0.0, %v10268
      %10270 = vmatmul.bf16.gmra.mxu0 %v10205
      %v10271 = vpop.f32.mrf.mxu0
      %v10272 = vadd.f32 0.0, %v10271
      %v10273 = vpop.f32.mrf.mxu0
      %v10274 = vadd.f32 0.0, %v10273
      %10275 = vmatmul.bf16.gmra.mxu0 %v10208
      %v10276 = vpop.f32.mrf.mxu0
      %v10277 = vadd.f32 0.0, %v10276
      %v10278 = vpop.f32.mrf.mxu0
      %v10279 = vadd.f32 0.0, %v10278
      %10280 = vmatmul.bf16.gmra.mxu0 %v10211
      %v10281 = vpop.f32.mrf.mxu0
      %v10282 = vadd.f32 0.0, %v10281
      %v10283 = vpop.f32.mrf.mxu0
      %v10284 = vadd.f32 0.0, %v10283
      %10285 = vmatmul.bf16.gmra.mxu0 %v10214
      %v10286 = vpop.f32.mrf.mxu0
      %v10287 = vadd.f32 0.0, %v10286
      %v10288 = vpop.f32.mrf.mxu0
      %v10289 = vadd.f32 0.0, %v10288
      %10290 = vmatmul.bf16.gmra.mxu0 %v10217
      %v10291 = vpop.f32.mrf.mxu0
      %v10292 = vadd.f32 0.0, %v10291
      %v10293 = vpop.f32.mrf.mxu0
      %v10294 = vadd.f32 0.0, %v10293
      %10295 = vmatmul.bf16.gmra.mxu0 %v10220
      %v10296 = vpop.f32.mrf.mxu0
      %v10297 = vadd.f32 0.0, %v10296
      %v10298 = vpop.f32.mrf.mxu0
      %v10299 = vadd.f32 0.0, %v10298
      %10300 = vmatmul.bf16.gmra.mxu0 %v10223
      %v10301 = vpop.f32.mrf.mxu0
      %v10302 = vadd.f32 0.0, %v10301
      %v10303 = vpop.f32.mrf.mxu0
      %v10304 = vadd.f32 0.0, %v10303
      %10305 = vmatmul.bf16.gmra.mxu0 %v10226
      %v10306 = vpop.f32.mrf.mxu0
      %v10307 = vadd.f32 0.0, %v10306
      %v10308 = vpop.f32.mrf.mxu0
      %v10309 = vadd.f32 0.0, %v10308
      %10310 = vmatmul.bf16.gmra.mxu0 %v10229
      %v10311 = vpop.f32.mrf.mxu0
      %v10312 = vadd.f32 0.0, %v10311
      %v10313 = vpop.f32.mrf.mxu0
      %v10314 = vadd.f32 0.0, %v10313
      %10315 = vmatmul.bf16.gmra.mxu0 %v10232
      %v10316 = vpop.f32.mrf.mxu0
      %v10317 = vadd.f32 0.0, %v10316
      %v10318 = vpop.f32.mrf.mxu0
      %v10319 = vadd.f32 0.0, %v10318
      %10320 = vmatmul.bf16.gmra.mxu0 %v10235
      %v10321 = vpop.f32.mrf.mxu0
      %v10322 = vadd.f32 0.0, %v10321
      %v10323 = vpop.f32.mrf.mxu0
      %v10324 = vadd.f32 0.0, %v10323
      %10325 = vdwg.mxu0
      %v10326 = vadd.f32 %v10092, %v10247
      %v10327 = vadd.f32 %v10093, %v10249
      %v10328 = vadd.f32 %v10094, %v10252
      %v10329 = vadd.f32 %v10095, %v10254
      %v10330 = vadd.f32 %v10096, %v10257
      %v10331 = vadd.f32 %v10097, %v10259
      %v10332 = vadd.f32 %v10098, %v10262
      %v10333 = vadd.f32 %v10099, %v10264
      %v10334 = vadd.f32 %v10100, %v10267
      %v10335 = vadd.f32 %v10101, %v10269
      %v10336 = vadd.f32 %v10102, %v10272
      %v10337 = vadd.f32 %v10103, %v10274
      %v10338 = vadd.f32 %v10104, %v10277
      %v10339 = vadd.f32 %v10105, %v10279
      %v10340 = vadd.f32 %v10106, %v10282
      %v10341 = vadd.f32 %v10107, %v10284
      %v10342 = vadd.f32 %v10108, %v10287
      %v10343 = vadd.f32 %v10109, %v10289
      %v10344 = vadd.f32 %v10110, %v10292
      %v10345 = vadd.f32 %v10111, %v10294
      %v10346 = vadd.f32 %v10112, %v10297
      %v10347 = vadd.f32 %v10113, %v10299
      %v10348 = vadd.f32 %v10114, %v10302
      %v10349 = vadd.f32 %v10115, %v10304
      %v10350 = vadd.f32 %v10116, %v10307
      %v10351 = vadd.f32 %v10117, %v10309
      %v10352 = vadd.f32 %v10118, %v10312
      %v10353 = vadd.f32 %v10119, %v10314
      %v10354 = vadd.f32 %v10120, %v10317
      %v10355 = vadd.f32 %v10121, %v10319
      %v10356 = vadd.f32 %v10122, %v10322
      %v10357 = vadd.f32 %v10123, %v10324
      %v10358 = vld [vmem:[%s4024] sm:$0xff]
      %v10359 = vld [vmem:[%s4024 + $0x8] sm:$0xff]
      %v10360 = vld [vmem:[%s4024 + $0x18] sm:$0xff]
      %v10361 = vld [vmem:[%s4024 + $0x20] sm:$0xff]
      %v10362 = vld [vmem:[%s4024 + $0x30] sm:$0xff]
      %v10363 = vld [vmem:[%s4024 + $0x38] sm:$0xff]
      %v10364 = vld [vmem:[%s4024 + $0x48] sm:$0xff]
      %v10365 = vld [vmem:[%s4024 + $0x50] sm:$0xff]
      %v10366 = vld [vmem:[%s4024 + $0x60] sm:$0xff]
      %v10367 = vld [vmem:[%s4024 + $0x68] sm:$0xff]
      %v10368 = vld [vmem:[%s4024 + $0x78] sm:$0xff]
      %v10369 = vld [vmem:[%s4024 + $0x80] sm:$0xff]
      %v10370 = vld [vmem:[%s4024 + $0x90] sm:$0xff]
      %v10371 = vld [vmem:[%s4024 + $0x98] sm:$0xff]
      %v10372 = vld [vmem:[%s4024 + $0xa8] sm:$0xff]
      %v10373 = vld [vmem:[%s4024 + $0xb0] sm:$0xff]
      %v10374 = vld [vmem:[%s4024 + $0xc0] sm:$0xff]
      %v10375 = vld [vmem:[%s4024 + $0xc8] sm:$0xff]
      %v10376 = vld [vmem:[%s4024 + $0xd8] sm:$0xff]
      %v10377 = vld [vmem:[%s4024 + $0xe0] sm:$0xff]
      %v10378 = vld [vmem:[%s4024 + $0xf0] sm:$0xff]
      %v10379 = vld [vmem:[%s4024 + $0xf8] sm:$0xff]
      %v10380 = vld [vmem:[%s4024 + $0x108] sm:$0xff]
      %v10381 = vld [vmem:[%s4024 + $0x110] sm:$0xff]
      %v10382 = vld [vmem:[%s4024 + $0x120] sm:$0xff]
      %v10383 = vld [vmem:[%s4024 + $0x128] sm:$0xff]
      %v10384 = vld [vmem:[%s4024 + $0x138] sm:$0xff]
      %v10385 = vld [vmem:[%s4024 + $0x140] sm:$0xff]
      %v10386 = vld [vmem:[%s4024 + $0x150] sm:$0xff]
      %v10387 = vld [vmem:[%s4024 + $0x158] sm:$0xff]
      %v10388 = vld [vmem:[%s4024 + $0x168] sm:$0xff]
      %v10389 = vld [vmem:[%s4024 + $0x170] sm:$0xff]
      %v10390 = vpack.c.bf16 %v10359, %v10358
      %v10391 = vpack.c.bf16 %v10361, %v10360
      %v10392 = vpack.c.bf16 %v10363, %v10362
      %v10393 = vpack.c.bf16 %v10365, %v10364
      %v10394 = vpack.c.bf16 %v10367, %v10366
      %v10395 = vpack.c.bf16 %v10369, %v10368
      %v10396 = vpack.c.bf16 %v10371, %v10370
      %v10397 = vpack.c.bf16 %v10373, %v10372
      %v10398 = vpack.c.bf16 %v10375, %v10374
      %v10399 = vpack.c.bf16 %v10377, %v10376
      %v10400 = vpack.c.bf16 %v10379, %v10378
      %v10401 = vpack.c.bf16 %v10381, %v10380
      %v10402 = vpack.c.bf16 %v10383, %v10382
      %v10403 = vpack.c.bf16 %v10385, %v10384
      %v10404 = vpack.c.bf16 %v10387, %v10386
      %v10405 = vpack.c.bf16 %v10389, %v10388
      %s10406 = scalar_lea.vmem %s8, 96
      %v10407 = vld [vmem:[%s10406] sm:$0xf]
      %v10408 = vld [vmem:[%s10406 + $0x4] sm:$0xf]
      %v10409 = vld [vmem:[%s10406 + $0x8] sm:$0xf]
      %v10410 = vld [vmem:[%s10406 + $0xc] sm:$0xf]
      %v10415 = vunpack.c.l.b16 %v10407
      %v10416 = vunpack.c.l.b16 %v10408
      %v10417 = vunpack.c.l.b16 %v10409
      %v10418 = vunpack.c.l.b16 %v10410
      %v10419 = vpack.c.b16 %v10416, %v10415
      %v10420 = vpack.c.b16 %v10418, %v10417
      %v10424 = vsel %vm471, %v10390, 0
      %v10427 = vsel %vm471, %v10391, 0
      %v10430 = vsel %vm471, %v10392, 0
      %v10433 = vsel %vm471, %v10393, 0
      %v10436 = vsel %vm471, %v10394, 0
      %v10439 = vsel %vm471, %v10395, 0
      %v10442 = vsel %vm471, %v10396, 0
      %v10445 = vsel %vm471, %v10397, 0
      %v10448 = vsel %vm471, %v10398, 0
      %v10451 = vsel %vm471, %v10399, 0
      %v10454 = vsel %vm471, %v10400, 0
      %v10457 = vsel %vm471, %v10401, 0
      %v10460 = vsel %vm471, %v10402, 0
      %v10463 = vsel %vm471, %v10403, 0
      %v10466 = vsel %vm471, %v10404, 0
      %v10469 = vsel %vm471, %v10405, 0
      %10471 = vmatpush.bf16.msra.mxu0 0
      %10472 = vmatpush.bf16.msra.mxu0 0
      %10473 = vmatpush.bf16.msra.mxu0 0
      %10474 = vmatpush.bf16.msra.mxu0 0
      %10475 = vmatpush.bf16.msra.mxu0 0
      %10476 = vmatpush.bf16.msra.mxu0 0
      %10477 = vmatpush.bf16.msra.mxu0 %v10420
      %10478 = vmatpush.bf16.msra.mxu0 %v10419
      %10479 = vmatmul.bf16.gmra.mxu0 %v10424
      %v10480 = vpop.f32.mrf.mxu0
      %v10481 = vadd.f32 0.0, %v10480
      %v10482 = vpop.f32.mrf.mxu0
      %v10483 = vadd.f32 0.0, %v10482
      %10484 = vmatmul.bf16.gmra.mxu0 %v10427
      %v10485 = vpop.f32.mrf.mxu0
      %v10486 = vadd.f32 0.0, %v10485
      %v10487 = vpop.f32.mrf.mxu0
      %v10488 = vadd.f32 0.0, %v10487
      %10489 = vmatmul.bf16.gmra.mxu0 %v10430
      %v10490 = vpop.f32.mrf.mxu0
      %v10491 = vadd.f32 0.0, %v10490
      %v10492 = vpop.f32.mrf.mxu0
      %v10493 = vadd.f32 0.0, %v10492
      %10494 = vmatmul.bf16.gmra.mxu0 %v10433
      %v10495 = vpop.f32.mrf.mxu0
      %v10496 = vadd.f32 0.0, %v10495
      %v10497 = vpop.f32.mrf.mxu0
      %v10498 = vadd.f32 0.0, %v10497
      %10499 = vmatmul.bf16.gmra.mxu0 %v10436
      %v10500 = vpop.f32.mrf.mxu0
      %v10501 = vadd.f32 0.0, %v10500
      %v10502 = vpop.f32.mrf.mxu0
      %v10503 = vadd.f32 0.0, %v10502
      %10504 = vmatmul.bf16.gmra.mxu0 %v10439
      %v10505 = vpop.f32.mrf.mxu0
      %v10506 = vadd.f32 0.0, %v10505
      %v10507 = vpop.f32.mrf.mxu0
      %v10508 = vadd.f32 0.0, %v10507
      %10509 = vmatmul.bf16.gmra.mxu0 %v10442
      %v10510 = vpop.f32.mrf.mxu0
      %v10511 = vadd.f32 0.0, %v10510
      %v10512 = vpop.f32.mrf.mxu0
      %v10513 = vadd.f32 0.0, %v10512
      %10514 = vmatmul.bf16.gmra.mxu0 %v10445
      %v10515 = vpop.f32.mrf.mxu0
      %v10516 = vadd.f32 0.0, %v10515
      %v10517 = vpop.f32.mrf.mxu0
      %v10518 = vadd.f32 0.0, %v10517
      %10519 = vmatmul.bf16.gmra.mxu0 %v10448
      %v10520 = vpop.f32.mrf.mxu0
      %v10521 = vadd.f32 0.0, %v10520
      %v10522 = vpop.f32.mrf.mxu0
      %v10523 = vadd.f32 0.0, %v10522
      %10524 = vmatmul.bf16.gmra.mxu0 %v10451
      %v10525 = vpop.f32.mrf.mxu0
      %v10526 = vadd.f32 0.0, %v10525
      %v10527 = vpop.f32.mrf.mxu0
      %v10528 = vadd.f32 0.0, %v10527
      %10529 = vmatmul.bf16.gmra.mxu0 %v10454
      %v10530 = vpop.f32.mrf.mxu0
      %v10531 = vadd.f32 0.0, %v10530
      %v10532 = vpop.f32.mrf.mxu0
      %v10533 = vadd.f32 0.0, %v10532
      %10534 = vmatmul.bf16.gmra.mxu0 %v10457
      %v10535 = vpop.f32.mrf.mxu0
      %v10536 = vadd.f32 0.0, %v10535
      %v10537 = vpop.f32.mrf.mxu0
      %v10538 = vadd.f32 0.0, %v10537
      %10539 = vmatmul.bf16.gmra.mxu0 %v10460
      %v10540 = vpop.f32.mrf.mxu0
      %v10541 = vadd.f32 0.0, %v10540
      %v10542 = vpop.f32.mrf.mxu0
      %v10543 = vadd.f32 0.0, %v10542
      %10544 = vmatmul.bf16.gmra.mxu0 %v10463
      %v10545 = vpop.f32.mrf.mxu0
      %v10546 = vadd.f32 0.0, %v10545
      %v10547 = vpop.f32.mrf.mxu0
      %v10548 = vadd.f32 0.0, %v10547
      %10549 = vmatmul.bf16.gmra.mxu0 %v10466
      %v10550 = vpop.f32.mrf.mxu0
      %v10551 = vadd.f32 0.0, %v10550
      %v10552 = vpop.f32.mrf.mxu0
      %v10553 = vadd.f32 0.0, %v10552
      %10554 = vmatmul.bf16.gmra.mxu0 %v10469
      %v10555 = vpop.f32.mrf.mxu0
      %v10556 = vadd.f32 0.0, %v10555
      %v10557 = vpop.f32.mrf.mxu0
      %v10558 = vadd.f32 0.0, %v10557
      %10559 = vdwg.mxu0
      %v10560 = vadd.f32 %v10326, %v10481
      %v10561 = vadd.f32 %v10327, %v10483
      %v10562 = vadd.f32 %v10328, %v10486
      %v10563 = vadd.f32 %v10329, %v10488
      %v10564 = vadd.f32 %v10330, %v10491
      %v10565 = vadd.f32 %v10331, %v10493
      %v10566 = vadd.f32 %v10332, %v10496
      %v10567 = vadd.f32 %v10333, %v10498
      %v10568 = vadd.f32 %v10334, %v10501
      %v10569 = vadd.f32 %v10335, %v10503
      %v10570 = vadd.f32 %v10336, %v10506
      %v10571 = vadd.f32 %v10337, %v10508
      %v10572 = vadd.f32 %v10338, %v10511
      %v10573 = vadd.f32 %v10339, %v10513
      %v10574 = vadd.f32 %v10340, %v10516
      %v10575 = vadd.f32 %v10341, %v10518
      %v10576 = vadd.f32 %v10342, %v10521
      %v10577 = vadd.f32 %v10343, %v10523
      %v10578 = vadd.f32 %v10344, %v10526
      %v10579 = vadd.f32 %v10345, %v10528
      %v10580 = vadd.f32 %v10346, %v10531
      %v10581 = vadd.f32 %v10347, %v10533
      %v10582 = vadd.f32 %v10348, %v10536
      %v10583 = vadd.f32 %v10349, %v10538
      %v10584 = vadd.f32 %v10350, %v10541
      %v10585 = vadd.f32 %v10351, %v10543
      %v10586 = vadd.f32 %v10352, %v10546
      %v10587 = vadd.f32 %v10353, %v10548
      %v10588 = vadd.f32 %v10354, %v10551
      %v10589 = vadd.f32 %v10355, %v10553
      %v10590 = vadd.f32 %v10356, %v10556
      %v10591 = vadd.f32 %v10357, %v10558
      %v10592 = vld [vmem:[%s4024 + $0x1] sm:$0xff]
      %v10593 = vld [vmem:[%s4024 + $0x9] sm:$0xff]
      %v10594 = vld [vmem:[%s4024 + $0x19] sm:$0xff]
      %v10595 = vld [vmem:[%s4024 + $0x21] sm:$0xff]
      %v10596 = vld [vmem:[%s4024 + $0x31] sm:$0xff]
      %v10597 = vld [vmem:[%s4024 + $0x39] sm:$0xff]
      %v10598 = vld [vmem:[%s4024 + $0x49] sm:$0xff]
      %v10599 = vld [vmem:[%s4024 + $0x51] sm:$0xff]
      %v10600 = vld [vmem:[%s4024 + $0x61] sm:$0xff]
      %v10601 = vld [vmem:[%s4024 + $0x69] sm:$0xff]
      %v10602 = vld [vmem:[%s4024 + $0x79] sm:$0xff]
      %v10603 = vld [vmem:[%s4024 + $0x81] sm:$0xff]
      %v10604 = vld [vmem:[%s4024 + $0x91] sm:$0xff]
      %v10605 = vld [vmem:[%s4024 + $0x99] sm:$0xff]
      %v10606 = vld [vmem:[%s4024 + $0xa9] sm:$0xff]
      %v10607 = vld [vmem:[%s4024 + $0xb1] sm:$0xff]
      %v10608 = vld [vmem:[%s4024 + $0xc1] sm:$0xff]
      %v10609 = vld [vmem:[%s4024 + $0xc9] sm:$0xff]
      %v10610 = vld [vmem:[%s4024 + $0xd9] sm:$0xff]
      %v10611 = vld [vmem:[%s4024 + $0xe1] sm:$0xff]
      %v10612 = vld [vmem:[%s4024 + $0xf1] sm:$0xff]
      %v10613 = vld [vmem:[%s4024 + $0xf9] sm:$0xff]
      %v10614 = vld [vmem:[%s4024 + $0x109] sm:$0xff]
      %v10615 = vld [vmem:[%s4024 + $0x111] sm:$0xff]
      %v10616 = vld [vmem:[%s4024 + $0x121] sm:$0xff]
      %v10617 = vld [vmem:[%s4024 + $0x129] sm:$0xff]
      %v10618 = vld [vmem:[%s4024 + $0x139] sm:$0xff]
      %v10619 = vld [vmem:[%s4024 + $0x141] sm:$0xff]
      %v10620 = vld [vmem:[%s4024 + $0x151] sm:$0xff]
      %v10621 = vld [vmem:[%s4024 + $0x159] sm:$0xff]
      %v10622 = vld [vmem:[%s4024 + $0x169] sm:$0xff]
      %v10623 = vld [vmem:[%s4024 + $0x171] sm:$0xff]
      %v10624 = vpack.c.bf16 %v10593, %v10592
      %v10625 = vpack.c.bf16 %v10595, %v10594
      %v10626 = vpack.c.bf16 %v10597, %v10596
      %v10627 = vpack.c.bf16 %v10599, %v10598
      %v10628 = vpack.c.bf16 %v10601, %v10600
      %v10629 = vpack.c.bf16 %v10603, %v10602
      %v10630 = vpack.c.bf16 %v10605, %v10604
      %v10631 = vpack.c.bf16 %v10607, %v10606
      %v10632 = vpack.c.bf16 %v10609, %v10608
      %v10633 = vpack.c.bf16 %v10611, %v10610
      %v10634 = vpack.c.bf16 %v10613, %v10612
      %v10635 = vpack.c.bf16 %v10615, %v10614
      %v10636 = vpack.c.bf16 %v10617, %v10616
      %v10637 = vpack.c.bf16 %v10619, %v10618
      %v10638 = vpack.c.bf16 %v10621, %v10620
      %v10639 = vpack.c.bf16 %v10623, %v10622
      %s10640 = scalar_lea.vmem %s8, 112
      %v10641 = vld [vmem:[%s10640] sm:$0xf]
      %v10642 = vld [vmem:[%s10640 + $0x4] sm:$0xf]
      %v10643 = vld [vmem:[%s10640 + $0x8] sm:$0xf]
      %v10644 = vld [vmem:[%s10640 + $0xc] sm:$0xf]
      %v10649 = vunpack.c.l.b16 %v10641
      %v10650 = vunpack.c.l.b16 %v10642
      %v10651 = vunpack.c.l.b16 %v10643
      %v10652 = vunpack.c.l.b16 %v10644
      %v10653 = vpack.c.b16 %v10650, %v10649
      %v10654 = vpack.c.b16 %v10652, %v10651
      %v10658 = vsel %vm471, %v10624, 0
      %v10661 = vsel %vm471, %v10625, 0
      %v10664 = vsel %vm471, %v10626, 0
      %v10667 = vsel %vm471, %v10627, 0
      %v10670 = vsel %vm471, %v10628, 0
      %v10673 = vsel %vm471, %v10629, 0
      %v10676 = vsel %vm471, %v10630, 0
      %v10679 = vsel %vm471, %v10631, 0
      %v10682 = vsel %vm471, %v10632, 0
      %v10685 = vsel %vm471, %v10633, 0
      %v10688 = vsel %vm471, %v10634, 0
      %v10691 = vsel %vm471, %v10635, 0
      %v10694 = vsel %vm471, %v10636, 0
      %v10697 = vsel %vm471, %v10637, 0
      %v10700 = vsel %vm471, %v10638, 0
      %v10703 = vsel %vm471, %v10639, 0
      %10705 = vmatpush.bf16.msra.mxu0 0
      %10706 = vmatpush.bf16.msra.mxu0 0
      %10707 = vmatpush.bf16.msra.mxu0 0
      %10708 = vmatpush.bf16.msra.mxu0 0
      %10709 = vmatpush.bf16.msra.mxu0 0
      %10710 = vmatpush.bf16.msra.mxu0 0
      %10711 = vmatpush.bf16.msra.mxu0 %v10654
      %10712 = vmatpush.bf16.msra.mxu0 %v10653
      %10713 = vmatmul.bf16.gmra.mxu0 %v10658
      %v10714 = vpop.f32.mrf.mxu0
      %v10715 = vadd.f32 0.0, %v10714
      %v10716 = vpop.f32.mrf.mxu0
      %v10717 = vadd.f32 0.0, %v10716
      %10718 = vmatmul.bf16.gmra.mxu0 %v10661
      %v10719 = vpop.f32.mrf.mxu0
      %v10720 = vadd.f32 0.0, %v10719
      %v10721 = vpop.f32.mrf.mxu0
      %v10722 = vadd.f32 0.0, %v10721
      %10723 = vmatmul.bf16.gmra.mxu0 %v10664
      %v10724 = vpop.f32.mrf.mxu0
      %v10725 = vadd.f32 0.0, %v10724
      %v10726 = vpop.f32.mrf.mxu0
      %v10727 = vadd.f32 0.0, %v10726
      %10728 = vmatmul.bf16.gmra.mxu0 %v10667
      %v10729 = vpop.f32.mrf.mxu0
      %v10730 = vadd.f32 0.0, %v10729
      %v10731 = vpop.f32.mrf.mxu0
      %v10732 = vadd.f32 0.0, %v10731
      %10733 = vmatmul.bf16.gmra.mxu0 %v10670
      %v10734 = vpop.f32.mrf.mxu0
      %v10735 = vadd.f32 0.0, %v10734
      %v10736 = vpop.f32.mrf.mxu0
      %v10737 = vadd.f32 0.0, %v10736
      %10738 = vmatmul.bf16.gmra.mxu0 %v10673
      %v10739 = vpop.f32.mrf.mxu0
      %v10740 = vadd.f32 0.0, %v10739
      %v10741 = vpop.f32.mrf.mxu0
      %v10742 = vadd.f32 0.0, %v10741
      %10743 = vmatmul.bf16.gmra.mxu0 %v10676
      %v10744 = vpop.f32.mrf.mxu0
      %v10745 = vadd.f32 0.0, %v10744
      %v10746 = vpop.f32.mrf.mxu0
      %v10747 = vadd.f32 0.0, %v10746
      %10748 = vmatmul.bf16.gmra.mxu0 %v10679
      %v10749 = vpop.f32.mrf.mxu0
      %v10750 = vadd.f32 0.0, %v10749
      %v10751 = vpop.f32.mrf.mxu0
      %v10752 = vadd.f32 0.0, %v10751
      %10753 = vmatmul.bf16.gmra.mxu0 %v10682
      %v10754 = vpop.f32.mrf.mxu0
      %v10755 = vadd.f32 0.0, %v10754
      %v10756 = vpop.f32.mrf.mxu0
      %v10757 = vadd.f32 0.0, %v10756
      %10758 = vmatmul.bf16.gmra.mxu0 %v10685
      %v10759 = vpop.f32.mrf.mxu0
      %v10760 = vadd.f32 0.0, %v10759
      %v10761 = vpop.f32.mrf.mxu0
      %v10762 = vadd.f32 0.0, %v10761
      %10763 = vmatmul.bf16.gmra.mxu0 %v10688
      %v10764 = vpop.f32.mrf.mxu0
      %v10765 = vadd.f32 0.0, %v10764
      %v10766 = vpop.f32.mrf.mxu0
      %v10767 = vadd.f32 0.0, %v10766
      %10768 = vmatmul.bf16.gmra.mxu0 %v10691
      %v10769 = vpop.f32.mrf.mxu0
      %v10770 = vadd.f32 0.0, %v10769
      %v10771 = vpop.f32.mrf.mxu0
      %v10772 = vadd.f32 0.0, %v10771
      %10773 = vmatmul.bf16.gmra.mxu0 %v10694
      %v10774 = vpop.f32.mrf.mxu0
      %v10775 = vadd.f32 0.0, %v10774
      %v10776 = vpop.f32.mrf.mxu0
      %v10777 = vadd.f32 0.0, %v10776
      %10778 = vmatmul.bf16.gmra.mxu0 %v10697
      %v10779 = vpop.f32.mrf.mxu0
      %v10780 = vadd.f32 0.0, %v10779
      %v10781 = vpop.f32.mrf.mxu0
      %v10782 = vadd.f32 0.0, %v10781
      %10783 = vmatmul.bf16.gmra.mxu0 %v10700
      %v10784 = vpop.f32.mrf.mxu0
      %v10785 = vadd.f32 0.0, %v10784
      %v10786 = vpop.f32.mrf.mxu0
      %v10787 = vadd.f32 0.0, %v10786
      %10788 = vmatmul.bf16.gmra.mxu0 %v10703
      %v10789 = vpop.f32.mrf.mxu0
      %v10790 = vadd.f32 0.0, %v10789
      %v10791 = vpop.f32.mrf.mxu0
      %v10792 = vadd.f32 0.0, %v10791
      %10793 = vdwg.mxu0
      %v10794 = vadd.f32 %v10560, %v10715
      %v10795 = vadd.f32 %v10561, %v10717
      %v10796 = vadd.f32 %v10562, %v10720
      %v10797 = vadd.f32 %v10563, %v10722
      %v10798 = vadd.f32 %v10564, %v10725
      %v10799 = vadd.f32 %v10565, %v10727
      %v10800 = vadd.f32 %v10566, %v10730
      %v10801 = vadd.f32 %v10567, %v10732
      %v10802 = vadd.f32 %v10568, %v10735
      %v10803 = vadd.f32 %v10569, %v10737
      %v10804 = vadd.f32 %v10570, %v10740
      %v10805 = vadd.f32 %v10571, %v10742
      %v10806 = vadd.f32 %v10572, %v10745
      %v10807 = vadd.f32 %v10573, %v10747
      %v10808 = vadd.f32 %v10574, %v10750
      %v10809 = vadd.f32 %v10575, %v10752
      %v10810 = vadd.f32 %v10576, %v10755
      %v10811 = vadd.f32 %v10577, %v10757
      %v10812 = vadd.f32 %v10578, %v10760
      %v10813 = vadd.f32 %v10579, %v10762
      %v10814 = vadd.f32 %v10580, %v10765
      %v10815 = vadd.f32 %v10581, %v10767
      %v10816 = vadd.f32 %v10582, %v10770
      %v10817 = vadd.f32 %v10583, %v10772
      %v10818 = vadd.f32 %v10584, %v10775
      %v10819 = vadd.f32 %v10585, %v10777
      %v10820 = vadd.f32 %v10586, %v10780
      %v10821 = vadd.f32 %v10587, %v10782
      %v10822 = vadd.f32 %v10588, %v10785
      %v10823 = vadd.f32 %v10589, %v10787
      %v10824 = vadd.f32 %v10590, %v10790
      %v10825 = vadd.f32 %v10591, %v10792
      %v10826 = vld [vmem:[%s4024 + $0x2] sm:$0xff]
      %v10827 = vld [vmem:[%s4024 + $0xa] sm:$0xff]
      %v10828 = vld [vmem:[%s4024 + $0x1a] sm:$0xff]
      %v10829 = vld [vmem:[%s4024 + $0x22] sm:$0xff]
      %v10830 = vld [vmem:[%s4024 + $0x32] sm:$0xff]
      %v10831 = vld [vmem:[%s4024 + $0x3a] sm:$0xff]
      %v10832 = vld [vmem:[%s4024 + $0x4a] sm:$0xff]
      %v10833 = vld [vmem:[%s4024 + $0x52] sm:$0xff]
      %v10834 = vld [vmem:[%s4024 + $0x62] sm:$0xff]
      %v10835 = vld [vmem:[%s4024 + $0x6a] sm:$0xff]
      %v10836 = vld [vmem:[%s4024 + $0x7a] sm:$0xff]
      %v10837 = vld [vmem:[%s4024 + $0x82] sm:$0xff]
      %v10838 = vld [vmem:[%s4024 + $0x92] sm:$0xff]
      %v10839 = vld [vmem:[%s4024 + $0x9a] sm:$0xff]
      %v10840 = vld [vmem:[%s4024 + $0xaa] sm:$0xff]
      %v10841 = vld [vmem:[%s4024 + $0xb2] sm:$0xff]
      %v10842 = vld [vmem:[%s4024 + $0xc2] sm:$0xff]
      %v10843 = vld [vmem:[%s4024 + $0xca] sm:$0xff]
      %v10844 = vld [vmem:[%s4024 + $0xda] sm:$0xff]
      %v10845 = vld [vmem:[%s4024 + $0xe2] sm:$0xff]
      %v10846 = vld [vmem:[%s4024 + $0xf2] sm:$0xff]
      %v10847 = vld [vmem:[%s4024 + $0xfa] sm:$0xff]
      %v10848 = vld [vmem:[%s4024 + $0x10a] sm:$0xff]
      %v10849 = vld [vmem:[%s4024 + $0x112] sm:$0xff]
      %v10850 = vld [vmem:[%s4024 + $0x122] sm:$0xff]
      %v10851 = vld [vmem:[%s4024 + $0x12a] sm:$0xff]
      %v10852 = vld [vmem:[%s4024 + $0x13a] sm:$0xff]
      %v10853 = vld [vmem:[%s4024 + $0x142] sm:$0xff]
      %v10854 = vld [vmem:[%s4024 + $0x152] sm:$0xff]
      %v10855 = vld [vmem:[%s4024 + $0x15a] sm:$0xff]
      %v10856 = vld [vmem:[%s4024 + $0x16a] sm:$0xff]
      %v10857 = vld [vmem:[%s4024 + $0x172] sm:$0xff]
      %v10858 = vpack.c.bf16 %v10827, %v10826
      %v10859 = vpack.c.bf16 %v10829, %v10828
      %v10860 = vpack.c.bf16 %v10831, %v10830
      %v10861 = vpack.c.bf16 %v10833, %v10832
      %v10862 = vpack.c.bf16 %v10835, %v10834
      %v10863 = vpack.c.bf16 %v10837, %v10836
      %v10864 = vpack.c.bf16 %v10839, %v10838
      %v10865 = vpack.c.bf16 %v10841, %v10840
      %v10866 = vpack.c.bf16 %v10843, %v10842
      %v10867 = vpack.c.bf16 %v10845, %v10844
      %v10868 = vpack.c.bf16 %v10847, %v10846
      %v10869 = vpack.c.bf16 %v10849, %v10848
      %v10870 = vpack.c.bf16 %v10851, %v10850
      %v10871 = vpack.c.bf16 %v10853, %v10852
      %v10872 = vpack.c.bf16 %v10855, %v10854
      %v10873 = vpack.c.bf16 %v10857, %v10856
      %s10874 = scalar_lea.vmem %s8, 128
      %v10875 = vld [vmem:[%s10874] sm:$0xf]
      %v10876 = vld [vmem:[%s10874 + $0x4] sm:$0xf]
      %v10877 = vld [vmem:[%s10874 + $0x8] sm:$0xf]
      %v10878 = vld [vmem:[%s10874 + $0xc] sm:$0xf]
      %v10883 = vunpack.c.l.b16 %v10875
      %v10884 = vunpack.c.l.b16 %v10876
      %v10885 = vunpack.c.l.b16 %v10877
      %v10886 = vunpack.c.l.b16 %v10878
      %v10887 = vpack.c.b16 %v10884, %v10883
      %v10888 = vpack.c.b16 %v10886, %v10885
      %v10892 = vsel %vm471, %v10858, 0
      %v10895 = vsel %vm471, %v10859, 0
      %v10898 = vsel %vm471, %v10860, 0
      %v10901 = vsel %vm471, %v10861, 0
      %v10904 = vsel %vm471, %v10862, 0
      %v10907 = vsel %vm471, %v10863, 0
      %v10910 = vsel %vm471, %v10864, 0
      %v10913 = vsel %vm471, %v10865, 0
      %v10916 = vsel %vm471, %v10866, 0
      %v10919 = vsel %vm471, %v10867, 0
      %v10922 = vsel %vm471, %v10868, 0
      %v10925 = vsel %vm471, %v10869, 0
      %v10928 = vsel %vm471, %v10870, 0
      %v10931 = vsel %vm471, %v10871, 0
      %v10934 = vsel %vm471, %v10872, 0
      %v10937 = vsel %vm471, %v10873, 0
      %10939 = vmatpush.bf16.msra.mxu0 0
      %10940 = vmatpush.bf16.msra.mxu0 0
      %10941 = vmatpush.bf16.msra.mxu0 0
      %10942 = vmatpush.bf16.msra.mxu0 0
      %10943 = vmatpush.bf16.msra.mxu0 0
      %10944 = vmatpush.bf16.msra.mxu0 0
      %10945 = vmatpush.bf16.msra.mxu0 %v10888
      %10946 = vmatpush.bf16.msra.mxu0 %v10887
      %10947 = vmatmul.bf16.gmra.mxu0 %v10892
      %v10948 = vpop.f32.mrf.mxu0
      %v10949 = vadd.f32 0.0, %v10948
      %v10950 = vpop.f32.mrf.mxu0
      %v10951 = vadd.f32 0.0, %v10950
      %10952 = vmatmul.bf16.gmra.mxu0 %v10895
      %v10953 = vpop.f32.mrf.mxu0
      %v10954 = vadd.f32 0.0, %v10953
      %v10955 = vpop.f32.mrf.mxu0
      %v10956 = vadd.f32 0.0, %v10955
      %10957 = vmatmul.bf16.gmra.mxu0 %v10898
      %v10958 = vpop.f32.mrf.mxu0
      %v10959 = vadd.f32 0.0, %v10958
      %v10960 = vpop.f32.mrf.mxu0
      %v10961 = vadd.f32 0.0, %v10960
      %10962 = vmatmul.bf16.gmra.mxu0 %v10901
      %v10963 = vpop.f32.mrf.mxu0
      %v10964 = vadd.f32 0.0, %v10963
      %v10965 = vpop.f32.mrf.mxu0
      %v10966 = vadd.f32 0.0, %v10965
      %10967 = vmatmul.bf16.gmra.mxu0 %v10904
      %v10968 = vpop.f32.mrf.mxu0
      %v10969 = vadd.f32 0.0, %v10968
      %v10970 = vpop.f32.mrf.mxu0
      %v10971 = vadd.f32 0.0, %v10970
      %10972 = vmatmul.bf16.gmra.mxu0 %v10907
      %v10973 = vpop.f32.mrf.mxu0
      %v10974 = vadd.f32 0.0, %v10973
      %v10975 = vpop.f32.mrf.mxu0
      %v10976 = vadd.f32 0.0, %v10975
      %10977 = vmatmul.bf16.gmra.mxu0 %v10910
      %v10978 = vpop.f32.mrf.mxu0
      %v10979 = vadd.f32 0.0, %v10978
      %v10980 = vpop.f32.mrf.mxu0
      %v10981 = vadd.f32 0.0, %v10980
      %10982 = vmatmul.bf16.gmra.mxu0 %v10913
      %v10983 = vpop.f32.mrf.mxu0
      %v10984 = vadd.f32 0.0, %v10983
      %v10985 = vpop.f32.mrf.mxu0
      %v10986 = vadd.f32 0.0, %v10985
      %10987 = vmatmul.bf16.gmra.mxu0 %v10916
      %v10988 = vpop.f32.mrf.mxu0
      %v10989 = vadd.f32 0.0, %v10988
      %v10990 = vpop.f32.mrf.mxu0
      %v10991 = vadd.f32 0.0, %v10990
      %10992 = vmatmul.bf16.gmra.mxu0 %v10919
      %v10993 = vpop.f32.mrf.mxu0
      %v10994 = vadd.f32 0.0, %v10993
      %v10995 = vpop.f32.mrf.mxu0
      %v10996 = vadd.f32 0.0, %v10995
      %10997 = vmatmul.bf16.gmra.mxu0 %v10922
      %v10998 = vpop.f32.mrf.mxu0
      %v10999 = vadd.f32 0.0, %v10998
      %v11000 = vpop.f32.mrf.mxu0
      %v11001 = vadd.f32 0.0, %v11000
      %11002 = vmatmul.bf16.gmra.mxu0 %v10925
      %v11003 = vpop.f32.mrf.mxu0
      %v11004 = vadd.f32 0.0, %v11003
      %v11005 = vpop.f32.mrf.mxu0
      %v11006 = vadd.f32 0.0, %v11005
      %11007 = vmatmul.bf16.gmra.mxu0 %v10928
      %v11008 = vpop.f32.mrf.mxu0
      %v11009 = vadd.f32 0.0, %v11008
      %v11010 = vpop.f32.mrf.mxu0
      %v11011 = vadd.f32 0.0, %v11010
      %11012 = vmatmul.bf16.gmra.mxu0 %v10931
      %v11013 = vpop.f32.mrf.mxu0
      %v11014 = vadd.f32 0.0, %v11013
      %v11015 = vpop.f32.mrf.mxu0
      %v11016 = vadd.f32 0.0, %v11015
      %11017 = vmatmul.bf16.gmra.mxu0 %v10934
      %v11018 = vpop.f32.mrf.mxu0
      %v11019 = vadd.f32 0.0, %v11018
      %v11020 = vpop.f32.mrf.mxu0
      %v11021 = vadd.f32 0.0, %v11020
      %11022 = vmatmul.bf16.gmra.mxu0 %v10937
      %v11023 = vpop.f32.mrf.mxu0
      %v11024 = vadd.f32 0.0, %v11023
      %v11025 = vpop.f32.mrf.mxu0
      %v11026 = vadd.f32 0.0, %v11025
      %11027 = vdwg.mxu0
      %v11028 = vadd.f32 %v10794, %v10949
      %v11029 = vadd.f32 %v10795, %v10951
      %v11030 = vadd.f32 %v10796, %v10954
      %v11031 = vadd.f32 %v10797, %v10956
      %v11032 = vadd.f32 %v10798, %v10959
      %v11033 = vadd.f32 %v10799, %v10961
      %v11034 = vadd.f32 %v10800, %v10964
      %v11035 = vadd.f32 %v10801, %v10966
      %v11036 = vadd.f32 %v10802, %v10969
      %v11037 = vadd.f32 %v10803, %v10971
      %v11038 = vadd.f32 %v10804, %v10974
      %v11039 = vadd.f32 %v10805, %v10976
      %v11040 = vadd.f32 %v10806, %v10979
      %v11041 = vadd.f32 %v10807, %v10981
      %v11042 = vadd.f32 %v10808, %v10984
      %v11043 = vadd.f32 %v10809, %v10986
      %v11044 = vadd.f32 %v10810, %v10989
      %v11045 = vadd.f32 %v10811, %v10991
      %v11046 = vadd.f32 %v10812, %v10994
      %v11047 = vadd.f32 %v10813, %v10996
      %v11048 = vadd.f32 %v10814, %v10999
      %v11049 = vadd.f32 %v10815, %v11001
      %v11050 = vadd.f32 %v10816, %v11004
      %v11051 = vadd.f32 %v10817, %v11006
      %v11052 = vadd.f32 %v10818, %v11009
      %v11053 = vadd.f32 %v10819, %v11011
      %v11054 = vadd.f32 %v10820, %v11014
      %v11055 = vadd.f32 %v10821, %v11016
      %v11056 = vadd.f32 %v10822, %v11019
      %v11057 = vadd.f32 %v10823, %v11021
      %v11058 = vadd.f32 %v10824, %v11024
      %v11059 = vadd.f32 %v10825, %v11026
      %v11060 = vld [vmem:[%s9] sm:$0x1]
      %v11062 = vperm.slane %v11060, 0
      %v11064 = vadd.f32 %v11028, %v11062
      %v11065 = vadd.f32 %v11029, %v11062
      %v11066 = vadd.f32 %v11030, %v11062
      %v11067 = vadd.f32 %v11031, %v11062
      %v11068 = vadd.f32 %v11032, %v11062
      %v11069 = vadd.f32 %v11033, %v11062
      %v11070 = vadd.f32 %v11034, %v11062
      %v11071 = vadd.f32 %v11035, %v11062
      %v11072 = vadd.f32 %v11036, %v11062
      %v11073 = vadd.f32 %v11037, %v11062
      %v11074 = vadd.f32 %v11038, %v11062
      %v11075 = vadd.f32 %v11039, %v11062
      %v11076 = vadd.f32 %v11040, %v11062
      %v11077 = vadd.f32 %v11041, %v11062
      %v11078 = vadd.f32 %v11042, %v11062
      %v11079 = vadd.f32 %v11043, %v11062
      %v11080 = vadd.f32 %v11044, %v11062
      %v11081 = vadd.f32 %v11045, %v11062
      %v11082 = vadd.f32 %v11046, %v11062
      %v11083 = vadd.f32 %v11047, %v11062
      %v11084 = vadd.f32 %v11048, %v11062
      %v11085 = vadd.f32 %v11049, %v11062
      %v11086 = vadd.f32 %v11050, %v11062
      %v11087 = vadd.f32 %v11051, %v11062
      %v11088 = vadd.f32 %v11052, %v11062
      %v11089 = vadd.f32 %v11053, %v11062
      %v11090 = vadd.f32 %v11054, %v11062
      %v11091 = vadd.f32 %v11055, %v11062
      %v11092 = vadd.f32 %v11056, %v11062
      %v11093 = vadd.f32 %v11057, %v11062
      %v11094 = vadd.f32 %v11058, %v11062
      %v11095 = vadd.f32 %v11059, %v11062
      %v11096 = vmax.f32 %v11064, 0.0
      %v11097 = vmax.f32 %v11065, 0.0
      %v11098 = vmax.f32 %v11066, 0.0
      %v11099 = vmax.f32 %v11067, 0.0
      %v11100 = vmax.f32 %v11068, 0.0
      %v11101 = vmax.f32 %v11069, 0.0
      %v11102 = vmax.f32 %v11070, 0.0
      %v11103 = vmax.f32 %v11071, 0.0
      %v11104 = vmax.f32 %v11072, 0.0
      %v11105 = vmax.f32 %v11073, 0.0
      %v11106 = vmax.f32 %v11074, 0.0
      %v11107 = vmax.f32 %v11075, 0.0
      %v11108 = vmax.f32 %v11076, 0.0
      %v11109 = vmax.f32 %v11077, 0.0
      %v11110 = vmax.f32 %v11078, 0.0
      %v11111 = vmax.f32 %v11079, 0.0
      %v11112 = vmax.f32 %v11080, 0.0
      %v11113 = vmax.f32 %v11081, 0.0
      %v11114 = vmax.f32 %v11082, 0.0
      %v11115 = vmax.f32 %v11083, 0.0
      %v11116 = vmax.f32 %v11084, 0.0
      %v11117 = vmax.f32 %v11085, 0.0
      %v11118 = vmax.f32 %v11086, 0.0
      %v11119 = vmax.f32 %v11087, 0.0
      %v11120 = vmax.f32 %v11088, 0.0
      %v11121 = vmax.f32 %v11089, 0.0
      %v11122 = vmax.f32 %v11090, 0.0
      %v11123 = vmax.f32 %v11091, 0.0
      %v11124 = vmax.f32 %v11092, 0.0
      %v11125 = vmax.f32 %v11093, 0.0
      %v11126 = vmax.f32 %v11094, 0.0
      %v11127 = vmax.f32 %v11095, 0.0
      %v11128 = vld [vmem:[%s10] sm:$0x3]
      %v11129 = vpack.c.bf16 %v11097, %v11096
      %v11130 = vpack.c.bf16 %v11099, %v11098
      %v11131 = vpack.c.bf16 %v11101, %v11100
      %v11132 = vpack.c.bf16 %v11103, %v11102
      %v11133 = vpack.c.bf16 %v11105, %v11104
      %v11134 = vpack.c.bf16 %v11107, %v11106
      %v11135 = vpack.c.bf16 %v11109, %v11108
      %v11136 = vpack.c.bf16 %v11111, %v11110
      %v11137 = vpack.c.bf16 %v11113, %v11112
      %v11138 = vpack.c.bf16 %v11115, %v11114
      %v11139 = vpack.c.bf16 %v11117, %v11116
      %v11140 = vpack.c.bf16 %v11119, %v11118
      %v11141 = vpack.c.bf16 %v11121, %v11120
      %v11142 = vpack.c.bf16 %v11123, %v11122
      %v11143 = vpack.c.bf16 %v11125, %v11124
      %v11144 = vpack.c.bf16 %v11127, %v11126
      %v11145 = vld [vmem:[%s11] sm:$0x7]
      %11147 = vset.pattern.permute.xlu0 0
      %11148 = vperm.xlu0 %11147, %v11145
      %v11149 = vpop.permute.xlu0 %11148
      %v11152 = vsel %vm471, %v11128, 0
      %v11155 = vsel %vm471, %v11129, 0
      %v11158 = vsel %vm471, %v11130, 0
      %v11161 = vsel %vm471, %v11131, 0
      %v11164 = vsel %vm471, %v11132, 0
      %v11167 = vsel %vm471, %v11133, 0
      %v11170 = vsel %vm471, %v11134, 0
      %v11173 = vsel %vm471, %v11135, 0
      %v11176 = vsel %vm471, %v11136, 0
      %v11179 = vsel %vm471, %v11137, 0
      %v11182 = vsel %vm471, %v11138, 0
      %v11185 = vsel %vm471, %v11139, 0
      %v11188 = vsel %vm471, %v11140, 0
      %v11191 = vsel %vm471, %v11141, 0
      %v11194 = vsel %vm471, %v11142, 0
      %v11197 = vsel %vm471, %v11143, 0
      %v11200 = vsel %vm471, %v11144, 0
      %11202 = vmatpush.bf16.xpose.msra.mxu0 %v11176
      %11203 = vmatpush.bf16.xpose.msra.mxu0 %v11173
      %11204 = vmatpush.bf16.xpose.msra.mxu0 %v11170
      %11205 = vmatpush.bf16.xpose.msra.mxu0 %v11167
      %11206 = vmatpush.bf16.xpose.msra.mxu0 %v11164
      %11207 = vmatpush.bf16.xpose.msra.mxu0 %v11161
      %11208 = vmatpush.bf16.xpose.msra.mxu0 %v11158
      %11209 = vmatpush.bf16.xpose.msra.mxu0 %v11155
      %11210 = vmatmul.bf16.gmra.mxu0 %v11152
      %v11211 = vpop.f32.mrf.mxu0
      %v11212 = vadd.f32 %v11149, %v11211
      %v11213 = vpop.f32.mrf.mxu0
      %11214 = vdwg.mxu0
      %11215 = vmatpush.bf16.xpose.msra.mxu0 %v11200
      %11216 = vmatpush.bf16.xpose.msra.mxu0 %v11197
      %11217 = vmatpush.bf16.xpose.msra.mxu0 %v11194
      %11218 = vmatpush.bf16.xpose.msra.mxu0 %v11191
      %11219 = vmatpush.bf16.xpose.msra.mxu0 %v11188
      %11220 = vmatpush.bf16.xpose.msra.mxu0 %v11185
      %11221 = vmatpush.bf16.xpose.msra.mxu0 %v11182
      %11222 = vmatpush.bf16.xpose.msra.mxu0 %v11179
      %11223 = vmatmul.bf16.gmra.mxu0 %v11152
      %v11224 = vpop.f32.mrf.mxu0
      %v11225 = vadd.f32 %v11149, %v11224
      %v11226 = vpop.f32.mrf.mxu0
      %11227 = vdwg.mxu0
      %v11230 = vrot.slane %v11225, 4
      %vm11231 = vcmask 1043456
      %v11232 = vsel %vm11231, %v11212, %v11230
      %11234 = vst [vmem:[%s413] sm:$0x77] %v11232
      %p11235 = scmp.lt.s32.totalorder %s23, 1
      %s11236 = scalar_select %p11235, %s23, 1
      %s11237 = smul.addr %s11236, 2
      %s11238 = smul.addr %s11237, 4
      %s11239 = scalar_lea.vmem %s12, %s11238
      // Predicated region
      $region69: #{encoder_forward.1} parent=67 // pred_check
        %p11240 = pneg %p298
      $region70: #{encoder_forward.1} parent=67 // pred_check_branch
        %11242 = sbr.rel (%p11240) target = $region72
      $region71: #{encoder_forward.1} parent=67 // pred_region
        _
      $region72: #{encoder_forward.1} parent=67 // pred_fallthru
        _
    $region68: #{encoder_forward.1} parent=5 // pred_fallthru
      _
    %p11243 = scmp.le.s32.totalorder 2, %s18
    // Predicated region
    $region73: #{encoder_forward.1} parent=5 // pred_check
      %p11244 = pneg %p11243
    $region74: #{encoder_forward.1} parent=5 // pred_check_branch
      %11246 = sbr.rel (%p11244) target = $region76
    $region75: #{encoder_forward.1} parent=5 // pred_region
      %s11247 = ssub.s32 %s18, 2
      // Predicated region
      $region77: #{encoder_forward.1} parent=75 // pred_check
        %p11248 = pneg %p304
      $region78: #{encoder_forward.1} parent=75 // pred_check_branch
        %11250 = sbr.rel (%p11248) target = $region80
      $region79: #{encoder_forward.1} parent=75 // pred_region
        %p11251 = scmp.lt.s32.totalorder %s24, 1
        %s11252 = scalar_select %p11251, %s24, 1
        %s11253 = smul.addr %s11252, 2
        %s11254 = smul.addr %s11253, 4
        %s11255 = scalar_lea.vmem %s12, %s11254
      $region80: #{encoder_forward.1} parent=75 // pred_fallthru
        _
    $region76: #{encoder_forward.1} parent=5 // pred_fallthru
      _
  $region6: #{encoder_forward.1} parent=0 // loop_footer
    %s22 = sadd.s32 1, %s18
  $region7: #{encoder_forward.1} parent=0 // loop_footer_branch
    %17 = sbr.rel target = $region3
  $region8: #{encoder_forward.1} parent=0 // loop_exit
    _

</llo_original>
